<compile_context>
chip_gen: v5e
topology: v5e:2x2
jax: 0.10.0
libtpu: 0.0.40
codegen_flags: <defaults>
</compile_context>

<pallas_src>
import jax
import jax.numpy as jnp
from jax import lax
from jax.experimental import pallas as pl
from jax.experimental.pallas import tpu as pltpu

# Model hyperparameters (mirror ConvNetwork(out_1=2, out_2=1)).
OUT_1 = 2
OUT_2 = 1
K = 5                      # conv kernel size
PAD = 2                    # conv padding
H = W = 16                 # input spatial size implied by fc1 = Linear(out_2*4*4, 10)
H2, W2 = H // 2, W // 2    # after pool1
HP, WP = H + 2 * PAD, W + 2 * PAD        # padded conv1 input  (20, 20)
HP2, WP2 = H2 + 2 * PAD, W2 + 2 * PAD    # padded conv2 input  (12, 12)
NUM_CLASSES = 10
FEAT = (H2 // 2) * (W2 // 2)             # 16 features per conv2 channel

# Batch tiling: images mapped onto the minor (sublane, lane) dims of a vreg.
SUB = 8
LANE = 128
TB = SUB * LANE            # images per grid step


def convnet_kernel(x_ref, w1_ref, b1_ref, w2_ref, b2_ref, fcw_ref, fcb_ref,
                   out_ref, xp1_ref, *xp2_refs):
    f32 = jnp.float32

    # ---- stage the zero-padded input: border-only zeroing, interior copied
    #      straight from the input block (no full-slab memset). ----
    ztb1 = jnp.zeros((PAD, WP, SUB, LANE), f32)
    zlr1 = jnp.zeros((H, PAD, SUB, LANE), f32)
    xp1_ref[0:PAD] = ztb1
    xp1_ref[H + PAD:HP] = ztb1
    xp1_ref[PAD:PAD + H, 0:PAD] = zlr1
    xp1_ref[PAD:PAD + H, W + PAD:WP] = zlr1
    xp1_ref[PAD:PAD + H, PAD:PAD + W] = x_ref[0].astype(f32)

    # Border-only zeroing of the pooled-activation slabs (interiors are fully
    # overwritten by the fused conv1+pool loop below).  Done every grid step:
    # gating on program_id==0 would be unsafe under megacore splitting.
    ztb2 = jnp.zeros((PAD, WP2, SUB, LANE), f32)
    zlr2 = jnp.zeros((H2, PAD, SUB, LANE), f32)
    for oc in range(OUT_1):
        xp2_refs[oc][0:PAD] = ztb2
        xp2_refs[oc][H2 + PAD:HP2] = ztb2
        xp2_refs[oc][PAD:PAD + H2, 0:PAD] = zlr2
        xp2_refs[oc][PAD:PAD + H2, W2 + PAD:WP2] = zlr2

    # ---- cnn1 (1 -> OUT_1) fused with 2x2 maxpool, bias + ReLU ----
    # Per pooled row p: accumulate conv rows 2p and 2p+1 in registers
    # (2 x 16 vregs); each of the 6 contributing padded input rows is loaded
    # once and all of its (<= 10) taps applied as static value slices.
    for oc in range(OUT_1):
        base1 = oc * K * K

        def c1_body(p, carry, base=base1, oc=oc):
            acc0 = None     # conv row 2p,   (W, SUB, LANE)
            acc1 = None     # conv row 2p+1, (W, SUB, LANE)
            for dr in range(K + 1):                    # padded rows 2p .. 2p+5
                row = xp1_ref[2 * p + dr]              # (WP, SUB, LANE), one load
                if dr <= K - 1:                        # taps for conv row 2p
                    kh = dr
                    for kw in range(K):
                        t = w1_ref[base + kh * K + kw] * row[kw:kw + W]
                        acc0 = t if acc0 is None else acc0 + t
                if dr >= 1:                            # taps for conv row 2p+1
                    kh = dr - 1
                    for kw in range(K):
                        t = w1_ref[base + kh * K + kw] * row[kw:kw + W]
                        acc1 = t if acc1 is None else acc1 + t
            m = jnp.maximum(acc0, acc1)                # vertical half of 2x2 pool
            pooled = jnp.stack(
                [jnp.maximum(m[2 * j], m[2 * j + 1]) for j in range(W2)], axis=0)
            # bias + ReLU after pooling is bit-exact (max is monotonic).
            act = jnp.maximum(pooled + b1_ref[oc], 0.0)          # (W2, SUB, LANE)
            xp2_refs[oc][pl.ds(PAD + p, 1), pl.ds(PAD, W2), :, :] = act[None]
            return carry

        lax.fori_loop(0, H2, c1_body, 0)

    # ---- cnn2 (OUT_1 -> OUT_2) fused with 2x2 maxpool, bias + ReLU and the
    #      fc1 partial accumulation (no pooled2 buffer at all). ----
    logits0 = jnp.stack(
        [jnp.zeros((SUB, LANE), f32) + fcb_ref[c] for c in range(NUM_CLASSES)],
        axis=0)                                                   # (10, SUB, LANE)

    def c2_body(p2, logits):
        for oc in range(OUT_2):
            acc0 = None
            acc1 = None
            for ic in range(OUT_1):
                base = (oc * OUT_1 + ic) * K * K
                for dr in range(K + 1):                # padded rows 2p2 .. 2p2+5
                    row = xp2_refs[ic][2 * p2 + dr]    # (WP2, SUB, LANE), one load
                    if dr <= K - 1:
                        kh = dr
                        for kw in range(K):
                            t = w2_ref[base + kh * K + kw] * row[kw:kw + W2]
                            acc0 = t if acc0 is None else acc0 + t
                    if dr >= 1:
                        kh = dr - 1
                        for kw in range(K):
                            t = w2_ref[base + kh * K + kw] * row[kw:kw + W2]
                            acc1 = t if acc1 is None else acc1 + t
            m = jnp.maximum(acc0, acc1)                            # (W2, SUB, LANE)
            act = [jnp.maximum(jnp.maximum(m[2 * j], m[2 * j + 1]) + b2_ref[oc], 0.0)
                   for j in range(W2 // 2)]                        # 4 x (SUB, LANE)
            # fc1 partial sums: feature index f = oc*16 + p2*4 + j (PyTorch
            # flatten order); 40 scalar-broadcast FMAs per pooled row.
            contrib = []
            for cls in range(NUM_CLASSES):
                s = None
                for j in range(W2 // 2):
                    fidx = cls * (OUT_2 * FEAT) + oc * FEAT + p2 * (W2 // 2) + j
                    t = fcw_ref[fidx] * act[j]
                    s = t if s is None else s + t
                contrib.append(s)
            logits = logits + jnp.stack(contrib, axis=0)
        return logits

    logits = lax.fori_loop(0, H2 // 2, c2_body, logits0)
    out_ref[0] = logits.astype(out_ref.dtype)                      # (10, SUB, LANE)


def convnet_forward(x_nchw, params):
    """Pallas forward. x_nchw: (B, 1, 16, 16) float32 -> (B, 10) float32."""
    w1, b1, w2, b2, fcw, fcb = params
    B = x_nchw.shape[0]
    x = x_nchw[:, 0, :, :].astype(jnp.float32)                     # (B, H, W)

    # Pad batch to whole (SUB, LANE) blocks; batch onto minor (sublane, lane).
    b_pad = pl.cdiv(B, TB) * TB
    nb = b_pad // TB
    if b_pad != B:
        x = jnp.concatenate(
            [x, jnp.zeros((b_pad - B, H, W), jnp.float32)], axis=0)
    # TODO(synk): if the upstream producer can emit the (nb, H, W, 8, 128)
    # layout directly, this standalone relayout (one extra HBM round trip of
    # the input) disappears.
    x = x.reshape(nb, SUB, LANE, H, W).transpose(0, 3, 4, 1, 2)

    w1_flat = w1.reshape(-1).astype(jnp.float32)                   # (OUT_1*1*25,)
    w2_flat = w2.reshape(-1).astype(jnp.float32)                   # (OUT_2*OUT_1*25,)
    fcw_flat = fcw.reshape(-1).astype(jnp.float32)                 # row-major (cls, feat)

    smem = pl.BlockSpec(memory_space=pltpu.MemorySpace.SMEM)
    out = pl.pallas_call(
        convnet_kernel,
        out_shape=jax.ShapeDtypeStruct((nb, NUM_CLASSES, SUB, LANE), jnp.float32),
        grid=(nb,),
        in_specs=[
            pl.BlockSpec((1, H, W, SUB, LANE), lambda b: (b, 0, 0, 0, 0)),
            smem, smem, smem, smem, smem, smem,
        ],
        out_specs=pl.BlockSpec((1, NUM_CLASSES, SUB, LANE),
                               lambda b: (b, 0, 0, 0)),
        scratch_shapes=(
            [pltpu.VMEM((HP, WP, SUB, LANE), jnp.float32)]          # padded input
            + [pltpu.VMEM((HP2, WP2, SUB, LANE), jnp.float32)       # padded pooled1
               for _ in range(OUT_1)]),
        compiler_params=pltpu.CompilerParams(
            dimension_semantics=("parallel",),
            vmem_limit_bytes=32 * 1024 * 1024),
    )(x, w1_flat, b1.astype(jnp.float32), w2_flat, b2.astype(jnp.float32),
      fcw_flat, fcb.astype(jnp.float32))

    # (NB, 10, SUB, LANE) -> (B, 10)
    out = out.transpose(0, 2, 3, 1).reshape(b_pad, NUM_CLASSES)
    return out[:B]


def convnet_reference(x_nchw, params):
    """Pure-JAX reference matching the PyTorch forward exactly."""
    w1, b1, w2, b2, fcw, fcb = params

    def conv(x, w, b):
        y = lax.conv_general_dilated(
            x, w, window_strides=(1, 1), padding=((PAD, PAD), (PAD, PAD)),
            dimension_numbers=("NCHW", "OIHW", "NCHW"))
        return y + b.reshape(1, -1, 1, 1)

    def maxpool(x):
        return lax.reduce_window(x, -jnp.inf, lax.max,
                                 (1, 1, 2, 2), (1, 1, 2, 2), "VALID")

    out = maxpool(jnp.maximum(conv(x_nchw, w1, b1), 0.0))
    out = maxpool(jnp.maximum(conv(out, w2, b2), 0.0))
    out = out.reshape(out.shape[0], -1)
    return out @ fcw.T + fcb


if __name__ == "__main__":
    key = jax.random.PRNGKey(0)
    kx, k1, k2, k3, k4, k5, k6 = jax.random.split(key, 7)
    B = 2
    x = jax.random.normal(kx, (B, 1, H, W), jnp.float32)
    params = (
        0.1 * jax.random.normal(k1, (OUT_1, 1, K, K), jnp.float32),      # cnn1.weight
        0.1 * jax.random.normal(k2, (OUT_1,), jnp.float32),              # cnn1.bias
        0.1 * jax.random.normal(k3, (OUT_2, OUT_1, K, K), jnp.float32),  # cnn2.weight
        0.1 * jax.random.normal(k4, (OUT_2,), jnp.float32),              # cnn2.bias
        0.1 * jax.random.normal(k5, (NUM_CLASSES, OUT_2 * 4 * 4), jnp.float32),  # fc1.weight
        0.1 * jax.random.normal(k6, (NUM_CLASSES,), jnp.float32),        # fc1.bias
    )

    y = jax.block_until_ready(convnet_forward(x, params))
    y_ref = convnet_reference(x, params)
    assert y.shape == (B, NUM_CLASSES), y.shape
    assert jnp.allclose(y, y_ref, atol=1e-4, rtol=1e-4), (y, y_ref)
    print("KERNEL_OK")
</pallas_src>

<mosaic_0001>
module attributes {stable_mosaic.version = 11 : i64} {
  func.func @convnet_kernel(%arg0: i32, %arg1: memref<1x16x16x8x128xf32, #tpu.memory_space<vmem>>, %arg2: memref<50xf32, #tpu.memory_space<smem>>, %arg3: memref<2xf32, #tpu.memory_space<smem>>, %arg4: memref<50xf32, #tpu.memory_space<smem>>, %arg5: memref<1xf32, #tpu.memory_space<smem>>, %arg6: memref<160xf32, #tpu.memory_space<smem>>, %arg7: memref<10xf32, #tpu.memory_space<smem>>, %arg8: memref<1x10x8x128xf32, #tpu.memory_space<vmem>>, %arg9: memref<20x20x8x128xf32, #tpu.memory_space<vmem>>, %arg10: memref<12x12x8x128xf32, #tpu.memory_space<vmem>>, %arg11: memref<12x12x8x128xf32, #tpu.memory_space<vmem>>) attributes {dimension_semantics = [#tpu.dimension_semantics<parallel>], iteration_bounds = array<i64: 1>, scalar_prefetch = 0 : i64, scratch_operands = 3 : i64, tpu.core_type = #tpu.core_type<tc>, window_params = [{transform_indices = @transform_0, window_bounds = array<i64: 1, 16, 16, 8, 128>}, {transform_indices = @transform_1, window_bounds = array<i64: 50>}, {transform_indices = @transform_2, window_bounds = array<i64: 2>}, {transform_indices = @transform_3, window_bounds = array<i64: 50>}, {transform_indices = @transform_4, window_bounds = array<i64: 1>}, {transform_indices = @transform_5, window_bounds = array<i64: 160>}, {transform_indices = @transform_6, window_bounds = array<i64: 10>}, {transform_indices = @transform_7, window_bounds = array<i64: 1, 10, 8, 128>}]} {
    %cst = arith.constant 0.000000e+00 : f32
    %0 = vector.broadcast %cst : f32 to vector<2x20x8x128xf32>
    %cst_0 = arith.constant 0.000000e+00 : f32
    %1 = vector.broadcast %cst_0 : f32 to vector<16x2x8x128xf32>
    %c0 = arith.constant 0 : index
    %c0_1 = arith.constant 0 : index
    %c0_2 = arith.constant 0 : index
    %c0_3 = arith.constant 0 : index
    %2 = vector.load %arg9[%c0, %c0_1, %c0_2, %c0_3] : memref<20x20x8x128xf32, #tpu.memory_space<vmem>>, vector<2x20x8x128xf32>
    tpu.vector_store %arg9[%c0, %c0_1, %c0_2, %c0_3], %0 {strides = array<i32>} : memref<20x20x8x128xf32, #tpu.memory_space<vmem>>, vector<2x20x8x128xf32>,
    %c18 = arith.constant 18 : index
    %c0_4 = arith.constant 0 : index
    %c0_5 = arith.constant 0 : index
    %c0_6 = arith.constant 0 : index
    %3 = vector.load %arg9[%c18, %c0_4, %c0_5, %c0_6] : memref<20x20x8x128xf32, #tpu.memory_space<vmem>>, vector<2x20x8x128xf32>
    tpu.vector_store %arg9[%c18, %c0_4, %c0_5, %c0_6], %0 {strides = array<i32>} : memref<20x20x8x128xf32, #tpu.memory_space<vmem>>, vector<2x20x8x128xf32>,
    %c2 = arith.constant 2 : index
    %c0_7 = arith.constant 0 : index
    %c0_8 = arith.constant 0 : index
    %c0_9 = arith.constant 0 : index
    %4 = vector.load %arg9[%c2, %c0_7, %c0_8, %c0_9] : memref<20x20x8x128xf32, #tpu.memory_space<vmem>>, vector<16x2x8x128xf32>
    tpu.vector_store %arg9[%c2, %c0_7, %c0_8, %c0_9], %1 {strides = array<i32>} : memref<20x20x8x128xf32, #tpu.memory_space<vmem>>, vector<16x2x8x128xf32>,
    %c2_10 = arith.constant 2 : index
    %c18_11 = arith.constant 18 : index
    %c0_12 = arith.constant 0 : index
    %c0_13 = arith.constant 0 : index
    %5 = vector.load %arg9[%c2_10, %c18_11, %c0_12, %c0_13] : memref<20x20x8x128xf32, #tpu.memory_space<vmem>>, vector<16x2x8x128xf32>
    tpu.vector_store %arg9[%c2_10, %c18_11, %c0_12, %c0_13], %1 {strides = array<i32>} : memref<20x20x8x128xf32, #tpu.memory_space<vmem>>, vector<16x2x8x128xf32>,
    %c0_14 = arith.constant 0 : index
    %c0_15 = arith.constant 0 : index
    %c0_16 = arith.constant 0 : index
    %c0_17 = arith.constant 0 : index
    %c0_18 = arith.constant 0 : index
    %6 = vector.load %arg1[%c0_14, %c0_15, %c0_16, %c0_17, %c0_18] : memref<1x16x16x8x128xf32, #tpu.memory_space<vmem>>, vector<1x16x16x8x128xf32>
    %7 = vector.shape_cast %6 : vector<1x16x16x8x128xf32> to vector<16x16x8x128xf32>
    %c2_19 = arith.constant 2 : index
    %c2_20 = arith.constant 2 : index
    %c0_21 = arith.constant 0 : index
    %c0_22 = arith.constant 0 : index
    %8 = vector.load %arg9[%c2_19, %c2_20, %c0_21, %c0_22] : memref<20x20x8x128xf32, #tpu.memory_space<vmem>>, vector<16x16x8x128xf32>
    tpu.vector_store %arg9[%c2_19, %c2_20, %c0_21, %c0_22], %7 {strides = array<i32>} : memref<20x20x8x128xf32, #tpu.memory_space<vmem>>, vector<16x16x8x128xf32>,
    %cst_23 = arith.constant 0.000000e+00 : f32
    %9 = vector.broadcast %cst_23 : f32 to vector<2x12x8x128xf32>
    %cst_24 = arith.constant 0.000000e+00 : f32
    %10 = vector.broadcast %cst_24 : f32 to vector<8x2x8x128xf32>
    %c0_25 = arith.constant 0 : index
    %c0_26 = arith.constant 0 : index
    %c0_27 = arith.constant 0 : index
    %c0_28 = arith.constant 0 : index
    %11 = vector.load %arg10[%c0_25, %c0_26, %c0_27, %c0_28] : memref<12x12x8x128xf32, #tpu.memory_space<vmem>>, vector<2x12x8x128xf32>
    tpu.vector_store %arg10[%c0_25, %c0_26, %c0_27, %c0_28], %9 {strides = array<i32>} : memref<12x12x8x128xf32, #tpu.memory_space<vmem>>, vector<2x12x8x128xf32>,
    %c10 = arith.constant 10 : index
    %c0_29 = arith.constant 0 : index
    %c0_30 = arith.constant 0 : index
    %c0_31 = arith.constant 0 : index
    %12 = vector.load %arg10[%c10, %c0_29, %c0_30, %c0_31] : memref<12x12x8x128xf32, #tpu.memory_space<vmem>>, vector<2x12x8x128xf32>
    tpu.vector_store %arg10[%c10, %c0_29, %c0_30, %c0_31], %9 {strides = array<i32>} : memref<12x12x8x128xf32, #tpu.memory_space<vmem>>, vector<2x12x8x128xf32>,
    %c2_32 = arith.constant 2 : index
    %c0_33 = arith.constant 0 : index
    %c0_34 = arith.constant 0 : index
    %c0_35 = arith.constant 0 : index
    %13 = vector.load %arg10[%c2_32, %c0_33, %c0_34, %c0_35] : memref<12x12x8x128xf32, #tpu.memory_space<vmem>>, vector<8x2x8x128xf32>
    tpu.vector_store %arg10[%c2_32, %c0_33, %c0_34, %c0_35], %10 {strides = array<i32>} : memref<12x12x8x128xf32, #tpu.memory_space<vmem>>, vector<8x2x8x128xf32>,
    %c2_36 = arith.constant 2 : index
    %c10_37 = arith.constant 10 : index
    %c0_38 = arith.constant 0 : index
    %c0_39 = arith.constant 0 : index
    %14 = vector.load %arg10[%c2_36, %c10_37, %c0_38, %c0_39] : memref<12x12x8x128xf32, #tpu.memory_space<vmem>>, vector<8x2x8x128xf32>
    tpu.vector_store %arg10[%c2_36, %c10_37, %c0_38, %c0_39], %10 {strides = array<i32>} : memref<12x12x8x128xf32, #tpu.memory_space<vmem>>, vector<8x2x8x128xf32>,
    %c0_40 = arith.constant 0 : index
    %c0_41 = arith.constant 0 : index
    %c0_42 = arith.constant 0 : index
    %c0_43 = arith.constant 0 : index
    %15 = vector.load %arg11[%c0_40, %c0_41, %c0_42, %c0_43] : memref<12x12x8x128xf32, #tpu.memory_space<vmem>>, vector<2x12x8x128xf32>
    tpu.vector_store %arg11[%c0_40, %c0_41, %c0_42, %c0_43], %9 {strides = array<i32>} : memref<12x12x8x128xf32, #tpu.memory_space<vmem>>, vector<2x12x8x128xf32>,
    %c10_44 = arith.constant 10 : index
    %c0_45 = arith.constant 0 : index
    %c0_46 = arith.constant 0 : index
    %c0_47 = arith.constant 0 : index
    %16 = vector.load %arg11[%c10_44, %c0_45, %c0_46, %c0_47] : memref<12x12x8x128xf32, #tpu.memory_space<vmem>>, vector<2x12x8x128xf32>
    tpu.vector_store %arg11[%c10_44, %c0_45, %c0_46, %c0_47], %9 {strides = array<i32>} : memref<12x12x8x128xf32, #tpu.memory_space<vmem>>, vector<2x12x8x128xf32>,
    %c2_48 = arith.constant 2 : index
    %c0_49 = arith.constant 0 : index
    %c0_50 = arith.constant 0 : index
    %c0_51 = arith.constant 0 : index
    %17 = vector.load %arg11[%c2_48, %c0_49, %c0_50, %c0_51] : memref<12x12x8x128xf32, #tpu.memory_space<vmem>>, vector<8x2x8x128xf32>
    tpu.vector_store %arg11[%c2_48, %c0_49, %c0_50, %c0_51], %10 {strides = array<i32>} : memref<12x12x8x128xf32, #tpu.memory_space<vmem>>, vector<8x2x8x128xf32>,
    %c2_52 = arith.constant 2 : index
    %c10_53 = arith.constant 10 : index
    %c0_54 = arith.constant 0 : index
    %c0_55 = arith.constant 0 : index
    %18 = vector.load %arg11[%c2_52, %c10_53, %c0_54, %c0_55] : memref<12x12x8x128xf32, #tpu.memory_space<vmem>>, vector<8x2x8x128xf32>
    tpu.vector_store %arg11[%c2_52, %c10_53, %c0_54, %c0_55], %10 {strides = array<i32>} : memref<12x12x8x128xf32, #tpu.memory_space<vmem>>, vector<8x2x8x128xf32>,
    %c0_i32 = arith.constant 0 : i32
    %c8_i32 = arith.constant 8 : i32
    %19 = arith.addi %c0_i32, %c8_i32 : i32
    %c1_i32 = arith.constant 1 : i32
    scf.for %arg12 = %c0_i32 to %19 step %c1_i32  : i32 {
      %c2_i32 = arith.constant 2 : i32
      %77 = arith.muli %c2_i32, %arg12 : i32
      %c0_i32_80 = arith.constant 0 : i32
      %78 = arith.addi %77, %c0_i32_80 : i32
      %79 = arith.index_cast %78 : i32 to index
      %c0_81 = arith.constant 0 : index
      %c0_82 = arith.constant 0 : index
      %c0_83 = arith.constant 0 : index
      %80 = vector.load %arg9[%79, %c0_81, %c0_82, %c0_83] : memref<20x20x8x128xf32, #tpu.memory_space<vmem>>, vector<1x20x8x128xf32>
      %81 = vector.shape_cast %80 : vector<1x20x8x128xf32> to vector<20x8x128xf32>
      %c0_84 = arith.constant 0 : index
      %82 = memref.load %arg2[%c0_84] : memref<50xf32, #tpu.memory_space<smem>>
      %83 = vector.extract_strided_slice %81 {offsets = [0, 0, 0], sizes = [16, 8, 128], strides = [1, 1, 1]} : vector<20x8x128xf32> to vector<16x8x128xf32>
      %84 = vector.broadcast %82 : f32 to vector<16x8x128xf32>
      %85 = arith.mulf %84, %83 : vector<16x8x128xf32>
      %c1_85 = arith.constant 1 : index
      %86 = memref.load %arg2[%c1_85] : memref<50xf32, #tpu.memory_space<smem>>
      %87 = vector.extract_strided_slice %81 {offsets = [1, 0, 0], sizes = [16, 8, 128], strides = [1, 1, 1]} : vector<20x8x128xf32> to vector<16x8x128xf32>
      %88 = vector.broadcast %86 : f32 to vector<16x8x128xf32>
      %89 = arith.mulf %88, %87 : vector<16x8x128xf32>
      %90 = arith.addf %85, %89 : vector<16x8x128xf32>
      %c2_86 = arith.constant 2 : index
      %91 = memref.load %arg2[%c2_86] : memref<50xf32, #tpu.memory_space<smem>>
      %92 = vector.extract_strided_slice %81 {offsets = [2, 0, 0], sizes = [16, 8, 128], strides = [1, 1, 1]} : vector<20x8x128xf32> to vector<16x8x128xf32>
      %93 = vector.broadcast %91 : f32 to vector<16x8x128xf32>
      %94 = arith.mulf %93, %92 : vector<16x8x128xf32>
      %95 = arith.addf %90, %94 : vector<16x8x128xf32>
      %c3_87 = arith.constant 3 : index
      %96 = memref.load %arg2[%c3_87] : memref<50xf32, #tpu.memory_space<smem>>
      %97 = vector.extract_strided_slice %81 {offsets = [3, 0, 0], sizes = [16, 8, 128], strides = [1, 1, 1]} : vector<20x8x128xf32> to vector<16x8x128xf32>
      %98 = vector.broadcast %96 : f32 to vector<16x8x128xf32>
      %99 = arith.mulf %98, %97 : vector<16x8x128xf32>
      %100 = arith.addf %95, %99 : vector<16x8x128xf32>
      %c4_88 = arith.constant 4 : index
      %101 = memref.load %arg2[%c4_88] : memref<50xf32, #tpu.memory_space<smem>>
      %102 = vector.extract_strided_slice %81 {offsets = [4, 0, 0], sizes = [16, 8, 128], strides = [1, 1, 1]} : vector<20x8x128xf32> to vector<16x8x128xf32>
      %103 = vector.broadcast %101 : f32 to vector<16x8x128xf32>
      %104 = arith.mulf %103, %102 : vector<16x8x128xf32>
      %105 = arith.addf %100, %104 : vector<16x8x128xf32>
      %c2_i32_89 = arith.constant 2 : i32
      %106 = arith.muli %c2_i32_89, %arg12 : i32
      %c1_i32_90 = arith.constant 1 : i32
      %107 = arith.addi %106, %c1_i32_90 : i32
      %108 = arith.index_cast %107 : i32 to index
      %c0_91 = arith.constant 0 : index
      %c0_92 = arith.constant 0 : index
      %c0_93 = arith.constant 0 : index
      %109 = vector.load %arg9[%108, %c0_91, %c0_92, %c0_93] : memref<20x20x8x128xf32, #tpu.memory_space<vmem>>, vector<1x20x8x128xf32>
      %110 = vector.shape_cast %109 : vector<1x20x8x128xf32> to vector<20x8x128xf32>
      %c5_94 = arith.constant 5 : index
      %111 = memref.load %arg2[%c5_94] : memref<50xf32, #tpu.memory_space<smem>>
      %112 = vector.extract_strided_slice %110 {offsets = [0, 0, 0], sizes = [16, 8, 128], strides = [1, 1, 1]} : vector<20x8x128xf32> to vector<16x8x128xf32>
      %113 = vector.broadcast %111 : f32 to vector<16x8x128xf32>
      %114 = arith.mulf %113, %112 : vector<16x8x128xf32>
      %115 = arith.addf %105, %114 : vector<16x8x128xf32>
      %c6_95 = arith.constant 6 : index
      %116 = memref.load %arg2[%c6_95] : memref<50xf32, #tpu.memory_space<smem>>
      %117 = vector.extract_strided_slice %110 {offsets = [1, 0, 0], sizes = [16, 8, 128], strides = [1, 1, 1]} : vector<20x8x128xf32> to vector<16x8x128xf32>
      %118 = vector.broadcast %116 : f32 to vector<16x8x128xf32>
      %119 = arith.mulf %118, %117 : vector<16x8x128xf32>
      %120 = arith.addf %115, %119 : vector<16x8x128xf32>
      %c7_96 = arith.constant 7 : index
      %121 = memref.load %arg2[%c7_96] : memref<50xf32, #tpu.memory_space<smem>>
      %122 = vector.extract_strided_slice %110 {offsets = [2, 0, 0], sizes = [16, 8, 128], strides = [1, 1, 1]} : vector<20x8x128xf32> to vector<16x8x128xf32>
      %123 = vector.broadcast %121 : f32 to vector<16x8x128xf32>
      %124 = arith.mulf %123, %122 : vector<16x8x128xf32>
      %125 = arith.addf %120, %124 : vector<16x8x128xf32>
      %c8_97 = arith.constant 8 : index
      %126 = memref.load %arg2[%c8_97] : memref<50xf32, #tpu.memory_space<smem>>
      %127 = vector.extract_strided_slice %110 {offsets = [3, 0, 0], sizes = [16, 8, 128], strides = [1, 1, 1]} : vector<20x8x128xf32> to vector<16x8x128xf32>
      %128 = vector.broadcast %126 : f32 to vector<16x8x128xf32>
      %129 = arith.mulf %128, %127 : vector<16x8x128xf32>
      %130 = arith.addf %125, %129 : vector<16x8x128xf32>
      %c9_98 = arith.constant 9 : index
      %131 = memref.load %arg2[%c9_98] : memref<50xf32, #tpu.memory_space<smem>>
      %132 = vector.extract_strided_slice %110 {offsets = [4, 0, 0], sizes = [16, 8, 128], strides = [1, 1, 1]} : vector<20x8x128xf32> to vector<16x8x128xf32>
      %133 = vector.broadcast %131 : f32 to vector<16x8x128xf32>
      %134 = arith.mulf %133, %132 : vector<16x8x128xf32>
      %135 = arith.addf %130, %134 : vector<16x8x128xf32>
      %c0_99 = arith.constant 0 : index
      %136 = memref.load %arg2[%c0_99] : memref<50xf32, #tpu.memory_space<smem>>
      %137 = vector.extract_strided_slice %110 {offsets = [0, 0, 0], sizes = [16, 8, 128], strides = [1, 1, 1]} : vector<20x8x128xf32> to vector<16x8x128xf32>
      %138 = vector.broadcast %136 : f32 to vector<16x8x128xf32>
      %139 = arith.mulf %138, %137 : vector<16x8x128xf32>
      %c1_100 = arith.constant 1 : index
      %140 = memref.load %arg2[%c1_100] : memref<50xf32, #tpu.memory_space<smem>>
      %141 = vector.extract_strided_slice %110 {offsets = [1, 0, 0], sizes = [16, 8, 128], strides = [1, 1, 1]} : vector<20x8x128xf32> to vector<16x8x128xf32>
      %142 = vector.broadcast %140 : f32 to vector<16x8x128xf32>
      %143 = arith.mulf %142, %141 : vector<16x8x128xf32>
      %144 = arith.addf %139, %143 : vector<16x8x128xf32>
      %c2_101 = arith.constant 2 : index
      %145 = memref.load %arg2[%c2_101] : memref<50xf32, #tpu.memory_space<smem>>
      %146 = vector.extract_strided_slice %110 {offsets = [2, 0, 0], sizes = [16, 8, 128], strides = [1, 1, 1]} : vector<20x8x128xf32> to vector<16x8x128xf32>
      %147 = vector.broadcast %145 : f32 to vector<16x8x128xf32>
      %148 = arith.mulf %147, %146 : vector<16x8x128xf32>
      %149 = arith.addf %144, %148 : vector<16x8x128xf32>
      %c3_102 = arith.constant 3 : index
      %150 = memref.load %arg2[%c3_102] : memref<50xf32, #tpu.memory_space<smem>>
      %151 = vector.extract_strided_slice %110 {offsets = [3, 0, 0], sizes = [16, 8, 128], strides = [1, 1, 1]} : vector<20x8x128xf32> to vector<16x8x128xf32>
      %152 = vector.broadcast %150 : f32 to vector<16x8x128xf32>
      %153 = arith.mulf %152, %151 : vector<16x8x128xf32>
      %154 = arith.addf %149, %153 : vector<16x8x128xf32>
      %c4_103 = arith.constant 4 : index
      %155 = memref.load %arg2[%c4_103] : memref<50xf32, #tpu.memory_space<smem>>
      %156 = vector.extract_strided_slice %110 {offsets = [4, 0, 0], sizes = [16, 8, 128], strides = [1, 1, 1]} : vector<20x8x128xf32> to vector<16x8x128xf32>
      %157 = vector.broadcast %155 : f32 to vector<16x8x128xf32>
      %158 = arith.mulf %157, %156 : vector<16x8x128xf32>
      %159 = arith.addf %154, %158 : vector<16x8x128xf32>
      %c2_i32_104 = arith.constant 2 : i32
      %160 = arith.muli %c2_i32_104, %arg12 : i32
      %c2_i32_105 = arith.constant 2 : i32
      %161 = arith.addi %160, %c2_i32_105 : i32
      %162 = arith.index_cast %161 : i32 to index
      %c0_106 = arith.constant 0 : index
      %c0_107 = arith.constant 0 : index
      %c0_108 = arith.constant 0 : index
      %163 = vector.load %arg9[%162, %c0_106, %c0_107, %c0_108] : memref<20x20x8x128xf32, #tpu.memory_space<vmem>>, vector<1x20x8x128xf32>
      %164 = vector.shape_cast %163 : vector<1x20x8x128xf32> to vector<20x8x128xf32>
      %c10_109 = arith.constant 10 : index
      %165 = memref.load %arg2[%c10_109] : memref<50xf32, #tpu.memory_space<smem>>
      %166 = vector.extract_strided_slice %164 {offsets = [0, 0, 0], sizes = [16, 8, 128], strides = [1, 1, 1]} : vector<20x8x128xf32> to vector<16x8x128xf32>
      %167 = vector.broadcast %165 : f32 to vector<16x8x128xf32>
      %168 = arith.mulf %167, %166 : vector<16x8x128xf32>
      %169 = arith.addf %135, %168 : vector<16x8x128xf32>
      %c11 = arith.constant 11 : index
      %170 = memref.load %arg2[%c11] : memref<50xf32, #tpu.memory_space<smem>>
      %171 = vector.extract_strided_slice %164 {offsets = [1, 0, 0], sizes = [16, 8, 128], strides = [1, 1, 1]} : vector<20x8x128xf32> to vector<16x8x128xf32>
      %172 = vector.broadcast %170 : f32 to vector<16x8x128xf32>
      %173 = arith.mulf %172, %171 : vector<16x8x128xf32>
      %174 = arith.addf %169, %173 : vector<16x8x128xf32>
      %c12 = arith.constant 12 : index
      %175 = memref.load %arg2[%c12] : memref<50xf32, #tpu.memory_space<smem>>
      %176 = vector.extract_strided_slice %164 {offsets = [2, 0, 0], sizes = [16, 8, 128], strides = [1, 1, 1]} : vector<20x8x128xf32> to vector<16x8x128xf32>
      %177 = vector.broadcast %175 : f32 to vector<16x8x128xf32>
      %178 = arith.mulf %177, %176 : vector<16x8x128xf32>
      %179 = arith.addf %174, %178 : vector<16x8x128xf32>
      %c13 = arith.constant 13 : index
      %180 = memref.load %arg2[%c13] : memref<50xf32, #tpu.memory_space<smem>>
      %181 = vector.extract_strided_slice %164 {offsets = [3, 0, 0], sizes = [16, 8, 128], strides = [1, 1, 1]} : vector<20x8x128xf32> to vector<16x8x128xf32>
      %182 = vector.broadcast %180 : f32 to vector<16x8x128xf32>
      %183 = arith.mulf %182, %181 : vector<16x8x128xf32>
      %184 = arith.addf %179, %183 : vector<16x8x128xf32>
      %c14 = arith.constant 14 : index
      %185 = memref.load %arg2[%c14] : memref<50xf32, #tpu.memory_space<smem>>
      %186 = vector.extract_strided_slice %164 {offsets = [4, 0, 0], sizes = [16, 8, 128], strides = [1, 1, 1]} : vector<20x8x128xf32> to vector<16x8x128xf32>
      %187 = vector.broadcast %185 : f32 to vector<16x8x128xf32>
      %188 = arith.mulf %187, %186 : vector<16x8x128xf32>
      %189 = arith.addf %184, %188 : vector<16x8x128xf32>
      %c5_110 = arith.constant 5 : index
      %190 = memref.load %arg2[%c5_110] : memref<50xf32, #tpu.memory_space<smem>>
      %191 = vector.extract_strided_slice %164 {offsets = [0, 0, 0], sizes = [16, 8, 128], strides = [1, 1, 1]} : vector<20x8x128xf32> to vector<16x8x128xf32>
      %192 = vector.broadcast %190 : f32 to vector<16x8x128xf32>
      %193 = arith.mulf %192, %191 : vector<16x8x128xf32>
      %194 = arith.addf %159, %193 : vector<16x8x128xf32>
      %c6_111 = arith.constant 6 : index
      %195 = memref.load %arg2[%c6_111] : memref<50xf32, #tpu.memory_space<smem>>
      %196 = vector.extract_strided_slice %164 {offsets = [1, 0, 0], sizes = [16, 8, 128], strides = [1, 1, 1]} : vector<20x8x128xf32> to vector<16x8x128xf32>
      %197 = vector.broadcast %195 : f32 to vector<16x8x128xf32>
      %198 = arith.mulf %197, %196 : vector<16x8x128xf32>
      %199 = arith.addf %194, %198 : vector<16x8x128xf32>
      %c7_112 = arith.constant 7 : index
      %200 = memref.load %arg2[%c7_112] : memref<50xf32, #tpu.memory_space<smem>>
      %201 = vector.extract_strided_slice %164 {offsets = [2, 0, 0], sizes = [16, 8, 128], strides = [1, 1, 1]} : vector<20x8x128xf32> to vector<16x8x128xf32>
      %202 = vector.broadcast %200 : f32 to vector<16x8x128xf32>
      %203 = arith.mulf %202, %201 : vector<16x8x128xf32>
      %204 = arith.addf %199, %203 : vector<16x8x128xf32>
      %c8_113 = arith.constant 8 : index
      %205 = memref.load %arg2[%c8_113] : memref<50xf32, #tpu.memory_space<smem>>
      %206 = vector.extract_strided_slice %164 {offsets = [3, 0, 0], sizes = [16, 8, 128], strides = [1, 1, 1]} : vector<20x8x128xf32> to vector<16x8x128xf32>
      %207 = vector.broadcast %205 : f32 to vector<16x8x128xf32>
      %208 = arith.mulf %207, %206 : vector<16x8x128xf32>
      %209 = arith.addf %204, %208 : vector<16x8x128xf32>
      %c9_114 = arith.constant 9 : index
      %210 = memref.load %arg2[%c9_114] : memref<50xf32, #tpu.memory_space<smem>>
      %211 = vector.extract_strided_slice %164 {offsets = [4, 0, 0], sizes = [16, 8, 128], strides = [1, 1, 1]} : vector<20x8x128xf32> to vector<16x8x128xf32>
      %212 = vector.broadcast %210 : f32 to vector<16x8x128xf32>
      %213 = arith.mulf %212, %211 : vector<16x8x128xf32>
      %214 = arith.addf %209, %213 : vector<16x8x128xf32>
      %c2_i32_115 = arith.constant 2 : i32
      %215 = arith.muli %c2_i32_115, %arg12 : i32
      %c3_i32 = arith.constant 3 : i32
      %216 = arith.addi %215, %c3_i32 : i32
      %217 = arith.index_cast %216 : i32 to index
      %c0_116 = arith.constant 0 : index
      %c0_117 = arith.constant 0 : index
      %c0_118 = arith.constant 0 : index
      %218 = vector.load %arg9[%217, %c0_116, %c0_117, %c0_118] : memref<20x20x8x128xf32, #tpu.memory_space<vmem>>, vector<1x20x8x128xf32>
      %219 = vector.shape_cast %218 : vector<1x20x8x128xf32> to vector<20x8x128xf32>
      %c15 = arith.constant 15 : index
      %220 = memref.load %arg2[%c15] : memref<50xf32, #tpu.memory_space<smem>>
      %221 = vector.extract_strided_slice %219 {offsets = [0, 0, 0], sizes = [16, 8, 128], strides = [1, 1, 1]} : vector<20x8x128xf32> to vector<16x8x128xf32>
      %222 = vector.broadcast %220 : f32 to vector<16x8x128xf32>
      %223 = arith.mulf %222, %221 : vector<16x8x128xf32>
      %224 = arith.addf %189, %223 : vector<16x8x128xf32>
      %c16 = arith.constant 16 : index
      %225 = memref.load %arg2[%c16] : memref<50xf32, #tpu.memory_space<smem>>
      %226 = vector.extract_strided_slice %219 {offsets = [1, 0, 0], sizes = [16, 8, 128], strides = [1, 1, 1]} : vector<20x8x128xf32> to vector<16x8x128xf32>
      %227 = vector.broadcast %225 : f32 to vector<16x8x128xf32>
      %228 = arith.mulf %227, %226 : vector<16x8x128xf32>
      %229 = arith.addf %224, %228 : vector<16x8x128xf32>
      %c17 = arith.constant 17 : index
      %230 = memref.load %arg2[%c17] : memref<50xf32, #tpu.memory_space<smem>>
      %231 = vector.extract_strided_slice %219 {offsets = [2, 0, 0], sizes = [16, 8, 128], strides = [1, 1, 1]} : vector<20x8x128xf32> to vector<16x8x128xf32>
      %232 = vector.broadcast %230 : f32 to vector<16x8x128xf32>
      %233 = arith.mulf %232, %231 : vector<16x8x128xf32>
      %234 = arith.addf %229, %233 : vector<16x8x128xf32>
      %c18_119 = arith.constant 18 : index
      %235 = memref.load %arg2[%c18_119] : memref<50xf32, #tpu.memory_space<smem>>
      %236 = vector.extract_strided_slice %219 {offsets = [3, 0, 0], sizes = [16, 8, 128], strides = [1, 1, 1]} : vector<20x8x128xf32> to vector<16x8x128xf32>
      %237 = vector.broadcast %235 : f32 to vector<16x8x128xf32>
      %238 = arith.mulf %237, %236 : vector<16x8x128xf32>
      %239 = arith.addf %234, %238 : vector<16x8x128xf32>
      %c19 = arith.constant 19 : index
      %240 = memref.load %arg2[%c19] : memref<50xf32, #tpu.memory_space<smem>>
      %241 = vector.extract_strided_slice %219 {offsets = [4, 0, 0], sizes = [16, 8, 128], strides = [1, 1, 1]} : vector<20x8x128xf32> to vector<16x8x128xf32>
      %242 = vector.broadcast %240 : f32 to vector<16x8x128xf32>
      %243 = arith.mulf %242, %241 : vector<16x8x128xf32>
      %244 = arith.addf %239, %243 : vector<16x8x128xf32>
      %c10_120 = arith.constant 10 : index
      %245 = memref.load %arg2[%c10_120] : memref<50xf32, #tpu.memory_space<smem>>
      %246 = vector.extract_strided_slice %219 {offsets = [0, 0, 0], sizes = [16, 8, 128], strides = [1, 1, 1]} : vector<20x8x128xf32> to vector<16x8x128xf32>
      %247 = vector.broadcast %245 : f32 to vector<16x8x128xf32>
      %248 = arith.mulf %247, %246 : vector<16x8x128xf32>
      %249 = arith.addf %214, %248 : vector<16x8x128xf32>
      %c11_121 = arith.constant 11 : index
      %250 = memref.load %arg2[%c11_121] : memref<50xf32, #tpu.memory_space<smem>>
      %251 = vector.extract_strided_slice %219 {offsets = [1, 0, 0], sizes = [16, 8, 128], strides = [1, 1, 1]} : vector<20x8x128xf32> to vector<16x8x128xf32>
      %252 = vector.broadcast %250 : f32 to vector<16x8x128xf32>
      %253 = arith.mulf %252, %251 : vector<16x8x128xf32>
      %254 = arith.addf %249, %253 : vector<16x8x128xf32>
      %c12_122 = arith.constant 12 : index
      %255 = memref.load %arg2[%c12_122] : memref<50xf32, #tpu.memory_space<smem>>
      %256 = vector.extract_strided_slice %219 {offsets = [2, 0, 0], sizes = [16, 8, 128], strides = [1, 1, 1]} : vector<20x8x128xf32> to vector<16x8x128xf32>
      %257 = vector.broadcast %255 : f32 to vector<16x8x128xf32>
      %258 = arith.mulf %257, %256 : vector<16x8x128xf32>
      %259 = arith.addf %254, %258 : vector<16x8x128xf32>
      %c13_123 = arith.constant 13 : index
      %260 = memref.load %arg2[%c13_123] : memref<50xf32, #tpu.memory_space<smem>>
      %261 = vector.extract_strided_slice %219 {offsets = [3, 0, 0], sizes = [16, 8, 128], strides = [1, 1, 1]} : vector<20x8x128xf32> to vector<16x8x128xf32>
      %262 = vector.broadcast %260 : f32 to vector<16x8x128xf32>
      %263 = arith.mulf %262, %261 : vector<16x8x128xf32>
      %264 = arith.addf %259, %263 : vector<16x8x128xf32>
      %c14_124 = arith.constant 14 : index
      %265 = memref.load %arg2[%c14_124] : memref<50xf32, #tpu.memory_space<smem>>
      %266 = vector.extract_strided_slice %219 {offsets = [4, 0, 0], sizes = [16, 8, 128], strides = [1, 1, 1]} : vector<20x8x128xf32> to vector<16x8x128xf32>
      %267 = vector.broadcast %265 : f32 to vector<16x8x128xf32>
      %268 = arith.mulf %267, %266 : vector<16x8x128xf32>
      %269 = arith.addf %264, %268 : vector<16x8x128xf32>
      %c2_i32_125 = arith.constant 2 : i32
      %270 = arith.muli %c2_i32_125, %arg12 : i32
      %c4_i32_126 = arith.constant 4 : i32
      %271 = arith.addi %270, %c4_i32_126 : i32
      %272 = arith.index_cast %271 : i32 to index
      %c0_127 = arith.constant 0 : index
      %c0_128 = arith.constant 0 : index
      %c0_129 = arith.constant 0 : index
      %273 = vector.load %arg9[%272, %c0_127, %c0_128, %c0_129] : memref<20x20x8x128xf32, #tpu.memory_space<vmem>>, vector<1x20x8x128xf32>
      %274 = vector.shape_cast %273 : vector<1x20x8x128xf32> to vector<20x8x128xf32>
      %c20 = arith.constant 20 : index
      %275 = memref.load %arg2[%c20] : memref<50xf32, #tpu.memory_space<smem>>
      %276 = vector.extract_strided_slice %274 {offsets = [0, 0, 0], sizes = [16, 8, 128], strides = [1, 1, 1]} : vector<20x8x128xf32> to vector<16x8x128xf32>
      %277 = vector.broadcast %275 : f32 to vector<16x8x128xf32>
      %278 = arith.mulf %277, %276 : vector<16x8x128xf32>
      %279 = arith.addf %244, %278 : vector<16x8x128xf32>
      %c21 = arith.constant 21 : index
      %280 = memref.load %arg2[%c21] : memref<50xf32, #tpu.memory_space<smem>>
      %281 = vector.extract_strided_slice %274 {offsets = [1, 0, 0], sizes = [16, 8, 128], strides = [1, 1, 1]} : vector<20x8x128xf32> to vector<16x8x128xf32>
      %282 = vector.broadcast %280 : f32 to vector<16x8x128xf32>
      %283 = arith.mulf %282, %281 : vector<16x8x128xf32>
      %284 = arith.addf %279, %283 : vector<16x8x128xf32>
      %c22 = arith.constant 22 : index
      %285 = memref.load %arg2[%c22] : memref<50xf32, #tpu.memory_space<smem>>
      %286 = vector.extract_strided_slice %274 {offsets = [2, 0, 0], sizes = [16, 8, 128], strides = [1, 1, 1]} : vector<20x8x128xf32> to vector<16x8x128xf32>
      %287 = vector.broadcast %285 : f32 to vector<16x8x128xf32>
      %288 = arith.mulf %287, %286 : vector<16x8x128xf32>
      %289 = arith.addf %284, %288 : vector<16x8x128xf32>
      %c23 = arith.constant 23 : index
      %290 = memref.load %arg2[%c23] : memref<50xf32, #tpu.memory_space<smem>>
      %291 = vector.extract_strided_slice %274 {offsets = [3, 0, 0], sizes = [16, 8, 128], strides = [1, 1, 1]} : vector<20x8x128xf32> to vector<16x8x128xf32>
      %292 = vector.broadcast %290 : f32 to vector<16x8x128xf32>
      %293 = arith.mulf %292, %291 : vector<16x8x128xf32>
      %294 = arith.addf %289, %293 : vector<16x8x128xf32>
      %c24 = arith.constant 24 : index
      %295 = memref.load %arg2[%c24] : memref<50xf32, #tpu.memory_space<smem>>
      %296 = vector.extract_strided_slice %274 {offsets = [4, 0, 0], sizes = [16, 8, 128], strides = [1, 1, 1]} : vector<20x8x128xf32> to vector<16x8x128xf32>
      %297 = vector.broadcast %295 : f32 to vector<16x8x128xf32>
      %298 = arith.mulf %297, %296 : vector<16x8x128xf32>
      %299 = arith.addf %294, %298 : vector<16x8x128xf32>
      %c15_130 = arith.constant 15 : index
      %300 = memref.load %arg2[%c15_130] : memref<50xf32, #tpu.memory_space<smem>>
      %301 = vector.extract_strided_slice %274 {offsets = [0, 0, 0], sizes = [16, 8, 128], strides = [1, 1, 1]} : vector<20x8x128xf32> to vector<16x8x128xf32>
      %302 = vector.broadcast %300 : f32 to vector<16x8x128xf32>
      %303 = arith.mulf %302, %301 : vector<16x8x128xf32>
      %304 = arith.addf %269, %303 : vector<16x8x128xf32>
      %c16_131 = arith.constant 16 : index
      %305 = memref.load %arg2[%c16_131] : memref<50xf32, #tpu.memory_space<smem>>
      %306 = vector.extract_strided_slice %274 {offsets = [1, 0, 0], sizes = [16, 8, 128], strides = [1, 1, 1]} : vector<20x8x128xf32> to vector<16x8x128xf32>
      %307 = vector.broadcast %305 : f32 to vector<16x8x128xf32>
      %308 = arith.mulf %307, %306 : vector<16x8x128xf32>
      %309 = arith.addf %304, %308 : vector<16x8x128xf32>
      %c17_132 = arith.constant 17 : index
      %310 = memref.load %arg2[%c17_132] : memref<50xf32, #tpu.memory_space<smem>>
      %311 = vector.extract_strided_slice %274 {offsets = [2, 0, 0], sizes = [16, 8, 128], strides = [1, 1, 1]} : vector<20x8x128xf32> to vector<16x8x128xf32>
      %312 = vector.broadcast %310 : f32 to vector<16x8x128xf32>
      %313 = arith.mulf %312, %311 : vector<16x8x128xf32>
      %314 = arith.addf %309, %313 : vector<16x8x128xf32>
      %c18_133 = arith.constant 18 : index
      %315 = memref.load %arg2[%c18_133] : memref<50xf32, #tpu.memory_space<smem>>
      %316 = vector.extract_strided_slice %274 {offsets = [3, 0, 0], sizes = [16, 8, 128], strides = [1, 1, 1]} : vector<20x8x128xf32> to vector<16x8x128xf32>
      %317 = vector.broadcast %315 : f32 to vector<16x8x128xf32>
      %318 = arith.mulf %317, %316 : vector<16x8x128xf32>
      %319 = arith.addf %314, %318 : vector<16x8x128xf32>
      %c19_134 = arith.constant 19 : index
      %320 = memref.load %arg2[%c19_134] : memref<50xf32, #tpu.memory_space<smem>>
      %321 = vector.extract_strided_slice %274 {offsets = [4, 0, 0], sizes = [16, 8, 128], strides = [1, 1, 1]} : vector<20x8x128xf32> to vector<16x8x128xf32>
      %322 = vector.broadcast %320 : f32 to vector<16x8x128xf32>
      %323 = arith.mulf %322, %321 : vector<16x8x128xf32>
      %324 = arith.addf %319, %323 : vector<16x8x128xf32>
      %c2_i32_135 = arith.constant 2 : i32
      %325 = arith.muli %c2_i32_135, %arg12 : i32
      %c5_i32 = arith.constant 5 : i32
      %326 = arith.addi %325, %c5_i32 : i32
      %327 = arith.index_cast %326 : i32 to index
      %c0_136 = arith.constant 0 : index
      %c0_137 = arith.constant 0 : index
      %c0_138 = arith.constant 0 : index
      %328 = vector.load %arg9[%327, %c0_136, %c0_137, %c0_138] : memref<20x20x8x128xf32, #tpu.memory_space<vmem>>, vector<1x20x8x128xf32>
      %329 = vector.shape_cast %328 : vector<1x20x8x128xf32> to vector<20x8x128xf32>
      %c20_139 = arith.constant 20 : index
      %330 = memref.load %arg2[%c20_139] : memref<50xf32, #tpu.memory_space<smem>>
      %331 = vector.extract_strided_slice %329 {offsets = [0, 0, 0], sizes = [16, 8, 128], strides = [1, 1, 1]} : vector<20x8x128xf32> to vector<16x8x128xf32>
      %332 = vector.broadcast %330 : f32 to vector<16x8x128xf32>
      %333 = arith.mulf %332, %331 : vector<16x8x128xf32>
      %334 = arith.addf %324, %333 : vector<16x8x128xf32>
      %c21_140 = arith.constant 21 : index
      %335 = memref.load %arg2[%c21_140] : memref<50xf32, #tpu.memory_space<smem>>
      %336 = vector.extract_strided_slice %329 {offsets = [1, 0, 0], sizes = [16, 8, 128], strides = [1, 1, 1]} : vector<20x8x128xf32> to vector<16x8x128xf32>
      %337 = vector.broadcast %335 : f32 to vector<16x8x128xf32>
      %338 = arith.mulf %337, %336 : vector<16x8x128xf32>
      %339 = arith.addf %334, %338 : vector<16x8x128xf32>
      %c22_141 = arith.constant 22 : index
      %340 = memref.load %arg2[%c22_141] : memref<50xf32, #tpu.memory_space<smem>>
      %341 = vector.extract_strided_slice %329 {offsets = [2, 0, 0], sizes = [16, 8, 128], strides = [1, 1, 1]} : vector<20x8x128xf32> to vector<16x8x128xf32>
      %342 = vector.broadcast %340 : f32 to vector<16x8x128xf32>
      %343 = arith.mulf %342, %341 : vector<16x8x128xf32>
      %344 = arith.addf %339, %343 : vector<16x8x128xf32>
      %c23_142 = arith.constant 23 : index
      %345 = memref.load %arg2[%c23_142] : memref<50xf32, #tpu.memory_space<smem>>
      %346 = vector.extract_strided_slice %329 {offsets = [3, 0, 0], sizes = [16, 8, 128], strides = [1, 1, 1]} : vector<20x8x128xf32> to vector<16x8x128xf32>
      %347 = vector.broadcast %345 : f32 to vector<16x8x128xf32>
      %348 = arith.mulf %347, %346 : vector<16x8x128xf32>
      %349 = arith.addf %344, %348 : vector<16x8x128xf32>
      %c24_143 = arith.constant 24 : index
      %350 = memref.load %arg2[%c24_143] : memref<50xf32, #tpu.memory_space<smem>>
      %351 = vector.extract_strided_slice %329 {offsets = [4, 0, 0], sizes = [16, 8, 128], strides = [1, 1, 1]} : vector<20x8x128xf32> to vector<16x8x128xf32>
      %352 = vector.broadcast %350 : f32 to vector<16x8x128xf32>
      %353 = arith.mulf %352, %351 : vector<16x8x128xf32>
      %354 = arith.addf %349, %353 : vector<16x8x128xf32>
      %355 = arith.maximumf %299, %354 : vector<16x8x128xf32>
      %356 = vector.extract_strided_slice %355 {offsets = [0, 0, 0], sizes = [1, 8, 128], strides = [1, 1, 1]} : vector<16x8x128xf32> to vector<1x8x128xf32>
      %357 = vector.shape_cast %356 : vector<1x8x128xf32> to vector<8x128xf32>
      %358 = vector.extract_strided_slice %355 {offsets = [1, 0, 0], sizes = [1, 8, 128], strides = [1, 1, 1]} : vector<16x8x128xf32> to vector<1x8x128xf32>
      %359 = vector.shape_cast %358 : vector<1x8x128xf32> to vector<8x128xf32>
      %360 = arith.maximumf %357, %359 : vector<8x128xf32>
      %361 = vector.extract_strided_slice %355 {offsets = [2, 0, 0], sizes = [1, 8, 128], strides = [1, 1, 1]} : vector<16x8x128xf32> to vector<1x8x128xf32>
      %362 = vector.shape_cast %361 : vector<1x8x128xf32> to vector<8x128xf32>
      %363 = vector.extract_strided_slice %355 {offsets = [3, 0, 0], sizes = [1, 8, 128], strides = [1, 1, 1]} : vector<16x8x128xf32> to vector<1x8x128xf32>
      %364 = vector.shape_cast %363 : vector<1x8x128xf32> to vector<8x128xf32>
      %365 = arith.maximumf %362, %364 : vector<8x128xf32>
      %366 = vector.extract_strided_slice %355 {offsets = [4, 0, 0], sizes = [1, 8, 128], strides = [1, 1, 1]} : vector<16x8x128xf32> to vector<1x8x128xf32>
      %367 = vector.shape_cast %366 : vector<1x8x128xf32> to vector<8x128xf32>
      %368 = vector.extract_strided_slice %355 {offsets = [5, 0, 0], sizes = [1, 8, 128], strides = [1, 1, 1]} : vector<16x8x128xf32> to vector<1x8x128xf32>
      %369 = vector.shape_cast %368 : vector<1x8x128xf32> to vector<8x128xf32>
      %370 = arith.maximumf %367, %369 : vector<8x128xf32>
      %371 = vector.extract_strided_slice %355 {offsets = [6, 0, 0], sizes = [1, 8, 128], strides = [1, 1, 1]} : vector<16x8x128xf32> to vector<1x8x128xf32>
      %372 = vector.shape_cast %371 : vector<1x8x128xf32> to vector<8x128xf32>
      %373 = vector.extract_strided_slice %355 {offsets = [7, 0, 0], sizes = [1, 8, 128], strides = [1, 1, 1]} : vector<16x8x128xf32> to vector<1x8x128xf32>
      %374 = vector.shape_cast %373 : vector<1x8x128xf32> to vector<8x128xf32>
      %375 = arith.maximumf %372, %374 : vector<8x128xf32>
      %376 = vector.extract_strided_slice %355 {offsets = [8, 0, 0], sizes = [1, 8, 128], strides = [1, 1, 1]} : vector<16x8x128xf32> to vector<1x8x128xf32>
      %377 = vector.shape_cast %376 : vector<1x8x128xf32> to vector<8x128xf32>
      %378 = vector.extract_strided_slice %355 {offsets = [9, 0, 0], sizes = [1, 8, 128], strides = [1, 1, 1]} : vector<16x8x128xf32> to vector<1x8x128xf32>
      %379 = vector.shape_cast %378 : vector<1x8x128xf32> to vector<8x128xf32>
      %380 = arith.maximumf %377, %379 : vector<8x128xf32>
      %381 = vector.extract_strided_slice %355 {offsets = [10, 0, 0], sizes = [1, 8, 128], strides = [1, 1, 1]} : vector<16x8x128xf32> to vector<1x8x128xf32>
      %382 = vector.shape_cast %381 : vector<1x8x128xf32> to vector<8x128xf32>
      %383 = vector.extract_strided_slice %355 {offsets = [11, 0, 0], sizes = [1, 8, 128], strides = [1, 1, 1]} : vector<16x8x128xf32> to vector<1x8x128xf32>
      %384 = vector.shape_cast %383 : vector<1x8x128xf32> to vector<8x128xf32>
      %385 = arith.maximumf %382, %384 : vector<8x128xf32>
      %386 = vector.extract_strided_slice %355 {offsets = [12, 0, 0], sizes = [1, 8, 128], strides = [1, 1, 1]} : vector<16x8x128xf32> to vector<1x8x128xf32>
      %387 = vector.shape_cast %386 : vector<1x8x128xf32> to vector<8x128xf32>
      %388 = vector.extract_strided_slice %355 {offsets = [13, 0, 0], sizes = [1, 8, 128], strides = [1, 1, 1]} : vector<16x8x128xf32> to vector<1x8x128xf32>
      %389 = vector.shape_cast %388 : vector<1x8x128xf32> to vector<8x128xf32>
      %390 = arith.maximumf %387, %389 : vector<8x128xf32>
      %391 = vector.extract_strided_slice %355 {offsets = [14, 0, 0], sizes = [1, 8, 128], strides = [1, 1, 1]} : vector<16x8x128xf32> to vector<1x8x128xf32>
      %392 = vector.shape_cast %391 : vector<1x8x128xf32> to vector<8x128xf32>
      %393 = vector.extract_strided_slice %355 {offsets = [15, 0, 0], sizes = [1, 8, 128], strides = [1, 1, 1]} : vector<16x8x128xf32> to vector<1x8x128xf32>
      %394 = vector.shape_cast %393 : vector<1x8x128xf32> to vector<8x128xf32>
      %395 = arith.maximumf %392, %394 : vector<8x128xf32>
      %396 = vector.shape_cast %360 : vector<8x128xf32> to vector<1x8x128xf32>
      %397 = vector.shape_cast %365 : vector<8x128xf32> to vector<1x8x128xf32>
      %398 = vector.shape_cast %370 : vector<8x128xf32> to vector<1x8x128xf32>
      %399 = vector.shape_cast %375 : vector<8x128xf32> to vector<1x8x128xf32>
      %400 = vector.shape_cast %380 : vector<8x128xf32> to vector<1x8x128xf32>
      %401 = vector.shape_cast %385 : vector<8x128xf32> to vector<1x8x128xf32>
      %402 = vector.shape_cast %390 : vector<8x128xf32> to vector<1x8x128xf32>
      %403 = vector.shape_cast %395 : vector<8x128xf32> to vector<1x8x128xf32>
      %404 = tpu.concatenate %396, %397, %398, %399, %400, %401, %402, %403 in 0 : vector<1x8x128xf32>, vector<1x8x128xf32>, vector<1x8x128xf32>, vector<1x8x128xf32>, vector<1x8x128xf32>, vector<1x8x128xf32>, vector<1x8x128xf32>, vector<1x8x128xf32> -> vector<8x8x128xf32>
      %c0_144 = arith.constant 0 : index
      %405 = memref.load %arg3[%c0_144] : memref<2xf32, #tpu.memory_space<smem>>
      %406 = vector.broadcast %405 : f32 to vector<8x8x128xf32>
      %407 = arith.addf %404, %406 : vector<8x8x128xf32>
      %cst_145 = arith.constant 0.000000e+00 : f32
      %408 = vector.broadcast %cst_145 : f32 to vector<8x8x128xf32>
      %409 = arith.maximumf %407, %408 : vector<8x8x128xf32>
      %410 = vector.shape_cast %409 : vector<8x8x128xf32> to vector<1x8x8x128xf32>
      %c2_i32_146 = arith.constant 2 : i32
      %411 = arith.addi %c2_i32_146, %arg12 : i32
      %412 = arith.index_cast %411 : i32 to index
      %c2_147 = arith.constant 2 : index
      %c0_148 = arith.constant 0 : index
      %c0_149 = arith.constant 0 : index
      %413 = vector.load %arg10[%412, %c2_147, %c0_148, %c0_149] : memref<12x12x8x128xf32, #tpu.memory_space<vmem>>, vector<1x8x8x128xf32>
      tpu.vector_store %arg10[%412, %c2_147, %c0_148, %c0_149], %410 {strides = array<i32>} : memref<12x12x8x128xf32, #tpu.memory_space<vmem>>, vector<1x8x8x128xf32>,
    }
    %c8_i32_56 = arith.constant 8 : i32
    %c0_i32_57 = arith.constant 0 : i32
    %c8_i32_58 = arith.constant 8 : i32
    %20 = arith.addi %c0_i32_57, %c8_i32_58 : i32
    %c1_i32_59 = arith.constant 1 : i32
    scf.for %arg12 = %c0_i32_57 to %20 step %c1_i32_59  : i32 {
      %c2_i32 = arith.constant 2 : i32
      %77 = arith.muli %c2_i32, %arg12 : i32
      %c0_i32_80 = arith.constant 0 : i32
      %78 = arith.addi %77, %c0_i32_80 : i32
      %79 = arith.index_cast %78 : i32 to index
      %c0_81 = arith.constant 0 : index
      %c0_82 = arith.constant 0 : index
      %c0_83 = arith.constant 0 : index
      %80 = vector.load %arg9[%79, %c0_81, %c0_82, %c0_83] : memref<20x20x8x128xf32, #tpu.memory_space<vmem>>, vector<1x20x8x128xf32>
      %81 = vector.shape_cast %80 : vector<1x20x8x128xf32> to vector<20x8x128xf32>
      %c25 = arith.constant 25 : index
      %82 = memref.load %arg2[%c25] : memref<50xf32, #tpu.memory_space<smem>>
      %83 = vector.extract_strided_slice %81 {offsets = [0, 0, 0], sizes = [16, 8, 128], strides = [1, 1, 1]} : vector<20x8x128xf32> to vector<16x8x128xf32>
      %84 = vector.broadcast %82 : f32 to vector<16x8x128xf32>
      %85 = arith.mulf %84, %83 : vector<16x8x128xf32>
      %c26 = arith.constant 26 : index
      %86 = memref.load %arg2[%c26] : memref<50xf32, #tpu.memory_space<smem>>
      %87 = vector.extract_strided_slice %81 {offsets = [1, 0, 0], sizes = [16, 8, 128], strides = [1, 1, 1]} : vector<20x8x128xf32> to vector<16x8x128xf32>
      %88 = vector.broadcast %86 : f32 to vector<16x8x128xf32>
      %89 = arith.mulf %88, %87 : vector<16x8x128xf32>
      %90 = arith.addf %85, %89 : vector<16x8x128xf32>
      %c27 = arith.constant 27 : index
      %91 = memref.load %arg2[%c27] : memref<50xf32, #tpu.memory_space<smem>>
      %92 = vector.extract_strided_slice %81 {offsets = [2, 0, 0], sizes = [16, 8, 128], strides = [1, 1, 1]} : vector<20x8x128xf32> to vector<16x8x128xf32>
      %93 = vector.broadcast %91 : f32 to vector<16x8x128xf32>
      %94 = arith.mulf %93, %92 : vector<16x8x128xf32>
      %95 = arith.addf %90, %94 : vector<16x8x128xf32>
      %c28 = arith.constant 28 : index
      %96 = memref.load %arg2[%c28] : memref<50xf32, #tpu.memory_space<smem>>
      %97 = vector.extract_strided_slice %81 {offsets = [3, 0, 0], sizes = [16, 8, 128], strides = [1, 1, 1]} : vector<20x8x128xf32> to vector<16x8x128xf32>
      %98 = vector.broadcast %96 : f32 to vector<16x8x128xf32>
      %99 = arith.mulf %98, %97 : vector<16x8x128xf32>
      %100 = arith.addf %95, %99 : vector<16x8x128xf32>
      %c29 = arith.constant 29 : index
      %101 = memref.load %arg2[%c29] : memref<50xf32, #tpu.memory_space<smem>>
      %102 = vector.extract_strided_slice %81 {offsets = [4, 0, 0], sizes = [16, 8, 128], strides = [1, 1, 1]} : vector<20x8x128xf32> to vector<16x8x128xf32>
      %103 = vector.broadcast %101 : f32 to vector<16x8x128xf32>
      %104 = arith.mulf %103, %102 : vector<16x8x128xf32>
      %105 = arith.addf %100, %104 : vector<16x8x128xf32>
      %c2_i32_84 = arith.constant 2 : i32
      %106 = arith.muli %c2_i32_84, %arg12 : i32
      %c1_i32_85 = arith.constant 1 : i32
      %107 = arith.addi %106, %c1_i32_85 : i32
      %108 = arith.index_cast %107 : i32 to index
      %c0_86 = arith.constant 0 : index
      %c0_87 = arith.constant 0 : index
      %c0_88 = arith.constant 0 : index
      %109 = vector.load %arg9[%108, %c0_86, %c0_87, %c0_88] : memref<20x20x8x128xf32, #tpu.memory_space<vmem>>, vector<1x20x8x128xf32>
      %110 = vector.shape_cast %109 : vector<1x20x8x128xf32> to vector<20x8x128xf32>
      %c30 = arith.constant 30 : index
      %111 = memref.load %arg2[%c30] : memref<50xf32, #tpu.memory_space<smem>>
      %112 = vector.extract_strided_slice %110 {offsets = [0, 0, 0], sizes = [16, 8, 128], strides = [1, 1, 1]} : vector<20x8x128xf32> to vector<16x8x128xf32>
      %113 = vector.broadcast %111 : f32 to vector<16x8x128xf32>
      %114 = arith.mulf %113, %112 : vector<16x8x128xf32>
      %115 = arith.addf %105, %114 : vector<16x8x128xf32>
      %c31 = arith.constant 31 : index
      %116 = memref.load %arg2[%c31] : memref<50xf32, #tpu.memory_space<smem>>
      %117 = vector.extract_strided_slice %110 {offsets = [1, 0, 0], sizes = [16, 8, 128], strides = [1, 1, 1]} : vector<20x8x128xf32> to vector<16x8x128xf32>
      %118 = vector.broadcast %116 : f32 to vector<16x8x128xf32>
      %119 = arith.mulf %118, %117 : vector<16x8x128xf32>
      %120 = arith.addf %115, %119 : vector<16x8x128xf32>
      %c32 = arith.constant 32 : index
      %121 = memref.load %arg2[%c32] : memref<50xf32, #tpu.memory_space<smem>>
      %122 = vector.extract_strided_slice %110 {offsets = [2, 0, 0], sizes = [16, 8, 128], strides = [1, 1, 1]} : vector<20x8x128xf32> to vector<16x8x128xf32>
      %123 = vector.broadcast %121 : f32 to vector<16x8x128xf32>
      %124 = arith.mulf %123, %122 : vector<16x8x128xf32>
      %125 = arith.addf %120, %124 : vector<16x8x128xf32>
      %c33 = arith.constant 33 : index
      %126 = memref.load %arg2[%c33] : memref<50xf32, #tpu.memory_space<smem>>
      %127 = vector.extract_strided_slice %110 {offsets = [3, 0, 0], sizes = [16, 8, 128], strides = [1, 1, 1]} : vector<20x8x128xf32> to vector<16x8x128xf32>
      %128 = vector.broadcast %126 : f32 to vector<16x8x128xf32>
      %129 = arith.mulf %128, %127 : vector<16x8x128xf32>
      %130 = arith.addf %125, %129 : vector<16x8x128xf32>
      %c34 = arith.constant 34 : index
      %131 = memref.load %arg2[%c34] : memref<50xf32, #tpu.memory_space<smem>>
      %132 = vector.extract_strided_slice %110 {offsets = [4, 0, 0], sizes = [16, 8, 128], strides = [1, 1, 1]} : vector<20x8x128xf32> to vector<16x8x128xf32>
      %133 = vector.broadcast %131 : f32 to vector<16x8x128xf32>
      %134 = arith.mulf %133, %132 : vector<16x8x128xf32>
      %135 = arith.addf %130, %134 : vector<16x8x128xf32>
      %c25_89 = arith.constant 25 : index
      %136 = memref.load %arg2[%c25_89] : memref<50xf32, #tpu.memory_space<smem>>
      %137 = vector.extract_strided_slice %110 {offsets = [0, 0, 0], sizes = [16, 8, 128], strides = [1, 1, 1]} : vector<20x8x128xf32> to vector<16x8x128xf32>
      %138 = vector.broadcast %136 : f32 to vector<16x8x128xf32>
      %139 = arith.mulf %138, %137 : vector<16x8x128xf32>
      %c26_90 = arith.constant 26 : index
      %140 = memref.load %arg2[%c26_90] : memref<50xf32, #tpu.memory_space<smem>>
      %141 = vector.extract_strided_slice %110 {offsets = [1, 0, 0], sizes = [16, 8, 128], strides = [1, 1, 1]} : vector<20x8x128xf32> to vector<16x8x128xf32>
      %142 = vector.broadcast %140 : f32 to vector<16x8x128xf32>
      %143 = arith.mulf %142, %141 : vector<16x8x128xf32>
      %144 = arith.addf %139, %143 : vector<16x8x128xf32>
      %c27_91 = arith.constant 27 : index
      %145 = memref.load %arg2[%c27_91] : memref<50xf32, #tpu.memory_space<smem>>
      %146 = vector.extract_strided_slice %110 {offsets = [2, 0, 0], sizes = [16, 8, 128], strides = [1, 1, 1]} : vector<20x8x128xf32> to vector<16x8x128xf32>
      %147 = vector.broadcast %145 : f32 to vector<16x8x128xf32>
      %148 = arith.mulf %147, %146 : vector<16x8x128xf32>
      %149 = arith.addf %144, %148 : vector<16x8x128xf32>
      %c28_92 = arith.constant 28 : index
      %150 = memref.load %arg2[%c28_92] : memref<50xf32, #tpu.memory_space<smem>>
      %151 = vector.extract_strided_slice %110 {offsets = [3, 0, 0], sizes = [16, 8, 128], strides = [1, 1, 1]} : vector<20x8x128xf32> to vector<16x8x128xf32>
      %152 = vector.broadcast %150 : f32 to vector<16x8x128xf32>
      %153 = arith.mulf %152, %151 : vector<16x8x128xf32>
      %154 = arith.addf %149, %153 : vector<16x8x128xf32>
      %c29_93 = arith.constant 29 : index
      %155 = memref.load %arg2[%c29_93] : memref<50xf32, #tpu.memory_space<smem>>
      %156 = vector.extract_strided_slice %110 {offsets = [4, 0, 0], sizes = [16, 8, 128], strides = [1, 1, 1]} : vector<20x8x128xf32> to vector<16x8x128xf32>
      %157 = vector.broadcast %155 : f32 to vector<16x8x128xf32>
      %158 = arith.mulf %157, %156 : vector<16x8x128xf32>
      %159 = arith.addf %154, %158 : vector<16x8x128xf32>
      %c2_i32_94 = arith.constant 2 : i32
      %160 = arith.muli %c2_i32_94, %arg12 : i32
      %c2_i32_95 = arith.constant 2 : i32
      %161 = arith.addi %160, %c2_i32_95 : i32
      %162 = arith.index_cast %161 : i32 to index
      %c0_96 = arith.constant 0 : index
      %c0_97 = arith.constant 0 : index
      %c0_98 = arith.constant 0 : index
      %163 = vector.load %arg9[%162, %c0_96, %c0_97, %c0_98] : memref<20x20x8x128xf32, #tpu.memory_space<vmem>>, vector<1x20x8x128xf32>
      %164 = vector.shape_cast %163 : vector<1x20x8x128xf32> to vector<20x8x128xf32>
      %c35 = arith.constant 35 : index
      %165 = memref.load %arg2[%c35] : memref<50xf32, #tpu.memory_space<smem>>
      %166 = vector.extract_strided_slice %164 {offsets = [0, 0, 0], sizes = [16, 8, 128], strides = [1, 1, 1]} : vector<20x8x128xf32> to vector<16x8x128xf32>
      %167 = vector.broadcast %165 : f32 to vector<16x8x128xf32>
      %168 = arith.mulf %167, %166 : vector<16x8x128xf32>
      %169 = arith.addf %135, %168 : vector<16x8x128xf32>
      %c36 = arith.constant 36 : index
      %170 = memref.load %arg2[%c36] : memref<50xf32, #tpu.memory_space<smem>>
      %171 = vector.extract_strided_slice %164 {offsets = [1, 0, 0], sizes = [16, 8, 128], strides = [1, 1, 1]} : vector<20x8x128xf32> to vector<16x8x128xf32>
      %172 = vector.broadcast %170 : f32 to vector<16x8x128xf32>
      %173 = arith.mulf %172, %171 : vector<16x8x128xf32>
      %174 = arith.addf %169, %173 : vector<16x8x128xf32>
      %c37 = arith.constant 37 : index
      %175 = memref.load %arg2[%c37] : memref<50xf32, #tpu.memory_space<smem>>
      %176 = vector.extract_strided_slice %164 {offsets = [2, 0, 0], sizes = [16, 8, 128], strides = [1, 1, 1]} : vector<20x8x128xf32> to vector<16x8x128xf32>
      %177 = vector.broadcast %175 : f32 to vector<16x8x128xf32>
      %178 = arith.mulf %177, %176 : vector<16x8x128xf32>
      %179 = arith.addf %174, %178 : vector<16x8x128xf32>
      %c38 = arith.constant 38 : index
      %180 = memref.load %arg2[%c38] : memref<50xf32, #tpu.memory_space<smem>>
      %181 = vector.extract_strided_slice %164 {offsets = [3, 0, 0], sizes = [16, 8, 128], strides = [1, 1, 1]} : vector<20x8x128xf32> to vector<16x8x128xf32>
      %182 = vector.broadcast %180 : f32 to vector<16x8x128xf32>
      %183 = arith.mulf %182, %181 : vector<16x8x128xf32>
      %184 = arith.addf %179, %183 : vector<16x8x128xf32>
      %c39 = arith.constant 39 : index
      %185 = memref.load %arg2[%c39] : memref<50xf32, #tpu.memory_space<smem>>
      %186 = vector.extract_strided_slice %164 {offsets = [4, 0, 0], sizes = [16, 8, 128], strides = [1, 1, 1]} : vector<20x8x128xf32> to vector<16x8x128xf32>
      %187 = vector.broadcast %185 : f32 to vector<16x8x128xf32>
      %188 = arith.mulf %187, %186 : vector<16x8x128xf32>
      %189 = arith.addf %184, %188 : vector<16x8x128xf32>
      %c30_99 = arith.constant 30 : index
      %190 = memref.load %arg2[%c30_99] : memref<50xf32, #tpu.memory_space<smem>>
      %191 = vector.extract_strided_slice %164 {offsets = [0, 0, 0], sizes = [16, 8, 128], strides = [1, 1, 1]} : vector<20x8x128xf32> to vector<16x8x128xf32>
      %192 = vector.broadcast %190 : f32 to vector<16x8x128xf32>
      %193 = arith.mulf %192, %191 : vector<16x8x128xf32>
      %194 = arith.addf %159, %193 : vector<16x8x128xf32>
      %c31_100 = arith.constant 31 : index
      %195 = memref.load %arg2[%c31_100] : memref<50xf32, #tpu.memory_space<smem>>
      %196 = vector.extract_strided_slice %164 {offsets = [1, 0, 0], sizes = [16, 8, 128], strides = [1, 1, 1]} : vector<20x8x128xf32> to vector<16x8x128xf32>
      %197 = vector.broadcast %195 : f32 to vector<16x8x128xf32>
      %198 = arith.mulf %197, %196 : vector<16x8x128xf32>
      %199 = arith.addf %194, %198 : vector<16x8x128xf32>
      %c32_101 = arith.constant 32 : index
      %200 = memref.load %arg2[%c32_101] : memref<50xf32, #tpu.memory_space<smem>>
      %201 = vector.extract_strided_slice %164 {offsets = [2, 0, 0], sizes = [16, 8, 128], strides = [1, 1, 1]} : vector<20x8x128xf32> to vector<16x8x128xf32>
      %202 = vector.broadcast %200 : f32 to vector<16x8x128xf32>
      %203 = arith.mulf %202, %201 : vector<16x8x128xf32>
      %204 = arith.addf %199, %203 : vector<16x8x128xf32>
      %c33_102 = arith.constant 33 : index
      %205 = memref.load %arg2[%c33_102] : memref<50xf32, #tpu.memory_space<smem>>
      %206 = vector.extract_strided_slice %164 {offsets = [3, 0, 0], sizes = [16, 8, 128], strides = [1, 1, 1]} : vector<20x8x128xf32> to vector<16x8x128xf32>
      %207 = vector.broadcast %205 : f32 to vector<16x8x128xf32>
      %208 = arith.mulf %207, %206 : vector<16x8x128xf32>
      %209 = arith.addf %204, %208 : vector<16x8x128xf32>
      %c34_103 = arith.constant 34 : index
      %210 = memref.load %arg2[%c34_103] : memref<50xf32, #tpu.memory_space<smem>>
      %211 = vector.extract_strided_slice %164 {offsets = [4, 0, 0], sizes = [16, 8, 128], strides = [1, 1, 1]} : vector<20x8x128xf32> to vector<16x8x128xf32>
      %212 = vector.broadcast %210 : f32 to vector<16x8x128xf32>
      %213 = arith.mulf %212, %211 : vector<16x8x128xf32>
      %214 = arith.addf %209, %213 : vector<16x8x128xf32>
      %c2_i32_104 = arith.constant 2 : i32
      %215 = arith.muli %c2_i32_104, %arg12 : i32
      %c3_i32 = arith.constant 3 : i32
      %216 = arith.addi %215, %c3_i32 : i32
      %217 = arith.index_cast %216 : i32 to index
      %c0_105 = arith.constant 0 : index
      %c0_106 = arith.constant 0 : index
      %c0_107 = arith.constant 0 : index
      %218 = vector.load %arg9[%217, %c0_105, %c0_106, %c0_107] : memref<20x20x8x128xf32, #tpu.memory_space<vmem>>, vector<1x20x8x128xf32>
      %219 = vector.shape_cast %218 : vector<1x20x8x128xf32> to vector<20x8x128xf32>
      %c40 = arith.constant 40 : index
      %220 = memref.load %arg2[%c40] : memref<50xf32, #tpu.memory_space<smem>>
      %221 = vector.extract_strided_slice %219 {offsets = [0, 0, 0], sizes = [16, 8, 128], strides = [1, 1, 1]} : vector<20x8x128xf32> to vector<16x8x128xf32>
      %222 = vector.broadcast %220 : f32 to vector<16x8x128xf32>
      %223 = arith.mulf %222, %221 : vector<16x8x128xf32>
      %224 = arith.addf %189, %223 : vector<16x8x128xf32>
      %c41 = arith.constant 41 : index
      %225 = memref.load %arg2[%c41] : memref<50xf32, #tpu.memory_space<smem>>
      %226 = vector.extract_strided_slice %219 {offsets = [1, 0, 0], sizes = [16, 8, 128], strides = [1, 1, 1]} : vector<20x8x128xf32> to vector<16x8x128xf32>
      %227 = vector.broadcast %225 : f32 to vector<16x8x128xf32>
      %228 = arith.mulf %227, %226 : vector<16x8x128xf32>
      %229 = arith.addf %224, %228 : vector<16x8x128xf32>
      %c42 = arith.constant 42 : index
      %230 = memref.load %arg2[%c42] : memref<50xf32, #tpu.memory_space<smem>>
      %231 = vector.extract_strided_slice %219 {offsets = [2, 0, 0], sizes = [16, 8, 128], strides = [1, 1, 1]} : vector<20x8x128xf32> to vector<16x8x128xf32>
      %232 = vector.broadcast %230 : f32 to vector<16x8x128xf32>
      %233 = arith.mulf %232, %231 : vector<16x8x128xf32>
      %234 = arith.addf %229, %233 : vector<16x8x128xf32>
      %c43 = arith.constant 43 : index
      %235 = memref.load %arg2[%c43] : memref<50xf32, #tpu.memory_space<smem>>
      %236 = vector.extract_strided_slice %219 {offsets = [3, 0, 0], sizes = [16, 8, 128], strides = [1, 1, 1]} : vector<20x8x128xf32> to vector<16x8x128xf32>
      %237 = vector.broadcast %235 : f32 to vector<16x8x128xf32>
      %238 = arith.mulf %237, %236 : vector<16x8x128xf32>
      %239 = arith.addf %234, %238 : vector<16x8x128xf32>
      %c44 = arith.constant 44 : index
      %240 = memref.load %arg2[%c44] : memref<50xf32, #tpu.memory_space<smem>>
      %241 = vector.extract_strided_slice %219 {offsets = [4, 0, 0], sizes = [16, 8, 128], strides = [1, 1, 1]} : vector<20x8x128xf32> to vector<16x8x128xf32>
      %242 = vector.broadcast %240 : f32 to vector<16x8x128xf32>
      %243 = arith.mulf %242, %241 : vector<16x8x128xf32>
      %244 = arith.addf %239, %243 : vector<16x8x128xf32>
      %c35_108 = arith.constant 35 : index
      %245 = memref.load %arg2[%c35_108] : memref<50xf32, #tpu.memory_space<smem>>
      %246 = vector.extract_strided_slice %219 {offsets = [0, 0, 0], sizes = [16, 8, 128], strides = [1, 1, 1]} : vector<20x8x128xf32> to vector<16x8x128xf32>
      %247 = vector.broadcast %245 : f32 to vector<16x8x128xf32>
      %248 = arith.mulf %247, %246 : vector<16x8x128xf32>
      %249 = arith.addf %214, %248 : vector<16x8x128xf32>
      %c36_109 = arith.constant 36 : index
      %250 = memref.load %arg2[%c36_109] : memref<50xf32, #tpu.memory_space<smem>>
      %251 = vector.extract_strided_slice %219 {offsets = [1, 0, 0], sizes = [16, 8, 128], strides = [1, 1, 1]} : vector<20x8x128xf32> to vector<16x8x128xf32>
      %252 = vector.broadcast %250 : f32 to vector<16x8x128xf32>
      %253 = arith.mulf %252, %251 : vector<16x8x128xf32>
      %254 = arith.addf %249, %253 : vector<16x8x128xf32>
      %c37_110 = arith.constant 37 : index
      %255 = memref.load %arg2[%c37_110] : memref<50xf32, #tpu.memory_space<smem>>
      %256 = vector.extract_strided_slice %219 {offsets = [2, 0, 0], sizes = [16, 8, 128], strides = [1, 1, 1]} : vector<20x8x128xf32> to vector<16x8x128xf32>
      %257 = vector.broadcast %255 : f32 to vector<16x8x128xf32>
      %258 = arith.mulf %257, %256 : vector<16x8x128xf32>
      %259 = arith.addf %254, %258 : vector<16x8x128xf32>
      %c38_111 = arith.constant 38 : index
      %260 = memref.load %arg2[%c38_111] : memref<50xf32, #tpu.memory_space<smem>>
      %261 = vector.extract_strided_slice %219 {offsets = [3, 0, 0], sizes = [16, 8, 128], strides = [1, 1, 1]} : vector<20x8x128xf32> to vector<16x8x128xf32>
      %262 = vector.broadcast %260 : f32 to vector<16x8x128xf32>
      %263 = arith.mulf %262, %261 : vector<16x8x128xf32>
      %264 = arith.addf %259, %263 : vector<16x8x128xf32>
      %c39_112 = arith.constant 39 : index
      %265 = memref.load %arg2[%c39_112] : memref<50xf32, #tpu.memory_space<smem>>
      %266 = vector.extract_strided_slice %219 {offsets = [4, 0, 0], sizes = [16, 8, 128], strides = [1, 1, 1]} : vector<20x8x128xf32> to vector<16x8x128xf32>
      %267 = vector.broadcast %265 : f32 to vector<16x8x128xf32>
      %268 = arith.mulf %267, %266 : vector<16x8x128xf32>
      %269 = arith.addf %264, %268 : vector<16x8x128xf32>
      %c2_i32_113 = arith.constant 2 : i32
      %270 = arith.muli %c2_i32_113, %arg12 : i32
      %c4_i32_114 = arith.constant 4 : i32
      %271 = arith.addi %270, %c4_i32_114 : i32
      %272 = arith.index_cast %271 : i32 to index
      %c0_115 = arith.constant 0 : index
      %c0_116 = arith.constant 0 : index
      %c0_117 = arith.constant 0 : index
      %273 = vector.load %arg9[%272, %c0_115, %c0_116, %c0_117] : memref<20x20x8x128xf32, #tpu.memory_space<vmem>>, vector<1x20x8x128xf32>
      %274 = vector.shape_cast %273 : vector<1x20x8x128xf32> to vector<20x8x128xf32>
      %c45 = arith.constant 45 : index
      %275 = memref.load %arg2[%c45] : memref<50xf32, #tpu.memory_space<smem>>
      %276 = vector.extract_strided_slice %274 {offsets = [0, 0, 0], sizes = [16, 8, 128], strides = [1, 1, 1]} : vector<20x8x128xf32> to vector<16x8x128xf32>
      %277 = vector.broadcast %275 : f32 to vector<16x8x128xf32>
      %278 = arith.mulf %277, %276 : vector<16x8x128xf32>
      %279 = arith.addf %244, %278 : vector<16x8x128xf32>
      %c46 = arith.constant 46 : index
      %280 = memref.load %arg2[%c46] : memref<50xf32, #tpu.memory_space<smem>>
      %281 = vector.extract_strided_slice %274 {offsets = [1, 0, 0], sizes = [16, 8, 128], strides = [1, 1, 1]} : vector<20x8x128xf32> to vector<16x8x128xf32>
      %282 = vector.broadcast %280 : f32 to vector<16x8x128xf32>
      %283 = arith.mulf %282, %281 : vector<16x8x128xf32>
      %284 = arith.addf %279, %283 : vector<16x8x128xf32>
      %c47 = arith.constant 47 : index
      %285 = memref.load %arg2[%c47] : memref<50xf32, #tpu.memory_space<smem>>
      %286 = vector.extract_strided_slice %274 {offsets = [2, 0, 0], sizes = [16, 8, 128], strides = [1, 1, 1]} : vector<20x8x128xf32> to vector<16x8x128xf32>
      %287 = vector.broadcast %285 : f32 to vector<16x8x128xf32>
      %288 = arith.mulf %287, %286 : vector<16x8x128xf32>
      %289 = arith.addf %284, %288 : vector<16x8x128xf32>
      %c48 = arith.constant 48 : index
      %290 = memref.load %arg2[%c48] : memref<50xf32, #tpu.memory_space<smem>>
      %291 = vector.extract_strided_slice %274 {offsets = [3, 0, 0], sizes = [16, 8, 128], strides = [1, 1, 1]} : vector<20x8x128xf32> to vector<16x8x128xf32>
      %292 = vector.broadcast %290 : f32 to vector<16x8x128xf32>
      %293 = arith.mulf %292, %291 : vector<16x8x128xf32>
      %294 = arith.addf %289, %293 : vector<16x8x128xf32>
      %c49 = arith.constant 49 : index
      %295 = memref.load %arg2[%c49] : memref<50xf32, #tpu.memory_space<smem>>
      %296 = vector.extract_strided_slice %274 {offsets = [4, 0, 0], sizes = [16, 8, 128], strides = [1, 1, 1]} : vector<20x8x128xf32> to vector<16x8x128xf32>
      %297 = vector.broadcast %295 : f32 to vector<16x8x128xf32>
      %298 = arith.mulf %297, %296 : vector<16x8x128xf32>
      %299 = arith.addf %294, %298 : vector<16x8x128xf32>
      %c40_118 = arith.constant 40 : index
      %300 = memref.load %arg2[%c40_118] : memref<50xf32, #tpu.memory_space<smem>>
      %301 = vector.extract_strided_slice %274 {offsets = [0, 0, 0], sizes = [16, 8, 128], strides = [1, 1, 1]} : vector<20x8x128xf32> to vector<16x8x128xf32>
      %302 = vector.broadcast %300 : f32 to vector<16x8x128xf32>
      %303 = arith.mulf %302, %301 : vector<16x8x128xf32>
      %304 = arith.addf %269, %303 : vector<16x8x128xf32>
      %c41_119 = arith.constant 41 : index
      %305 = memref.load %arg2[%c41_119] : memref<50xf32, #tpu.memory_space<smem>>
      %306 = vector.extract_strided_slice %274 {offsets = [1, 0, 0], sizes = [16, 8, 128], strides = [1, 1, 1]} : vector<20x8x128xf32> to vector<16x8x128xf32>
      %307 = vector.broadcast %305 : f32 to vector<16x8x128xf32>
      %308 = arith.mulf %307, %306 : vector<16x8x128xf32>
      %309 = arith.addf %304, %308 : vector<16x8x128xf32>
      %c42_120 = arith.constant 42 : index
      %310 = memref.load %arg2[%c42_120] : memref<50xf32, #tpu.memory_space<smem>>
      %311 = vector.extract_strided_slice %274 {offsets = [2, 0, 0], sizes = [16, 8, 128], strides = [1, 1, 1]} : vector<20x8x128xf32> to vector<16x8x128xf32>
      %312 = vector.broadcast %310 : f32 to vector<16x8x128xf32>
      %313 = arith.mulf %312, %311 : vector<16x8x128xf32>
      %314 = arith.addf %309, %313 : vector<16x8x128xf32>
      %c43_121 = arith.constant 43 : index
      %315 = memref.load %arg2[%c43_121] : memref<50xf32, #tpu.memory_space<smem>>
      %316 = vector.extract_strided_slice %274 {offsets = [3, 0, 0], sizes = [16, 8, 128], strides = [1, 1, 1]} : vector<20x8x128xf32> to vector<16x8x128xf32>
      %317 = vector.broadcast %315 : f32 to vector<16x8x128xf32>
      %318 = arith.mulf %317, %316 : vector<16x8x128xf32>
      %319 = arith.addf %314, %318 : vector<16x8x128xf32>
      %c44_122 = arith.constant 44 : index
      %320 = memref.load %arg2[%c44_122] : memref<50xf32, #tpu.memory_space<smem>>
      %321 = vector.extract_strided_slice %274 {offsets = [4, 0, 0], sizes = [16, 8, 128], strides = [1, 1, 1]} : vector<20x8x128xf32> to vector<16x8x128xf32>
      %322 = vector.broadcast %320 : f32 to vector<16x8x128xf32>
      %323 = arith.mulf %322, %321 : vector<16x8x128xf32>
      %324 = arith.addf %319, %323 : vector<16x8x128xf32>
      %c2_i32_123 = arith.constant 2 : i32
      %325 = arith.muli %c2_i32_123, %arg12 : i32
      %c5_i32 = arith.constant 5 : i32
      %326 = arith.addi %325, %c5_i32 : i32
      %327 = arith.index_cast %326 : i32 to index
      %c0_124 = arith.constant 0 : index
      %c0_125 = arith.constant 0 : index
      %c0_126 = arith.constant 0 : index
      %328 = vector.load %arg9[%327, %c0_124, %c0_125, %c0_126] : memref<20x20x8x128xf32, #tpu.memory_space<vmem>>, vector<1x20x8x128xf32>
      %329 = vector.shape_cast %328 : vector<1x20x8x128xf32> to vector<20x8x128xf32>
      %c45_127 = arith.constant 45 : index
      %330 = memref.load %arg2[%c45_127] : memref<50xf32, #tpu.memory_space<smem>>
      %331 = vector.extract_strided_slice %329 {offsets = [0, 0, 0], sizes = [16, 8, 128], strides = [1, 1, 1]} : vector<20x8x128xf32> to vector<16x8x128xf32>
      %332 = vector.broadcast %330 : f32 to vector<16x8x128xf32>
      %333 = arith.mulf %332, %331 : vector<16x8x128xf32>
      %334 = arith.addf %324, %333 : vector<16x8x128xf32>
      %c46_128 = arith.constant 46 : index
      %335 = memref.load %arg2[%c46_128] : memref<50xf32, #tpu.memory_space<smem>>
      %336 = vector.extract_strided_slice %329 {offsets = [1, 0, 0], sizes = [16, 8, 128], strides = [1, 1, 1]} : vector<20x8x128xf32> to vector<16x8x128xf32>
      %337 = vector.broadcast %335 : f32 to vector<16x8x128xf32>
      %338 = arith.mulf %337, %336 : vector<16x8x128xf32>
      %339 = arith.addf %334, %338 : vector<16x8x128xf32>
      %c47_129 = arith.constant 47 : index
      %340 = memref.load %arg2[%c47_129] : memref<50xf32, #tpu.memory_space<smem>>
      %341 = vector.extract_strided_slice %329 {offsets = [2, 0, 0], sizes = [16, 8, 128], strides = [1, 1, 1]} : vector<20x8x128xf32> to vector<16x8x128xf32>
      %342 = vector.broadcast %340 : f32 to vector<16x8x128xf32>
      %343 = arith.mulf %342, %341 : vector<16x8x128xf32>
      %344 = arith.addf %339, %343 : vector<16x8x128xf32>
      %c48_130 = arith.constant 48 : index
      %345 = memref.load %arg2[%c48_130] : memref<50xf32, #tpu.memory_space<smem>>
      %346 = vector.extract_strided_slice %329 {offsets = [3, 0, 0], sizes = [16, 8, 128], strides = [1, 1, 1]} : vector<20x8x128xf32> to vector<16x8x128xf32>
      %347 = vector.broadcast %345 : f32 to vector<16x8x128xf32>
      %348 = arith.mulf %347, %346 : vector<16x8x128xf32>
      %349 = arith.addf %344, %348 : vector<16x8x128xf32>
      %c49_131 = arith.constant 49 : index
      %350 = memref.load %arg2[%c49_131] : memref<50xf32, #tpu.memory_space<smem>>
      %351 = vector.extract_strided_slice %329 {offsets = [4, 0, 0], sizes = [16, 8, 128], strides = [1, 1, 1]} : vector<20x8x128xf32> to vector<16x8x128xf32>
      %352 = vector.broadcast %350 : f32 to vector<16x8x128xf32>
      %353 = arith.mulf %352, %351 : vector<16x8x128xf32>
      %354 = arith.addf %349, %353 : vector<16x8x128xf32>
      %355 = arith.maximumf %299, %354 : vector<16x8x128xf32>
      %356 = vector.extract_strided_slice %355 {offsets = [0, 0, 0], sizes = [1, 8, 128], strides = [1, 1, 1]} : vector<16x8x128xf32> to vector<1x8x128xf32>
      %357 = vector.shape_cast %356 : vector<1x8x128xf32> to vector<8x128xf32>
      %358 = vector.extract_strided_slice %355 {offsets = [1, 0, 0], sizes = [1, 8, 128], strides = [1, 1, 1]} : vector<16x8x128xf32> to vector<1x8x128xf32>
      %359 = vector.shape_cast %358 : vector<1x8x128xf32> to vector<8x128xf32>
      %360 = arith.maximumf %357, %359 : vector<8x128xf32>
      %361 = vector.extract_strided_slice %355 {offsets = [2, 0, 0], sizes = [1, 8, 128], strides = [1, 1, 1]} : vector<16x8x128xf32> to vector<1x8x128xf32>
      %362 = vector.shape_cast %361 : vector<1x8x128xf32> to vector<8x128xf32>
      %363 = vector.extract_strided_slice %355 {offsets = [3, 0, 0], sizes = [1, 8, 128], strides = [1, 1, 1]} : vector<16x8x128xf32> to vector<1x8x128xf32>
      %364 = vector.shape_cast %363 : vector<1x8x128xf32> to vector<8x128xf32>
      %365 = arith.maximumf %362, %364 : vector<8x128xf32>
      %366 = vector.extract_strided_slice %355 {offsets = [4, 0, 0], sizes = [1, 8, 128], strides = [1, 1, 1]} : vector<16x8x128xf32> to vector<1x8x128xf32>
      %367 = vector.shape_cast %366 : vector<1x8x128xf32> to vector<8x128xf32>
      %368 = vector.extract_strided_slice %355 {offsets = [5, 0, 0], sizes = [1, 8, 128], strides = [1, 1, 1]} : vector<16x8x128xf32> to vector<1x8x128xf32>
      %369 = vector.shape_cast %368 : vector<1x8x128xf32> to vector<8x128xf32>
      %370 = arith.maximumf %367, %369 : vector<8x128xf32>
      %371 = vector.extract_strided_slice %355 {offsets = [6, 0, 0], sizes = [1, 8, 128], strides = [1, 1, 1]} : vector<16x8x128xf32> to vector<1x8x128xf32>
      %372 = vector.shape_cast %371 : vector<1x8x128xf32> to vector<8x128xf32>
      %373 = vector.extract_strided_slice %355 {offsets = [7, 0, 0], sizes = [1, 8, 128], strides = [1, 1, 1]} : vector<16x8x128xf32> to vector<1x8x128xf32>
      %374 = vector.shape_cast %373 : vector<1x8x128xf32> to vector<8x128xf32>
      %375 = arith.maximumf %372, %374 : vector<8x128xf32>
      %376 = vector.extract_strided_slice %355 {offsets = [8, 0, 0], sizes = [1, 8, 128], strides = [1, 1, 1]} : vector<16x8x128xf32> to vector<1x8x128xf32>
      %377 = vector.shape_cast %376 : vector<1x8x128xf32> to vector<8x128xf32>
      %378 = vector.extract_strided_slice %355 {offsets = [9, 0, 0], sizes = [1, 8, 128], strides = [1, 1, 1]} : vector<16x8x128xf32> to vector<1x8x128xf32>
      %379 = vector.shape_cast %378 : vector<1x8x128xf32> to vector<8x128xf32>
      %380 = arith.maximumf %377, %379 : vector<8x128xf32>
      %381 = vector.extract_strided_slice %355 {offsets = [10, 0, 0], sizes = [1, 8, 128], strides = [1, 1, 1]} : vector<16x8x128xf32> to vector<1x8x128xf32>
      %382 = vector.shape_cast %381 : vector<1x8x128xf32> to vector<8x128xf32>
      %383 = vector.extract_strided_slice %355 {offsets = [11, 0, 0], sizes = [1, 8, 128], strides = [1, 1, 1]} : vector<16x8x128xf32> to vector<1x8x128xf32>
      %384 = vector.shape_cast %383 : vector<1x8x128xf32> to vector<8x128xf32>
      %385 = arith.maximumf %382, %384 : vector<8x128xf32>
      %386 = vector.extract_strided_slice %355 {offsets = [12, 0, 0], sizes = [1, 8, 128], strides = [1, 1, 1]} : vector<16x8x128xf32> to vector<1x8x128xf32>
      %387 = vector.shape_cast %386 : vector<1x8x128xf32> to vector<8x128xf32>
      %388 = vector.extract_strided_slice %355 {offsets = [13, 0, 0], sizes = [1, 8, 128], strides = [1, 1, 1]} : vector<16x8x128xf32> to vector<1x8x128xf32>
      %389 = vector.shape_cast %388 : vector<1x8x128xf32> to vector<8x128xf32>
      %390 = arith.maximumf %387, %389 : vector<8x128xf32>
      %391 = vector.extract_strided_slice %355 {offsets = [14, 0, 0], sizes = [1, 8, 128], strides = [1, 1, 1]} : vector<16x8x128xf32> to vector<1x8x128xf32>
      %392 = vector.shape_cast %391 : vector<1x8x128xf32> to vector<8x128xf32>
      %393 = vector.extract_strided_slice %355 {offsets = [15, 0, 0], sizes = [1, 8, 128], strides = [1, 1, 1]} : vector<16x8x128xf32> to vector<1x8x128xf32>
      %394 = vector.shape_cast %393 : vector<1x8x128xf32> to vector<8x128xf32>
      %395 = arith.maximumf %392, %394 : vector<8x128xf32>
      %396 = vector.shape_cast %360 : vector<8x128xf32> to vector<1x8x128xf32>
      %397 = vector.shape_cast %365 : vector<8x128xf32> to vector<1x8x128xf32>
      %398 = vector.shape_cast %370 : vector<8x128xf32> to vector<1x8x128xf32>
      %399 = vector.shape_cast %375 : vector<8x128xf32> to vector<1x8x128xf32>
      %400 = vector.shape_cast %380 : vector<8x128xf32> to vector<1x8x128xf32>
      %401 = vector.shape_cast %385 : vector<8x128xf32> to vector<1x8x128xf32>
      %402 = vector.shape_cast %390 : vector<8x128xf32> to vector<1x8x128xf32>
      %403 = vector.shape_cast %395 : vector<8x128xf32> to vector<1x8x128xf32>
      %404 = tpu.concatenate %396, %397, %398, %399, %400, %401, %402, %403 in 0 : vector<1x8x128xf32>, vector<1x8x128xf32>, vector<1x8x128xf32>, vector<1x8x128xf32>, vector<1x8x128xf32>, vector<1x8x128xf32>, vector<1x8x128xf32>, vector<1x8x128xf32> -> vector<8x8x128xf32>
      %c1_132 = arith.constant 1 : index
      %405 = memref.load %arg3[%c1_132] : memref<2xf32, #tpu.memory_space<smem>>
      %406 = vector.broadcast %405 : f32 to vector<8x8x128xf32>
      %407 = arith.addf %404, %406 : vector<8x8x128xf32>
      %cst_133 = arith.constant 0.000000e+00 : f32
      %408 = vector.broadcast %cst_133 : f32 to vector<8x8x128xf32>
      %409 = arith.maximumf %407, %408 : vector<8x8x128xf32>
      %410 = vector.shape_cast %409 : vector<8x8x128xf32> to vector<1x8x8x128xf32>
      %c2_i32_134 = arith.constant 2 : i32
      %411 = arith.addi %c2_i32_134, %arg12 : i32
      %412 = arith.index_cast %411 : i32 to index
      %c2_135 = arith.constant 2 : index
      %c0_136 = arith.constant 0 : index
      %c0_137 = arith.constant 0 : index
      %413 = vector.load %arg11[%412, %c2_135, %c0_136, %c0_137] : memref<12x12x8x128xf32, #tpu.memory_space<vmem>>, vector<1x8x8x128xf32>
      tpu.vector_store %arg11[%412, %c2_135, %c0_136, %c0_137], %410 {strides = array<i32>} : memref<12x12x8x128xf32, #tpu.memory_space<vmem>>, vector<1x8x8x128xf32>,
    }
    %c8_i32_60 = arith.constant 8 : i32
    %cst_61 = arith.constant 0.000000e+00 : f32
    %21 = vector.broadcast %cst_61 : f32 to vector<8x128xf32>
    %c0_62 = arith.constant 0 : index
    %22 = memref.load %arg7[%c0_62] : memref<10xf32, #tpu.memory_space<smem>>
    %23 = vector.broadcast %22 : f32 to vector<8x128xf32>
    %24 = arith.addf %21, %23 : vector<8x128xf32>
    %cst_63 = arith.constant 0.000000e+00 : f32
    %25 = vector.broadcast %cst_63 : f32 to vector<8x128xf32>
    %c1 = arith.constant 1 : index
    %26 = memref.load %arg7[%c1] : memref<10xf32, #tpu.memory_space<smem>>
    %27 = vector.broadcast %26 : f32 to vector<8x128xf32>
    %28 = arith.addf %25, %27 : vector<8x128xf32>
    %cst_64 = arith.constant 0.000000e+00 : f32
    %29 = vector.broadcast %cst_64 : f32 to vector<8x128xf32>
    %c2_65 = arith.constant 2 : index
    %30 = memref.load %arg7[%c2_65] : memref<10xf32, #tpu.memory_space<smem>>
    %31 = vector.broadcast %30 : f32 to vector<8x128xf32>
    %32 = arith.addf %29, %31 : vector<8x128xf32>
    %cst_66 = arith.constant 0.000000e+00 : f32
    %33 = vector.broadcast %cst_66 : f32 to vector<8x128xf32>
    %c3 = arith.constant 3 : index
    %34 = memref.load %arg7[%c3] : memref<10xf32, #tpu.memory_space<smem>>
    %35 = vector.broadcast %34 : f32 to vector<8x128xf32>
    %36 = arith.addf %33, %35 : vector<8x128xf32>
    %cst_67 = arith.constant 0.000000e+00 : f32
    %37 = vector.broadcast %cst_67 : f32 to vector<8x128xf32>
    %c4 = arith.constant 4 : index
    %38 = memref.load %arg7[%c4] : memref<10xf32, #tpu.memory_space<smem>>
    %39 = vector.broadcast %38 : f32 to vector<8x128xf32>
    %40 = arith.addf %37, %39 : vector<8x128xf32>
    %cst_68 = arith.constant 0.000000e+00 : f32
    %41 = vector.broadcast %cst_68 : f32 to vector<8x128xf32>
    %c5 = arith.constant 5 : index
    %42 = memref.load %arg7[%c5] : memref<10xf32, #tpu.memory_space<smem>>
    %43 = vector.broadcast %42 : f32 to vector<8x128xf32>
    %44 = arith.addf %41, %43 : vector<8x128xf32>
    %cst_69 = arith.constant 0.000000e+00 : f32
    %45 = vector.broadcast %cst_69 : f32 to vector<8x128xf32>
    %c6 = arith.constant 6 : index
    %46 = memref.load %arg7[%c6] : memref<10xf32, #tpu.memory_space<smem>>
    %47 = vector.broadcast %46 : f32 to vector<8x128xf32>
    %48 = arith.addf %45, %47 : vector<8x128xf32>
    %cst_70 = arith.constant 0.000000e+00 : f32
    %49 = vector.broadcast %cst_70 : f32 to vector<8x128xf32>
    %c7 = arith.constant 7 : index
    %50 = memref.load %arg7[%c7] : memref<10xf32, #tpu.memory_space<smem>>
    %51 = vector.broadcast %50 : f32 to vector<8x128xf32>
    %52 = arith.addf %49, %51 : vector<8x128xf32>
    %cst_71 = arith.constant 0.000000e+00 : f32
    %53 = vector.broadcast %cst_71 : f32 to vector<8x128xf32>
    %c8 = arith.constant 8 : index
    %54 = memref.load %arg7[%c8] : memref<10xf32, #tpu.memory_space<smem>>
    %55 = vector.broadcast %54 : f32 to vector<8x128xf32>
    %56 = arith.addf %53, %55 : vector<8x128xf32>
    %cst_72 = arith.constant 0.000000e+00 : f32
    %57 = vector.broadcast %cst_72 : f32 to vector<8x128xf32>
    %c9 = arith.constant 9 : index
    %58 = memref.load %arg7[%c9] : memref<10xf32, #tpu.memory_space<smem>>
    %59 = vector.broadcast %58 : f32 to vector<8x128xf32>
    %60 = arith.addf %57, %59 : vector<8x128xf32>
    %61 = vector.shape_cast %24 : vector<8x128xf32> to vector<1x8x128xf32>
    %62 = vector.shape_cast %28 : vector<8x128xf32> to vector<1x8x128xf32>
    %63 = vector.shape_cast %32 : vector<8x128xf32> to vector<1x8x128xf32>
    %64 = vector.shape_cast %36 : vector<8x128xf32> to vector<1x8x128xf32>
    %65 = vector.shape_cast %40 : vector<8x128xf32> to vector<1x8x128xf32>
    %66 = vector.shape_cast %44 : vector<8x128xf32> to vector<1x8x128xf32>
    %67 = vector.shape_cast %48 : vector<8x128xf32> to vector<1x8x128xf32>
    %68 = vector.shape_cast %52 : vector<8x128xf32> to vector<1x8x128xf32>
    %69 = vector.shape_cast %56 : vector<8x128xf32> to vector<1x8x128xf32>
    %70 = vector.shape_cast %60 : vector<8x128xf32> to vector<1x8x128xf32>
    %71 = tpu.concatenate %61, %62, %63, %64, %65, %66, %67, %68, %69, %70 in 0 : vector<1x8x128xf32>, vector<1x8x128xf32>, vector<1x8x128xf32>, vector<1x8x128xf32>, vector<1x8x128xf32>, vector<1x8x128xf32>, vector<1x8x128xf32>, vector<1x8x128xf32>, vector<1x8x128xf32>, vector<1x8x128xf32> -> vector<10x8x128xf32>
    %c0_i32_73 = arith.constant 0 : i32
    %c4_i32 = arith.constant 4 : i32
    %72 = arith.addi %c0_i32_73, %c4_i32 : i32
    %c1_i32_74 = arith.constant 1 : i32
    %73 = scf.for %arg12 = %c0_i32_73 to %72 step %c1_i32_74 iter_args(%arg13 = %71) -> (vector<10x8x128xf32>)  : i32 {
      %c2_i32 = arith.constant 2 : i32
      %77 = arith.muli %c2_i32, %arg12 : i32
      %c0_i32_80 = arith.constant 0 : i32
      %78 = arith.addi %77, %c0_i32_80 : i32
      %79 = arith.index_cast %78 : i32 to index
      %c0_81 = arith.constant 0 : index
      %c0_82 = arith.constant 0 : index
      %c0_83 = arith.constant 0 : index
      %80 = vector.load %arg10[%79, %c0_81, %c0_82, %c0_83] : memref<12x12x8x128xf32, #tpu.memory_space<vmem>>, vector<1x12x8x128xf32>
      %81 = vector.shape_cast %80 : vector<1x12x8x128xf32> to vector<12x8x128xf32>
      %c0_84 = arith.constant 0 : index
      %82 = memref.load %arg4[%c0_84] : memref<50xf32, #tpu.memory_space<smem>>
      %83 = vector.extract_strided_slice %81 {offsets = [0, 0, 0], sizes = [8, 8, 128], strides = [1, 1, 1]} : vector<12x8x128xf32> to vector<8x8x128xf32>
      %84 = vector.broadcast %82 : f32 to vector<8x8x128xf32>
      %85 = arith.mulf %84, %83 : vector<8x8x128xf32>
      %c1_85 = arith.constant 1 : index
      %86 = memref.load %arg4[%c1_85] : memref<50xf32, #tpu.memory_space<smem>>
      %87 = vector.extract_strided_slice %81 {offsets = [1, 0, 0], sizes = [8, 8, 128], strides = [1, 1, 1]} : vector<12x8x128xf32> to vector<8x8x128xf32>
      %88 = vector.broadcast %86 : f32 to vector<8x8x128xf32>
      %89 = arith.mulf %88, %87 : vector<8x8x128xf32>
      %90 = arith.addf %85, %89 : vector<8x8x128xf32>
      %c2_86 = arith.constant 2 : index
      %91 = memref.load %arg4[%c2_86] : memref<50xf32, #tpu.memory_space<smem>>
      %92 = vector.extract_strided_slice %81 {offsets = [2, 0, 0], sizes = [8, 8, 128], strides = [1, 1, 1]} : vector<12x8x128xf32> to vector<8x8x128xf32>
      %93 = vector.broadcast %91 : f32 to vector<8x8x128xf32>
      %94 = arith.mulf %93, %92 : vector<8x8x128xf32>
      %95 = arith.addf %90, %94 : vector<8x8x128xf32>
      %c3_87 = arith.constant 3 : index
      %96 = memref.load %arg4[%c3_87] : memref<50xf32, #tpu.memory_space<smem>>
      %97 = vector.extract_strided_slice %81 {offsets = [3, 0, 0], sizes = [8, 8, 128], strides = [1, 1, 1]} : vector<12x8x128xf32> to vector<8x8x128xf32>
      %98 = vector.broadcast %96 : f32 to vector<8x8x128xf32>
      %99 = arith.mulf %98, %97 : vector<8x8x128xf32>
      %100 = arith.addf %95, %99 : vector<8x8x128xf32>
      %c4_88 = arith.constant 4 : index
      %101 = memref.load %arg4[%c4_88] : memref<50xf32, #tpu.memory_space<smem>>
      %102 = vector.extract_strided_slice %81 {offsets = [4, 0, 0], sizes = [8, 8, 128], strides = [1, 1, 1]} : vector<12x8x128xf32> to vector<8x8x128xf32>
      %103 = vector.broadcast %101 : f32 to vector<8x8x128xf32>
      %104 = arith.mulf %103, %102 : vector<8x8x128xf32>
      %105 = arith.addf %100, %104 : vector<8x8x128xf32>
      %c2_i32_89 = arith.constant 2 : i32
      %106 = arith.muli %c2_i32_89, %arg12 : i32
      %c1_i32_90 = arith.constant 1 : i32
      %107 = arith.addi %106, %c1_i32_90 : i32
      %108 = arith.index_cast %107 : i32 to index
      %c0_91 = arith.constant 0 : index
      %c0_92 = arith.constant 0 : index
      %c0_93 = arith.constant 0 : index
      %109 = vector.load %arg10[%108, %c0_91, %c0_92, %c0_93] : memref<12x12x8x128xf32, #tpu.memory_space<vmem>>, vector<1x12x8x128xf32>
      %110 = vector.shape_cast %109 : vector<1x12x8x128xf32> to vector<12x8x128xf32>
      %c5_94 = arith.constant 5 : index
      %111 = memref.load %arg4[%c5_94] : memref<50xf32, #tpu.memory_space<smem>>
      %112 = vector.extract_strided_slice %110 {offsets = [0, 0, 0], sizes = [8, 8, 128], strides = [1, 1, 1]} : vector<12x8x128xf32> to vector<8x8x128xf32>
      %113 = vector.broadcast %111 : f32 to vector<8x8x128xf32>
      %114 = arith.mulf %113, %112 : vector<8x8x128xf32>
      %115 = arith.addf %105, %114 : vector<8x8x128xf32>
      %c6_95 = arith.constant 6 : index
      %116 = memref.load %arg4[%c6_95] : memref<50xf32, #tpu.memory_space<smem>>
      %117 = vector.extract_strided_slice %110 {offsets = [1, 0, 0], sizes = [8, 8, 128], strides = [1, 1, 1]} : vector<12x8x128xf32> to vector<8x8x128xf32>
      %118 = vector.broadcast %116 : f32 to vector<8x8x128xf32>
      %119 = arith.mulf %118, %117 : vector<8x8x128xf32>
      %120 = arith.addf %115, %119 : vector<8x8x128xf32>
      %c7_96 = arith.constant 7 : index
      %121 = memref.load %arg4[%c7_96] : memref<50xf32, #tpu.memory_space<smem>>
      %122 = vector.extract_strided_slice %110 {offsets = [2, 0, 0], sizes = [8, 8, 128], strides = [1, 1, 1]} : vector<12x8x128xf32> to vector<8x8x128xf32>
      %123 = vector.broadcast %121 : f32 to vector<8x8x128xf32>
      %124 = arith.mulf %123, %122 : vector<8x8x128xf32>
      %125 = arith.addf %120, %124 : vector<8x8x128xf32>
      %c8_97 = arith.constant 8 : index
      %126 = memref.load %arg4[%c8_97] : memref<50xf32, #tpu.memory_space<smem>>
      %127 = vector.extract_strided_slice %110 {offsets = [3, 0, 0], sizes = [8, 8, 128], strides = [1, 1, 1]} : vector<12x8x128xf32> to vector<8x8x128xf32>
      %128 = vector.broadcast %126 : f32 to vector<8x8x128xf32>
      %129 = arith.mulf %128, %127 : vector<8x8x128xf32>
      %130 = arith.addf %125, %129 : vector<8x8x128xf32>
      %c9_98 = arith.constant 9 : index
      %131 = memref.load %arg4[%c9_98] : memref<50xf32, #tpu.memory_space<smem>>
      %132 = vector.extract_strided_slice %110 {offsets = [4, 0, 0], sizes = [8, 8, 128], strides = [1, 1, 1]} : vector<12x8x128xf32> to vector<8x8x128xf32>
      %133 = vector.broadcast %131 : f32 to vector<8x8x128xf32>
      %134 = arith.mulf %133, %132 : vector<8x8x128xf32>
      %135 = arith.addf %130, %134 : vector<8x8x128xf32>
      %c0_99 = arith.constant 0 : index
      %136 = memref.load %arg4[%c0_99] : memref<50xf32, #tpu.memory_space<smem>>
      %137 = vector.extract_strided_slice %110 {offsets = [0, 0, 0], sizes = [8, 8, 128], strides = [1, 1, 1]} : vector<12x8x128xf32> to vector<8x8x128xf32>
      %138 = vector.broadcast %136 : f32 to vector<8x8x128xf32>
      %139 = arith.mulf %138, %137 : vector<8x8x128xf32>
      %c1_100 = arith.constant 1 : index
      %140 = memref.load %arg4[%c1_100] : memref<50xf32, #tpu.memory_space<smem>>
      %141 = vector.extract_strided_slice %110 {offsets = [1, 0, 0], sizes = [8, 8, 128], strides = [1, 1, 1]} : vector<12x8x128xf32> to vector<8x8x128xf32>
      %142 = vector.broadcast %140 : f32 to vector<8x8x128xf32>
      %143 = arith.mulf %142, %141 : vector<8x8x128xf32>
      %144 = arith.addf %139, %143 : vector<8x8x128xf32>
      %c2_101 = arith.constant 2 : index
      %145 = memref.load %arg4[%c2_101] : memref<50xf32, #tpu.memory_space<smem>>
      %146 = vector.extract_strided_slice %110 {offsets = [2, 0, 0], sizes = [8, 8, 128], strides = [1, 1, 1]} : vector<12x8x128xf32> to vector<8x8x128xf32>
      %147 = vector.broadcast %145 : f32 to vector<8x8x128xf32>
      %148 = arith.mulf %147, %146 : vector<8x8x128xf32>
      %149 = arith.addf %144, %148 : vector<8x8x128xf32>
      %c3_102 = arith.constant 3 : index
      %150 = memref.load %arg4[%c3_102] : memref<50xf32, #tpu.memory_space<smem>>
      %151 = vector.extract_strided_slice %110 {offsets = [3, 0, 0], sizes = [8, 8, 128], strides = [1, 1, 1]} : vector<12x8x128xf32> to vector<8x8x128xf32>
      %152 = vector.broadcast %150 : f32 to vector<8x8x128xf32>
      %153 = arith.mulf %152, %151 : vector<8x8x128xf32>
      %154 = arith.addf %149, %153 : vector<8x8x128xf32>
      %c4_103 = arith.constant 4 : index
      %155 = memref.load %arg4[%c4_103] : memref<50xf32, #tpu.memory_space<smem>>
      %156 = vector.extract_strided_slice %110 {offsets = [4, 0, 0], sizes = [8, 8, 128], strides = [1, 1, 1]} : vector<12x8x128xf32> to vector<8x8x128xf32>
      %157 = vector.broadcast %155 : f32 to vector<8x8x128xf32>
      %158 = arith.mulf %157, %156 : vector<8x8x128xf32>
      %159 = arith.addf %154, %158 : vector<8x8x128xf32>
      %c2_i32_104 = arith.constant 2 : i32
      %160 = arith.muli %c2_i32_104, %arg12 : i32
      %c2_i32_105 = arith.constant 2 : i32
      %161 = arith.addi %160, %c2_i32_105 : i32
      %162 = arith.index_cast %161 : i32 to index
      %c0_106 = arith.constant 0 : index
      %c0_107 = arith.constant 0 : index
      %c0_108 = arith.constant 0 : index
      %163 = vector.load %arg10[%162, %c0_106, %c0_107, %c0_108] : memref<12x12x8x128xf32, #tpu.memory_space<vmem>>, vector<1x12x8x128xf32>
      %164 = vector.shape_cast %163 : vector<1x12x8x128xf32> to vector<12x8x128xf32>
      %c10_109 = arith.constant 10 : index
      %165 = memref.load %arg4[%c10_109] : memref<50xf32, #tpu.memory_space<smem>>
      %166 = vector.extract_strided_slice %164 {offsets = [0, 0, 0], sizes = [8, 8, 128], strides = [1, 1, 1]} : vector<12x8x128xf32> to vector<8x8x128xf32>
      %167 = vector.broadcast %165 : f32 to vector<8x8x128xf32>
      %168 = arith.mulf %167, %166 : vector<8x8x128xf32>
      %169 = arith.addf %135, %168 : vector<8x8x128xf32>
      %c11 = arith.constant 11 : index
      %170 = memref.load %arg4[%c11] : memref<50xf32, #tpu.memory_space<smem>>
      %171 = vector.extract_strided_slice %164 {offsets = [1, 0, 0], sizes = [8, 8, 128], strides = [1, 1, 1]} : vector<12x8x128xf32> to vector<8x8x128xf32>
      %172 = vector.broadcast %170 : f32 to vector<8x8x128xf32>
      %173 = arith.mulf %172, %171 : vector<8x8x128xf32>
      %174 = arith.addf %169, %173 : vector<8x8x128xf32>
      %c12 = arith.constant 12 : index
      %175 = memref.load %arg4[%c12] : memref<50xf32, #tpu.memory_space<smem>>
      %176 = vector.extract_strided_slice %164 {offsets = [2, 0, 0], sizes = [8, 8, 128], strides = [1, 1, 1]} : vector<12x8x128xf32> to vector<8x8x128xf32>
      %177 = vector.broadcast %175 : f32 to vector<8x8x128xf32>
      %178 = arith.mulf %177, %176 : vector<8x8x128xf32>
      %179 = arith.addf %174, %178 : vector<8x8x128xf32>
      %c13 = arith.constant 13 : index
      %180 = memref.load %arg4[%c13] : memref<50xf32, #tpu.memory_space<smem>>
      %181 = vector.extract_strided_slice %164 {offsets = [3, 0, 0], sizes = [8, 8, 128], strides = [1, 1, 1]} : vector<12x8x128xf32> to vector<8x8x128xf32>
      %182 = vector.broadcast %180 : f32 to vector<8x8x128xf32>
      %183 = arith.mulf %182, %181 : vector<8x8x128xf32>
      %184 = arith.addf %179, %183 : vector<8x8x128xf32>
      %c14 = arith.constant 14 : index
      %185 = memref.load %arg4[%c14] : memref<50xf32, #tpu.memory_space<smem>>
      %186 = vector.extract_strided_slice %164 {offsets = [4, 0, 0], sizes = [8, 8, 128], strides = [1, 1, 1]} : vector<12x8x128xf32> to vector<8x8x128xf32>
      %187 = vector.broadcast %185 : f32 to vector<8x8x128xf32>
      %188 = arith.mulf %187, %186 : vector<8x8x128xf32>
      %189 = arith.addf %184, %188 : vector<8x8x128xf32>
      %c5_110 = arith.constant 5 : index
      %190 = memref.load %arg4[%c5_110] : memref<50xf32, #tpu.memory_space<smem>>
      %191 = vector.extract_strided_slice %164 {offsets = [0, 0, 0], sizes = [8, 8, 128], strides = [1, 1, 1]} : vector<12x8x128xf32> to vector<8x8x128xf32>
      %192 = vector.broadcast %190 : f32 to vector<8x8x128xf32>
      %193 = arith.mulf %192, %191 : vector<8x8x128xf32>
      %194 = arith.addf %159, %193 : vector<8x8x128xf32>
      %c6_111 = arith.constant 6 : index
      %195 = memref.load %arg4[%c6_111] : memref<50xf32, #tpu.memory_space<smem>>
      %196 = vector.extract_strided_slice %164 {offsets = [1, 0, 0], sizes = [8, 8, 128], strides = [1, 1, 1]} : vector<12x8x128xf32> to vector<8x8x128xf32>
      %197 = vector.broadcast %195 : f32 to vector<8x8x128xf32>
      %198 = arith.mulf %197, %196 : vector<8x8x128xf32>
      %199 = arith.addf %194, %198 : vector<8x8x128xf32>
      %c7_112 = arith.constant 7 : index
      %200 = memref.load %arg4[%c7_112] : memref<50xf32, #tpu.memory_space<smem>>
      %201 = vector.extract_strided_slice %164 {offsets = [2, 0, 0], sizes = [8, 8, 128], strides = [1, 1, 1]} : vector<12x8x128xf32> to vector<8x8x128xf32>
      %202 = vector.broadcast %200 : f32 to vector<8x8x128xf32>
      %203 = arith.mulf %202, %201 : vector<8x8x128xf32>
      %204 = arith.addf %199, %203 : vector<8x8x128xf32>
      %c8_113 = arith.constant 8 : index
      %205 = memref.load %arg4[%c8_113] : memref<50xf32, #tpu.memory_space<smem>>
      %206 = vector.extract_strided_slice %164 {offsets = [3, 0, 0], sizes = [8, 8, 128], strides = [1, 1, 1]} : vector<12x8x128xf32> to vector<8x8x128xf32>
      %207 = vector.broadcast %205 : f32 to vector<8x8x128xf32>
      %208 = arith.mulf %207, %206 : vector<8x8x128xf32>
      %209 = arith.addf %204, %208 : vector<8x8x128xf32>
      %c9_114 = arith.constant 9 : index
      %210 = memref.load %arg4[%c9_114] : memref<50xf32, #tpu.memory_space<smem>>
      %211 = vector.extract_strided_slice %164 {offsets = [4, 0, 0], sizes = [8, 8, 128], strides = [1, 1, 1]} : vector<12x8x128xf32> to vector<8x8x128xf32>
      %212 = vector.broadcast %210 : f32 to vector<8x8x128xf32>
      %213 = arith.mulf %212, %211 : vector<8x8x128xf32>
      %214 = arith.addf %209, %213 : vector<8x8x128xf32>
      %c2_i32_115 = arith.constant 2 : i32
      %215 = arith.muli %c2_i32_115, %arg12 : i32
      %c3_i32 = arith.constant 3 : i32
      %216 = arith.addi %215, %c3_i32 : i32
      %217 = arith.index_cast %216 : i32 to index
      %c0_116 = arith.constant 0 : index
      %c0_117 = arith.constant 0 : index
      %c0_118 = arith.constant 0 : index
      %218 = vector.load %arg10[%217, %c0_116, %c0_117, %c0_118] : memref<12x12x8x128xf32, #tpu.memory_space<vmem>>, vector<1x12x8x128xf32>
      %219 = vector.shape_cast %218 : vector<1x12x8x128xf32> to vector<12x8x128xf32>
      %c15 = arith.constant 15 : index
      %220 = memref.load %arg4[%c15] : memref<50xf32, #tpu.memory_space<smem>>
      %221 = vector.extract_strided_slice %219 {offsets = [0, 0, 0], sizes = [8, 8, 128], strides = [1, 1, 1]} : vector<12x8x128xf32> to vector<8x8x128xf32>
      %222 = vector.broadcast %220 : f32 to vector<8x8x128xf32>
      %223 = arith.mulf %222, %221 : vector<8x8x128xf32>
      %224 = arith.addf %189, %223 : vector<8x8x128xf32>
      %c16 = arith.constant 16 : index
      %225 = memref.load %arg4[%c16] : memref<50xf32, #tpu.memory_space<smem>>
      %226 = vector.extract_strided_slice %219 {offsets = [1, 0, 0], sizes = [8, 8, 128], strides = [1, 1, 1]} : vector<12x8x128xf32> to vector<8x8x128xf32>
      %227 = vector.broadcast %225 : f32 to vector<8x8x128xf32>
      %228 = arith.mulf %227, %226 : vector<8x8x128xf32>
      %229 = arith.addf %224, %228 : vector<8x8x128xf32>
      %c17 = arith.constant 17 : index
      %230 = memref.load %arg4[%c17] : memref<50xf32, #tpu.memory_space<smem>>
      %231 = vector.extract_strided_slice %219 {offsets = [2, 0, 0], sizes = [8, 8, 128], strides = [1, 1, 1]} : vector<12x8x128xf32> to vector<8x8x128xf32>
      %232 = vector.broadcast %230 : f32 to vector<8x8x128xf32>
      %233 = arith.mulf %232, %231 : vector<8x8x128xf32>
      %234 = arith.addf %229, %233 : vector<8x8x128xf32>
      %c18_119 = arith.constant 18 : index
      %235 = memref.load %arg4[%c18_119] : memref<50xf32, #tpu.memory_space<smem>>
      %236 = vector.extract_strided_slice %219 {offsets = [3, 0, 0], sizes = [8, 8, 128], strides = [1, 1, 1]} : vector<12x8x128xf32> to vector<8x8x128xf32>
      %237 = vector.broadcast %235 : f32 to vector<8x8x128xf32>
      %238 = arith.mulf %237, %236 : vector<8x8x128xf32>
      %239 = arith.addf %234, %238 : vector<8x8x128xf32>
      %c19 = arith.constant 19 : index
      %240 = memref.load %arg4[%c19] : memref<50xf32, #tpu.memory_space<smem>>
      %241 = vector.extract_strided_slice %219 {offsets = [4, 0, 0], sizes = [8, 8, 128], strides = [1, 1, 1]} : vector<12x8x128xf32> to vector<8x8x128xf32>
      %242 = vector.broadcast %240 : f32 to vector<8x8x128xf32>
      %243 = arith.mulf %242, %241 : vector<8x8x128xf32>
      %244 = arith.addf %239, %243 : vector<8x8x128xf32>
      %c10_120 = arith.constant 10 : index
      %245 = memref.load %arg4[%c10_120] : memref<50xf32, #tpu.memory_space<smem>>
      %246 = vector.extract_strided_slice %219 {offsets = [0, 0, 0], sizes = [8, 8, 128], strides = [1, 1, 1]} : vector<12x8x128xf32> to vector<8x8x128xf32>
      %247 = vector.broadcast %245 : f32 to vector<8x8x128xf32>
      %248 = arith.mulf %247, %246 : vector<8x8x128xf32>
      %249 = arith.addf %214, %248 : vector<8x8x128xf32>
      %c11_121 = arith.constant 11 : index
      %250 = memref.load %arg4[%c11_121] : memref<50xf32, #tpu.memory_space<smem>>
      %251 = vector.extract_strided_slice %219 {offsets = [1, 0, 0], sizes = [8, 8, 128], strides = [1, 1, 1]} : vector<12x8x128xf32> to vector<8x8x128xf32>
      %252 = vector.broadcast %250 : f32 to vector<8x8x128xf32>
      %253 = arith.mulf %252, %251 : vector<8x8x128xf32>
      %254 = arith.addf %249, %253 : vector<8x8x128xf32>
      %c12_122 = arith.constant 12 : index
      %255 = memref.load %arg4[%c12_122] : memref<50xf32, #tpu.memory_space<smem>>
      %256 = vector.extract_strided_slice %219 {offsets = [2, 0, 0], sizes = [8, 8, 128], strides = [1, 1, 1]} : vector<12x8x128xf32> to vector<8x8x128xf32>
      %257 = vector.broadcast %255 : f32 to vector<8x8x128xf32>
      %258 = arith.mulf %257, %256 : vector<8x8x128xf32>
      %259 = arith.addf %254, %258 : vector<8x8x128xf32>
      %c13_123 = arith.constant 13 : index
      %260 = memref.load %arg4[%c13_123] : memref<50xf32, #tpu.memory_space<smem>>
      %261 = vector.extract_strided_slice %219 {offsets = [3, 0, 0], sizes = [8, 8, 128], strides = [1, 1, 1]} : vector<12x8x128xf32> to vector<8x8x128xf32>
      %262 = vector.broadcast %260 : f32 to vector<8x8x128xf32>
      %263 = arith.mulf %262, %261 : vector<8x8x128xf32>
      %264 = arith.addf %259, %263 : vector<8x8x128xf32>
      %c14_124 = arith.constant 14 : index
      %265 = memref.load %arg4[%c14_124] : memref<50xf32, #tpu.memory_space<smem>>
      %266 = vector.extract_strided_slice %219 {offsets = [4, 0, 0], sizes = [8, 8, 128], strides = [1, 1, 1]} : vector<12x8x128xf32> to vector<8x8x128xf32>
      %267 = vector.broadcast %265 : f32 to vector<8x8x128xf32>
      %268 = arith.mulf %267, %266 : vector<8x8x128xf32>
      %269 = arith.addf %264, %268 : vector<8x8x128xf32>
      %c2_i32_125 = arith.constant 2 : i32
      %270 = arith.muli %c2_i32_125, %arg12 : i32
      %c4_i32_126 = arith.constant 4 : i32
      %271 = arith.addi %270, %c4_i32_126 : i32
      %272 = arith.index_cast %271 : i32 to index
      %c0_127 = arith.constant 0 : index
      %c0_128 = arith.constant 0 : index
      %c0_129 = arith.constant 0 : index
      %273 = vector.load %arg10[%272, %c0_127, %c0_128, %c0_129] : memref<12x12x8x128xf32, #tpu.memory_space<vmem>>, vector<1x12x8x128xf32>
      %274 = vector.shape_cast %273 : vector<1x12x8x128xf32> to vector<12x8x128xf32>
      %c20 = arith.constant 20 : index
      %275 = memref.load %arg4[%c20] : memref<50xf32, #tpu.memory_space<smem>>
      %276 = vector.extract_strided_slice %274 {offsets = [0, 0, 0], sizes = [8, 8, 128], strides = [1, 1, 1]} : vector<12x8x128xf32> to vector<8x8x128xf32>
      %277 = vector.broadcast %275 : f32 to vector<8x8x128xf32>
      %278 = arith.mulf %277, %276 : vector<8x8x128xf32>
      %279 = arith.addf %244, %278 : vector<8x8x128xf32>
      %c21 = arith.constant 21 : index
      %280 = memref.load %arg4[%c21] : memref<50xf32, #tpu.memory_space<smem>>
      %281 = vector.extract_strided_slice %274 {offsets = [1, 0, 0], sizes = [8, 8, 128], strides = [1, 1, 1]} : vector<12x8x128xf32> to vector<8x8x128xf32>
      %282 = vector.broadcast %280 : f32 to vector<8x8x128xf32>
      %283 = arith.mulf %282, %281 : vector<8x8x128xf32>
      %284 = arith.addf %279, %283 : vector<8x8x128xf32>
      %c22 = arith.constant 22 : index
      %285 = memref.load %arg4[%c22] : memref<50xf32, #tpu.memory_space<smem>>
      %286 = vector.extract_strided_slice %274 {offsets = [2, 0, 0], sizes = [8, 8, 128], strides = [1, 1, 1]} : vector<12x8x128xf32> to vector<8x8x128xf32>
      %287 = vector.broadcast %285 : f32 to vector<8x8x128xf32>
      %288 = arith.mulf %287, %286 : vector<8x8x128xf32>
      %289 = arith.addf %284, %288 : vector<8x8x128xf32>
      %c23 = arith.constant 23 : index
      %290 = memref.load %arg4[%c23] : memref<50xf32, #tpu.memory_space<smem>>
      %291 = vector.extract_strided_slice %274 {offsets = [3, 0, 0], sizes = [8, 8, 128], strides = [1, 1, 1]} : vector<12x8x128xf32> to vector<8x8x128xf32>
      %292 = vector.broadcast %290 : f32 to vector<8x8x128xf32>
      %293 = arith.mulf %292, %291 : vector<8x8x128xf32>
      %294 = arith.addf %289, %293 : vector<8x8x128xf32>
      %c24 = arith.constant 24 : index
      %295 = memref.load %arg4[%c24] : memref<50xf32, #tpu.memory_space<smem>>
      %296 = vector.extract_strided_slice %274 {offsets = [4, 0, 0], sizes = [8, 8, 128], strides = [1, 1, 1]} : vector<12x8x128xf32> to vector<8x8x128xf32>
      %297 = vector.broadcast %295 : f32 to vector<8x8x128xf32>
      %298 = arith.mulf %297, %296 : vector<8x8x128xf32>
      %299 = arith.addf %294, %298 : vector<8x8x128xf32>
      %c15_130 = arith.constant 15 : index
      %300 = memref.load %arg4[%c15_130] : memref<50xf32, #tpu.memory_space<smem>>
      %301 = vector.extract_strided_slice %274 {offsets = [0, 0, 0], sizes = [8, 8, 128], strides = [1, 1, 1]} : vector<12x8x128xf32> to vector<8x8x128xf32>
      %302 = vector.broadcast %300 : f32 to vector<8x8x128xf32>
      %303 = arith.mulf %302, %301 : vector<8x8x128xf32>
      %304 = arith.addf %269, %303 : vector<8x8x128xf32>
      %c16_131 = arith.constant 16 : index
      %305 = memref.load %arg4[%c16_131] : memref<50xf32, #tpu.memory_space<smem>>
      %306 = vector.extract_strided_slice %274 {offsets = [1, 0, 0], sizes = [8, 8, 128], strides = [1, 1, 1]} : vector<12x8x128xf32> to vector<8x8x128xf32>
      %307 = vector.broadcast %305 : f32 to vector<8x8x128xf32>
      %308 = arith.mulf %307, %306 : vector<8x8x128xf32>
      %309 = arith.addf %304, %308 : vector<8x8x128xf32>
      %c17_132 = arith.constant 17 : index
      %310 = memref.load %arg4[%c17_132] : memref<50xf32, #tpu.memory_space<smem>>
      %311 = vector.extract_strided_slice %274 {offsets = [2, 0, 0], sizes = [8, 8, 128], strides = [1, 1, 1]} : vector<12x8x128xf32> to vector<8x8x128xf32>
      %312 = vector.broadcast %310 : f32 to vector<8x8x128xf32>
      %313 = arith.mulf %312, %311 : vector<8x8x128xf32>
      %314 = arith.addf %309, %313 : vector<8x8x128xf32>
      %c18_133 = arith.constant 18 : index
      %315 = memref.load %arg4[%c18_133] : memref<50xf32, #tpu.memory_space<smem>>
      %316 = vector.extract_strided_slice %274 {offsets = [3, 0, 0], sizes = [8, 8, 128], strides = [1, 1, 1]} : vector<12x8x128xf32> to vector<8x8x128xf32>
      %317 = vector.broadcast %315 : f32 to vector<8x8x128xf32>
      %318 = arith.mulf %317, %316 : vector<8x8x128xf32>
      %319 = arith.addf %314, %318 : vector<8x8x128xf32>
      %c19_134 = arith.constant 19 : index
      %320 = memref.load %arg4[%c19_134] : memref<50xf32, #tpu.memory_space<smem>>
      %321 = vector.extract_strided_slice %274 {offsets = [4, 0, 0], sizes = [8, 8, 128], strides = [1, 1, 1]} : vector<12x8x128xf32> to vector<8x8x128xf32>
      %322 = vector.broadcast %320 : f32 to vector<8x8x128xf32>
      %323 = arith.mulf %322, %321 : vector<8x8x128xf32>
      %324 = arith.addf %319, %323 : vector<8x8x128xf32>
      %c2_i32_135 = arith.constant 2 : i32
      %325 = arith.muli %c2_i32_135, %arg12 : i32
      %c5_i32 = arith.constant 5 : i32
      %326 = arith.addi %325, %c5_i32 : i32
      %327 = arith.index_cast %326 : i32 to index
      %c0_136 = arith.constant 0 : index
      %c0_137 = arith.constant 0 : index
      %c0_138 = arith.constant 0 : index
      %328 = vector.load %arg10[%327, %c0_136, %c0_137, %c0_138] : memref<12x12x8x128xf32, #tpu.memory_space<vmem>>, vector<1x12x8x128xf32>
      %329 = vector.shape_cast %328 : vector<1x12x8x128xf32> to vector<12x8x128xf32>
      %c20_139 = arith.constant 20 : index
      %330 = memref.load %arg4[%c20_139] : memref<50xf32, #tpu.memory_space<smem>>
      %331 = vector.extract_strided_slice %329 {offsets = [0, 0, 0], sizes = [8, 8, 128], strides = [1, 1, 1]} : vector<12x8x128xf32> to vector<8x8x128xf32>
      %332 = vector.broadcast %330 : f32 to vector<8x8x128xf32>
      %333 = arith.mulf %332, %331 : vector<8x8x128xf32>
      %334 = arith.addf %324, %333 : vector<8x8x128xf32>
      %c21_140 = arith.constant 21 : index
      %335 = memref.load %arg4[%c21_140] : memref<50xf32, #tpu.memory_space<smem>>
      %336 = vector.extract_strided_slice %329 {offsets = [1, 0, 0], sizes = [8, 8, 128], strides = [1, 1, 1]} : vector<12x8x128xf32> to vector<8x8x128xf32>
      %337 = vector.broadcast %335 : f32 to vector<8x8x128xf32>
      %338 = arith.mulf %337, %336 : vector<8x8x128xf32>
      %339 = arith.addf %334, %338 : vector<8x8x128xf32>
      %c22_141 = arith.constant 22 : index
      %340 = memref.load %arg4[%c22_141] : memref<50xf32, #tpu.memory_space<smem>>
      %341 = vector.extract_strided_slice %329 {offsets = [2, 0, 0], sizes = [8, 8, 128], strides = [1, 1, 1]} : vector<12x8x128xf32> to vector<8x8x128xf32>
      %342 = vector.broadcast %340 : f32 to vector<8x8x128xf32>
      %343 = arith.mulf %342, %341 : vector<8x8x128xf32>
      %344 = arith.addf %339, %343 : vector<8x8x128xf32>
      %c23_142 = arith.constant 23 : index
      %345 = memref.load %arg4[%c23_142] : memref<50xf32, #tpu.memory_space<smem>>
      %346 = vector.extract_strided_slice %329 {offsets = [3, 0, 0], sizes = [8, 8, 128], strides = [1, 1, 1]} : vector<12x8x128xf32> to vector<8x8x128xf32>
      %347 = vector.broadcast %345 : f32 to vector<8x8x128xf32>
      %348 = arith.mulf %347, %346 : vector<8x8x128xf32>
      %349 = arith.addf %344, %348 : vector<8x8x128xf32>
      %c24_143 = arith.constant 24 : index
      %350 = memref.load %arg4[%c24_143] : memref<50xf32, #tpu.memory_space<smem>>
      %351 = vector.extract_strided_slice %329 {offsets = [4, 0, 0], sizes = [8, 8, 128], strides = [1, 1, 1]} : vector<12x8x128xf32> to vector<8x8x128xf32>
      %352 = vector.broadcast %350 : f32 to vector<8x8x128xf32>
      %353 = arith.mulf %352, %351 : vector<8x8x128xf32>
      %354 = arith.addf %349, %353 : vector<8x8x128xf32>
      %c2_i32_144 = arith.constant 2 : i32
      %355 = arith.muli %c2_i32_144, %arg12 : i32
      %c0_i32_145 = arith.constant 0 : i32
      %356 = arith.addi %355, %c0_i32_145 : i32
      %357 = arith.index_cast %356 : i32 to index
      %c0_146 = arith.constant 0 : index
      %c0_147 = arith.constant 0 : index
      %c0_148 = arith.constant 0 : index
      %358 = vector.load %arg11[%357, %c0_146, %c0_147, %c0_148] : memref<12x12x8x128xf32, #tpu.memory_space<vmem>>, vector<1x12x8x128xf32>
      %359 = vector.shape_cast %358 : vector<1x12x8x128xf32> to vector<12x8x128xf32>
      %c25 = arith.constant 25 : index
      %360 = memref.load %arg4[%c25] : memref<50xf32, #tpu.memory_space<smem>>
      %361 = vector.extract_strided_slice %359 {offsets = [0, 0, 0], sizes = [8, 8, 128], strides = [1, 1, 1]} : vector<12x8x128xf32> to vector<8x8x128xf32>
      %362 = vector.broadcast %360 : f32 to vector<8x8x128xf32>
      %363 = arith.mulf %362, %361 : vector<8x8x128xf32>
      %364 = arith.addf %299, %363 : vector<8x8x128xf32>
      %c26 = arith.constant 26 : index
      %365 = memref.load %arg4[%c26] : memref<50xf32, #tpu.memory_space<smem>>
      %366 = vector.extract_strided_slice %359 {offsets = [1, 0, 0], sizes = [8, 8, 128], strides = [1, 1, 1]} : vector<12x8x128xf32> to vector<8x8x128xf32>
      %367 = vector.broadcast %365 : f32 to vector<8x8x128xf32>
      %368 = arith.mulf %367, %366 : vector<8x8x128xf32>
      %369 = arith.addf %364, %368 : vector<8x8x128xf32>
      %c27 = arith.constant 27 : index
      %370 = memref.load %arg4[%c27] : memref<50xf32, #tpu.memory_space<smem>>
      %371 = vector.extract_strided_slice %359 {offsets = [2, 0, 0], sizes = [8, 8, 128], strides = [1, 1, 1]} : vector<12x8x128xf32> to vector<8x8x128xf32>
      %372 = vector.broadcast %370 : f32 to vector<8x8x128xf32>
      %373 = arith.mulf %372, %371 : vector<8x8x128xf32>
      %374 = arith.addf %369, %373 : vector<8x8x128xf32>
      %c28 = arith.constant 28 : index
      %375 = memref.load %arg4[%c28] : memref<50xf32, #tpu.memory_space<smem>>
      %376 = vector.extract_strided_slice %359 {offsets = [3, 0, 0], sizes = [8, 8, 128], strides = [1, 1, 1]} : vector<12x8x128xf32> to vector<8x8x128xf32>
      %377 = vector.broadcast %375 : f32 to vector<8x8x128xf32>
      %378 = arith.mulf %377, %376 : vector<8x8x128xf32>
      %379 = arith.addf %374, %378 : vector<8x8x128xf32>
      %c29 = arith.constant 29 : index
      %380 = memref.load %arg4[%c29] : memref<50xf32, #tpu.memory_space<smem>>
      %381 = vector.extract_strided_slice %359 {offsets = [4, 0, 0], sizes = [8, 8, 128], strides = [1, 1, 1]} : vector<12x8x128xf32> to vector<8x8x128xf32>
      %382 = vector.broadcast %380 : f32 to vector<8x8x128xf32>
      %383 = arith.mulf %382, %381 : vector<8x8x128xf32>
      %384 = arith.addf %379, %383 : vector<8x8x128xf32>
      %c2_i32_149 = arith.constant 2 : i32
      %385 = arith.muli %c2_i32_149, %arg12 : i32
      %c1_i32_150 = arith.constant 1 : i32
      %386 = arith.addi %385, %c1_i32_150 : i32
      %387 = arith.index_cast %386 : i32 to index
      %c0_151 = arith.constant 0 : index
      %c0_152 = arith.constant 0 : index
      %c0_153 = arith.constant 0 : index
      %388 = vector.load %arg11[%387, %c0_151, %c0_152, %c0_153] : memref<12x12x8x128xf32, #tpu.memory_space<vmem>>, vector<1x12x8x128xf32>
      %389 = vector.shape_cast %388 : vector<1x12x8x128xf32> to vector<12x8x128xf32>
      %c30 = arith.constant 30 : index
      %390 = memref.load %arg4[%c30] : memref<50xf32, #tpu.memory_space<smem>>
      %391 = vector.extract_strided_slice %389 {offsets = [0, 0, 0], sizes = [8, 8, 128], strides = [1, 1, 1]} : vector<12x8x128xf32> to vector<8x8x128xf32>
      %392 = vector.broadcast %390 : f32 to vector<8x8x128xf32>
      %393 = arith.mulf %392, %391 : vector<8x8x128xf32>
      %394 = arith.addf %384, %393 : vector<8x8x128xf32>
      %c31 = arith.constant 31 : index
      %395 = memref.load %arg4[%c31] : memref<50xf32, #tpu.memory_space<smem>>
      %396 = vector.extract_strided_slice %389 {offsets = [1, 0, 0], sizes = [8, 8, 128], strides = [1, 1, 1]} : vector<12x8x128xf32> to vector<8x8x128xf32>
      %397 = vector.broadcast %395 : f32 to vector<8x8x128xf32>
      %398 = arith.mulf %397, %396 : vector<8x8x128xf32>
      %399 = arith.addf %394, %398 : vector<8x8x128xf32>
      %c32 = arith.constant 32 : index
      %400 = memref.load %arg4[%c32] : memref<50xf32, #tpu.memory_space<smem>>
      %401 = vector.extract_strided_slice %389 {offsets = [2, 0, 0], sizes = [8, 8, 128], strides = [1, 1, 1]} : vector<12x8x128xf32> to vector<8x8x128xf32>
      %402 = vector.broadcast %400 : f32 to vector<8x8x128xf32>
      %403 = arith.mulf %402, %401 : vector<8x8x128xf32>
      %404 = arith.addf %399, %403 : vector<8x8x128xf32>
      %c33 = arith.constant 33 : index
      %405 = memref.load %arg4[%c33] : memref<50xf32, #tpu.memory_space<smem>>
      %406 = vector.extract_strided_slice %389 {offsets = [3, 0, 0], sizes = [8, 8, 128], strides = [1, 1, 1]} : vector<12x8x128xf32> to vector<8x8x128xf32>
      %407 = vector.broadcast %405 : f32 to vector<8x8x128xf32>
      %408 = arith.mulf %407, %406 : vector<8x8x128xf32>
      %409 = arith.addf %404, %408 : vector<8x8x128xf32>
      %c34 = arith.constant 34 : index
      %410 = memref.load %arg4[%c34] : memref<50xf32, #tpu.memory_space<smem>>
      %411 = vector.extract_strided_slice %389 {offsets = [4, 0, 0], sizes = [8, 8, 128], strides = [1, 1, 1]} : vector<12x8x128xf32> to vector<8x8x128xf32>
      %412 = vector.broadcast %410 : f32 to vector<8x8x128xf32>
      %413 = arith.mulf %412, %411 : vector<8x8x128xf32>
      %414 = arith.addf %409, %413 : vector<8x8x128xf32>
      %c25_154 = arith.constant 25 : index
      %415 = memref.load %arg4[%c25_154] : memref<50xf32, #tpu.memory_space<smem>>
      %416 = vector.extract_strided_slice %389 {offsets = [0, 0, 0], sizes = [8, 8, 128], strides = [1, 1, 1]} : vector<12x8x128xf32> to vector<8x8x128xf32>
      %417 = vector.broadcast %415 : f32 to vector<8x8x128xf32>
      %418 = arith.mulf %417, %416 : vector<8x8x128xf32>
      %419 = arith.addf %354, %418 : vector<8x8x128xf32>
      %c26_155 = arith.constant 26 : index
      %420 = memref.load %arg4[%c26_155] : memref<50xf32, #tpu.memory_space<smem>>
      %421 = vector.extract_strided_slice %389 {offsets = [1, 0, 0], sizes = [8, 8, 128], strides = [1, 1, 1]} : vector<12x8x128xf32> to vector<8x8x128xf32>
      %422 = vector.broadcast %420 : f32 to vector<8x8x128xf32>
      %423 = arith.mulf %422, %421 : vector<8x8x128xf32>
      %424 = arith.addf %419, %423 : vector<8x8x128xf32>
      %c27_156 = arith.constant 27 : index
      %425 = memref.load %arg4[%c27_156] : memref<50xf32, #tpu.memory_space<smem>>
      %426 = vector.extract_strided_slice %389 {offsets = [2, 0, 0], sizes = [8, 8, 128], strides = [1, 1, 1]} : vector<12x8x128xf32> to vector<8x8x128xf32>
      %427 = vector.broadcast %425 : f32 to vector<8x8x128xf32>
      %428 = arith.mulf %427, %426 : vector<8x8x128xf32>
      %429 = arith.addf %424, %428 : vector<8x8x128xf32>
      %c28_157 = arith.constant 28 : index
      %430 = memref.load %arg4[%c28_157] : memref<50xf32, #tpu.memory_space<smem>>
      %431 = vector.extract_strided_slice %389 {offsets = [3, 0, 0], sizes = [8, 8, 128], strides = [1, 1, 1]} : vector<12x8x128xf32> to vector<8x8x128xf32>
      %432 = vector.broadcast %430 : f32 to vector<8x8x128xf32>
      %433 = arith.mulf %432, %431 : vector<8x8x128xf32>
      %434 = arith.addf %429, %433 : vector<8x8x128xf32>
      %c29_158 = arith.constant 29 : index
      %435 = memref.load %arg4[%c29_158] : memref<50xf32, #tpu.memory_space<smem>>
      %436 = vector.extract_strided_slice %389 {offsets = [4, 0, 0], sizes = [8, 8, 128], strides = [1, 1, 1]} : vector<12x8x128xf32> to vector<8x8x128xf32>
      %437 = vector.broadcast %435 : f32 to vector<8x8x128xf32>
      %438 = arith.mulf %437, %436 : vector<8x8x128xf32>
      %439 = arith.addf %434, %438 : vector<8x8x128xf32>
      %c2_i32_159 = arith.constant 2 : i32
      %440 = arith.muli %c2_i32_159, %arg12 : i32
      %c2_i32_160 = arith.constant 2 : i32
      %441 = arith.addi %440, %c2_i32_160 : i32
      %442 = arith.index_cast %441 : i32 to index
      %c0_161 = arith.constant 0 : index
      %c0_162 = arith.constant 0 : index
      %c0_163 = arith.constant 0 : index
      %443 = vector.load %arg11[%442, %c0_161, %c0_162, %c0_163] : memref<12x12x8x128xf32, #tpu.memory_space<vmem>>, vector<1x12x8x128xf32>
      %444 = vector.shape_cast %443 : vector<1x12x8x128xf32> to vector<12x8x128xf32>
      %c35 = arith.constant 35 : index
      %445 = memref.load %arg4[%c35] : memref<50xf32, #tpu.memory_space<smem>>
      %446 = vector.extract_strided_slice %444 {offsets = [0, 0, 0], sizes = [8, 8, 128], strides = [1, 1, 1]} : vector<12x8x128xf32> to vector<8x8x128xf32>
      %447 = vector.broadcast %445 : f32 to vector<8x8x128xf32>
      %448 = arith.mulf %447, %446 : vector<8x8x128xf32>
      %449 = arith.addf %414, %448 : vector<8x8x128xf32>
      %c36 = arith.constant 36 : index
      %450 = memref.load %arg4[%c36] : memref<50xf32, #tpu.memory_space<smem>>
      %451 = vector.extract_strided_slice %444 {offsets = [1, 0, 0], sizes = [8, 8, 128], strides = [1, 1, 1]} : vector<12x8x128xf32> to vector<8x8x128xf32>
      %452 = vector.broadcast %450 : f32 to vector<8x8x128xf32>
      %453 = arith.mulf %452, %451 : vector<8x8x128xf32>
      %454 = arith.addf %449, %453 : vector<8x8x128xf32>
      %c37 = arith.constant 37 : index
      %455 = memref.load %arg4[%c37] : memref<50xf32, #tpu.memory_space<smem>>
      %456 = vector.extract_strided_slice %444 {offsets = [2, 0, 0], sizes = [8, 8, 128], strides = [1, 1, 1]} : vector<12x8x128xf32> to vector<8x8x128xf32>
      %457 = vector.broadcast %455 : f32 to vector<8x8x128xf32>
      %458 = arith.mulf %457, %456 : vector<8x8x128xf32>
      %459 = arith.addf %454, %458 : vector<8x8x128xf32>
      %c38 = arith.constant 38 : index
      %460 = memref.load %arg4[%c38] : memref<50xf32, #tpu.memory_space<smem>>
      %461 = vector.extract_strided_slice %444 {offsets = [3, 0, 0], sizes = [8, 8, 128], strides = [1, 1, 1]} : vector<12x8x128xf32> to vector<8x8x128xf32>
      %462 = vector.broadcast %460 : f32 to vector<8x8x128xf32>
      %463 = arith.mulf %462, %461 : vector<8x8x128xf32>
      %464 = arith.addf %459, %463 : vector<8x8x128xf32>
      %c39 = arith.constant 39 : index
      %465 = memref.load %arg4[%c39] : memref<50xf32, #tpu.memory_space<smem>>
      %466 = vector.extract_strided_slice %444 {offsets = [4, 0, 0], sizes = [8, 8, 128], strides = [1, 1, 1]} : vector<12x8x128xf32> to vector<8x8x128xf32>
      %467 = vector.broadcast %465 : f32 to vector<8x8x128xf32>
      %468 = arith.mulf %467, %466 : vector<8x8x128xf32>
      %469 = arith.addf %464, %468 : vector<8x8x128xf32>
      %c30_164 = arith.constant 30 : index
      %470 = memref.load %arg4[%c30_164] : memref<50xf32, #tpu.memory_space<smem>>
      %471 = vector.extract_strided_slice %444 {offsets = [0, 0, 0], sizes = [8, 8, 128], strides = [1, 1, 1]} : vector<12x8x128xf32> to vector<8x8x128xf32>
      %472 = vector.broadcast %470 : f32 to vector<8x8x128xf32>
      %473 = arith.mulf %472, %471 : vector<8x8x128xf32>
      %474 = arith.addf %439, %473 : vector<8x8x128xf32>
      %c31_165 = arith.constant 31 : index
      %475 = memref.load %arg4[%c31_165] : memref<50xf32, #tpu.memory_space<smem>>
      %476 = vector.extract_strided_slice %444 {offsets = [1, 0, 0], sizes = [8, 8, 128], strides = [1, 1, 1]} : vector<12x8x128xf32> to vector<8x8x128xf32>
      %477 = vector.broadcast %475 : f32 to vector<8x8x128xf32>
      %478 = arith.mulf %477, %476 : vector<8x8x128xf32>
      %479 = arith.addf %474, %478 : vector<8x8x128xf32>
      %c32_166 = arith.constant 32 : index
      %480 = memref.load %arg4[%c32_166] : memref<50xf32, #tpu.memory_space<smem>>
      %481 = vector.extract_strided_slice %444 {offsets = [2, 0, 0], sizes = [8, 8, 128], strides = [1, 1, 1]} : vector<12x8x128xf32> to vector<8x8x128xf32>
      %482 = vector.broadcast %480 : f32 to vector<8x8x128xf32>
      %483 = arith.mulf %482, %481 : vector<8x8x128xf32>
      %484 = arith.addf %479, %483 : vector<8x8x128xf32>
      %c33_167 = arith.constant 33 : index
      %485 = memref.load %arg4[%c33_167] : memref<50xf32, #tpu.memory_space<smem>>
      %486 = vector.extract_strided_slice %444 {offsets = [3, 0, 0], sizes = [8, 8, 128], strides = [1, 1, 1]} : vector<12x8x128xf32> to vector<8x8x128xf32>
      %487 = vector.broadcast %485 : f32 to vector<8x8x128xf32>
      %488 = arith.mulf %487, %486 : vector<8x8x128xf32>
      %489 = arith.addf %484, %488 : vector<8x8x128xf32>
      %c34_168 = arith.constant 34 : index
      %490 = memref.load %arg4[%c34_168] : memref<50xf32, #tpu.memory_space<smem>>
      %491 = vector.extract_strided_slice %444 {offsets = [4, 0, 0], sizes = [8, 8, 128], strides = [1, 1, 1]} : vector<12x8x128xf32> to vector<8x8x128xf32>
      %492 = vector.broadcast %490 : f32 to vector<8x8x128xf32>
      %493 = arith.mulf %492, %491 : vector<8x8x128xf32>
      %494 = arith.addf %489, %493 : vector<8x8x128xf32>
      %c2_i32_169 = arith.constant 2 : i32
      %495 = arith.muli %c2_i32_169, %arg12 : i32
      %c3_i32_170 = arith.constant 3 : i32
      %496 = arith.addi %495, %c3_i32_170 : i32
      %497 = arith.index_cast %496 : i32 to index
      %c0_171 = arith.constant 0 : index
      %c0_172 = arith.constant 0 : index
      %c0_173 = arith.constant 0 : index
      %498 = vector.load %arg11[%497, %c0_171, %c0_172, %c0_173] : memref<12x12x8x128xf32, #tpu.memory_space<vmem>>, vector<1x12x8x128xf32>
      %499 = vector.shape_cast %498 : vector<1x12x8x128xf32> to vector<12x8x128xf32>
      %c40 = arith.constant 40 : index
      %500 = memref.load %arg4[%c40] : memref<50xf32, #tpu.memory_space<smem>>
      %501 = vector.extract_strided_slice %499 {offsets = [0, 0, 0], sizes = [8, 8, 128], strides = [1, 1, 1]} : vector<12x8x128xf32> to vector<8x8x128xf32>
      %502 = vector.broadcast %500 : f32 to vector<8x8x128xf32>
      %503 = arith.mulf %502, %501 : vector<8x8x128xf32>
      %504 = arith.addf %469, %503 : vector<8x8x128xf32>
      %c41 = arith.constant 41 : index
      %505 = memref.load %arg4[%c41] : memref<50xf32, #tpu.memory_space<smem>>
      %506 = vector.extract_strided_slice %499 {offsets = [1, 0, 0], sizes = [8, 8, 128], strides = [1, 1, 1]} : vector<12x8x128xf32> to vector<8x8x128xf32>
      %507 = vector.broadcast %505 : f32 to vector<8x8x128xf32>
      %508 = arith.mulf %507, %506 : vector<8x8x128xf32>
      %509 = arith.addf %504, %508 : vector<8x8x128xf32>
      %c42 = arith.constant 42 : index
      %510 = memref.load %arg4[%c42] : memref<50xf32, #tpu.memory_space<smem>>
      %511 = vector.extract_strided_slice %499 {offsets = [2, 0, 0], sizes = [8, 8, 128], strides = [1, 1, 1]} : vector<12x8x128xf32> to vector<8x8x128xf32>
      %512 = vector.broadcast %510 : f32 to vector<8x8x128xf32>
      %513 = arith.mulf %512, %511 : vector<8x8x128xf32>
      %514 = arith.addf %509, %513 : vector<8x8x128xf32>
      %c43 = arith.constant 43 : index
      %515 = memref.load %arg4[%c43] : memref<50xf32, #tpu.memory_space<smem>>
      %516 = vector.extract_strided_slice %499 {offsets = [3, 0, 0], sizes = [8, 8, 128], strides = [1, 1, 1]} : vector<12x8x128xf32> to vector<8x8x128xf32>
      %517 = vector.broadcast %515 : f32 to vector<8x8x128xf32>
      %518 = arith.mulf %517, %516 : vector<8x8x128xf32>
      %519 = arith.addf %514, %518 : vector<8x8x128xf32>
      %c44 = arith.constant 44 : index
      %520 = memref.load %arg4[%c44] : memref<50xf32, #tpu.memory_space<smem>>
      %521 = vector.extract_strided_slice %499 {offsets = [4, 0, 0], sizes = [8, 8, 128], strides = [1, 1, 1]} : vector<12x8x128xf32> to vector<8x8x128xf32>
      %522 = vector.broadcast %520 : f32 to vector<8x8x128xf32>
      %523 = arith.mulf %522, %521 : vector<8x8x128xf32>
      %524 = arith.addf %519, %523 : vector<8x8x128xf32>
      %c35_174 = arith.constant 35 : index
      %525 = memref.load %arg4[%c35_174] : memref<50xf32, #tpu.memory_space<smem>>
      %526 = vector.extract_strided_slice %499 {offsets = [0, 0, 0], sizes = [8, 8, 128], strides = [1, 1, 1]} : vector<12x8x128xf32> to vector<8x8x128xf32>
      %527 = vector.broadcast %525 : f32 to vector<8x8x128xf32>
      %528 = arith.mulf %527, %526 : vector<8x8x128xf32>
      %529 = arith.addf %494, %528 : vector<8x8x128xf32>
      %c36_175 = arith.constant 36 : index
      %530 = memref.load %arg4[%c36_175] : memref<50xf32, #tpu.memory_space<smem>>
      %531 = vector.extract_strided_slice %499 {offsets = [1, 0, 0], sizes = [8, 8, 128], strides = [1, 1, 1]} : vector<12x8x128xf32> to vector<8x8x128xf32>
      %532 = vector.broadcast %530 : f32 to vector<8x8x128xf32>
      %533 = arith.mulf %532, %531 : vector<8x8x128xf32>
      %534 = arith.addf %529, %533 : vector<8x8x128xf32>
      %c37_176 = arith.constant 37 : index
      %535 = memref.load %arg4[%c37_176] : memref<50xf32, #tpu.memory_space<smem>>
      %536 = vector.extract_strided_slice %499 {offsets = [2, 0, 0], sizes = [8, 8, 128], strides = [1, 1, 1]} : vector<12x8x128xf32> to vector<8x8x128xf32>
      %537 = vector.broadcast %535 : f32 to vector<8x8x128xf32>
      %538 = arith.mulf %537, %536 : vector<8x8x128xf32>
      %539 = arith.addf %534, %538 : vector<8x8x128xf32>
      %c38_177 = arith.constant 38 : index
      %540 = memref.load %arg4[%c38_177] : memref<50xf32, #tpu.memory_space<smem>>
      %541 = vector.extract_strided_slice %499 {offsets = [3, 0, 0], sizes = [8, 8, 128], strides = [1, 1, 1]} : vector<12x8x128xf32> to vector<8x8x128xf32>
      %542 = vector.broadcast %540 : f32 to vector<8x8x128xf32>
      %543 = arith.mulf %542, %541 : vector<8x8x128xf32>
      %544 = arith.addf %539, %543 : vector<8x8x128xf32>
      %c39_178 = arith.constant 39 : index
      %545 = memref.load %arg4[%c39_178] : memref<50xf32, #tpu.memory_space<smem>>
      %546 = vector.extract_strided_slice %499 {offsets = [4, 0, 0], sizes = [8, 8, 128], strides = [1, 1, 1]} : vector<12x8x128xf32> to vector<8x8x128xf32>
      %547 = vector.broadcast %545 : f32 to vector<8x8x128xf32>
      %548 = arith.mulf %547, %546 : vector<8x8x128xf32>
      %549 = arith.addf %544, %548 : vector<8x8x128xf32>
      %c2_i32_179 = arith.constant 2 : i32
      %550 = arith.muli %c2_i32_179, %arg12 : i32
      %c4_i32_180 = arith.constant 4 : i32
      %551 = arith.addi %550, %c4_i32_180 : i32
      %552 = arith.index_cast %551 : i32 to index
      %c0_181 = arith.constant 0 : index
      %c0_182 = arith.constant 0 : index
      %c0_183 = arith.constant 0 : index
      %553 = vector.load %arg11[%552, %c0_181, %c0_182, %c0_183] : memref<12x12x8x128xf32, #tpu.memory_space<vmem>>, vector<1x12x8x128xf32>
      %554 = vector.shape_cast %553 : vector<1x12x8x128xf32> to vector<12x8x128xf32>
      %c45 = arith.constant 45 : index
      %555 = memref.load %arg4[%c45] : memref<50xf32, #tpu.memory_space<smem>>
      %556 = vector.extract_strided_slice %554 {offsets = [0, 0, 0], sizes = [8, 8, 128], strides = [1, 1, 1]} : vector<12x8x128xf32> to vector<8x8x128xf32>
      %557 = vector.broadcast %555 : f32 to vector<8x8x128xf32>
      %558 = arith.mulf %557, %556 : vector<8x8x128xf32>
      %559 = arith.addf %524, %558 : vector<8x8x128xf32>
      %c46 = arith.constant 46 : index
      %560 = memref.load %arg4[%c46] : memref<50xf32, #tpu.memory_space<smem>>
      %561 = vector.extract_strided_slice %554 {offsets = [1, 0, 0], sizes = [8, 8, 128], strides = [1, 1, 1]} : vector<12x8x128xf32> to vector<8x8x128xf32>
      %562 = vector.broadcast %560 : f32 to vector<8x8x128xf32>
      %563 = arith.mulf %562, %561 : vector<8x8x128xf32>
      %564 = arith.addf %559, %563 : vector<8x8x128xf32>
      %c47 = arith.constant 47 : index
      %565 = memref.load %arg4[%c47] : memref<50xf32, #tpu.memory_space<smem>>
      %566 = vector.extract_strided_slice %554 {offsets = [2, 0, 0], sizes = [8, 8, 128], strides = [1, 1, 1]} : vector<12x8x128xf32> to vector<8x8x128xf32>
      %567 = vector.broadcast %565 : f32 to vector<8x8x128xf32>
      %568 = arith.mulf %567, %566 : vector<8x8x128xf32>
      %569 = arith.addf %564, %568 : vector<8x8x128xf32>
      %c48 = arith.constant 48 : index
      %570 = memref.load %arg4[%c48] : memref<50xf32, #tpu.memory_space<smem>>
      %571 = vector.extract_strided_slice %554 {offsets = [3, 0, 0], sizes = [8, 8, 128], strides = [1, 1, 1]} : vector<12x8x128xf32> to vector<8x8x128xf32>
      %572 = vector.broadcast %570 : f32 to vector<8x8x128xf32>
      %573 = arith.mulf %572, %571 : vector<8x8x128xf32>
      %574 = arith.addf %569, %573 : vector<8x8x128xf32>
      %c49 = arith.constant 49 : index
      %575 = memref.load %arg4[%c49] : memref<50xf32, #tpu.memory_space<smem>>
      %576 = vector.extract_strided_slice %554 {offsets = [4, 0, 0], sizes = [8, 8, 128], strides = [1, 1, 1]} : vector<12x8x128xf32> to vector<8x8x128xf32>
      %577 = vector.broadcast %575 : f32 to vector<8x8x128xf32>
      %578 = arith.mulf %577, %576 : vector<8x8x128xf32>
      %579 = arith.addf %574, %578 : vector<8x8x128xf32>
      %c40_184 = arith.constant 40 : index
      %580 = memref.load %arg4[%c40_184] : memref<50xf32, #tpu.memory_space<smem>>
      %581 = vector.extract_strided_slice %554 {offsets = [0, 0, 0], sizes = [8, 8, 128], strides = [1, 1, 1]} : vector<12x8x128xf32> to vector<8x8x128xf32>
      %582 = vector.broadcast %580 : f32 to vector<8x8x128xf32>
      %583 = arith.mulf %582, %581 : vector<8x8x128xf32>
      %584 = arith.addf %549, %583 : vector<8x8x128xf32>
      %c41_185 = arith.constant 41 : index
      %585 = memref.load %arg4[%c41_185] : memref<50xf32, #tpu.memory_space<smem>>
      %586 = vector.extract_strided_slice %554 {offsets = [1, 0, 0], sizes = [8, 8, 128], strides = [1, 1, 1]} : vector<12x8x128xf32> to vector<8x8x128xf32>
      %587 = vector.broadcast %585 : f32 to vector<8x8x128xf32>
      %588 = arith.mulf %587, %586 : vector<8x8x128xf32>
      %589 = arith.addf %584, %588 : vector<8x8x128xf32>
      %c42_186 = arith.constant 42 : index
      %590 = memref.load %arg4[%c42_186] : memref<50xf32, #tpu.memory_space<smem>>
      %591 = vector.extract_strided_slice %554 {offsets = [2, 0, 0], sizes = [8, 8, 128], strides = [1, 1, 1]} : vector<12x8x128xf32> to vector<8x8x128xf32>
      %592 = vector.broadcast %590 : f32 to vector<8x8x128xf32>
      %593 = arith.mulf %592, %591 : vector<8x8x128xf32>
      %594 = arith.addf %589, %593 : vector<8x8x128xf32>
      %c43_187 = arith.constant 43 : index
      %595 = memref.load %arg4[%c43_187] : memref<50xf32, #tpu.memory_space<smem>>
      %596 = vector.extract_strided_slice %554 {offsets = [3, 0, 0], sizes = [8, 8, 128], strides = [1, 1, 1]} : vector<12x8x128xf32> to vector<8x8x128xf32>
      %597 = vector.broadcast %595 : f32 to vector<8x8x128xf32>
      %598 = arith.mulf %597, %596 : vector<8x8x128xf32>
      %599 = arith.addf %594, %598 : vector<8x8x128xf32>
      %c44_188 = arith.constant 44 : index
      %600 = memref.load %arg4[%c44_188] : memref<50xf32, #tpu.memory_space<smem>>
      %601 = vector.extract_strided_slice %554 {offsets = [4, 0, 0], sizes = [8, 8, 128], strides = [1, 1, 1]} : vector<12x8x128xf32> to vector<8x8x128xf32>
      %602 = vector.broadcast %600 : f32 to vector<8x8x128xf32>
      %603 = arith.mulf %602, %601 : vector<8x8x128xf32>
      %604 = arith.addf %599, %603 : vector<8x8x128xf32>
      %c2_i32_189 = arith.constant 2 : i32
      %605 = arith.muli %c2_i32_189, %arg12 : i32
      %c5_i32_190 = arith.constant 5 : i32
      %606 = arith.addi %605, %c5_i32_190 : i32
      %607 = arith.index_cast %606 : i32 to index
      %c0_191 = arith.constant 0 : index
      %c0_192 = arith.constant 0 : index
      %c0_193 = arith.constant 0 : index
      %608 = vector.load %arg11[%607, %c0_191, %c0_192, %c0_193] : memref<12x12x8x128xf32, #tpu.memory_space<vmem>>, vector<1x12x8x128xf32>
      %609 = vector.shape_cast %608 : vector<1x12x8x128xf32> to vector<12x8x128xf32>
      %c45_194 = arith.constant 45 : index
      %610 = memref.load %arg4[%c45_194] : memref<50xf32, #tpu.memory_space<smem>>
      %611 = vector.extract_strided_slice %609 {offsets = [0, 0, 0], sizes = [8, 8, 128], strides = [1, 1, 1]} : vector<12x8x128xf32> to vector<8x8x128xf32>
      %612 = vector.broadcast %610 : f32 to vector<8x8x128xf32>
      %613 = arith.mulf %612, %611 : vector<8x8x128xf32>
      %614 = arith.addf %604, %613 : vector<8x8x128xf32>
      %c46_195 = arith.constant 46 : index
      %615 = memref.load %arg4[%c46_195] : memref<50xf32, #tpu.memory_space<smem>>
      %616 = vector.extract_strided_slice %609 {offsets = [1, 0, 0], sizes = [8, 8, 128], strides = [1, 1, 1]} : vector<12x8x128xf32> to vector<8x8x128xf32>
      %617 = vector.broadcast %615 : f32 to vector<8x8x128xf32>
      %618 = arith.mulf %617, %616 : vector<8x8x128xf32>
      %619 = arith.addf %614, %618 : vector<8x8x128xf32>
      %c47_196 = arith.constant 47 : index
      %620 = memref.load %arg4[%c47_196] : memref<50xf32, #tpu.memory_space<smem>>
      %621 = vector.extract_strided_slice %609 {offsets = [2, 0, 0], sizes = [8, 8, 128], strides = [1, 1, 1]} : vector<12x8x128xf32> to vector<8x8x128xf32>
      %622 = vector.broadcast %620 : f32 to vector<8x8x128xf32>
      %623 = arith.mulf %622, %621 : vector<8x8x128xf32>
      %624 = arith.addf %619, %623 : vector<8x8x128xf32>
      %c48_197 = arith.constant 48 : index
      %625 = memref.load %arg4[%c48_197] : memref<50xf32, #tpu.memory_space<smem>>
      %626 = vector.extract_strided_slice %609 {offsets = [3, 0, 0], sizes = [8, 8, 128], strides = [1, 1, 1]} : vector<12x8x128xf32> to vector<8x8x128xf32>
      %627 = vector.broadcast %625 : f32 to vector<8x8x128xf32>
      %628 = arith.mulf %627, %626 : vector<8x8x128xf32>
      %629 = arith.addf %624, %628 : vector<8x8x128xf32>
      %c49_198 = arith.constant 49 : index
      %630 = memref.load %arg4[%c49_198] : memref<50xf32, #tpu.memory_space<smem>>
      %631 = vector.extract_strided_slice %609 {offsets = [4, 0, 0], sizes = [8, 8, 128], strides = [1, 1, 1]} : vector<12x8x128xf32> to vector<8x8x128xf32>
      %632 = vector.broadcast %630 : f32 to vector<8x8x128xf32>
      %633 = arith.mulf %632, %631 : vector<8x8x128xf32>
      %634 = arith.addf %629, %633 : vector<8x8x128xf32>
      %635 = arith.maximumf %579, %634 : vector<8x8x128xf32>
      %636 = vector.extract_strided_slice %635 {offsets = [0, 0, 0], sizes = [1, 8, 128], strides = [1, 1, 1]} : vector<8x8x128xf32> to vector<1x8x128xf32>
      %637 = vector.shape_cast %636 : vector<1x8x128xf32> to vector<8x128xf32>
      %638 = vector.extract_strided_slice %635 {offsets = [1, 0, 0], sizes = [1, 8, 128], strides = [1, 1, 1]} : vector<8x8x128xf32> to vector<1x8x128xf32>
      %639 = vector.shape_cast %638 : vector<1x8x128xf32> to vector<8x128xf32>
      %640 = arith.maximumf %637, %639 : vector<8x128xf32>
      %c0_199 = arith.constant 0 : index
      %641 = memref.load %arg5[%c0_199] : memref<1xf32, #tpu.memory_space<smem>>
      %642 = vector.broadcast %641 : f32 to vector<8x128xf32>
      %643 = arith.addf %640, %642 : vector<8x128xf32>
      %cst_200 = arith.constant 0.000000e+00 : f32
      %644 = vector.broadcast %cst_200 : f32 to vector<8x128xf32>
      %645 = arith.maximumf %643, %644 : vector<8x128xf32>
      %646 = vector.extract_strided_slice %635 {offsets = [2, 0, 0], sizes = [1, 8, 128], strides = [1, 1, 1]} : vector<8x8x128xf32> to vector<1x8x128xf32>
      %647 = vector.shape_cast %646 : vector<1x8x128xf32> to vector<8x128xf32>
      %648 = vector.extract_strided_slice %635 {offsets = [3, 0, 0], sizes = [1, 8, 128], strides = [1, 1, 1]} : vector<8x8x128xf32> to vector<1x8x128xf32>
      %649 = vector.shape_cast %648 : vector<1x8x128xf32> to vector<8x128xf32>
      %650 = arith.maximumf %647, %649 : vector<8x128xf32>
      %c0_201 = arith.constant 0 : index
      %651 = memref.load %arg5[%c0_201] : memref<1xf32, #tpu.memory_space<smem>>
      %652 = vector.broadcast %651 : f32 to vector<8x128xf32>
      %653 = arith.addf %650, %652 : vector<8x128xf32>
      %cst_202 = arith.constant 0.000000e+00 : f32
      %654 = vector.broadcast %cst_202 : f32 to vector<8x128xf32>
      %655 = arith.maximumf %653, %654 : vector<8x128xf32>
      %656 = vector.extract_strided_slice %635 {offsets = [4, 0, 0], sizes = [1, 8, 128], strides = [1, 1, 1]} : vector<8x8x128xf32> to vector<1x8x128xf32>
      %657 = vector.shape_cast %656 : vector<1x8x128xf32> to vector<8x128xf32>
      %658 = vector.extract_strided_slice %635 {offsets = [5, 0, 0], sizes = [1, 8, 128], strides = [1, 1, 1]} : vector<8x8x128xf32> to vector<1x8x128xf32>
      %659 = vector.shape_cast %658 : vector<1x8x128xf32> to vector<8x128xf32>
      %660 = arith.maximumf %657, %659 : vector<8x128xf32>
      %c0_203 = arith.constant 0 : index
      %661 = memref.load %arg5[%c0_203] : memref<1xf32, #tpu.memory_space<smem>>
      %662 = vector.broadcast %661 : f32 to vector<8x128xf32>
      %663 = arith.addf %660, %662 : vector<8x128xf32>
      %cst_204 = arith.constant 0.000000e+00 : f32
      %664 = vector.broadcast %cst_204 : f32 to vector<8x128xf32>
      %665 = arith.maximumf %663, %664 : vector<8x128xf32>
      %666 = vector.extract_strided_slice %635 {offsets = [6, 0, 0], sizes = [1, 8, 128], strides = [1, 1, 1]} : vector<8x8x128xf32> to vector<1x8x128xf32>
      %667 = vector.shape_cast %666 : vector<1x8x128xf32> to vector<8x128xf32>
      %668 = vector.extract_strided_slice %635 {offsets = [7, 0, 0], sizes = [1, 8, 128], strides = [1, 1, 1]} : vector<8x8x128xf32> to vector<1x8x128xf32>
      %669 = vector.shape_cast %668 : vector<1x8x128xf32> to vector<8x128xf32>
      %670 = arith.maximumf %667, %669 : vector<8x128xf32>
      %c0_205 = arith.constant 0 : index
      %671 = memref.load %arg5[%c0_205] : memref<1xf32, #tpu.memory_space<smem>>
      %672 = vector.broadcast %671 : f32 to vector<8x128xf32>
      %673 = arith.addf %670, %672 : vector<8x128xf32>
      %cst_206 = arith.constant 0.000000e+00 : f32
      %674 = vector.broadcast %cst_206 : f32 to vector<8x128xf32>
      %675 = arith.maximumf %673, %674 : vector<8x128xf32>
      %c4_i32_207 = arith.constant 4 : i32
      %676 = arith.muli %arg12, %c4_i32_207 : i32
      %c0_i32_208 = arith.constant 0 : i32
      %677 = arith.addi %c0_i32_208, %676 : i32
      %c0_i32_209 = arith.constant 0 : i32
      %678 = arith.addi %677, %c0_i32_209 : i32
      %679 = arith.index_cast %678 : i32 to index
      %680 = memref.load %arg6[%679] : memref<160xf32, #tpu.memory_space<smem>>
      %681 = vector.broadcast %680 : f32 to vector<8x128xf32>
      %682 = arith.mulf %681, %645 : vector<8x128xf32>
      %c4_i32_210 = arith.constant 4 : i32
      %683 = arith.muli %arg12, %c4_i32_210 : i32
      %c0_i32_211 = arith.constant 0 : i32
      %684 = arith.addi %c0_i32_211, %683 : i32
      %c1_i32_212 = arith.constant 1 : i32
      %685 = arith.addi %684, %c1_i32_212 : i32
      %686 = arith.index_cast %685 : i32 to index
      %687 = memref.load %arg6[%686] : memref<160xf32, #tpu.memory_space<smem>>
      %688 = vector.broadcast %687 : f32 to vector<8x128xf32>
      %689 = arith.mulf %688, %655 : vector<8x128xf32>
      %690 = arith.addf %682, %689 : vector<8x128xf32>
      %c4_i32_213 = arith.constant 4 : i32
      %691 = arith.muli %arg12, %c4_i32_213 : i32
      %c0_i32_214 = arith.constant 0 : i32
      %692 = arith.addi %c0_i32_214, %691 : i32
      %c2_i32_215 = arith.constant 2 : i32
      %693 = arith.addi %692, %c2_i32_215 : i32
      %694 = arith.index_cast %693 : i32 to index
      %695 = memref.load %arg6[%694] : memref<160xf32, #tpu.memory_space<smem>>
      %696 = vector.broadcast %695 : f32 to vector<8x128xf32>
      %697 = arith.mulf %696, %665 : vector<8x128xf32>
      %698 = arith.addf %690, %697 : vector<8x128xf32>
      %c4_i32_216 = arith.constant 4 : i32
      %699 = arith.muli %arg12, %c4_i32_216 : i32
      %c0_i32_217 = arith.constant 0 : i32
      %700 = arith.addi %c0_i32_217, %699 : i32
      %c3_i32_218 = arith.constant 3 : i32
      %701 = arith.addi %700, %c3_i32_218 : i32
      %702 = arith.index_cast %701 : i32 to index
      %703 = memref.load %arg6[%702] : memref<160xf32, #tpu.memory_space<smem>>
      %704 = vector.broadcast %703 : f32 to vector<8x128xf32>
      %705 = arith.mulf %704, %675 : vector<8x128xf32>
      %706 = arith.addf %698, %705 : vector<8x128xf32>
      %c4_i32_219 = arith.constant 4 : i32
      %707 = arith.muli %arg12, %c4_i32_219 : i32
      %c16_i32 = arith.constant 16 : i32
      %708 = arith.addi %c16_i32, %707 : i32
      %c0_i32_220 = arith.constant 0 : i32
      %709 = arith.addi %708, %c0_i32_220 : i32
      %710 = arith.index_cast %709 : i32 to index
      %711 = memref.load %arg6[%710] : memref<160xf32, #tpu.memory_space<smem>>
      %712 = vector.broadcast %711 : f32 to vector<8x128xf32>
      %713 = arith.mulf %712, %645 : vector<8x128xf32>
      %c4_i32_221 = arith.constant 4 : i32
      %714 = arith.muli %arg12, %c4_i32_221 : i32
      %c16_i32_222 = arith.constant 16 : i32
      %715 = arith.addi %c16_i32_222, %714 : i32
      %c1_i32_223 = arith.constant 1 : i32
      %716 = arith.addi %715, %c1_i32_223 : i32
      %717 = arith.index_cast %716 : i32 to index
      %718 = memref.load %arg6[%717] : memref<160xf32, #tpu.memory_space<smem>>
      %719 = vector.broadcast %718 : f32 to vector<8x128xf32>
      %720 = arith.mulf %719, %655 : vector<8x128xf32>
      %721 = arith.addf %713, %720 : vector<8x128xf32>
      %c4_i32_224 = arith.constant 4 : i32
      %722 = arith.muli %arg12, %c4_i32_224 : i32
      %c16_i32_225 = arith.constant 16 : i32
      %723 = arith.addi %c16_i32_225, %722 : i32
      %c2_i32_226 = arith.constant 2 : i32
      %724 = arith.addi %723, %c2_i32_226 : i32
      %725 = arith.index_cast %724 : i32 to index
      %726 = memref.load %arg6[%725] : memref<160xf32, #tpu.memory_space<smem>>
      %727 = vector.broadcast %726 : f32 to vector<8x128xf32>
      %728 = arith.mulf %727, %665 : vector<8x128xf32>
      %729 = arith.addf %721, %728 : vector<8x128xf32>
      %c4_i32_227 = arith.constant 4 : i32
      %730 = arith.muli %arg12, %c4_i32_227 : i32
      %c16_i32_228 = arith.constant 16 : i32
      %731 = arith.addi %c16_i32_228, %730 : i32
      %c3_i32_229 = arith.constant 3 : i32
      %732 = arith.addi %731, %c3_i32_229 : i32
      %733 = arith.index_cast %732 : i32 to index
      %734 = memref.load %arg6[%733] : memref<160xf32, #tpu.memory_space<smem>>
      %735 = vector.broadcast %734 : f32 to vector<8x128xf32>
      %736 = arith.mulf %735, %675 : vector<8x128xf32>
      %737 = arith.addf %729, %736 : vector<8x128xf32>
      %c4_i32_230 = arith.constant 4 : i32
      %738 = arith.muli %arg12, %c4_i32_230 : i32
      %c32_i32 = arith.constant 32 : i32
      %739 = arith.addi %c32_i32, %738 : i32
      %c0_i32_231 = arith.constant 0 : i32
      %740 = arith.addi %739, %c0_i32_231 : i32
      %741 = arith.index_cast %740 : i32 to index
      %742 = memref.load %arg6[%741] : memref<160xf32, #tpu.memory_space<smem>>
      %743 = vector.broadcast %742 : f32 to vector<8x128xf32>
      %744 = arith.mulf %743, %645 : vector<8x128xf32>
      %c4_i32_232 = arith.constant 4 : i32
      %745 = arith.muli %arg12, %c4_i32_232 : i32
      %c32_i32_233 = arith.constant 32 : i32
      %746 = arith.addi %c32_i32_233, %745 : i32
      %c1_i32_234 = arith.constant 1 : i32
      %747 = arith.addi %746, %c1_i32_234 : i32
      %748 = arith.index_cast %747 : i32 to index
      %749 = memref.load %arg6[%748] : memref<160xf32, #tpu.memory_space<smem>>
      %750 = vector.broadcast %749 : f32 to vector<8x128xf32>
      %751 = arith.mulf %750, %655 : vector<8x128xf32>
      %752 = arith.addf %744, %751 : vector<8x128xf32>
      %c4_i32_235 = arith.constant 4 : i32
      %753 = arith.muli %arg12, %c4_i32_235 : i32
      %c32_i32_236 = arith.constant 32 : i32
      %754 = arith.addi %c32_i32_236, %753 : i32
      %c2_i32_237 = arith.constant 2 : i32
      %755 = arith.addi %754, %c2_i32_237 : i32
      %756 = arith.index_cast %755 : i32 to index
      %757 = memref.load %arg6[%756] : memref<160xf32, #tpu.memory_space<smem>>
      %758 = vector.broadcast %757 : f32 to vector<8x128xf32>
      %759 = arith.mulf %758, %665 : vector<8x128xf32>
      %760 = arith.addf %752, %759 : vector<8x128xf32>
      %c4_i32_238 = arith.constant 4 : i32
      %761 = arith.muli %arg12, %c4_i32_238 : i32
      %c32_i32_239 = arith.constant 32 : i32
      %762 = arith.addi %c32_i32_239, %761 : i32
      %c3_i32_240 = arith.constant 3 : i32
      %763 = arith.addi %762, %c3_i32_240 : i32
      %764 = arith.index_cast %763 : i32 to index
      %765 = memref.load %arg6[%764] : memref<160xf32, #tpu.memory_space<smem>>
      %766 = vector.broadcast %765 : f32 to vector<8x128xf32>
      %767 = arith.mulf %766, %675 : vector<8x128xf32>
      %768 = arith.addf %760, %767 : vector<8x128xf32>
      %c4_i32_241 = arith.constant 4 : i32
      %769 = arith.muli %arg12, %c4_i32_241 : i32
      %c48_i32 = arith.constant 48 : i32
      %770 = arith.addi %c48_i32, %769 : i32
      %c0_i32_242 = arith.constant 0 : i32
      %771 = arith.addi %770, %c0_i32_242 : i32
      %772 = arith.index_cast %771 : i32 to index
      %773 = memref.load %arg6[%772] : memref<160xf32, #tpu.memory_space<smem>>
      %774 = vector.broadcast %773 : f32 to vector<8x128xf32>
      %775 = arith.mulf %774, %645 : vector<8x128xf32>
      %c4_i32_243 = arith.constant 4 : i32
      %776 = arith.muli %arg12, %c4_i32_243 : i32
      %c48_i32_244 = arith.constant 48 : i32
      %777 = arith.addi %c48_i32_244, %776 : i32
      %c1_i32_245 = arith.constant 1 : i32
      %778 = arith.addi %777, %c1_i32_245 : i32
      %779 = arith.index_cast %778 : i32 to index
      %780 = memref.load %arg6[%779] : memref<160xf32, #tpu.memory_space<smem>>
      %781 = vector.broadcast %780 : f32 to vector<8x128xf32>
      %782 = arith.mulf %781, %655 : vector<8x128xf32>
      %783 = arith.addf %775, %782 : vector<8x128xf32>
      %c4_i32_246 = arith.constant 4 : i32
      %784 = arith.muli %arg12, %c4_i32_246 : i32
      %c48_i32_247 = arith.constant 48 : i32
      %785 = arith.addi %c48_i32_247, %784 : i32
      %c2_i32_248 = arith.constant 2 : i32
      %786 = arith.addi %785, %c2_i32_248 : i32
      %787 = arith.index_cast %786 : i32 to index
      %788 = memref.load %arg6[%787] : memref<160xf32, #tpu.memory_space<smem>>
      %789 = vector.broadcast %788 : f32 to vector<8x128xf32>
      %790 = arith.mulf %789, %665 : vector<8x128xf32>
      %791 = arith.addf %783, %790 : vector<8x128xf32>
      %c4_i32_249 = arith.constant 4 : i32
      %792 = arith.muli %arg12, %c4_i32_249 : i32
      %c48_i32_250 = arith.constant 48 : i32
      %793 = arith.addi %c48_i32_250, %792 : i32
      %c3_i32_251 = arith.constant 3 : i32
      %794 = arith.addi %793, %c3_i32_251 : i32
      %795 = arith.index_cast %794 : i32 to index
      %796 = memref.load %arg6[%795] : memref<160xf32, #tpu.memory_space<smem>>
      %797 = vector.broadcast %796 : f32 to vector<8x128xf32>
      %798 = arith.mulf %797, %675 : vector<8x128xf32>
      %799 = arith.addf %791, %798 : vector<8x128xf32>
      %c4_i32_252 = arith.constant 4 : i32
      %800 = arith.muli %arg12, %c4_i32_252 : i32
      %c64_i32 = arith.constant 64 : i32
      %801 = arith.addi %c64_i32, %800 : i32
      %c0_i32_253 = arith.constant 0 : i32
      %802 = arith.addi %801, %c0_i32_253 : i32
      %803 = arith.index_cast %802 : i32 to index
      %804 = memref.load %arg6[%803] : memref<160xf32, #tpu.memory_space<smem>>
      %805 = vector.broadcast %804 : f32 to vector<8x128xf32>
      %806 = arith.mulf %805, %645 : vector<8x128xf32>
      %c4_i32_254 = arith.constant 4 : i32
      %807 = arith.muli %arg12, %c4_i32_254 : i32
      %c64_i32_255 = arith.constant 64 : i32
      %808 = arith.addi %c64_i32_255, %807 : i32
      %c1_i32_256 = arith.constant 1 : i32
      %809 = arith.addi %808, %c1_i32_256 : i32
      %810 = arith.index_cast %809 : i32 to index
      %811 = memref.load %arg6[%810] : memref<160xf32, #tpu.memory_space<smem>>
      %812 = vector.broadcast %811 : f32 to vector<8x128xf32>
      %813 = arith.mulf %812, %655 : vector<8x128xf32>
      %814 = arith.addf %806, %813 : vector<8x128xf32>
      %c4_i32_257 = arith.constant 4 : i32
      %815 = arith.muli %arg12, %c4_i32_257 : i32
      %c64_i32_258 = arith.constant 64 : i32
      %816 = arith.addi %c64_i32_258, %815 : i32
      %c2_i32_259 = arith.constant 2 : i32
      %817 = arith.addi %816, %c2_i32_259 : i32
      %818 = arith.index_cast %817 : i32 to index
      %819 = memref.load %arg6[%818] : memref<160xf32, #tpu.memory_space<smem>>
      %820 = vector.broadcast %819 : f32 to vector<8x128xf32>
      %821 = arith.mulf %820, %665 : vector<8x128xf32>
      %822 = arith.addf %814, %821 : vector<8x128xf32>
      %c4_i32_260 = arith.constant 4 : i32
      %823 = arith.muli %arg12, %c4_i32_260 : i32
      %c64_i32_261 = arith.constant 64 : i32
      %824 = arith.addi %c64_i32_261, %823 : i32
      %c3_i32_262 = arith.constant 3 : i32
      %825 = arith.addi %824, %c3_i32_262 : i32
      %826 = arith.index_cast %825 : i32 to index
      %827 = memref.load %arg6[%826] : memref<160xf32, #tpu.memory_space<smem>>
      %828 = vector.broadcast %827 : f32 to vector<8x128xf32>
      %829 = arith.mulf %828, %675 : vector<8x128xf32>
      %830 = arith.addf %822, %829 : vector<8x128xf32>
      %c4_i32_263 = arith.constant 4 : i32
      %831 = arith.muli %arg12, %c4_i32_263 : i32
      %c80_i32 = arith.constant 80 : i32
      %832 = arith.addi %c80_i32, %831 : i32
      %c0_i32_264 = arith.constant 0 : i32
      %833 = arith.addi %832, %c0_i32_264 : i32
      %834 = arith.index_cast %833 : i32 to index
      %835 = memref.load %arg6[%834] : memref<160xf32, #tpu.memory_space<smem>>
      %836 = vector.broadcast %835 : f32 to vector<8x128xf32>
      %837 = arith.mulf %836, %645 : vector<8x128xf32>
      %c4_i32_265 = arith.constant 4 : i32
      %838 = arith.muli %arg12, %c4_i32_265 : i32
      %c80_i32_266 = arith.constant 80 : i32
      %839 = arith.addi %c80_i32_266, %838 : i32
      %c1_i32_267 = arith.constant 1 : i32
      %840 = arith.addi %839, %c1_i32_267 : i32
      %841 = arith.index_cast %840 : i32 to index
      %842 = memref.load %arg6[%841] : memref<160xf32, #tpu.memory_space<smem>>
      %843 = vector.broadcast %842 : f32 to vector<8x128xf32>
      %844 = arith.mulf %843, %655 : vector<8x128xf32>
      %845 = arith.addf %837, %844 : vector<8x128xf32>
      %c4_i32_268 = arith.constant 4 : i32
      %846 = arith.muli %arg12, %c4_i32_268 : i32
      %c80_i32_269 = arith.constant 80 : i32
      %847 = arith.addi %c80_i32_269, %846 : i32
      %c2_i32_270 = arith.constant 2 : i32
      %848 = arith.addi %847, %c2_i32_270 : i32
      %849 = arith.index_cast %848 : i32 to index
      %850 = memref.load %arg6[%849] : memref<160xf32, #tpu.memory_space<smem>>
      %851 = vector.broadcast %850 : f32 to vector<8x128xf32>
      %852 = arith.mulf %851, %665 : vector<8x128xf32>
      %853 = arith.addf %845, %852 : vector<8x128xf32>
      %c4_i32_271 = arith.constant 4 : i32
      %854 = arith.muli %arg12, %c4_i32_271 : i32
      %c80_i32_272 = arith.constant 80 : i32
      %855 = arith.addi %c80_i32_272, %854 : i32
      %c3_i32_273 = arith.constant 3 : i32
      %856 = arith.addi %855, %c3_i32_273 : i32
      %857 = arith.index_cast %856 : i32 to index
      %858 = memref.load %arg6[%857] : memref<160xf32, #tpu.memory_space<smem>>
      %859 = vector.broadcast %858 : f32 to vector<8x128xf32>
      %860 = arith.mulf %859, %675 : vector<8x128xf32>
      %861 = arith.addf %853, %860 : vector<8x128xf32>
      %c4_i32_274 = arith.constant 4 : i32
      %862 = arith.muli %arg12, %c4_i32_274 : i32
      %c96_i32 = arith.constant 96 : i32
      %863 = arith.addi %c96_i32, %862 : i32
      %c0_i32_275 = arith.constant 0 : i32
      %864 = arith.addi %863, %c0_i32_275 : i32
      %865 = arith.index_cast %864 : i32 to index
      %866 = memref.load %arg6[%865] : memref<160xf32, #tpu.memory_space<smem>>
      %867 = vector.broadcast %866 : f32 to vector<8x128xf32>
      %868 = arith.mulf %867, %645 : vector<8x128xf32>
      %c4_i32_276 = arith.constant 4 : i32
      %869 = arith.muli %arg12, %c4_i32_276 : i32
      %c96_i32_277 = arith.constant 96 : i32
      %870 = arith.addi %c96_i32_277, %869 : i32
      %c1_i32_278 = arith.constant 1 : i32
      %871 = arith.addi %870, %c1_i32_278 : i32
      %872 = arith.index_cast %871 : i32 to index
      %873 = memref.load %arg6[%872] : memref<160xf32, #tpu.memory_space<smem>>
      %874 = vector.broadcast %873 : f32 to vector<8x128xf32>
      %875 = arith.mulf %874, %655 : vector<8x128xf32>
      %876 = arith.addf %868, %875 : vector<8x128xf32>
      %c4_i32_279 = arith.constant 4 : i32
      %877 = arith.muli %arg12, %c4_i32_279 : i32
      %c96_i32_280 = arith.constant 96 : i32
      %878 = arith.addi %c96_i32_280, %877 : i32
      %c2_i32_281 = arith.constant 2 : i32
      %879 = arith.addi %878, %c2_i32_281 : i32
      %880 = arith.index_cast %879 : i32 to index
      %881 = memref.load %arg6[%880] : memref<160xf32, #tpu.memory_space<smem>>
      %882 = vector.broadcast %881 : f32 to vector<8x128xf32>
      %883 = arith.mulf %882, %665 : vector<8x128xf32>
      %884 = arith.addf %876, %883 : vector<8x128xf32>
      %c4_i32_282 = arith.constant 4 : i32
      %885 = arith.muli %arg12, %c4_i32_282 : i32
      %c96_i32_283 = arith.constant 96 : i32
      %886 = arith.addi %c96_i32_283, %885 : i32
      %c3_i32_284 = arith.constant 3 : i32
      %887 = arith.addi %886, %c3_i32_284 : i32
      %888 = arith.index_cast %887 : i32 to index
      %889 = memref.load %arg6[%888] : memref<160xf32, #tpu.memory_space<smem>>
      %890 = vector.broadcast %889 : f32 to vector<8x128xf32>
      %891 = arith.mulf %890, %675 : vector<8x128xf32>
      %892 = arith.addf %884, %891 : vector<8x128xf32>
      %c4_i32_285 = arith.constant 4 : i32
      %893 = arith.muli %arg12, %c4_i32_285 : i32
      %c112_i32 = arith.constant 112 : i32
      %894 = arith.addi %c112_i32, %893 : i32
      %c0_i32_286 = arith.constant 0 : i32
      %895 = arith.addi %894, %c0_i32_286 : i32
      %896 = arith.index_cast %895 : i32 to index
      %897 = memref.load %arg6[%896] : memref<160xf32, #tpu.memory_space<smem>>
      %898 = vector.broadcast %897 : f32 to vector<8x128xf32>
      %899 = arith.mulf %898, %645 : vector<8x128xf32>
      %c4_i32_287 = arith.constant 4 : i32
      %900 = arith.muli %arg12, %c4_i32_287 : i32
      %c112_i32_288 = arith.constant 112 : i32
      %901 = arith.addi %c112_i32_288, %900 : i32
      %c1_i32_289 = arith.constant 1 : i32
      %902 = arith.addi %901, %c1_i32_289 : i32
      %903 = arith.index_cast %902 : i32 to index
      %904 = memref.load %arg6[%903] : memref<160xf32, #tpu.memory_space<smem>>
      %905 = vector.broadcast %904 : f32 to vector<8x128xf32>
      %906 = arith.mulf %905, %655 : vector<8x128xf32>
      %907 = arith.addf %899, %906 : vector<8x128xf32>
      %c4_i32_290 = arith.constant 4 : i32
      %908 = arith.muli %arg12, %c4_i32_290 : i32
      %c112_i32_291 = arith.constant 112 : i32
      %909 = arith.addi %c112_i32_291, %908 : i32
      %c2_i32_292 = arith.constant 2 : i32
      %910 = arith.addi %909, %c2_i32_292 : i32
      %911 = arith.index_cast %910 : i32 to index
      %912 = memref.load %arg6[%911] : memref<160xf32, #tpu.memory_space<smem>>
      %913 = vector.broadcast %912 : f32 to vector<8x128xf32>
      %914 = arith.mulf %913, %665 : vector<8x128xf32>
      %915 = arith.addf %907, %914 : vector<8x128xf32>
      %c4_i32_293 = arith.constant 4 : i32
      %916 = arith.muli %arg12, %c4_i32_293 : i32
      %c112_i32_294 = arith.constant 112 : i32
      %917 = arith.addi %c112_i32_294, %916 : i32
      %c3_i32_295 = arith.constant 3 : i32
      %918 = arith.addi %917, %c3_i32_295 : i32
      %919 = arith.index_cast %918 : i32 to index
      %920 = memref.load %arg6[%919] : memref<160xf32, #tpu.memory_space<smem>>
      %921 = vector.broadcast %920 : f32 to vector<8x128xf32>
      %922 = arith.mulf %921, %675 : vector<8x128xf32>
      %923 = arith.addf %915, %922 : vector<8x128xf32>
      %c4_i32_296 = arith.constant 4 : i32
      %924 = arith.muli %arg12, %c4_i32_296 : i32
      %c128_i32 = arith.constant 128 : i32
      %925 = arith.addi %c128_i32, %924 : i32
      %c0_i32_297 = arith.constant 0 : i32
      %926 = arith.addi %925, %c0_i32_297 : i32
      %927 = arith.index_cast %926 : i32 to index
      %928 = memref.load %arg6[%927] : memref<160xf32, #tpu.memory_space<smem>>
      %929 = vector.broadcast %928 : f32 to vector<8x128xf32>
      %930 = arith.mulf %929, %645 : vector<8x128xf32>
      %c4_i32_298 = arith.constant 4 : i32
      %931 = arith.muli %arg12, %c4_i32_298 : i32
      %c128_i32_299 = arith.constant 128 : i32
      %932 = arith.addi %c128_i32_299, %931 : i32
      %c1_i32_300 = arith.constant 1 : i32
      %933 = arith.addi %932, %c1_i32_300 : i32
      %934 = arith.index_cast %933 : i32 to index
      %935 = memref.load %arg6[%934] : memref<160xf32, #tpu.memory_space<smem>>
      %936 = vector.broadcast %935 : f32 to vector<8x128xf32>
      %937 = arith.mulf %936, %655 : vector<8x128xf32>
      %938 = arith.addf %930, %937 : vector<8x128xf32>
      %c4_i32_301 = arith.constant 4 : i32
      %939 = arith.muli %arg12, %c4_i32_301 : i32
      %c128_i32_302 = arith.constant 128 : i32
      %940 = arith.addi %c128_i32_302, %939 : i32
      %c2_i32_303 = arith.constant 2 : i32
      %941 = arith.addi %940, %c2_i32_303 : i32
      %942 = arith.index_cast %941 : i32 to index
      %943 = memref.load %arg6[%942] : memref<160xf32, #tpu.memory_space<smem>>
      %944 = vector.broadcast %943 : f32 to vector<8x128xf32>
      %945 = arith.mulf %944, %665 : vector<8x128xf32>
      %946 = arith.addf %938, %945 : vector<8x128xf32>
      %c4_i32_304 = arith.constant 4 : i32
      %947 = arith.muli %arg12, %c4_i32_304 : i32
      %c128_i32_305 = arith.constant 128 : i32
      %948 = arith.addi %c128_i32_305, %947 : i32
      %c3_i32_306 = arith.constant 3 : i32
      %949 = arith.addi %948, %c3_i32_306 : i32
      %950 = arith.index_cast %949 : i32 to index
      %951 = memref.load %arg6[%950] : memref<160xf32, #tpu.memory_space<smem>>
      %952 = vector.broadcast %951 : f32 to vector<8x128xf32>
      %953 = arith.mulf %952, %675 : vector<8x128xf32>
      %954 = arith.addf %946, %953 : vector<8x128xf32>
      %c4_i32_307 = arith.constant 4 : i32
      %955 = arith.muli %arg12, %c4_i32_307 : i32
      %c144_i32 = arith.constant 144 : i32
      %956 = arith.addi %c144_i32, %955 : i32
      %c0_i32_308 = arith.constant 0 : i32
      %957 = arith.addi %956, %c0_i32_308 : i32
      %958 = arith.index_cast %957 : i32 to index
      %959 = memref.load %arg6[%958] : memref<160xf32, #tpu.memory_space<smem>>
      %960 = vector.broadcast %959 : f32 to vector<8x128xf32>
      %961 = arith.mulf %960, %645 : vector<8x128xf32>
      %c4_i32_309 = arith.constant 4 : i32
      %962 = arith.muli %arg12, %c4_i32_309 : i32
      %c144_i32_310 = arith.constant 144 : i32
      %963 = arith.addi %c144_i32_310, %962 : i32
      %c1_i32_311 = arith.constant 1 : i32
      %964 = arith.addi %963, %c1_i32_311 : i32
      %965 = arith.index_cast %964 : i32 to index
      %966 = memref.load %arg6[%965] : memref<160xf32, #tpu.memory_space<smem>>
      %967 = vector.broadcast %966 : f32 to vector<8x128xf32>
      %968 = arith.mulf %967, %655 : vector<8x128xf32>
      %969 = arith.addf %961, %968 : vector<8x128xf32>
      %c4_i32_312 = arith.constant 4 : i32
      %970 = arith.muli %arg12, %c4_i32_312 : i32
      %c144_i32_313 = arith.constant 144 : i32
      %971 = arith.addi %c144_i32_313, %970 : i32
      %c2_i32_314 = arith.constant 2 : i32
      %972 = arith.addi %971, %c2_i32_314 : i32
      %973 = arith.index_cast %972 : i32 to index
      %974 = memref.load %arg6[%973] : memref<160xf32, #tpu.memory_space<smem>>
      %975 = vector.broadcast %974 : f32 to vector<8x128xf32>
      %976 = arith.mulf %975, %665 : vector<8x128xf32>
      %977 = arith.addf %969, %976 : vector<8x128xf32>
      %c4_i32_315 = arith.constant 4 : i32
      %978 = arith.muli %arg12, %c4_i32_315 : i32
      %c144_i32_316 = arith.constant 144 : i32
      %979 = arith.addi %c144_i32_316, %978 : i32
      %c3_i32_317 = arith.constant 3 : i32
      %980 = arith.addi %979, %c3_i32_317 : i32
      %981 = arith.index_cast %980 : i32 to index
      %982 = memref.load %arg6[%981] : memref<160xf32, #tpu.memory_space<smem>>
      %983 = vector.broadcast %982 : f32 to vector<8x128xf32>
      %984 = arith.mulf %983, %675 : vector<8x128xf32>
      %985 = arith.addf %977, %984 : vector<8x128xf32>
      %986 = vector.shape_cast %706 : vector<8x128xf32> to vector<1x8x128xf32>
      %987 = vector.shape_cast %737 : vector<8x128xf32> to vector<1x8x128xf32>
      %988 = vector.shape_cast %768 : vector<8x128xf32> to vector<1x8x128xf32>
      %989 = vector.shape_cast %799 : vector<8x128xf32> to vector<1x8x128xf32>
      %990 = vector.shape_cast %830 : vector<8x128xf32> to vector<1x8x128xf32>
      %991 = vector.shape_cast %861 : vector<8x128xf32> to vector<1x8x128xf32>
      %992 = vector.shape_cast %892 : vector<8x128xf32> to vector<1x8x128xf32>
      %993 = vector.shape_cast %923 : vector<8x128xf32> to vector<1x8x128xf32>
      %994 = vector.shape_cast %954 : vector<8x128xf32> to vector<1x8x128xf32>
      %995 = vector.shape_cast %985 : vector<8x128xf32> to vector<1x8x128xf32>
      %996 = tpu.concatenate %986, %987, %988, %989, %990, %991, %992, %993, %994, %995 in 0 : vector<1x8x128xf32>, vector<1x8x128xf32>, vector<1x8x128xf32>, vector<1x8x128xf32>, vector<1x8x128xf32>, vector<1x8x128xf32>, vector<1x8x128xf32>, vector<1x8x128xf32>, vector<1x8x128xf32>, vector<1x8x128xf32> -> vector<10x8x128xf32>
      %997 = arith.addf %arg13, %996 : vector<10x8x128xf32>
      scf.yield %997 : vector<10x8x128xf32>
    }
    %c4_i32_75 = arith.constant 4 : i32
    %c0_76 = arith.constant 0 : index
    %c0_77 = arith.constant 0 : index
    %c0_78 = arith.constant 0 : index
    %c0_79 = arith.constant 0 : index
    %74 = vector.load %arg8[%c0_76, %c0_77, %c0_78, %c0_79] : memref<1x10x8x128xf32, #tpu.memory_space<vmem>>, vector<1x10x8x128xf32>
    %75 = vector.shape_cast %74 : vector<1x10x8x128xf32> to vector<10x8x128xf32>
    %76 = vector.shape_cast %73 : vector<10x8x128xf32> to vector<1x10x8x128xf32>
    tpu.vector_store %arg8[%c0_76, %c0_77, %c0_78, %c0_79], %76 {strides = array<i32>} : memref<1x10x8x128xf32, #tpu.memory_space<vmem>>, vector<1x10x8x128xf32>,
    return
  }
  func.func @transform_0(%arg0: i32) -> (i32, i32, i32, i32, i32) {
    %c0_i32 = arith.constant 0 : i32
    %c0_i32_0 = arith.constant 0 : i32
    %c0_i32_1 = arith.constant 0 : i32
    %c0_i32_2 = arith.constant 0 : i32
    %c0_i32_3 = arith.constant 0 : i32
    return %arg0, %c0_i32, %c0_i32_0, %c0_i32_1, %c0_i32_2 : i32, i32, i32, i32, i32
  }
  func.func @transform_1(%arg0: i32) -> i32 {
    %c0_i32 = arith.constant 0 : i32
    %c0_i32_0 = arith.constant 0 : i32
    return %c0_i32 : i32
  }
  func.func @transform_2(%arg0: i32) -> i32 {
    %c0_i32 = arith.constant 0 : i32
    %c0_i32_0 = arith.constant 0 : i32
    return %c0_i32 : i32
  }
  func.func @transform_3(%arg0: i32) -> i32 {
    %c0_i32 = arith.constant 0 : i32
    %c0_i32_0 = arith.constant 0 : i32
    return %c0_i32 : i32
  }
  func.func @transform_4(%arg0: i32) -> i32 {
    %c0_i32 = arith.constant 0 : i32
    %c0_i32_0 = arith.constant 0 : i32
    return %c0_i32 : i32
  }
  func.func @transform_5(%arg0: i32) -> i32 {
    %c0_i32 = arith.constant 0 : i32
    %c0_i32_0 = arith.constant 0 : i32
    return %c0_i32 : i32
  }
  func.func @transform_6(%arg0: i32) -> i32 {
    %c0_i32 = arith.constant 0 : i32
    %c0_i32_0 = arith.constant 0 : i32
    return %c0_i32 : i32
  }
  func.func @transform_7(%arg0: i32) -> (i32, i32, i32, i32) {
    %c0_i32 = arith.constant 0 : i32
    %c0_i32_0 = arith.constant 0 : i32
    %c0_i32_1 = arith.constant 0 : i32
    %c0_i32_2 = arith.constant 0 : i32
    return %arg0, %c0_i32, %c0_i32_0, %c0_i32_1 : i32, i32, i32, i32
  }
}

</mosaic_0001>

<llo_original>
// kernel: tpu_custom_call.1
$region0: #{tpu_custom_call.1}
  #allocation0 [shape = 'u32[]', space=smem, size = 0x4, offset = 0x4, fixed_abs, tag = 'smem constant byte address 0x4 - core index']
  #allocation1 [shape = 'u32[72,128]{1,0:T(1,128)}', space=vmem, size = 0x9000, scoped, tag = 'internal scratch']
  #allocation2 [shape = 'f32[20,20,8,128]{3,2,1,0:T(8,128)}', space=vmem, size = 0x190000, scoped, tag = 'scratch operand']
  #allocation3 [shape = 'f32[12,12,8,128]{3,2,1,0:T(8,128)}', space=vmem, size = 0x90000, scoped, tag = 'scratch operand']
  #allocation4 [shape = 'f32[12,12,8,128]{3,2,1,0:T(8,128)}', space=vmem, size = 0x90000, scoped, tag = 'scratch operand']
  #allocation5 [shape = 'f32[1]{0:T(128)S(6)}', space=smem, size = 0x200, scoped, tag = 'scoped memory for tpu_custom_call.1']
  %s0 = inlined_call_operand.hbm [shape: f32[1,16,16,8,128], index: 0, kind: input, shape index: {}]
  %s1 = inlined_call_operand.vmem [shape: f32[50], index: 1, kind: input, shape index: {}]
  %s2 = inlined_call_operand.hbm [shape: f32[2], index: 2, kind: input, shape index: {}]
  %s3 = inlined_call_operand.vmem [shape: f32[50], index: 3, kind: input, shape index: {}]
  %s4 = inlined_call_operand.<no memory space> [shape: f32[1], index: 4, kind: input, shape index: {}]
  %s5 = inlined_call_operand.vmem [shape: f32[160], index: 5, kind: input, shape index: {}]
  %s6 = inlined_call_operand.vmem [shape: f32[10], index: 6, kind: input, shape index: {}]
  %s7 = inlined_call_operand.hbm [shape: f32[1,10,8,128], index: 7, kind: output, shape index: {}]
  %s8 = sld [smem:[#allocation0]]
  $region83: #{tpu_custom_call.1} parent=0
    _
  %s10 = ssub.s32 1, %s8
  %s11 = scalar_select 0, %s10, %s8
  %12 = sst [smem:[#allocation5]] %s4
  $region1: #{tpu_custom_call.1} parent=0
    #allocation6 [shape = 'u8[1048576]{0}', space=vmem, size = 0x100000, scoped, tag = 'input window, operand 0, single buffered']
    #allocation7 [shape = 's32[1]{0}', space=sflag, size = 0x4, scoped, tag = 'scoped memory for tpu_custom_call.1']
    #allocation8 [shape = 's32[1]{0}', space=sflag, size = 0x4, scoped, tag = 'scoped memory for tpu_custom_call.1']
    #allocation9 [shape = 's32[1]{0}', space=sflag, size = 0x4, scoped, tag = 'scoped memory for tpu_custom_call.1']
    #allocation10 [shape = 's32[1]{0}', space=sflag, size = 0x4, scoped, tag = 'scoped memory for tpu_custom_call.1']
    #allocation11 [shape = 'u8[512]{0}', space=smem, size = 0x200, scoped, tag = 'input window, operand 1, single buffered']
    #allocation12 [shape = 'u8[512]{0}', space=smem, size = 0x200, scoped, tag = 'input window, operand 2, single buffered']
    #allocation13 [shape = 'u8[512]{0}', space=smem, size = 0x200, scoped, tag = 'input window, operand 3, single buffered']
    #allocation14 [shape = 's32[1]{0}', space=sflag, size = 0x4, scoped, tag = 'scoped memory for tpu_custom_call.1']
    #allocation15 [shape = 'u8[1024]{0}', space=smem, size = 0x400, scoped, tag = 'input window, operand 5, single buffered']
    #allocation16 [shape = 'u8[512]{0}', space=smem, size = 0x200, scoped, tag = 'input window, operand 6, single buffered']
    #allocation17 [shape = 's32[1]{0}', space=sflag, size = 0x4, scoped, tag = 'scoped memory for tpu_custom_call.1']
    #allocation18 [shape = 'u8[40960]{0}', space=vmem, size = 0xa000, scoped, tag = 'output window, operand 0, single buffered']
    %13 = vsyncpa [#allocation7], 0
    %14 = vsyncpa [#allocation10], 0
    %15 = vsyncpa [#allocation9], 0
    %16 = vsyncpa [#allocation14], 0
    %17 = vsyncpa [#allocation17], 0
    %18 = vsyncpa [#allocation8], 0
    // Predicated region
    $region2: #{tpu_custom_call.1} parent=1 // pred_check
      _
    $region3: #{tpu_custom_call.1} parent=1 // pred_check_branch
      %20 = sbr.rel (0) target = $region5
    $region4: #{tpu_custom_call.1} parent=1 // pred_region
      %22 = vsyncadd [#allocation7], 0
      %s23 = sshll.u32 %s0, 4
      %s24 = int_to_ptr.hbm [resolvable:$true] %s23
      %s25 = sshll.u32 [#allocation6], 4
      %s26 = int_to_ptr.vmem [resolvable:$true] %s25
      %31 = dma.hbm_to_vmem [thread:$0]  %s24, 32768, %s26, [#allocation7], 128, 128, 8
    $region5: #{tpu_custom_call.1} parent=1 // pred_fallthru
      _
    // Predicated region
    $region6: #{tpu_custom_call.1} parent=1 // pred_check
      _
    $region7: #{tpu_custom_call.1} parent=1 // pred_check_branch
      %33 = sbr.rel (0) target = $region9
    $region8: #{tpu_custom_call.1} parent=1 // pred_region
      %35 = vsyncadd [#allocation10], 0
      %s37 = sshll.u32 %s1, 4
      %s38 = int_to_ptr.vmem [resolvable:$true] %s37
      %40 = dma.vmem_to_smem %s38, 16, [#allocation11], [#allocation10]
    $region9: #{tpu_custom_call.1} parent=1 // pred_fallthru
      _
    // Predicated region
    $region10: #{tpu_custom_call.1} parent=1 // pred_check
      _
    $region11: #{tpu_custom_call.1} parent=1 // pred_check_branch
      %42 = sbr.rel (0) target = $region13
    $region12: #{tpu_custom_call.1} parent=1 // pred_region
      %44 = vsyncadd [#allocation9], 0
      %s46 = sshll.u32 %s2, 4
      %s47 = int_to_ptr.hbm [resolvable:$true] %s46
      %49 = dma.hbm_to_smem %s47, 16, [#allocation12], [#allocation9]
    $region13: #{tpu_custom_call.1} parent=1 // pred_fallthru
      _
    // Predicated region
    $region14: #{tpu_custom_call.1} parent=1 // pred_check
      _
    $region15: #{tpu_custom_call.1} parent=1 // pred_check_branch
      %51 = sbr.rel (0) target = $region17
    $region16: #{tpu_custom_call.1} parent=1 // pred_region
      %53 = vsyncadd [#allocation14], 0
      %s55 = sshll.u32 %s3, 4
      %s56 = int_to_ptr.vmem [resolvable:$true] %s55
      %58 = dma.vmem_to_smem %s56, 16, [#allocation13], [#allocation14]
    $region17: #{tpu_custom_call.1} parent=1 // pred_fallthru
      _
    // Predicated region
    $region18: #{tpu_custom_call.1} parent=1 // pred_check
      _
    $region19: #{tpu_custom_call.1} parent=1 // pred_check_branch
      %60 = sbr.rel (0) target = $region21
    $region20: #{tpu_custom_call.1} parent=1 // pred_region
      _
    $region21: #{tpu_custom_call.1} parent=1 // pred_fallthru
      _
    // Predicated region
    $region22: #{tpu_custom_call.1} parent=1 // pred_check
      _
    $region23: #{tpu_custom_call.1} parent=1 // pred_check_branch
      %62 = sbr.rel (0) target = $region25
    $region24: #{tpu_custom_call.1} parent=1 // pred_region
      %64 = vsyncadd [#allocation14], 0
      %s66 = sshll.u32 %s5, 4
      %s67 = int_to_ptr.vmem [resolvable:$true] %s66
      %69 = dma.vmem_to_smem %s67, 32, [#allocation15], [#allocation14]
    $region25: #{tpu_custom_call.1} parent=1 // pred_fallthru
      _
    // Predicated region
    $region26: #{tpu_custom_call.1} parent=1 // pred_check
      _
    $region27: #{tpu_custom_call.1} parent=1 // pred_check_branch
      %71 = sbr.rel (0) target = $region29
    $region28: #{tpu_custom_call.1} parent=1 // pred_region
      %73 = vsyncadd [#allocation17], 0
      %s75 = sshll.u32 %s6, 4
      %s76 = int_to_ptr.vmem [resolvable:$true] %s75
      %78 = dma.vmem_to_smem %s76, 16, [#allocation16], [#allocation17]
    $region29: #{tpu_custom_call.1} parent=1 // pred_fallthru
      _
    // Predicated region
    $region30: #{tpu_custom_call.1} parent=1 // pred_check
      _
    $region31: #{tpu_custom_call.1} parent=1 // pred_check_branch
      %80 = sbr.rel (0) target = $region33
    $region32: #{tpu_custom_call.1} parent=1 // pred_region
      %82 = dma.done [#allocation7], 32768
    $region33: #{tpu_custom_call.1} parent=1 // pred_fallthru
      _
    // Predicated region
    $region34: #{tpu_custom_call.1} parent=1 // pred_check
      _
    $region35: #{tpu_custom_call.1} parent=1 // pred_check_branch
      %84 = sbr.rel (0) target = $region37
    $region36: #{tpu_custom_call.1} parent=1 // pred_region
      %86 = dma.done [#allocation10], 16
    $region37: #{tpu_custom_call.1} parent=1 // pred_fallthru
      _
    // Predicated region
    $region38: #{tpu_custom_call.1} parent=1 // pred_check
      _
    $region39: #{tpu_custom_call.1} parent=1 // pred_check_branch
      %88 = sbr.rel (0) target = $region41
    $region40: #{tpu_custom_call.1} parent=1 // pred_region
      %90 = dma.done [#allocation9], 16
    $region41: #{tpu_custom_call.1} parent=1 // pred_fallthru
      _
    // Predicated region
    $region42: #{tpu_custom_call.1} parent=1 // pred_check
      _
    $region43: #{tpu_custom_call.1} parent=1 // pred_check_branch
      %92 = sbr.rel (0) target = $region45
    $region44: #{tpu_custom_call.1} parent=1 // pred_region
      %94 = dma.done [#allocation14], 16
    $region45: #{tpu_custom_call.1} parent=1 // pred_fallthru
      _
    // Predicated region
    $region46: #{tpu_custom_call.1} parent=1 // pred_check
      _
    $region47: #{tpu_custom_call.1} parent=1 // pred_check_branch
      %96 = sbr.rel (0) target = $region49
    $region48: #{tpu_custom_call.1} parent=1 // pred_region
      %98 = dma.done [#allocation14], 32
    $region49: #{tpu_custom_call.1} parent=1 // pred_fallthru
      _
    // Predicated region
    $region50: #{tpu_custom_call.1} parent=1 // pred_check
      _
    $region51: #{tpu_custom_call.1} parent=1 // pred_check_branch
      %100 = sbr.rel (0) target = $region53
    $region52: #{tpu_custom_call.1} parent=1 // pred_region
      %102 = dma.done [#allocation17], 16
    $region53: #{tpu_custom_call.1} parent=1 // pred_fallthru
      _
    %103 = sfence
    %104 = vst [vmem:[#allocation2] sm:$0xff] 0.0
    %105 = vst [vmem:[#allocation2 + $0x8] sm:$0xff] 0.0
    %106 = vst [vmem:[#allocation2 + $0x10] sm:$0xff] 0.0
    %107 = vst [vmem:[#allocation2 + $0x18] sm:$0xff] 0.0
    %108 = vst [vmem:[#allocation2 + $0x20] sm:$0xff] 0.0
    %109 = vst [vmem:[#allocation2 + $0x28] sm:$0xff] 0.0
    %110 = vst [vmem:[#allocation2 + $0x30] sm:$0xff] 0.0
    %111 = vst [vmem:[#allocation2 + $0x38] sm:$0xff] 0.0
    %112 = vst [vmem:[#allocation2 + $0x40] sm:$0xff] 0.0
    %113 = vst [vmem:[#allocation2 + $0x48] sm:$0xff] 0.0
    %114 = vst [vmem:[#allocation2 + $0x50] sm:$0xff] 0.0
    %115 = vst [vmem:[#allocation2 + $0x58] sm:$0xff] 0.0
    %116 = vst [vmem:[#allocation2 + $0x60] sm:$0xff] 0.0
    %117 = vst [vmem:[#allocation2 + $0x68] sm:$0xff] 0.0
    %118 = vst [vmem:[#allocation2 + $0x70] sm:$0xff] 0.0
    %119 = vst [vmem:[#allocation2 + $0x78] sm:$0xff] 0.0
    %120 = vst [vmem:[#allocation2 + $0x80] sm:$0xff] 0.0
    %121 = vst [vmem:[#allocation2 + $0x88] sm:$0xff] 0.0
    %122 = vst [vmem:[#allocation2 + $0x90] sm:$0xff] 0.0
    %123 = vst [vmem:[#allocation2 + $0x98] sm:$0xff] 0.0
    %124 = vst [vmem:[#allocation2 + $0xa0] sm:$0xff] 0.0
    %125 = vst [vmem:[#allocation2 + $0xa8] sm:$0xff] 0.0
    %126 = vst [vmem:[#allocation2 + $0xb0] sm:$0xff] 0.0
    %127 = vst [vmem:[#allocation2 + $0xb8] sm:$0xff] 0.0
    %128 = vst [vmem:[#allocation2 + $0xc0] sm:$0xff] 0.0
    %129 = vst [vmem:[#allocation2 + $0xc8] sm:$0xff] 0.0
    %130 = vst [vmem:[#allocation2 + $0xd0] sm:$0xff] 0.0
    %131 = vst [vmem:[#allocation2 + $0xd8] sm:$0xff] 0.0
    %132 = vst [vmem:[#allocation2 + $0xe0] sm:$0xff] 0.0
    %133 = vst [vmem:[#allocation2 + $0xe8] sm:$0xff] 0.0
    %134 = vst [vmem:[#allocation2 + $0xf0] sm:$0xff] 0.0
    %135 = vst [vmem:[#allocation2 + $0xf8] sm:$0xff] 0.0
    %136 = vst [vmem:[#allocation2 + $0x100] sm:$0xff] 0.0
    %137 = vst [vmem:[#allocation2 + $0x108] sm:$0xff] 0.0
    %138 = vst [vmem:[#allocation2 + $0x110] sm:$0xff] 0.0
    %139 = vst [vmem:[#allocation2 + $0x118] sm:$0xff] 0.0
    %140 = vst [vmem:[#allocation2 + $0x120] sm:$0xff] 0.0
    %141 = vst [vmem:[#allocation2 + $0x128] sm:$0xff] 0.0
    %142 = vst [vmem:[#allocation2 + $0x130] sm:$0xff] 0.0
    %143 = vst [vmem:[#allocation2 + $0x138] sm:$0xff] 0.0
    %s144 = scalar_lea.vmem [#allocation2], 2880
    %145 = vst [vmem:[%s144] sm:$0xff] 0.0
    %146 = vst [vmem:[%s144 + $0x8] sm:$0xff] 0.0
    %147 = vst [vmem:[%s144 + $0x10] sm:$0xff] 0.0
    %148 = vst [vmem:[%s144 + $0x18] sm:$0xff] 0.0
    %149 = vst [vmem:[%s144 + $0x20] sm:$0xff] 0.0
    %150 = vst [vmem:[%s144 + $0x28] sm:$0xff] 0.0
    %151 = vst [vmem:[%s144 + $0x30] sm:$0xff] 0.0
    %152 = vst [vmem:[%s144 + $0x38] sm:$0xff] 0.0
    %153 = vst [vmem:[%s144 + $0x40] sm:$0xff] 0.0
    %154 = vst [vmem:[%s144 + $0x48] sm:$0xff] 0.0
    %155 = vst [vmem:[%s144 + $0x50] sm:$0xff] 0.0
    %156 = vst [vmem:[%s144 + $0x58] sm:$0xff] 0.0
    %157 = vst [vmem:[%s144 + $0x60] sm:$0xff] 0.0
    %158 = vst [vmem:[%s144 + $0x68] sm:$0xff] 0.0
    %159 = vst [vmem:[%s144 + $0x70] sm:$0xff] 0.0
    %160 = vst [vmem:[%s144 + $0x78] sm:$0xff] 0.0
    %161 = vst [vmem:[%s144 + $0x80] sm:$0xff] 0.0
    %162 = vst [vmem:[%s144 + $0x88] sm:$0xff] 0.0
    %163 = vst [vmem:[%s144 + $0x90] sm:$0xff] 0.0
    %164 = vst [vmem:[%s144 + $0x98] sm:$0xff] 0.0
    %165 = vst [vmem:[%s144 + $0xa0] sm:$0xff] 0.0
    %166 = vst [vmem:[%s144 + $0xa8] sm:$0xff] 0.0
    %167 = vst [vmem:[%s144 + $0xb0] sm:$0xff] 0.0
    %168 = vst [vmem:[%s144 + $0xb8] sm:$0xff] 0.0
    %169 = vst [vmem:[%s144 + $0xc0] sm:$0xff] 0.0
    %170 = vst [vmem:[%s144 + $0xc8] sm:$0xff] 0.0
    %171 = vst [vmem:[%s144 + $0xd0] sm:$0xff] 0.0
    %172 = vst [vmem:[%s144 + $0xd8] sm:$0xff] 0.0
    %173 = vst [vmem:[%s144 + $0xe0] sm:$0xff] 0.0
    %174 = vst [vmem:[%s144 + $0xe8] sm:$0xff] 0.0
    %175 = vst [vmem:[%s144 + $0xf0] sm:$0xff] 0.0
    %176 = vst [vmem:[%s144 + $0xf8] sm:$0xff] 0.0
    %177 = vst [vmem:[%s144 + $0x100] sm:$0xff] 0.0
    %178 = vst [vmem:[%s144 + $0x108] sm:$0xff] 0.0
    %179 = vst [vmem:[%s144 + $0x110] sm:$0xff] 0.0
    %180 = vst [vmem:[%s144 + $0x118] sm:$0xff] 0.0
    %181 = vst [vmem:[%s144 + $0x120] sm:$0xff] 0.0
    %182 = vst [vmem:[%s144 + $0x128] sm:$0xff] 0.0
    %183 = vst [vmem:[%s144 + $0x130] sm:$0xff] 0.0
    %184 = vst [vmem:[%s144 + $0x138] sm:$0xff] 0.0
    %s185 = scalar_lea.vmem [#allocation2], 320
    %186 = vst [vmem:[%s185] sm:$0xff] 0.0
    %187 = vst [vmem:[%s185 + $0x8] sm:$0xff] 0.0
    %188 = vst [vmem:[%s185 + $0xa0] sm:$0xff] 0.0
    %189 = vst [vmem:[%s185 + $0xa8] sm:$0xff] 0.0
    %190 = vst [vmem:[%s185 + $0x140] sm:$0xff] 0.0
    %191 = vst [vmem:[%s185 + $0x148] sm:$0xff] 0.0
    %192 = vst [vmem:[%s185 + $0x1e0] sm:$0xff] 0.0
    %193 = vst [vmem:[%s185 + $0x1e8] sm:$0xff] 0.0
    %194 = vst [vmem:[%s185 + $0x280] sm:$0xff] 0.0
    %195 = vst [vmem:[%s185 + $0x288] sm:$0xff] 0.0
    %196 = vst [vmem:[%s185 + $0x320] sm:$0xff] 0.0
    %197 = vst [vmem:[%s185 + $0x328] sm:$0xff] 0.0
    %198 = vst [vmem:[%s185 + $0x3c0] sm:$0xff] 0.0
    %199 = vst [vmem:[%s185 + $0x3c8] sm:$0xff] 0.0
    %200 = vst [vmem:[%s185 + $0x460] sm:$0xff] 0.0
    %201 = vst [vmem:[%s185 + $0x468] sm:$0xff] 0.0
    %202 = vst [vmem:[%s185 + $0x500] sm:$0xff] 0.0
    %203 = vst [vmem:[%s185 + $0x508] sm:$0xff] 0.0
    %204 = vst [vmem:[%s185 + $0x5a0] sm:$0xff] 0.0
    %205 = vst [vmem:[%s185 + $0x5a8] sm:$0xff] 0.0
    %206 = vst [vmem:[%s185 + $0x640] sm:$0xff] 0.0
    %207 = vst [vmem:[%s185 + $0x648] sm:$0xff] 0.0
    %208 = vst [vmem:[%s185 + $0x6e0] sm:$0xff] 0.0
    %209 = vst [vmem:[%s185 + $0x6e8] sm:$0xff] 0.0
    %210 = vst [vmem:[%s185 + $0x780] sm:$0xff] 0.0
    %211 = vst [vmem:[%s185 + $0x788] sm:$0xff] 0.0
    %212 = vst [vmem:[%s185 + $0x820] sm:$0xff] 0.0
    %213 = vst [vmem:[%s185 + $0x828] sm:$0xff] 0.0
    %214 = vst [vmem:[%s185 + $0x8c0] sm:$0xff] 0.0
    %215 = vst [vmem:[%s185 + $0x8c8] sm:$0xff] 0.0
    %216 = vst [vmem:[%s185 + $0x960] sm:$0xff] 0.0
    %217 = vst [vmem:[%s185 + $0x968] sm:$0xff] 0.0
    %s218 = scalar_lea.vmem [#allocation2], 464
    %219 = vst [vmem:[%s218] sm:$0xff] 0.0
    %220 = vst [vmem:[%s218 + $0x8] sm:$0xff] 0.0
    %221 = vst [vmem:[%s218 + $0xa0] sm:$0xff] 0.0
    %222 = vst [vmem:[%s218 + $0xa8] sm:$0xff] 0.0
    %223 = vst [vmem:[%s218 + $0x140] sm:$0xff] 0.0
    %224 = vst [vmem:[%s218 + $0x148] sm:$0xff] 0.0
    %225 = vst [vmem:[%s218 + $0x1e0] sm:$0xff] 0.0
    %226 = vst [vmem:[%s218 + $0x1e8] sm:$0xff] 0.0
    %227 = vst [vmem:[%s218 + $0x280] sm:$0xff] 0.0
    %228 = vst [vmem:[%s218 + $0x288] sm:$0xff] 0.0
    %229 = vst [vmem:[%s218 + $0x320] sm:$0xff] 0.0
    %230 = vst [vmem:[%s218 + $0x328] sm:$0xff] 0.0
    %231 = vst [vmem:[%s218 + $0x3c0] sm:$0xff] 0.0
    %232 = vst [vmem:[%s218 + $0x3c8] sm:$0xff] 0.0
    %233 = vst [vmem:[%s218 + $0x460] sm:$0xff] 0.0
    %234 = vst [vmem:[%s218 + $0x468] sm:$0xff] 0.0
    %235 = vst [vmem:[%s218 + $0x500] sm:$0xff] 0.0
    %236 = vst [vmem:[%s218 + $0x508] sm:$0xff] 0.0
    %237 = vst [vmem:[%s218 + $0x5a0] sm:$0xff] 0.0
    %238 = vst [vmem:[%s218 + $0x5a8] sm:$0xff] 0.0
    %239 = vst [vmem:[%s218 + $0x640] sm:$0xff] 0.0
    %240 = vst [vmem:[%s218 + $0x648] sm:$0xff] 0.0
    %241 = vst [vmem:[%s218 + $0x6e0] sm:$0xff] 0.0
    %242 = vst [vmem:[%s218 + $0x6e8] sm:$0xff] 0.0
    %243 = vst [vmem:[%s218 + $0x780] sm:$0xff] 0.0
    %244 = vst [vmem:[%s218 + $0x788] sm:$0xff] 0.0
    %245 = vst [vmem:[%s218 + $0x820] sm:$0xff] 0.0
    %246 = vst [vmem:[%s218 + $0x828] sm:$0xff] 0.0
    %247 = vst [vmem:[%s218 + $0x8c0] sm:$0xff] 0.0
    %248 = vst [vmem:[%s218 + $0x8c8] sm:$0xff] 0.0
    %249 = vst [vmem:[%s218 + $0x960] sm:$0xff] 0.0
    %250 = vst [vmem:[%s218 + $0x968] sm:$0xff] 0.0
    %v251 = vld [vmem:[#allocation6] sm:$0xff]
    %v252 = vld [vmem:[#allocation6 + $0x8] sm:$0xff]
    %v253 = vld [vmem:[#allocation6 + $0x10] sm:$0xff]
    %v254 = vld [vmem:[#allocation6 + $0x18] sm:$0xff]
    %v255 = vld [vmem:[#allocation6 + $0x20] sm:$0xff]
    %v256 = vld [vmem:[#allocation6 + $0x28] sm:$0xff]
    %v257 = vld [vmem:[#allocation6 + $0x30] sm:$0xff]
    %v258 = vld [vmem:[#allocation6 + $0x38] sm:$0xff]
    %v259 = vld [vmem:[#allocation6 + $0x40] sm:$0xff]
    %v260 = vld [vmem:[#allocation6 + $0x48] sm:$0xff]
    %v261 = vld [vmem:[#allocation6 + $0x50] sm:$0xff]
    %v262 = vld [vmem:[#allocation6 + $0x58] sm:$0xff]
    %v263 = vld [vmem:[#allocation6 + $0x60] sm:$0xff]
    %v264 = vld [vmem:[#allocation6 + $0x68] sm:$0xff]
    %v265 = vld [vmem:[#allocation6 + $0x70] sm:$0xff]
    %v266 = vld [vmem:[#allocation6 + $0x78] sm:$0xff]
    %v267 = vld [vmem:[#allocation6 + $0x80] sm:$0xff]
    %v268 = vld [vmem:[#allocation6 + $0x88] sm:$0xff]
    %v269 = vld [vmem:[#allocation6 + $0x90] sm:$0xff]
    %v270 = vld [vmem:[#allocation6 + $0x98] sm:$0xff]
    %v271 = vld [vmem:[#allocation6 + $0xa0] sm:$0xff]
    %v272 = vld [vmem:[#allocation6 + $0xa8] sm:$0xff]
    %v273 = vld [vmem:[#allocation6 + $0xb0] sm:$0xff]
    %v274 = vld [vmem:[#allocation6 + $0xb8] sm:$0xff]
    %v275 = vld [vmem:[#allocation6 + $0xc0] sm:$0xff]
    %v276 = vld [vmem:[#allocation6 + $0xc8] sm:$0xff]
    %v277 = vld [vmem:[#allocation6 + $0xd0] sm:$0xff]
    %v278 = vld [vmem:[#allocation6 + $0xd8] sm:$0xff]
    %v279 = vld [vmem:[#allocation6 + $0xe0] sm:$0xff]
    %v280 = vld [vmem:[#allocation6 + $0xe8] sm:$0xff]
    %v281 = vld [vmem:[#allocation6 + $0xf0] sm:$0xff]
    %v282 = vld [vmem:[#allocation6 + $0xf8] sm:$0xff]
    %v283 = vld [vmem:[#allocation6 + $0x100] sm:$0xff]
    %v284 = vld [vmem:[#allocation6 + $0x108] sm:$0xff]
    %v285 = vld [vmem:[#allocation6 + $0x110] sm:$0xff]
    %v286 = vld [vmem:[#allocation6 + $0x118] sm:$0xff]
    %v287 = vld [vmem:[#allocation6 + $0x120] sm:$0xff]
    %v288 = vld [vmem:[#allocation6 + $0x128] sm:$0xff]
    %v289 = vld [vmem:[#allocation6 + $0x130] sm:$0xff]
    %v290 = vld [vmem:[#allocation6 + $0x138] sm:$0xff]
    %v291 = vld [vmem:[#allocation6 + $0x140] sm:$0xff]
    %v292 = vld [vmem:[#allocation6 + $0x148] sm:$0xff]
    %v293 = vld [vmem:[#allocation6 + $0x150] sm:$0xff]
    %v294 = vld [vmem:[#allocation6 + $0x158] sm:$0xff]
    %v295 = vld [vmem:[#allocation6 + $0x160] sm:$0xff]
    %v296 = vld [vmem:[#allocation6 + $0x168] sm:$0xff]
    %v297 = vld [vmem:[#allocation6 + $0x170] sm:$0xff]
    %v298 = vld [vmem:[#allocation6 + $0x178] sm:$0xff]
    %v299 = vld [vmem:[#allocation6 + $0x180] sm:$0xff]
    %v300 = vld [vmem:[#allocation6 + $0x188] sm:$0xff]
    %v301 = vld [vmem:[#allocation6 + $0x190] sm:$0xff]
    %v302 = vld [vmem:[#allocation6 + $0x198] sm:$0xff]
    %v303 = vld [vmem:[#allocation6 + $0x1a0] sm:$0xff]
    %v304 = vld [vmem:[#allocation6 + $0x1a8] sm:$0xff]
    %v305 = vld [vmem:[#allocation6 + $0x1b0] sm:$0xff]
    %v306 = vld [vmem:[#allocation6 + $0x1b8] sm:$0xff]
    %v307 = vld [vmem:[#allocation6 + $0x1c0] sm:$0xff]
    %v308 = vld [vmem:[#allocation6 + $0x1c8] sm:$0xff]
    %v309 = vld [vmem:[#allocation6 + $0x1d0] sm:$0xff]
    %v310 = vld [vmem:[#allocation6 + $0x1d8] sm:$0xff]
    %v311 = vld [vmem:[#allocation6 + $0x1e0] sm:$0xff]
    %v312 = vld [vmem:[#allocation6 + $0x1e8] sm:$0xff]
    %v313 = vld [vmem:[#allocation6 + $0x1f0] sm:$0xff]
    %v314 = vld [vmem:[#allocation6 + $0x1f8] sm:$0xff]
    %v315 = vld [vmem:[#allocation6 + $0x200] sm:$0xff]
    %v316 = vld [vmem:[#allocation6 + $0x208] sm:$0xff]
    %v317 = vld [vmem:[#allocation6 + $0x210] sm:$0xff]
    %v318 = vld [vmem:[#allocation6 + $0x218] sm:$0xff]
    %v319 = vld [vmem:[#allocation6 + $0x220] sm:$0xff]
    %v320 = vld [vmem:[#allocation6 + $0x228] sm:$0xff]
    %v321 = vld [vmem:[#allocation6 + $0x230] sm:$0xff]
    %v322 = vld [vmem:[#allocation6 + $0x238] sm:$0xff]
    %v323 = vld [vmem:[#allocation6 + $0x240] sm:$0xff]
    %v324 = vld [vmem:[#allocation6 + $0x248] sm:$0xff]
    %v325 = vld [vmem:[#allocation6 + $0x250] sm:$0xff]
    %v326 = vld [vmem:[#allocation6 + $0x258] sm:$0xff]
    %v327 = vld [vmem:[#allocation6 + $0x260] sm:$0xff]
    %v328 = vld [vmem:[#allocation6 + $0x268] sm:$0xff]
    %v329 = vld [vmem:[#allocation6 + $0x270] sm:$0xff]
    %v330 = vld [vmem:[#allocation6 + $0x278] sm:$0xff]
    %v331 = vld [vmem:[#allocation6 + $0x280] sm:$0xff]
    %v332 = vld [vmem:[#allocation6 + $0x288] sm:$0xff]
    %v333 = vld [vmem:[#allocation6 + $0x290] sm:$0xff]
    %v334 = vld [vmem:[#allocation6 + $0x298] sm:$0xff]
    %v335 = vld [vmem:[#allocation6 + $0x2a0] sm:$0xff]
    %v336 = vld [vmem:[#allocation6 + $0x2a8] sm:$0xff]
    %v337 = vld [vmem:[#allocation6 + $0x2b0] sm:$0xff]
    %v338 = vld [vmem:[#allocation6 + $0x2b8] sm:$0xff]
    %v339 = vld [vmem:[#allocation6 + $0x2c0] sm:$0xff]
    %v340 = vld [vmem:[#allocation6 + $0x2c8] sm:$0xff]
    %v341 = vld [vmem:[#allocation6 + $0x2d0] sm:$0xff]
    %v342 = vld [vmem:[#allocation6 + $0x2d8] sm:$0xff]
    %v343 = vld [vmem:[#allocation6 + $0x2e0] sm:$0xff]
    %v344 = vld [vmem:[#allocation6 + $0x2e8] sm:$0xff]
    %v345 = vld [vmem:[#allocation6 + $0x2f0] sm:$0xff]
    %v346 = vld [vmem:[#allocation6 + $0x2f8] sm:$0xff]
    %v347 = vld [vmem:[#allocation6 + $0x300] sm:$0xff]
    %v348 = vld [vmem:[#allocation6 + $0x308] sm:$0xff]
    %v349 = vld [vmem:[#allocation6 + $0x310] sm:$0xff]
    %v350 = vld [vmem:[#allocation6 + $0x318] sm:$0xff]
    %v351 = vld [vmem:[#allocation6 + $0x320] sm:$0xff]
    %v352 = vld [vmem:[#allocation6 + $0x328] sm:$0xff]
    %v353 = vld [vmem:[#allocation6 + $0x330] sm:$0xff]
    %v354 = vld [vmem:[#allocation6 + $0x338] sm:$0xff]
    %v355 = vld [vmem:[#allocation6 + $0x340] sm:$0xff]
    %v356 = vld [vmem:[#allocation6 + $0x348] sm:$0xff]
    %v357 = vld [vmem:[#allocation6 + $0x350] sm:$0xff]
    %v358 = vld [vmem:[#allocation6 + $0x358] sm:$0xff]
    %v359 = vld [vmem:[#allocation6 + $0x360] sm:$0xff]
    %v360 = vld [vmem:[#allocation6 + $0x368] sm:$0xff]
    %v361 = vld [vmem:[#allocation6 + $0x370] sm:$0xff]
    %v362 = vld [vmem:[#allocation6 + $0x378] sm:$0xff]
    %v363 = vld [vmem:[#allocation6 + $0x380] sm:$0xff]
    %v364 = vld [vmem:[#allocation6 + $0x388] sm:$0xff]
    %v365 = vld [vmem:[#allocation6 + $0x390] sm:$0xff]
    %v366 = vld [vmem:[#allocation6 + $0x398] sm:$0xff]
    %v367 = vld [vmem:[#allocation6 + $0x3a0] sm:$0xff]
    %v368 = vld [vmem:[#allocation6 + $0x3a8] sm:$0xff]
    %v369 = vld [vmem:[#allocation6 + $0x3b0] sm:$0xff]
    %v370 = vld [vmem:[#allocation6 + $0x3b8] sm:$0xff]
    %v371 = vld [vmem:[#allocation6 + $0x3c0] sm:$0xff]
    %v372 = vld [vmem:[#allocation6 + $0x3c8] sm:$0xff]
    %v373 = vld [vmem:[#allocation6 + $0x3d0] sm:$0xff]
    %v374 = vld [vmem:[#allocation6 + $0x3d8] sm:$0xff]
    %v375 = vld [vmem:[#allocation6 + $0x3e0] sm:$0xff]
    %v376 = vld [vmem:[#allocation6 + $0x3e8] sm:$0xff]
    %v377 = vld [vmem:[#allocation6 + $0x3f0] sm:$0xff]
    %v378 = vld [vmem:[#allocation6 + $0x3f8] sm:$0xff]
    %v379 = vld [vmem:[#allocation6 + $0x400] sm:$0xff]
    %v380 = vld [vmem:[#allocation6 + $0x408] sm:$0xff]
    %v381 = vld [vmem:[#allocation6 + $0x410] sm:$0xff]
    %v382 = vld [vmem:[#allocation6 + $0x418] sm:$0xff]
    %v383 = vld [vmem:[#allocation6 + $0x420] sm:$0xff]
    %v384 = vld [vmem:[#allocation6 + $0x428] sm:$0xff]
    %v385 = vld [vmem:[#allocation6 + $0x430] sm:$0xff]
    %v386 = vld [vmem:[#allocation6 + $0x438] sm:$0xff]
    %v387 = vld [vmem:[#allocation6 + $0x440] sm:$0xff]
    %v388 = vld [vmem:[#allocation6 + $0x448] sm:$0xff]
    %v389 = vld [vmem:[#allocation6 + $0x450] sm:$0xff]
    %v390 = vld [vmem:[#allocation6 + $0x458] sm:$0xff]
    %v391 = vld [vmem:[#allocation6 + $0x460] sm:$0xff]
    %v392 = vld [vmem:[#allocation6 + $0x468] sm:$0xff]
    %v393 = vld [vmem:[#allocation6 + $0x470] sm:$0xff]
    %v394 = vld [vmem:[#allocation6 + $0x478] sm:$0xff]
    %v395 = vld [vmem:[#allocation6 + $0x480] sm:$0xff]
    %v396 = vld [vmem:[#allocation6 + $0x488] sm:$0xff]
    %v397 = vld [vmem:[#allocation6 + $0x490] sm:$0xff]
    %v398 = vld [vmem:[#allocation6 + $0x498] sm:$0xff]
    %v399 = vld [vmem:[#allocation6 + $0x4a0] sm:$0xff]
    %v400 = vld [vmem:[#allocation6 + $0x4a8] sm:$0xff]
    %v401 = vld [vmem:[#allocation6 + $0x4b0] sm:$0xff]
    %v402 = vld [vmem:[#allocation6 + $0x4b8] sm:$0xff]
    %v403 = vld [vmem:[#allocation6 + $0x4c0] sm:$0xff]
    %v404 = vld [vmem:[#allocation6 + $0x4c8] sm:$0xff]
    %v405 = vld [vmem:[#allocation6 + $0x4d0] sm:$0xff]
    %v406 = vld [vmem:[#allocation6 + $0x4d8] sm:$0xff]
    %v407 = vld [vmem:[#allocation6 + $0x4e0] sm:$0xff]
    %v408 = vld [vmem:[#allocation6 + $0x4e8] sm:$0xff]
    %v409 = vld [vmem:[#allocation6 + $0x4f0] sm:$0xff]
    %v410 = vld [vmem:[#allocation6 + $0x4f8] sm:$0xff]
    %v411 = vld [vmem:[#allocation6 + $0x500] sm:$0xff]
    %v412 = vld [vmem:[#allocation6 + $0x508] sm:$0xff]
    %v413 = vld [vmem:[#allocation6 + $0x510] sm:$0xff]
    %v414 = vld [vmem:[#allocation6 + $0x518] sm:$0xff]
    %v415 = vld [vmem:[#allocation6 + $0x520] sm:$0xff]
    %v416 = vld [vmem:[#allocation6 + $0x528] sm:$0xff]
    %v417 = vld [vmem:[#allocation6 + $0x530] sm:$0xff]
    %v418 = vld [vmem:[#allocation6 + $0x538] sm:$0xff]
    %v419 = vld [vmem:[#allocation6 + $0x540] sm:$0xff]
    %v420 = vld [vmem:[#allocation6 + $0x548] sm:$0xff]
    %v421 = vld [vmem:[#allocation6 + $0x550] sm:$0xff]
    %v422 = vld [vmem:[#allocation6 + $0x558] sm:$0xff]
    %v423 = vld [vmem:[#allocation6 + $0x560] sm:$0xff]
    %v424 = vld [vmem:[#allocation6 + $0x568] sm:$0xff]
    %v425 = vld [vmem:[#allocation6 + $0x570] sm:$0xff]
    %v426 = vld [vmem:[#allocation6 + $0x578] sm:$0xff]
    %v427 = vld [vmem:[#allocation6 + $0x580] sm:$0xff]
    %v428 = vld [vmem:[#allocation6 + $0x588] sm:$0xff]
    %v429 = vld [vmem:[#allocation6 + $0x590] sm:$0xff]
    %v430 = vld [vmem:[#allocation6 + $0x598] sm:$0xff]
    %v431 = vld [vmem:[#allocation6 + $0x5a0] sm:$0xff]
    %v432 = vld [vmem:[#allocation6 + $0x5a8] sm:$0xff]
    %v433 = vld [vmem:[#allocation6 + $0x5b0] sm:$0xff]
    %v434 = vld [vmem:[#allocation6 + $0x5b8] sm:$0xff]
    %v435 = vld [vmem:[#allocation6 + $0x5c0] sm:$0xff]
    %v436 = vld [vmem:[#allocation6 + $0x5c8] sm:$0xff]
    %v437 = vld [vmem:[#allocation6 + $0x5d0] sm:$0xff]
    %v438 = vld [vmem:[#allocation6 + $0x5d8] sm:$0xff]
    %v439 = vld [vmem:[#allocation6 + $0x5e0] sm:$0xff]
    %v440 = vld [vmem:[#allocation6 + $0x5e8] sm:$0xff]
    %v441 = vld [vmem:[#allocation6 + $0x5f0] sm:$0xff]
    %v442 = vld [vmem:[#allocation6 + $0x5f8] sm:$0xff]
    %v443 = vld [vmem:[#allocation6 + $0x600] sm:$0xff]
    %v444 = vld [vmem:[#allocation6 + $0x608] sm:$0xff]
    %v445 = vld [vmem:[#allocation6 + $0x610] sm:$0xff]
    %v446 = vld [vmem:[#allocation6 + $0x618] sm:$0xff]
    %v447 = vld [vmem:[#allocation6 + $0x620] sm:$0xff]
    %v448 = vld [vmem:[#allocation6 + $0x628] sm:$0xff]
    %v449 = vld [vmem:[#allocation6 + $0x630] sm:$0xff]
    %v450 = vld [vmem:[#allocation6 + $0x638] sm:$0xff]
    %v451 = vld [vmem:[#allocation6 + $0x640] sm:$0xff]
    %v452 = vld [vmem:[#allocation6 + $0x648] sm:$0xff]
    %v453 = vld [vmem:[#allocation6 + $0x650] sm:$0xff]
    %v454 = vld [vmem:[#allocation6 + $0x658] sm:$0xff]
    %v455 = vld [vmem:[#allocation6 + $0x660] sm:$0xff]
    %v456 = vld [vmem:[#allocation6 + $0x668] sm:$0xff]
    %v457 = vld [vmem:[#allocation6 + $0x670] sm:$0xff]
    %v458 = vld [vmem:[#allocation6 + $0x678] sm:$0xff]
    %v459 = vld [vmem:[#allocation6 + $0x680] sm:$0xff]
    %v460 = vld [vmem:[#allocation6 + $0x688] sm:$0xff]
    %v461 = vld [vmem:[#allocation6 + $0x690] sm:$0xff]
    %v462 = vld [vmem:[#allocation6 + $0x698] sm:$0xff]
    %v463 = vld [vmem:[#allocation6 + $0x6a0] sm:$0xff]
    %v464 = vld [vmem:[#allocation6 + $0x6a8] sm:$0xff]
    %v465 = vld [vmem:[#allocation6 + $0x6b0] sm:$0xff]
    %v466 = vld [vmem:[#allocation6 + $0x6b8] sm:$0xff]
    %v467 = vld [vmem:[#allocation6 + $0x6c0] sm:$0xff]
    %v468 = vld [vmem:[#allocation6 + $0x6c8] sm:$0xff]
    %v469 = vld [vmem:[#allocation6 + $0x6d0] sm:$0xff]
    %v470 = vld [vmem:[#allocation6 + $0x6d8] sm:$0xff]
    %v471 = vld [vmem:[#allocation6 + $0x6e0] sm:$0xff]
    %v472 = vld [vmem:[#allocation6 + $0x6e8] sm:$0xff]
    %v473 = vld [vmem:[#allocation6 + $0x6f0] sm:$0xff]
    %v474 = vld [vmem:[#allocation6 + $0x6f8] sm:$0xff]
    %v475 = vld [vmem:[#allocation6 + $0x700] sm:$0xff]
    %v476 = vld [vmem:[#allocation6 + $0x708] sm:$0xff]
    %v477 = vld [vmem:[#allocation6 + $0x710] sm:$0xff]
    %v478 = vld [vmem:[#allocation6 + $0x718] sm:$0xff]
    %v479 = vld [vmem:[#allocation6 + $0x720] sm:$0xff]
    %v480 = vld [vmem:[#allocation6 + $0x728] sm:$0xff]
    %v481 = vld [vmem:[#allocation6 + $0x730] sm:$0xff]
    %v482 = vld [vmem:[#allocation6 + $0x738] sm:$0xff]
    %v483 = vld [vmem:[#allocation6 + $0x740] sm:$0xff]
    %v484 = vld [vmem:[#allocation6 + $0x748] sm:$0xff]
    %v485 = vld [vmem:[#allocation6 + $0x750] sm:$0xff]
    %v486 = vld [vmem:[#allocation6 + $0x758] sm:$0xff]
    %v487 = vld [vmem:[#allocation6 + $0x760] sm:$0xff]
    %v488 = vld [vmem:[#allocation6 + $0x768] sm:$0xff]
    %v489 = vld [vmem:[#allocation6 + $0x770] sm:$0xff]
    %v490 = vld [vmem:[#allocation6 + $0x778] sm:$0xff]
    %v491 = vld [vmem:[#allocation6 + $0x780] sm:$0xff]
    %v492 = vld [vmem:[#allocation6 + $0x788] sm:$0xff]
    %v493 = vld [vmem:[#allocation6 + $0x790] sm:$0xff]
    %v494 = vld [vmem:[#allocation6 + $0x798] sm:$0xff]
    %v495 = vld [vmem:[#allocation6 + $0x7a0] sm:$0xff]
    %v496 = vld [vmem:[#allocation6 + $0x7a8] sm:$0xff]
    %v497 = vld [vmem:[#allocation6 + $0x7b0] sm:$0xff]
    %v498 = vld [vmem:[#allocation6 + $0x7b8] sm:$0xff]
    %v499 = vld [vmem:[#allocation6 + $0x7c0] sm:$0xff]
    %v500 = vld [vmem:[#allocation6 + $0x7c8] sm:$0xff]
    %v501 = vld [vmem:[#allocation6 + $0x7d0] sm:$0xff]
    %v502 = vld [vmem:[#allocation6 + $0x7d8] sm:$0xff]
    %v503 = vld [vmem:[#allocation6 + $0x7e0] sm:$0xff]
    %v504 = vld [vmem:[#allocation6 + $0x7e8] sm:$0xff]
    %v505 = vld [vmem:[#allocation6 + $0x7f0] sm:$0xff]
    %v506 = vld [vmem:[#allocation6 + $0x7f8] sm:$0xff]
    %s507 = scalar_lea.vmem [#allocation2], 336
    %508 = vst [vmem:[%s507] sm:$0xff] %v251
    %509 = vst [vmem:[%s507 + $0x8] sm:$0xff] %v252
    %510 = vst [vmem:[%s507 + $0x10] sm:$0xff] %v253
    %511 = vst [vmem:[%s507 + $0x18] sm:$0xff] %v254
    %512 = vst [vmem:[%s507 + $0x20] sm:$0xff] %v255
    %513 = vst [vmem:[%s507 + $0x28] sm:$0xff] %v256
    %514 = vst [vmem:[%s507 + $0x30] sm:$0xff] %v257
    %515 = vst [vmem:[%s507 + $0x38] sm:$0xff] %v258
    %516 = vst [vmem:[%s507 + $0x40] sm:$0xff] %v259
    %517 = vst [vmem:[%s507 + $0x48] sm:$0xff] %v260
    %518 = vst [vmem:[%s507 + $0x50] sm:$0xff] %v261
    %519 = vst [vmem:[%s507 + $0x58] sm:$0xff] %v262
    %520 = vst [vmem:[%s507 + $0x60] sm:$0xff] %v263
    %521 = vst [vmem:[%s507 + $0x68] sm:$0xff] %v264
    %522 = vst [vmem:[%s507 + $0x70] sm:$0xff] %v265
    %523 = vst [vmem:[%s507 + $0x78] sm:$0xff] %v266
    %524 = vst [vmem:[%s507 + $0xa0] sm:$0xff] %v267
    %525 = vst [vmem:[%s507 + $0xa8] sm:$0xff] %v268
    %526 = vst [vmem:[%s507 + $0xb0] sm:$0xff] %v269
    %527 = vst [vmem:[%s507 + $0xb8] sm:$0xff] %v270
    %528 = vst [vmem:[%s507 + $0xc0] sm:$0xff] %v271
    %529 = vst [vmem:[%s507 + $0xc8] sm:$0xff] %v272
    %530 = vst [vmem:[%s507 + $0xd0] sm:$0xff] %v273
    %531 = vst [vmem:[%s507 + $0xd8] sm:$0xff] %v274
    %532 = vst [vmem:[%s507 + $0xe0] sm:$0xff] %v275
    %533 = vst [vmem:[%s507 + $0xe8] sm:$0xff] %v276
    %534 = vst [vmem:[%s507 + $0xf0] sm:$0xff] %v277
    %535 = vst [vmem:[%s507 + $0xf8] sm:$0xff] %v278
    %536 = vst [vmem:[%s507 + $0x100] sm:$0xff] %v279
    %537 = vst [vmem:[%s507 + $0x108] sm:$0xff] %v280
    %538 = vst [vmem:[%s507 + $0x110] sm:$0xff] %v281
    %539 = vst [vmem:[%s507 + $0x118] sm:$0xff] %v282
    %540 = vst [vmem:[%s507 + $0x140] sm:$0xff] %v283
    %541 = vst [vmem:[%s507 + $0x148] sm:$0xff] %v284
    %542 = vst [vmem:[%s507 + $0x150] sm:$0xff] %v285
    %543 = vst [vmem:[%s507 + $0x158] sm:$0xff] %v286
    %544 = vst [vmem:[%s507 + $0x160] sm:$0xff] %v287
    %545 = vst [vmem:[%s507 + $0x168] sm:$0xff] %v288
    %546 = vst [vmem:[%s507 + $0x170] sm:$0xff] %v289
    %547 = vst [vmem:[%s507 + $0x178] sm:$0xff] %v290
    %548 = vst [vmem:[%s507 + $0x180] sm:$0xff] %v291
    %549 = vst [vmem:[%s507 + $0x188] sm:$0xff] %v292
    %550 = vst [vmem:[%s507 + $0x190] sm:$0xff] %v293
    %551 = vst [vmem:[%s507 + $0x198] sm:$0xff] %v294
    %552 = vst [vmem:[%s507 + $0x1a0] sm:$0xff] %v295
    %553 = vst [vmem:[%s507 + $0x1a8] sm:$0xff] %v296
    %554 = vst [vmem:[%s507 + $0x1b0] sm:$0xff] %v297
    %555 = vst [vmem:[%s507 + $0x1b8] sm:$0xff] %v298
    %556 = vst [vmem:[%s507 + $0x1e0] sm:$0xff] %v299
    %557 = vst [vmem:[%s507 + $0x1e8] sm:$0xff] %v300
    %558 = vst [vmem:[%s507 + $0x1f0] sm:$0xff] %v301
    %559 = vst [vmem:[%s507 + $0x1f8] sm:$0xff] %v302
    %560 = vst [vmem:[%s507 + $0x200] sm:$0xff] %v303
    %561 = vst [vmem:[%s507 + $0x208] sm:$0xff] %v304
    %562 = vst [vmem:[%s507 + $0x210] sm:$0xff] %v305
    %563 = vst [vmem:[%s507 + $0x218] sm:$0xff] %v306
    %564 = vst [vmem:[%s507 + $0x220] sm:$0xff] %v307
    %565 = vst [vmem:[%s507 + $0x228] sm:$0xff] %v308
    %566 = vst [vmem:[%s507 + $0x230] sm:$0xff] %v309
    %567 = vst [vmem:[%s507 + $0x238] sm:$0xff] %v310
    %568 = vst [vmem:[%s507 + $0x240] sm:$0xff] %v311
    %569 = vst [vmem:[%s507 + $0x248] sm:$0xff] %v312
    %570 = vst [vmem:[%s507 + $0x250] sm:$0xff] %v313
    %571 = vst [vmem:[%s507 + $0x258] sm:$0xff] %v314
    %572 = vst [vmem:[%s507 + $0x280] sm:$0xff] %v315
    %573 = vst [vmem:[%s507 + $0x288] sm:$0xff] %v316
    %574 = vst [vmem:[%s507 + $0x290] sm:$0xff] %v317
    %575 = vst [vmem:[%s507 + $0x298] sm:$0xff] %v318
    %576 = vst [vmem:[%s507 + $0x2a0] sm:$0xff] %v319
    %577 = vst [vmem:[%s507 + $0x2a8] sm:$0xff] %v320
    %578 = vst [vmem:[%s507 + $0x2b0] sm:$0xff] %v321
    %579 = vst [vmem:[%s507 + $0x2b8] sm:$0xff] %v322
    %580 = vst [vmem:[%s507 + $0x2c0] sm:$0xff] %v323
    %581 = vst [vmem:[%s507 + $0x2c8] sm:$0xff] %v324
    %582 = vst [vmem:[%s507 + $0x2d0] sm:$0xff] %v325
    %583 = vst [vmem:[%s507 + $0x2d8] sm:$0xff] %v326
    %584 = vst [vmem:[%s507 + $0x2e0] sm:$0xff] %v327
    %585 = vst [vmem:[%s507 + $0x2e8] sm:$0xff] %v328
    %586 = vst [vmem:[%s507 + $0x2f0] sm:$0xff] %v329
    %587 = vst [vmem:[%s507 + $0x2f8] sm:$0xff] %v330
    %588 = vst [vmem:[%s507 + $0x320] sm:$0xff] %v331
    %589 = vst [vmem:[%s507 + $0x328] sm:$0xff] %v332
    %590 = vst [vmem:[%s507 + $0x330] sm:$0xff] %v333
    %591 = vst [vmem:[%s507 + $0x338] sm:$0xff] %v334
    %592 = vst [vmem:[%s507 + $0x340] sm:$0xff] %v335
    %593 = vst [vmem:[%s507 + $0x348] sm:$0xff] %v336
    %594 = vst [vmem:[%s507 + $0x350] sm:$0xff] %v337
    %595 = vst [vmem:[%s507 + $0x358] sm:$0xff] %v338
    %596 = vst [vmem:[%s507 + $0x360] sm:$0xff] %v339
    %597 = vst [vmem:[%s507 + $0x368] sm:$0xff] %v340
    %598 = vst [vmem:[%s507 + $0x370] sm:$0xff] %v341
    %599 = vst [vmem:[%s507 + $0x378] sm:$0xff] %v342
    %600 = vst [vmem:[%s507 + $0x380] sm:$0xff] %v343
    %601 = vst [vmem:[%s507 + $0x388] sm:$0xff] %v344
    %602 = vst [vmem:[%s507 + $0x390] sm:$0xff] %v345
    %603 = vst [vmem:[%s507 + $0x398] sm:$0xff] %v346
    %604 = vst [vmem:[%s507 + $0x3c0] sm:$0xff] %v347
    %605 = vst [vmem:[%s507 + $0x3c8] sm:$0xff] %v348
    %606 = vst [vmem:[%s507 + $0x3d0] sm:$0xff] %v349
    %607 = vst [vmem:[%s507 + $0x3d8] sm:$0xff] %v350
    %608 = vst [vmem:[%s507 + $0x3e0] sm:$0xff] %v351
    %609 = vst [vmem:[%s507 + $0x3e8] sm:$0xff] %v352
    %610 = vst [vmem:[%s507 + $0x3f0] sm:$0xff] %v353
    %611 = vst [vmem:[%s507 + $0x3f8] sm:$0xff] %v354
    %612 = vst [vmem:[%s507 + $0x400] sm:$0xff] %v355
    %613 = vst [vmem:[%s507 + $0x408] sm:$0xff] %v356
    %614 = vst [vmem:[%s507 + $0x410] sm:$0xff] %v357
    %615 = vst [vmem:[%s507 + $0x418] sm:$0xff] %v358
    %616 = vst [vmem:[%s507 + $0x420] sm:$0xff] %v359
    %617 = vst [vmem:[%s507 + $0x428] sm:$0xff] %v360
    %618 = vst [vmem:[%s507 + $0x430] sm:$0xff] %v361
    %619 = vst [vmem:[%s507 + $0x438] sm:$0xff] %v362
    %620 = vst [vmem:[%s507 + $0x460] sm:$0xff] %v363
    %621 = vst [vmem:[%s507 + $0x468] sm:$0xff] %v364
    %622 = vst [vmem:[%s507 + $0x470] sm:$0xff] %v365
    %623 = vst [vmem:[%s507 + $0x478] sm:$0xff] %v366
    %624 = vst [vmem:[%s507 + $0x480] sm:$0xff] %v367
    %625 = vst [vmem:[%s507 + $0x488] sm:$0xff] %v368
    %626 = vst [vmem:[%s507 + $0x490] sm:$0xff] %v369
    %627 = vst [vmem:[%s507 + $0x498] sm:$0xff] %v370
    %628 = vst [vmem:[%s507 + $0x4a0] sm:$0xff] %v371
    %629 = vst [vmem:[%s507 + $0x4a8] sm:$0xff] %v372
    %630 = vst [vmem:[%s507 + $0x4b0] sm:$0xff] %v373
    %631 = vst [vmem:[%s507 + $0x4b8] sm:$0xff] %v374
    %632 = vst [vmem:[%s507 + $0x4c0] sm:$0xff] %v375
    %633 = vst [vmem:[%s507 + $0x4c8] sm:$0xff] %v376
    %634 = vst [vmem:[%s507 + $0x4d0] sm:$0xff] %v377
    %635 = vst [vmem:[%s507 + $0x4d8] sm:$0xff] %v378
    %636 = vst [vmem:[%s507 + $0x500] sm:$0xff] %v379
    %637 = vst [vmem:[%s507 + $0x508] sm:$0xff] %v380
    %638 = vst [vmem:[%s507 + $0x510] sm:$0xff] %v381
    %639 = vst [vmem:[%s507 + $0x518] sm:$0xff] %v382
    %640 = vst [vmem:[%s507 + $0x520] sm:$0xff] %v383
    %641 = vst [vmem:[%s507 + $0x528] sm:$0xff] %v384
    %642 = vst [vmem:[%s507 + $0x530] sm:$0xff] %v385
    %643 = vst [vmem:[%s507 + $0x538] sm:$0xff] %v386
    %644 = vst [vmem:[%s507 + $0x540] sm:$0xff] %v387
    %645 = vst [vmem:[%s507 + $0x548] sm:$0xff] %v388
    %646 = vst [vmem:[%s507 + $0x550] sm:$0xff] %v389
    %647 = vst [vmem:[%s507 + $0x558] sm:$0xff] %v390
    %648 = vst [vmem:[%s507 + $0x560] sm:$0xff] %v391
    %649 = vst [vmem:[%s507 + $0x568] sm:$0xff] %v392
    %650 = vst [vmem:[%s507 + $0x570] sm:$0xff] %v393
    %651 = vst [vmem:[%s507 + $0x578] sm:$0xff] %v394
    %652 = vst [vmem:[%s507 + $0x5a0] sm:$0xff] %v395
    %653 = vst [vmem:[%s507 + $0x5a8] sm:$0xff] %v396
    %654 = vst [vmem:[%s507 + $0x5b0] sm:$0xff] %v397
    %655 = vst [vmem:[%s507 + $0x5b8] sm:$0xff] %v398
    %656 = vst [vmem:[%s507 + $0x5c0] sm:$0xff] %v399
    %657 = vst [vmem:[%s507 + $0x5c8] sm:$0xff] %v400
    %658 = vst [vmem:[%s507 + $0x5d0] sm:$0xff] %v401
    %659 = vst [vmem:[%s507 + $0x5d8] sm:$0xff] %v402
    %660 = vst [vmem:[%s507 + $0x5e0] sm:$0xff] %v403
    %661 = vst [vmem:[%s507 + $0x5e8] sm:$0xff] %v404
    %662 = vst [vmem:[%s507 + $0x5f0] sm:$0xff] %v405
    %663 = vst [vmem:[%s507 + $0x5f8] sm:$0xff] %v406
    %664 = vst [vmem:[%s507 + $0x600] sm:$0xff] %v407
    %665 = vst [vmem:[%s507 + $0x608] sm:$0xff] %v408
    %666 = vst [vmem:[%s507 + $0x610] sm:$0xff] %v409
    %667 = vst [vmem:[%s507 + $0x618] sm:$0xff] %v410
    %668 = vst [vmem:[%s507 + $0x640] sm:$0xff] %v411
    %669 = vst [vmem:[%s507 + $0x648] sm:$0xff] %v412
    %670 = vst [vmem:[%s507 + $0x650] sm:$0xff] %v413
    %671 = vst [vmem:[%s507 + $0x658] sm:$0xff] %v414
    %672 = vst [vmem:[%s507 + $0x660] sm:$0xff] %v415
    %673 = vst [vmem:[%s507 + $0x668] sm:$0xff] %v416
    %674 = vst [vmem:[%s507 + $0x670] sm:$0xff] %v417
    %675 = vst [vmem:[%s507 + $0x678] sm:$0xff] %v418
    %676 = vst [vmem:[%s507 + $0x680] sm:$0xff] %v419
    %677 = vst [vmem:[%s507 + $0x688] sm:$0xff] %v420
    %678 = vst [vmem:[%s507 + $0x690] sm:$0xff] %v421
    %679 = vst [vmem:[%s507 + $0x698] sm:$0xff] %v422
    %680 = vst [vmem:[%s507 + $0x6a0] sm:$0xff] %v423
    %681 = vst [vmem:[%s507 + $0x6a8] sm:$0xff] %v424
    %682 = vst [vmem:[%s507 + $0x6b0] sm:$0xff] %v425
    %683 = vst [vmem:[%s507 + $0x6b8] sm:$0xff] %v426
    %684 = vst [vmem:[%s507 + $0x6e0] sm:$0xff] %v427
    %685 = vst [vmem:[%s507 + $0x6e8] sm:$0xff] %v428
    %686 = vst [vmem:[%s507 + $0x6f0] sm:$0xff] %v429
    %687 = vst [vmem:[%s507 + $0x6f8] sm:$0xff] %v430
    %688 = vst [vmem:[%s507 + $0x700] sm:$0xff] %v431
    %689 = vst [vmem:[%s507 + $0x708] sm:$0xff] %v432
    %690 = vst [vmem:[%s507 + $0x710] sm:$0xff] %v433
    %691 = vst [vmem:[%s507 + $0x718] sm:$0xff] %v434
    %692 = vst [vmem:[%s507 + $0x720] sm:$0xff] %v435
    %693 = vst [vmem:[%s507 + $0x728] sm:$0xff] %v436
    %694 = vst [vmem:[%s507 + $0x730] sm:$0xff] %v437
    %695 = vst [vmem:[%s507 + $0x738] sm:$0xff] %v438
    %696 = vst [vmem:[%s507 + $0x740] sm:$0xff] %v439
    %697 = vst [vmem:[%s507 + $0x748] sm:$0xff] %v440
    %698 = vst [vmem:[%s507 + $0x750] sm:$0xff] %v441
    %699 = vst [vmem:[%s507 + $0x758] sm:$0xff] %v442
    %700 = vst [vmem:[%s507 + $0x780] sm:$0xff] %v443
    %701 = vst [vmem:[%s507 + $0x788] sm:$0xff] %v444
    %702 = vst [vmem:[%s507 + $0x790] sm:$0xff] %v445
    %703 = vst [vmem:[%s507 + $0x798] sm:$0xff] %v446
    %704 = vst [vmem:[%s507 + $0x7a0] sm:$0xff] %v447
    %705 = vst [vmem:[%s507 + $0x7a8] sm:$0xff] %v448
    %706 = vst [vmem:[%s507 + $0x7b0] sm:$0xff] %v449
    %707 = vst [vmem:[%s507 + $0x7b8] sm:$0xff] %v450
    %708 = vst [vmem:[%s507 + $0x7c0] sm:$0xff] %v451
    %709 = vst [vmem:[%s507 + $0x7c8] sm:$0xff] %v452
    %710 = vst [vmem:[%s507 + $0x7d0] sm:$0xff] %v453
    %711 = vst [vmem:[%s507 + $0x7d8] sm:$0xff] %v454
    %712 = vst [vmem:[%s507 + $0x7e0] sm:$0xff] %v455
    %713 = vst [vmem:[%s507 + $0x7e8] sm:$0xff] %v456
    %714 = vst [vmem:[%s507 + $0x7f0] sm:$0xff] %v457
    %715 = vst [vmem:[%s507 + $0x7f8] sm:$0xff] %v458
    %716 = vst [vmem:[%s507 + $0x820] sm:$0xff] %v459
    %717 = vst [vmem:[%s507 + $0x828] sm:$0xff] %v460
    %718 = vst [vmem:[%s507 + $0x830] sm:$0xff] %v461
    %719 = vst [vmem:[%s507 + $0x838] sm:$0xff] %v462
    %720 = vst [vmem:[%s507 + $0x840] sm:$0xff] %v463
    %721 = vst [vmem:[%s507 + $0x848] sm:$0xff] %v464
    %722 = vst [vmem:[%s507 + $0x850] sm:$0xff] %v465
    %723 = vst [vmem:[%s507 + $0x858] sm:$0xff] %v466
    %724 = vst [vmem:[%s507 + $0x860] sm:$0xff] %v467
    %725 = vst [vmem:[%s507 + $0x868] sm:$0xff] %v468
    %726 = vst [vmem:[%s507 + $0x870] sm:$0xff] %v469
    %727 = vst [vmem:[%s507 + $0x878] sm:$0xff] %v470
    %728 = vst [vmem:[%s507 + $0x880] sm:$0xff] %v471
    %729 = vst [vmem:[%s507 + $0x888] sm:$0xff] %v472
    %730 = vst [vmem:[%s507 + $0x890] sm:$0xff] %v473
    %731 = vst [vmem:[%s507 + $0x898] sm:$0xff] %v474
    %732 = vst [vmem:[%s507 + $0x8c0] sm:$0xff] %v475
    %733 = vst [vmem:[%s507 + $0x8c8] sm:$0xff] %v476
    %734 = vst [vmem:[%s507 + $0x8d0] sm:$0xff] %v477
    %735 = vst [vmem:[%s507 + $0x8d8] sm:$0xff] %v478
    %736 = vst [vmem:[%s507 + $0x8e0] sm:$0xff] %v479
    %737 = vst [vmem:[%s507 + $0x8e8] sm:$0xff] %v480
    %738 = vst [vmem:[%s507 + $0x8f0] sm:$0xff] %v481
    %739 = vst [vmem:[%s507 + $0x8f8] sm:$0xff] %v482
    %740 = vst [vmem:[%s507 + $0x900] sm:$0xff] %v483
    %741 = vst [vmem:[%s507 + $0x908] sm:$0xff] %v484
    %742 = vst [vmem:[%s507 + $0x910] sm:$0xff] %v485
    %743 = vst [vmem:[%s507 + $0x918] sm:$0xff] %v486
    %744 = vst [vmem:[%s507 + $0x920] sm:$0xff] %v487
    %745 = vst [vmem:[%s507 + $0x928] sm:$0xff] %v488
    %746 = vst [vmem:[%s507 + $0x930] sm:$0xff] %v489
    %747 = vst [vmem:[%s507 + $0x938] sm:$0xff] %v490
    %748 = vst [vmem:[%s507 + $0x960] sm:$0xff] %v491
    %749 = vst [vmem:[%s507 + $0x968] sm:$0xff] %v492
    %750 = vst [vmem:[%s507 + $0x970] sm:$0xff] %v493
    %751 = vst [vmem:[%s507 + $0x978] sm:$0xff] %v494
    %752 = vst [vmem:[%s507 + $0x980] sm:$0xff] %v495
    %753 = vst [vmem:[%s507 + $0x988] sm:$0xff] %v496
    %754 = vst [vmem:[%s507 + $0x990] sm:$0xff] %v497
    %755 = vst [vmem:[%s507 + $0x998] sm:$0xff] %v498
    %756 = vst [vmem:[%s507 + $0x9a0] sm:$0xff] %v499
    %757 = vst [vmem:[%s507 + $0x9a8] sm:$0xff] %v500
    %758 = vst [vmem:[%s507 + $0x9b0] sm:$0xff] %v501
    %759 = vst [vmem:[%s507 + $0x9b8] sm:$0xff] %v502
    %760 = vst [vmem:[%s507 + $0x9c0] sm:$0xff] %v503
    %761 = vst [vmem:[%s507 + $0x9c8] sm:$0xff] %v504
    %762 = vst [vmem:[%s507 + $0x9d0] sm:$0xff] %v505
    %763 = vst [vmem:[%s507 + $0x9d8] sm:$0xff] %v506
    %764 = vst [vmem:[#allocation3] sm:$0xff] 0.0
    %765 = vst [vmem:[#allocation3 + $0x8] sm:$0xff] 0.0
    %766 = vst [vmem:[#allocation3 + $0x10] sm:$0xff] 0.0
    %767 = vst [vmem:[#allocation3 + $0x18] sm:$0xff] 0.0
    %768 = vst [vmem:[#allocation3 + $0x20] sm:$0xff] 0.0
    %769 = vst [vmem:[#allocation3 + $0x28] sm:$0xff] 0.0
    %770 = vst [vmem:[#allocation3 + $0x30] sm:$0xff] 0.0
    %771 = vst [vmem:[#allocation3 + $0x38] sm:$0xff] 0.0
    %772 = vst [vmem:[#allocation3 + $0x40] sm:$0xff] 0.0
    %773 = vst [vmem:[#allocation3 + $0x48] sm:$0xff] 0.0
    %774 = vst [vmem:[#allocation3 + $0x50] sm:$0xff] 0.0
    %775 = vst [vmem:[#allocation3 + $0x58] sm:$0xff] 0.0
    %776 = vst [vmem:[#allocation3 + $0x60] sm:$0xff] 0.0
    %777 = vst [vmem:[#allocation3 + $0x68] sm:$0xff] 0.0
    %778 = vst [vmem:[#allocation3 + $0x70] sm:$0xff] 0.0
    %779 = vst [vmem:[#allocation3 + $0x78] sm:$0xff] 0.0
    %780 = vst [vmem:[#allocation3 + $0x80] sm:$0xff] 0.0
    %781 = vst [vmem:[#allocation3 + $0x88] sm:$0xff] 0.0
    %782 = vst [vmem:[#allocation3 + $0x90] sm:$0xff] 0.0
    %783 = vst [vmem:[#allocation3 + $0x98] sm:$0xff] 0.0
    %784 = vst [vmem:[#allocation3 + $0xa0] sm:$0xff] 0.0
    %785 = vst [vmem:[#allocation3 + $0xa8] sm:$0xff] 0.0
    %786 = vst [vmem:[#allocation3 + $0xb0] sm:$0xff] 0.0
    %787 = vst [vmem:[#allocation3 + $0xb8] sm:$0xff] 0.0
    %s788 = scalar_lea.vmem [#allocation3], 960
    %789 = vst [vmem:[%s788] sm:$0xff] 0.0
    %790 = vst [vmem:[%s788 + $0x8] sm:$0xff] 0.0
    %791 = vst [vmem:[%s788 + $0x10] sm:$0xff] 0.0
    %792 = vst [vmem:[%s788 + $0x18] sm:$0xff] 0.0
    %793 = vst [vmem:[%s788 + $0x20] sm:$0xff] 0.0
    %794 = vst [vmem:[%s788 + $0x28] sm:$0xff] 0.0
    %795 = vst [vmem:[%s788 + $0x30] sm:$0xff] 0.0
    %796 = vst [vmem:[%s788 + $0x38] sm:$0xff] 0.0
    %797 = vst [vmem:[%s788 + $0x40] sm:$0xff] 0.0
    %798 = vst [vmem:[%s788 + $0x48] sm:$0xff] 0.0
    %799 = vst [vmem:[%s788 + $0x50] sm:$0xff] 0.0
    %800 = vst [vmem:[%s788 + $0x58] sm:$0xff] 0.0
    %801 = vst [vmem:[%s788 + $0x60] sm:$0xff] 0.0
    %802 = vst [vmem:[%s788 + $0x68] sm:$0xff] 0.0
    %803 = vst [vmem:[%s788 + $0x70] sm:$0xff] 0.0
    %804 = vst [vmem:[%s788 + $0x78] sm:$0xff] 0.0
    %805 = vst [vmem:[%s788 + $0x80] sm:$0xff] 0.0
    %806 = vst [vmem:[%s788 + $0x88] sm:$0xff] 0.0
    %807 = vst [vmem:[%s788 + $0x90] sm:$0xff] 0.0
    %808 = vst [vmem:[%s788 + $0x98] sm:$0xff] 0.0
    %809 = vst [vmem:[%s788 + $0xa0] sm:$0xff] 0.0
    %810 = vst [vmem:[%s788 + $0xa8] sm:$0xff] 0.0
    %811 = vst [vmem:[%s788 + $0xb0] sm:$0xff] 0.0
    %812 = vst [vmem:[%s788 + $0xb8] sm:$0xff] 0.0
    %s813 = scalar_lea.vmem [#allocation3], 192
    %814 = vst [vmem:[%s813] sm:$0xff] 0.0
    %815 = vst [vmem:[%s813 + $0x8] sm:$0xff] 0.0
    %816 = vst [vmem:[%s813 + $0x60] sm:$0xff] 0.0
    %817 = vst [vmem:[%s813 + $0x68] sm:$0xff] 0.0
    %818 = vst [vmem:[%s813 + $0xc0] sm:$0xff] 0.0
    %819 = vst [vmem:[%s813 + $0xc8] sm:$0xff] 0.0
    %820 = vst [vmem:[%s813 + $0x120] sm:$0xff] 0.0
    %821 = vst [vmem:[%s813 + $0x128] sm:$0xff] 0.0
    %822 = vst [vmem:[%s813 + $0x180] sm:$0xff] 0.0
    %823 = vst [vmem:[%s813 + $0x188] sm:$0xff] 0.0
    %824 = vst [vmem:[%s813 + $0x1e0] sm:$0xff] 0.0
    %825 = vst [vmem:[%s813 + $0x1e8] sm:$0xff] 0.0
    %826 = vst [vmem:[%s813 + $0x240] sm:$0xff] 0.0
    %827 = vst [vmem:[%s813 + $0x248] sm:$0xff] 0.0
    %828 = vst [vmem:[%s813 + $0x2a0] sm:$0xff] 0.0
    %829 = vst [vmem:[%s813 + $0x2a8] sm:$0xff] 0.0
    %s830 = scalar_lea.vmem [#allocation3], 272
    %831 = vst [vmem:[%s830] sm:$0xff] 0.0
    %832 = vst [vmem:[%s830 + $0x8] sm:$0xff] 0.0
    %833 = vst [vmem:[%s830 + $0x60] sm:$0xff] 0.0
    %834 = vst [vmem:[%s830 + $0x68] sm:$0xff] 0.0
    %835 = vst [vmem:[%s830 + $0xc0] sm:$0xff] 0.0
    %836 = vst [vmem:[%s830 + $0xc8] sm:$0xff] 0.0
    %837 = vst [vmem:[%s830 + $0x120] sm:$0xff] 0.0
    %838 = vst [vmem:[%s830 + $0x128] sm:$0xff] 0.0
    %839 = vst [vmem:[%s830 + $0x180] sm:$0xff] 0.0
    %840 = vst [vmem:[%s830 + $0x188] sm:$0xff] 0.0
    %841 = vst [vmem:[%s830 + $0x1e0] sm:$0xff] 0.0
    %842 = vst [vmem:[%s830 + $0x1e8] sm:$0xff] 0.0
    %843 = vst [vmem:[%s830 + $0x240] sm:$0xff] 0.0
    %844 = vst [vmem:[%s830 + $0x248] sm:$0xff] 0.0
    %845 = vst [vmem:[%s830 + $0x2a0] sm:$0xff] 0.0
    %846 = vst [vmem:[%s830 + $0x2a8] sm:$0xff] 0.0
    %847 = vst [vmem:[#allocation4] sm:$0xff] 0.0
    %848 = vst [vmem:[#allocation4 + $0x8] sm:$0xff] 0.0
    %849 = vst [vmem:[#allocation4 + $0x10] sm:$0xff] 0.0
    %850 = vst [vmem:[#allocation4 + $0x18] sm:$0xff] 0.0
    %851 = vst [vmem:[#allocation4 + $0x20] sm:$0xff] 0.0
    %852 = vst [vmem:[#allocation4 + $0x28] sm:$0xff] 0.0
    %853 = vst [vmem:[#allocation4 + $0x30] sm:$0xff] 0.0
    %854 = vst [vmem:[#allocation4 + $0x38] sm:$0xff] 0.0
    %855 = vst [vmem:[#allocation4 + $0x40] sm:$0xff] 0.0
    %856 = vst [vmem:[#allocation4 + $0x48] sm:$0xff] 0.0
    %857 = vst [vmem:[#allocation4 + $0x50] sm:$0xff] 0.0
    %858 = vst [vmem:[#allocation4 + $0x58] sm:$0xff] 0.0
    %859 = vst [vmem:[#allocation4 + $0x60] sm:$0xff] 0.0
    %860 = vst [vmem:[#allocation4 + $0x68] sm:$0xff] 0.0
    %861 = vst [vmem:[#allocation4 + $0x70] sm:$0xff] 0.0
    %862 = vst [vmem:[#allocation4 + $0x78] sm:$0xff] 0.0
    %863 = vst [vmem:[#allocation4 + $0x80] sm:$0xff] 0.0
    %864 = vst [vmem:[#allocation4 + $0x88] sm:$0xff] 0.0
    %865 = vst [vmem:[#allocation4 + $0x90] sm:$0xff] 0.0
    %866 = vst [vmem:[#allocation4 + $0x98] sm:$0xff] 0.0
    %867 = vst [vmem:[#allocation4 + $0xa0] sm:$0xff] 0.0
    %868 = vst [vmem:[#allocation4 + $0xa8] sm:$0xff] 0.0
    %869 = vst [vmem:[#allocation4 + $0xb0] sm:$0xff] 0.0
    %870 = vst [vmem:[#allocation4 + $0xb8] sm:$0xff] 0.0
    %s871 = scalar_lea.vmem [#allocation4], 960
    %872 = vst [vmem:[%s871] sm:$0xff] 0.0
    %873 = vst [vmem:[%s871 + $0x8] sm:$0xff] 0.0
    %874 = vst [vmem:[%s871 + $0x10] sm:$0xff] 0.0
    %875 = vst [vmem:[%s871 + $0x18] sm:$0xff] 0.0
    %876 = vst [vmem:[%s871 + $0x20] sm:$0xff] 0.0
    %877 = vst [vmem:[%s871 + $0x28] sm:$0xff] 0.0
    %878 = vst [vmem:[%s871 + $0x30] sm:$0xff] 0.0
    %879 = vst [vmem:[%s871 + $0x38] sm:$0xff] 0.0
    %880 = vst [vmem:[%s871 + $0x40] sm:$0xff] 0.0
    %881 = vst [vmem:[%s871 + $0x48] sm:$0xff] 0.0
    %882 = vst [vmem:[%s871 + $0x50] sm:$0xff] 0.0
    %883 = vst [vmem:[%s871 + $0x58] sm:$0xff] 0.0
    %884 = vst [vmem:[%s871 + $0x60] sm:$0xff] 0.0
    %885 = vst [vmem:[%s871 + $0x68] sm:$0xff] 0.0
    %886 = vst [vmem:[%s871 + $0x70] sm:$0xff] 0.0
    %887 = vst [vmem:[%s871 + $0x78] sm:$0xff] 0.0
    %888 = vst [vmem:[%s871 + $0x80] sm:$0xff] 0.0
    %889 = vst [vmem:[%s871 + $0x88] sm:$0xff] 0.0
    %890 = vst [vmem:[%s871 + $0x90] sm:$0xff] 0.0
    %891 = vst [vmem:[%s871 + $0x98] sm:$0xff] 0.0
    %892 = vst [vmem:[%s871 + $0xa0] sm:$0xff] 0.0
    %893 = vst [vmem:[%s871 + $0xa8] sm:$0xff] 0.0
    %894 = vst [vmem:[%s871 + $0xb0] sm:$0xff] 0.0
    %895 = vst [vmem:[%s871 + $0xb8] sm:$0xff] 0.0
    %s896 = scalar_lea.vmem [#allocation4], 192
    %897 = vst [vmem:[%s896] sm:$0xff] 0.0
    %898 = vst [vmem:[%s896 + $0x8] sm:$0xff] 0.0
    %899 = vst [vmem:[%s896 + $0x60] sm:$0xff] 0.0
    %900 = vst [vmem:[%s896 + $0x68] sm:$0xff] 0.0
    %901 = vst [vmem:[%s896 + $0xc0] sm:$0xff] 0.0
    %902 = vst [vmem:[%s896 + $0xc8] sm:$0xff] 0.0
    %903 = vst [vmem:[%s896 + $0x120] sm:$0xff] 0.0
    %904 = vst [vmem:[%s896 + $0x128] sm:$0xff] 0.0
    %905 = vst [vmem:[%s896 + $0x180] sm:$0xff] 0.0
    %906 = vst [vmem:[%s896 + $0x188] sm:$0xff] 0.0
    %907 = vst [vmem:[%s896 + $0x1e0] sm:$0xff] 0.0
    %908 = vst [vmem:[%s896 + $0x1e8] sm:$0xff] 0.0
    %909 = vst [vmem:[%s896 + $0x240] sm:$0xff] 0.0
    %910 = vst [vmem:[%s896 + $0x248] sm:$0xff] 0.0
    %911 = vst [vmem:[%s896 + $0x2a0] sm:$0xff] 0.0
    %912 = vst [vmem:[%s896 + $0x2a8] sm:$0xff] 0.0
    %s913 = scalar_lea.vmem [#allocation4], 272
    %914 = vst [vmem:[%s913] sm:$0xff] 0.0
    %915 = vst [vmem:[%s913 + $0x8] sm:$0xff] 0.0
    %916 = vst [vmem:[%s913 + $0x60] sm:$0xff] 0.0
    %917 = vst [vmem:[%s913 + $0x68] sm:$0xff] 0.0
    %918 = vst [vmem:[%s913 + $0xc0] sm:$0xff] 0.0
    %919 = vst [vmem:[%s913 + $0xc8] sm:$0xff] 0.0
    %920 = vst [vmem:[%s913 + $0x120] sm:$0xff] 0.0
    %921 = vst [vmem:[%s913 + $0x128] sm:$0xff] 0.0
    %922 = vst [vmem:[%s913 + $0x180] sm:$0xff] 0.0
    %923 = vst [vmem:[%s913 + $0x188] sm:$0xff] 0.0
    %924 = vst [vmem:[%s913 + $0x1e0] sm:$0xff] 0.0
    %925 = vst [vmem:[%s913 + $0x1e8] sm:$0xff] 0.0
    %926 = vst [vmem:[%s913 + $0x240] sm:$0xff] 0.0
    %927 = vst [vmem:[%s913 + $0x248] sm:$0xff] 0.0
    %928 = vst [vmem:[%s913 + $0x2a0] sm:$0xff] 0.0
    %929 = vst [vmem:[%s913 + $0x2a8] sm:$0xff] 0.0
    loop: start=0, step=1, limit=8
    $region54: #{tpu_custom_call.1} parent=1 // loop_pre_header
      _
    $region55: #{tpu_custom_call.1} parent=1 // loop_header
      %s931 = sphi 0, %s935
      %p932 = scmp.ge.s32.totalorder %s931, 8
    $region56: #{tpu_custom_call.1} parent=1 // loop_header_branch
      %934 = sbr.rel (%p932) target = $region60
    $region57: #{tpu_custom_call.1} parent=1 // loop_body
      %s936 = smul.u32 %s931, 2
      %s937 = smul.u32 %s936, 160
      %s938 = scalar_lea.vmem [#allocation2], %s937
      %v939 = vld [vmem:[%s938] sm:$0xff]
      %v940 = vld [vmem:[%s938 + $0x8] sm:$0xff]
      %v941 = vld [vmem:[%s938 + $0x10] sm:$0xff]
      %v942 = vld [vmem:[%s938 + $0x18] sm:$0xff]
      %v943 = vld [vmem:[%s938 + $0x20] sm:$0xff]
      %v944 = vld [vmem:[%s938 + $0x28] sm:$0xff]
      %v945 = vld [vmem:[%s938 + $0x30] sm:$0xff]
      %v946 = vld [vmem:[%s938 + $0x38] sm:$0xff]
      %v947 = vld [vmem:[%s938 + $0x40] sm:$0xff]
      %v948 = vld [vmem:[%s938 + $0x48] sm:$0xff]
      %v949 = vld [vmem:[%s938 + $0x50] sm:$0xff]
      %v950 = vld [vmem:[%s938 + $0x58] sm:$0xff]
      %v951 = vld [vmem:[%s938 + $0x60] sm:$0xff]
      %v952 = vld [vmem:[%s938 + $0x68] sm:$0xff]
      %v953 = vld [vmem:[%s938 + $0x70] sm:$0xff]
      %v954 = vld [vmem:[%s938 + $0x78] sm:$0xff]
      %v955 = vld [vmem:[%s938 + $0x80] sm:$0xff]
      %v956 = vld [vmem:[%s938 + $0x88] sm:$0xff]
      %v957 = vld [vmem:[%s938 + $0x90] sm:$0xff]
      %v958 = vld [vmem:[%s938 + $0x98] sm:$0xff]
      %s959 = sld [smem:[#allocation11]]
      %v960 = vstv %s959
      %v961 = vmul.f32 %v960, %v939
      %v962 = vmul.f32 %v960, %v940
      %v963 = vmul.f32 %v960, %v941
      %v964 = vmul.f32 %v960, %v942
      %v965 = vmul.f32 %v960, %v943
      %v966 = vmul.f32 %v960, %v944
      %v967 = vmul.f32 %v960, %v945
      %v968 = vmul.f32 %v960, %v946
      %v969 = vmul.f32 %v960, %v947
      %v970 = vmul.f32 %v960, %v948
      %v971 = vmul.f32 %v960, %v949
      %v972 = vmul.f32 %v960, %v950
      %v973 = vmul.f32 %v960, %v951
      %v974 = vmul.f32 %v960, %v952
      %v975 = vmul.f32 %v960, %v953
      %v976 = vmul.f32 %v960, %v954
      %s977 = sld [smem:[#allocation11 + $0x1]]
      %v978 = vstv %s977
      %v979 = vmul.f32 %v978, %v940
      %v980 = vmul.f32 %v978, %v941
      %v981 = vmul.f32 %v978, %v942
      %v982 = vmul.f32 %v978, %v943
      %v983 = vmul.f32 %v978, %v944
      %v984 = vmul.f32 %v978, %v945
      %v985 = vmul.f32 %v978, %v946
      %v986 = vmul.f32 %v978, %v947
      %v987 = vmul.f32 %v978, %v948
      %v988 = vmul.f32 %v978, %v949
      %v989 = vmul.f32 %v978, %v950
      %v990 = vmul.f32 %v978, %v951
      %v991 = vmul.f32 %v978, %v952
      %v992 = vmul.f32 %v978, %v953
      %v993 = vmul.f32 %v978, %v954
      %v994 = vmul.f32 %v978, %v955
      %v995 = vadd.f32 %v961, %v979
      %v996 = vadd.f32 %v962, %v980
      %v997 = vadd.f32 %v963, %v981
      %v998 = vadd.f32 %v964, %v982
      %v999 = vadd.f32 %v965, %v983
      %v1000 = vadd.f32 %v966, %v984
      %v1001 = vadd.f32 %v967, %v985
      %v1002 = vadd.f32 %v968, %v986
      %v1003 = vadd.f32 %v969, %v987
      %v1004 = vadd.f32 %v970, %v988
      %v1005 = vadd.f32 %v971, %v989
      %v1006 = vadd.f32 %v972, %v990
      %v1007 = vadd.f32 %v973, %v991
      %v1008 = vadd.f32 %v974, %v992
      %v1009 = vadd.f32 %v975, %v993
      %v1010 = vadd.f32 %v976, %v994
      %s1011 = sld [smem:[#allocation11 + $0x2]]
      %v1012 = vstv %s1011
      %v1013 = vmul.f32 %v1012, %v941
      %v1014 = vmul.f32 %v1012, %v942
      %v1015 = vmul.f32 %v1012, %v943
      %v1016 = vmul.f32 %v1012, %v944
      %v1017 = vmul.f32 %v1012, %v945
      %v1018 = vmul.f32 %v1012, %v946
      %v1019 = vmul.f32 %v1012, %v947
      %v1020 = vmul.f32 %v1012, %v948
      %v1021 = vmul.f32 %v1012, %v949
      %v1022 = vmul.f32 %v1012, %v950
      %v1023 = vmul.f32 %v1012, %v951
      %v1024 = vmul.f32 %v1012, %v952
      %v1025 = vmul.f32 %v1012, %v953
      %v1026 = vmul.f32 %v1012, %v954
      %v1027 = vmul.f32 %v1012, %v955
      %v1028 = vmul.f32 %v1012, %v956
      %v1029 = vadd.f32 %v995, %v1013
      %v1030 = vadd.f32 %v996, %v1014
      %v1031 = vadd.f32 %v997, %v1015
      %v1032 = vadd.f32 %v998, %v1016
      %v1033 = vadd.f32 %v999, %v1017
      %v1034 = vadd.f32 %v1000, %v1018
      %v1035 = vadd.f32 %v1001, %v1019
      %v1036 = vadd.f32 %v1002, %v1020
      %v1037 = vadd.f32 %v1003, %v1021
      %v1038 = vadd.f32 %v1004, %v1022
      %v1039 = vadd.f32 %v1005, %v1023
      %v1040 = vadd.f32 %v1006, %v1024
      %v1041 = vadd.f32 %v1007, %v1025
      %v1042 = vadd.f32 %v1008, %v1026
      %v1043 = vadd.f32 %v1009, %v1027
      %v1044 = vadd.f32 %v1010, %v1028
      %s1045 = sld [smem:[#allocation11 + $0x3]]
      %v1046 = vstv %s1045
      %v1047 = vmul.f32 %v1046, %v942
      %v1048 = vmul.f32 %v1046, %v943
      %v1049 = vmul.f32 %v1046, %v944
      %v1050 = vmul.f32 %v1046, %v945
      %v1051 = vmul.f32 %v1046, %v946
      %v1052 = vmul.f32 %v1046, %v947
      %v1053 = vmul.f32 %v1046, %v948
      %v1054 = vmul.f32 %v1046, %v949
      %v1055 = vmul.f32 %v1046, %v950
      %v1056 = vmul.f32 %v1046, %v951
      %v1057 = vmul.f32 %v1046, %v952
      %v1058 = vmul.f32 %v1046, %v953
      %v1059 = vmul.f32 %v1046, %v954
      %v1060 = vmul.f32 %v1046, %v955
      %v1061 = vmul.f32 %v1046, %v956
      %v1062 = vmul.f32 %v1046, %v957
      %v1063 = vadd.f32 %v1029, %v1047
      %v1064 = vadd.f32 %v1030, %v1048
      %v1065 = vadd.f32 %v1031, %v1049
      %v1066 = vadd.f32 %v1032, %v1050
      %v1067 = vadd.f32 %v1033, %v1051
      %v1068 = vadd.f32 %v1034, %v1052
      %v1069 = vadd.f32 %v1035, %v1053
      %v1070 = vadd.f32 %v1036, %v1054
      %v1071 = vadd.f32 %v1037, %v1055
      %v1072 = vadd.f32 %v1038, %v1056
      %v1073 = vadd.f32 %v1039, %v1057
      %v1074 = vadd.f32 %v1040, %v1058
      %v1075 = vadd.f32 %v1041, %v1059
      %v1076 = vadd.f32 %v1042, %v1060
      %v1077 = vadd.f32 %v1043, %v1061
      %v1078 = vadd.f32 %v1044, %v1062
      %s1079 = sld [smem:[#allocation11 + $0x4]]
      %v1080 = vstv %s1079
      %v1081 = vmul.f32 %v1080, %v943
      %v1082 = vmul.f32 %v1080, %v944
      %v1083 = vmul.f32 %v1080, %v945
      %v1084 = vmul.f32 %v1080, %v946
      %v1085 = vmul.f32 %v1080, %v947
      %v1086 = vmul.f32 %v1080, %v948
      %v1087 = vmul.f32 %v1080, %v949
      %v1088 = vmul.f32 %v1080, %v950
      %v1089 = vmul.f32 %v1080, %v951
      %v1090 = vmul.f32 %v1080, %v952
      %v1091 = vmul.f32 %v1080, %v953
      %v1092 = vmul.f32 %v1080, %v954
      %v1093 = vmul.f32 %v1080, %v955
      %v1094 = vmul.f32 %v1080, %v956
      %v1095 = vmul.f32 %v1080, %v957
      %v1096 = vmul.f32 %v1080, %v958
      %v1097 = vadd.f32 %v1063, %v1081
      %v1098 = vadd.f32 %v1064, %v1082
      %v1099 = vadd.f32 %v1065, %v1083
      %v1100 = vadd.f32 %v1066, %v1084
      %v1101 = vadd.f32 %v1067, %v1085
      %v1102 = vadd.f32 %v1068, %v1086
      %v1103 = vadd.f32 %v1069, %v1087
      %v1104 = vadd.f32 %v1070, %v1088
      %v1105 = vadd.f32 %v1071, %v1089
      %v1106 = vadd.f32 %v1072, %v1090
      %v1107 = vadd.f32 %v1073, %v1091
      %v1108 = vadd.f32 %v1074, %v1092
      %v1109 = vadd.f32 %v1075, %v1093
      %v1110 = vadd.f32 %v1076, %v1094
      %v1111 = vadd.f32 %v1077, %v1095
      %v1112 = vadd.f32 %v1078, %v1096
      %s1113 = sadd.s32 %s936, 1
      %s1114 = smul.u32 %s1113, 160
      %s1115 = scalar_lea.vmem [#allocation2], %s1114
      %v1116 = vld [vmem:[%s1115] sm:$0xff]
      %v1117 = vld [vmem:[%s1115 + $0x8] sm:$0xff]
      %v1118 = vld [vmem:[%s1115 + $0x10] sm:$0xff]
      %v1119 = vld [vmem:[%s1115 + $0x18] sm:$0xff]
      %v1120 = vld [vmem:[%s1115 + $0x20] sm:$0xff]
      %v1121 = vld [vmem:[%s1115 + $0x28] sm:$0xff]
      %v1122 = vld [vmem:[%s1115 + $0x30] sm:$0xff]
      %v1123 = vld [vmem:[%s1115 + $0x38] sm:$0xff]
      %v1124 = vld [vmem:[%s1115 + $0x40] sm:$0xff]
      %v1125 = vld [vmem:[%s1115 + $0x48] sm:$0xff]
      %v1126 = vld [vmem:[%s1115 + $0x50] sm:$0xff]
      %v1127 = vld [vmem:[%s1115 + $0x58] sm:$0xff]
      %v1128 = vld [vmem:[%s1115 + $0x60] sm:$0xff]
      %v1129 = vld [vmem:[%s1115 + $0x68] sm:$0xff]
      %v1130 = vld [vmem:[%s1115 + $0x70] sm:$0xff]
      %v1131 = vld [vmem:[%s1115 + $0x78] sm:$0xff]
      %v1132 = vld [vmem:[%s1115 + $0x80] sm:$0xff]
      %v1133 = vld [vmem:[%s1115 + $0x88] sm:$0xff]
      %v1134 = vld [vmem:[%s1115 + $0x90] sm:$0xff]
      %v1135 = vld [vmem:[%s1115 + $0x98] sm:$0xff]
      %s1136 = sld [smem:[#allocation11 + $0x5]]
      %v1137 = vstv %s1136
      %v1138 = vmul.f32 %v1137, %v1116
      %v1139 = vmul.f32 %v1137, %v1117
      %v1140 = vmul.f32 %v1137, %v1118
      %v1141 = vmul.f32 %v1137, %v1119
      %v1142 = vmul.f32 %v1137, %v1120
      %v1143 = vmul.f32 %v1137, %v1121
      %v1144 = vmul.f32 %v1137, %v1122
      %v1145 = vmul.f32 %v1137, %v1123
      %v1146 = vmul.f32 %v1137, %v1124
      %v1147 = vmul.f32 %v1137, %v1125
      %v1148 = vmul.f32 %v1137, %v1126
      %v1149 = vmul.f32 %v1137, %v1127
      %v1150 = vmul.f32 %v1137, %v1128
      %v1151 = vmul.f32 %v1137, %v1129
      %v1152 = vmul.f32 %v1137, %v1130
      %v1153 = vmul.f32 %v1137, %v1131
      %v1154 = vadd.f32 %v1097, %v1138
      %v1155 = vadd.f32 %v1098, %v1139
      %v1156 = vadd.f32 %v1099, %v1140
      %v1157 = vadd.f32 %v1100, %v1141
      %v1158 = vadd.f32 %v1101, %v1142
      %v1159 = vadd.f32 %v1102, %v1143
      %v1160 = vadd.f32 %v1103, %v1144
      %v1161 = vadd.f32 %v1104, %v1145
      %v1162 = vadd.f32 %v1105, %v1146
      %v1163 = vadd.f32 %v1106, %v1147
      %v1164 = vadd.f32 %v1107, %v1148
      %v1165 = vadd.f32 %v1108, %v1149
      %v1166 = vadd.f32 %v1109, %v1150
      %v1167 = vadd.f32 %v1110, %v1151
      %v1168 = vadd.f32 %v1111, %v1152
      %v1169 = vadd.f32 %v1112, %v1153
      %s1170 = sld [smem:[#allocation11 + $0x6]]
      %v1171 = vstv %s1170
      %v1172 = vmul.f32 %v1171, %v1117
      %v1173 = vmul.f32 %v1171, %v1118
      %v1174 = vmul.f32 %v1171, %v1119
      %v1175 = vmul.f32 %v1171, %v1120
      %v1176 = vmul.f32 %v1171, %v1121
      %v1177 = vmul.f32 %v1171, %v1122
      %v1178 = vmul.f32 %v1171, %v1123
      %v1179 = vmul.f32 %v1171, %v1124
      %v1180 = vmul.f32 %v1171, %v1125
      %v1181 = vmul.f32 %v1171, %v1126
      %v1182 = vmul.f32 %v1171, %v1127
      %v1183 = vmul.f32 %v1171, %v1128
      %v1184 = vmul.f32 %v1171, %v1129
      %v1185 = vmul.f32 %v1171, %v1130
      %v1186 = vmul.f32 %v1171, %v1131
      %v1187 = vmul.f32 %v1171, %v1132
      %v1188 = vadd.f32 %v1154, %v1172
      %v1189 = vadd.f32 %v1155, %v1173
      %v1190 = vadd.f32 %v1156, %v1174
      %v1191 = vadd.f32 %v1157, %v1175
      %v1192 = vadd.f32 %v1158, %v1176
      %v1193 = vadd.f32 %v1159, %v1177
      %v1194 = vadd.f32 %v1160, %v1178
      %v1195 = vadd.f32 %v1161, %v1179
      %v1196 = vadd.f32 %v1162, %v1180
      %v1197 = vadd.f32 %v1163, %v1181
      %v1198 = vadd.f32 %v1164, %v1182
      %v1199 = vadd.f32 %v1165, %v1183
      %v1200 = vadd.f32 %v1166, %v1184
      %v1201 = vadd.f32 %v1167, %v1185
      %v1202 = vadd.f32 %v1168, %v1186
      %v1203 = vadd.f32 %v1169, %v1187
      %s1204 = sld [smem:[#allocation11 + $0x7]]
      %v1205 = vstv %s1204
      %v1206 = vmul.f32 %v1205, %v1118
      %v1207 = vmul.f32 %v1205, %v1119
      %v1208 = vmul.f32 %v1205, %v1120
      %v1209 = vmul.f32 %v1205, %v1121
      %v1210 = vmul.f32 %v1205, %v1122
      %v1211 = vmul.f32 %v1205, %v1123
      %v1212 = vmul.f32 %v1205, %v1124
      %v1213 = vmul.f32 %v1205, %v1125
      %v1214 = vmul.f32 %v1205, %v1126
      %v1215 = vmul.f32 %v1205, %v1127
      %v1216 = vmul.f32 %v1205, %v1128
      %v1217 = vmul.f32 %v1205, %v1129
      %v1218 = vmul.f32 %v1205, %v1130
      %v1219 = vmul.f32 %v1205, %v1131
      %v1220 = vmul.f32 %v1205, %v1132
      %v1221 = vmul.f32 %v1205, %v1133
      %v1222 = vadd.f32 %v1188, %v1206
      %v1223 = vadd.f32 %v1189, %v1207
      %v1224 = vadd.f32 %v1190, %v1208
      %v1225 = vadd.f32 %v1191, %v1209
      %v1226 = vadd.f32 %v1192, %v1210
      %v1227 = vadd.f32 %v1193, %v1211
      %v1228 = vadd.f32 %v1194, %v1212
      %v1229 = vadd.f32 %v1195, %v1213
      %v1230 = vadd.f32 %v1196, %v1214
      %v1231 = vadd.f32 %v1197, %v1215
      %v1232 = vadd.f32 %v1198, %v1216
      %v1233 = vadd.f32 %v1199, %v1217
      %v1234 = vadd.f32 %v1200, %v1218
      %v1235 = vadd.f32 %v1201, %v1219
      %v1236 = vadd.f32 %v1202, %v1220
      %v1237 = vadd.f32 %v1203, %v1221
      %s1238 = sld [smem:[#allocation11 + $0x8]]
      %v1239 = vstv %s1238
      %v1240 = vmul.f32 %v1239, %v1119
      %v1241 = vmul.f32 %v1239, %v1120
      %v1242 = vmul.f32 %v1239, %v1121
      %v1243 = vmul.f32 %v1239, %v1122
      %v1244 = vmul.f32 %v1239, %v1123
      %v1245 = vmul.f32 %v1239, %v1124
      %v1246 = vmul.f32 %v1239, %v1125
      %v1247 = vmul.f32 %v1239, %v1126
      %v1248 = vmul.f32 %v1239, %v1127
      %v1249 = vmul.f32 %v1239, %v1128
      %v1250 = vmul.f32 %v1239, %v1129
      %v1251 = vmul.f32 %v1239, %v1130
      %v1252 = vmul.f32 %v1239, %v1131
      %v1253 = vmul.f32 %v1239, %v1132
      %v1254 = vmul.f32 %v1239, %v1133
      %v1255 = vmul.f32 %v1239, %v1134
      %v1256 = vadd.f32 %v1222, %v1240
      %v1257 = vadd.f32 %v1223, %v1241
      %v1258 = vadd.f32 %v1224, %v1242
      %v1259 = vadd.f32 %v1225, %v1243
      %v1260 = vadd.f32 %v1226, %v1244
      %v1261 = vadd.f32 %v1227, %v1245
      %v1262 = vadd.f32 %v1228, %v1246
      %v1263 = vadd.f32 %v1229, %v1247
      %v1264 = vadd.f32 %v1230, %v1248
      %v1265 = vadd.f32 %v1231, %v1249
      %v1266 = vadd.f32 %v1232, %v1250
      %v1267 = vadd.f32 %v1233, %v1251
      %v1268 = vadd.f32 %v1234, %v1252
      %v1269 = vadd.f32 %v1235, %v1253
      %v1270 = vadd.f32 %v1236, %v1254
      %v1271 = vadd.f32 %v1237, %v1255
      %s1272 = sld [smem:[#allocation11 + $0x9]]
      %v1273 = vstv %s1272
      %v1274 = vmul.f32 %v1273, %v1120
      %v1275 = vmul.f32 %v1273, %v1121
      %v1276 = vmul.f32 %v1273, %v1122
      %v1277 = vmul.f32 %v1273, %v1123
      %v1278 = vmul.f32 %v1273, %v1124
      %v1279 = vmul.f32 %v1273, %v1125
      %v1280 = vmul.f32 %v1273, %v1126
      %v1281 = vmul.f32 %v1273, %v1127
      %v1282 = vmul.f32 %v1273, %v1128
      %v1283 = vmul.f32 %v1273, %v1129
      %v1284 = vmul.f32 %v1273, %v1130
      %v1285 = vmul.f32 %v1273, %v1131
      %v1286 = vmul.f32 %v1273, %v1132
      %v1287 = vmul.f32 %v1273, %v1133
      %v1288 = vmul.f32 %v1273, %v1134
      %v1289 = vmul.f32 %v1273, %v1135
      %v1290 = vadd.f32 %v1256, %v1274
      %v1291 = vadd.f32 %v1257, %v1275
      %v1292 = vadd.f32 %v1258, %v1276
      %v1293 = vadd.f32 %v1259, %v1277
      %v1294 = vadd.f32 %v1260, %v1278
      %v1295 = vadd.f32 %v1261, %v1279
      %v1296 = vadd.f32 %v1262, %v1280
      %v1297 = vadd.f32 %v1263, %v1281
      %v1298 = vadd.f32 %v1264, %v1282
      %v1299 = vadd.f32 %v1265, %v1283
      %v1300 = vadd.f32 %v1266, %v1284
      %v1301 = vadd.f32 %v1267, %v1285
      %v1302 = vadd.f32 %v1268, %v1286
      %v1303 = vadd.f32 %v1269, %v1287
      %v1304 = vadd.f32 %v1270, %v1288
      %v1305 = vadd.f32 %v1271, %v1289
      %v1306 = vmul.f32 %v960, %v1116
      %v1307 = vmul.f32 %v960, %v1117
      %v1308 = vmul.f32 %v960, %v1118
      %v1309 = vmul.f32 %v960, %v1119
      %v1310 = vmul.f32 %v960, %v1120
      %v1311 = vmul.f32 %v960, %v1121
      %v1312 = vmul.f32 %v960, %v1122
      %v1313 = vmul.f32 %v960, %v1123
      %v1314 = vmul.f32 %v960, %v1124
      %v1315 = vmul.f32 %v960, %v1125
      %v1316 = vmul.f32 %v960, %v1126
      %v1317 = vmul.f32 %v960, %v1127
      %v1318 = vmul.f32 %v960, %v1128
      %v1319 = vmul.f32 %v960, %v1129
      %v1320 = vmul.f32 %v960, %v1130
      %v1321 = vmul.f32 %v960, %v1131
      %v1322 = vmul.f32 %v978, %v1117
      %v1323 = vmul.f32 %v978, %v1118
      %v1324 = vmul.f32 %v978, %v1119
      %v1325 = vmul.f32 %v978, %v1120
      %v1326 = vmul.f32 %v978, %v1121
      %v1327 = vmul.f32 %v978, %v1122
      %v1328 = vmul.f32 %v978, %v1123
      %v1329 = vmul.f32 %v978, %v1124
      %v1330 = vmul.f32 %v978, %v1125
      %v1331 = vmul.f32 %v978, %v1126
      %v1332 = vmul.f32 %v978, %v1127
      %v1333 = vmul.f32 %v978, %v1128
      %v1334 = vmul.f32 %v978, %v1129
      %v1335 = vmul.f32 %v978, %v1130
      %v1336 = vmul.f32 %v978, %v1131
      %v1337 = vmul.f32 %v978, %v1132
      %v1338 = vadd.f32 %v1306, %v1322
      %v1339 = vadd.f32 %v1307, %v1323
      %v1340 = vadd.f32 %v1308, %v1324
      %v1341 = vadd.f32 %v1309, %v1325
      %v1342 = vadd.f32 %v1310, %v1326
      %v1343 = vadd.f32 %v1311, %v1327
      %v1344 = vadd.f32 %v1312, %v1328
      %v1345 = vadd.f32 %v1313, %v1329
      %v1346 = vadd.f32 %v1314, %v1330
      %v1347 = vadd.f32 %v1315, %v1331
      %v1348 = vadd.f32 %v1316, %v1332
      %v1349 = vadd.f32 %v1317, %v1333
      %v1350 = vadd.f32 %v1318, %v1334
      %v1351 = vadd.f32 %v1319, %v1335
      %v1352 = vadd.f32 %v1320, %v1336
      %v1353 = vadd.f32 %v1321, %v1337
      %v1354 = vmul.f32 %v1012, %v1118
      %v1355 = vmul.f32 %v1012, %v1119
      %v1356 = vmul.f32 %v1012, %v1120
      %v1357 = vmul.f32 %v1012, %v1121
      %v1358 = vmul.f32 %v1012, %v1122
      %v1359 = vmul.f32 %v1012, %v1123
      %v1360 = vmul.f32 %v1012, %v1124
      %v1361 = vmul.f32 %v1012, %v1125
      %v1362 = vmul.f32 %v1012, %v1126
      %v1363 = vmul.f32 %v1012, %v1127
      %v1364 = vmul.f32 %v1012, %v1128
      %v1365 = vmul.f32 %v1012, %v1129
      %v1366 = vmul.f32 %v1012, %v1130
      %v1367 = vmul.f32 %v1012, %v1131
      %v1368 = vmul.f32 %v1012, %v1132
      %v1369 = vmul.f32 %v1012, %v1133
      %v1370 = vadd.f32 %v1338, %v1354
      %v1371 = vadd.f32 %v1339, %v1355
      %v1372 = vadd.f32 %v1340, %v1356
      %v1373 = vadd.f32 %v1341, %v1357
      %v1374 = vadd.f32 %v1342, %v1358
      %v1375 = vadd.f32 %v1343, %v1359
      %v1376 = vadd.f32 %v1344, %v1360
      %v1377 = vadd.f32 %v1345, %v1361
      %v1378 = vadd.f32 %v1346, %v1362
      %v1379 = vadd.f32 %v1347, %v1363
      %v1380 = vadd.f32 %v1348, %v1364
      %v1381 = vadd.f32 %v1349, %v1365
      %v1382 = vadd.f32 %v1350, %v1366
      %v1383 = vadd.f32 %v1351, %v1367
      %v1384 = vadd.f32 %v1352, %v1368
      %v1385 = vadd.f32 %v1353, %v1369
      %v1386 = vmul.f32 %v1046, %v1119
      %v1387 = vmul.f32 %v1046, %v1120
      %v1388 = vmul.f32 %v1046, %v1121
      %v1389 = vmul.f32 %v1046, %v1122
      %v1390 = vmul.f32 %v1046, %v1123
      %v1391 = vmul.f32 %v1046, %v1124
      %v1392 = vmul.f32 %v1046, %v1125
      %v1393 = vmul.f32 %v1046, %v1126
      %v1394 = vmul.f32 %v1046, %v1127
      %v1395 = vmul.f32 %v1046, %v1128
      %v1396 = vmul.f32 %v1046, %v1129
      %v1397 = vmul.f32 %v1046, %v1130
      %v1398 = vmul.f32 %v1046, %v1131
      %v1399 = vmul.f32 %v1046, %v1132
      %v1400 = vmul.f32 %v1046, %v1133
      %v1401 = vmul.f32 %v1046, %v1134
      %v1402 = vadd.f32 %v1370, %v1386
      %v1403 = vadd.f32 %v1371, %v1387
      %v1404 = vadd.f32 %v1372, %v1388
      %v1405 = vadd.f32 %v1373, %v1389
      %v1406 = vadd.f32 %v1374, %v1390
      %v1407 = vadd.f32 %v1375, %v1391
      %v1408 = vadd.f32 %v1376, %v1392
      %v1409 = vadd.f32 %v1377, %v1393
      %v1410 = vadd.f32 %v1378, %v1394
      %v1411 = vadd.f32 %v1379, %v1395
      %v1412 = vadd.f32 %v1380, %v1396
      %v1413 = vadd.f32 %v1381, %v1397
      %v1414 = vadd.f32 %v1382, %v1398
      %v1415 = vadd.f32 %v1383, %v1399
      %v1416 = vadd.f32 %v1384, %v1400
      %v1417 = vadd.f32 %v1385, %v1401
      %v1418 = vmul.f32 %v1080, %v1120
      %v1419 = vmul.f32 %v1080, %v1121
      %v1420 = vmul.f32 %v1080, %v1122
      %v1421 = vmul.f32 %v1080, %v1123
      %v1422 = vmul.f32 %v1080, %v1124
      %v1423 = vmul.f32 %v1080, %v1125
      %v1424 = vmul.f32 %v1080, %v1126
      %v1425 = vmul.f32 %v1080, %v1127
      %v1426 = vmul.f32 %v1080, %v1128
      %v1427 = vmul.f32 %v1080, %v1129
      %v1428 = vmul.f32 %v1080, %v1130
      %v1429 = vmul.f32 %v1080, %v1131
      %v1430 = vmul.f32 %v1080, %v1132
      %v1431 = vmul.f32 %v1080, %v1133
      %v1432 = vmul.f32 %v1080, %v1134
      %v1433 = vmul.f32 %v1080, %v1135
      %v1434 = vadd.f32 %v1402, %v1418
      %v1435 = vadd.f32 %v1403, %v1419
      %v1436 = vadd.f32 %v1404, %v1420
      %v1437 = vadd.f32 %v1405, %v1421
      %v1438 = vadd.f32 %v1406, %v1422
      %v1439 = vadd.f32 %v1407, %v1423
      %v1440 = vadd.f32 %v1408, %v1424
      %v1441 = vadd.f32 %v1409, %v1425
      %v1442 = vadd.f32 %v1410, %v1426
      %v1443 = vadd.f32 %v1411, %v1427
      %v1444 = vadd.f32 %v1412, %v1428
      %v1445 = vadd.f32 %v1413, %v1429
      %v1446 = vadd.f32 %v1414, %v1430
      %v1447 = vadd.f32 %v1415, %v1431
      %v1448 = vadd.f32 %v1416, %v1432
      %v1449 = vadd.f32 %v1417, %v1433
      %s1450 = sadd.s32 %s936, 2
      %s1451 = smul.u32 %s1450, 160
      %s1452 = scalar_lea.vmem [#allocation2], %s1451
      %v1453 = vld [vmem:[%s1452] sm:$0xff]
      %v1454 = vld [vmem:[%s1452 + $0x8] sm:$0xff]
      %v1455 = vld [vmem:[%s1452 + $0x10] sm:$0xff]
      %v1456 = vld [vmem:[%s1452 + $0x18] sm:$0xff]
      %v1457 = vld [vmem:[%s1452 + $0x20] sm:$0xff]
      %v1458 = vld [vmem:[%s1452 + $0x28] sm:$0xff]
      %v1459 = vld [vmem:[%s1452 + $0x30] sm:$0xff]
      %v1460 = vld [vmem:[%s1452 + $0x38] sm:$0xff]
      %v1461 = vld [vmem:[%s1452 + $0x40] sm:$0xff]
      %v1462 = vld [vmem:[%s1452 + $0x48] sm:$0xff]
      %v1463 = vld [vmem:[%s1452 + $0x50] sm:$0xff]
      %v1464 = vld [vmem:[%s1452 + $0x58] sm:$0xff]
      %v1465 = vld [vmem:[%s1452 + $0x60] sm:$0xff]
      %v1466 = vld [vmem:[%s1452 + $0x68] sm:$0xff]
      %v1467 = vld [vmem:[%s1452 + $0x70] sm:$0xff]
      %v1468 = vld [vmem:[%s1452 + $0x78] sm:$0xff]
      %v1469 = vld [vmem:[%s1452 + $0x80] sm:$0xff]
      %v1470 = vld [vmem:[%s1452 + $0x88] sm:$0xff]
      %v1471 = vld [vmem:[%s1452 + $0x90] sm:$0xff]
      %v1472 = vld [vmem:[%s1452 + $0x98] sm:$0xff]
      %s1473 = sld [smem:[#allocation11 + $0xa]]
      %v1474 = vstv %s1473
      %v1475 = vmul.f32 %v1474, %v1453
      %v1476 = vmul.f32 %v1474, %v1454
      %v1477 = vmul.f32 %v1474, %v1455
      %v1478 = vmul.f32 %v1474, %v1456
      %v1479 = vmul.f32 %v1474, %v1457
      %v1480 = vmul.f32 %v1474, %v1458
      %v1481 = vmul.f32 %v1474, %v1459
      %v1482 = vmul.f32 %v1474, %v1460
      %v1483 = vmul.f32 %v1474, %v1461
      %v1484 = vmul.f32 %v1474, %v1462
      %v1485 = vmul.f32 %v1474, %v1463
      %v1486 = vmul.f32 %v1474, %v1464
      %v1487 = vmul.f32 %v1474, %v1465
      %v1488 = vmul.f32 %v1474, %v1466
      %v1489 = vmul.f32 %v1474, %v1467
      %v1490 = vmul.f32 %v1474, %v1468
      %v1491 = vadd.f32 %v1290, %v1475
      %v1492 = vadd.f32 %v1291, %v1476
      %v1493 = vadd.f32 %v1292, %v1477
      %v1494 = vadd.f32 %v1293, %v1478
      %v1495 = vadd.f32 %v1294, %v1479
      %v1496 = vadd.f32 %v1295, %v1480
      %v1497 = vadd.f32 %v1296, %v1481
      %v1498 = vadd.f32 %v1297, %v1482
      %v1499 = vadd.f32 %v1298, %v1483
      %v1500 = vadd.f32 %v1299, %v1484
      %v1501 = vadd.f32 %v1300, %v1485
      %v1502 = vadd.f32 %v1301, %v1486
      %v1503 = vadd.f32 %v1302, %v1487
      %v1504 = vadd.f32 %v1303, %v1488
      %v1505 = vadd.f32 %v1304, %v1489
      %v1506 = vadd.f32 %v1305, %v1490
      %s1507 = sld [smem:[#allocation11 + $0xb]]
      %v1508 = vstv %s1507
      %v1509 = vmul.f32 %v1508, %v1454
      %v1510 = vmul.f32 %v1508, %v1455
      %v1511 = vmul.f32 %v1508, %v1456
      %v1512 = vmul.f32 %v1508, %v1457
      %v1513 = vmul.f32 %v1508, %v1458
      %v1514 = vmul.f32 %v1508, %v1459
      %v1515 = vmul.f32 %v1508, %v1460
      %v1516 = vmul.f32 %v1508, %v1461
      %v1517 = vmul.f32 %v1508, %v1462
      %v1518 = vmul.f32 %v1508, %v1463
      %v1519 = vmul.f32 %v1508, %v1464
      %v1520 = vmul.f32 %v1508, %v1465
      %v1521 = vmul.f32 %v1508, %v1466
      %v1522 = vmul.f32 %v1508, %v1467
      %v1523 = vmul.f32 %v1508, %v1468
      %v1524 = vmul.f32 %v1508, %v1469
      %v1525 = vadd.f32 %v1491, %v1509
      %v1526 = vadd.f32 %v1492, %v1510
      %v1527 = vadd.f32 %v1493, %v1511
      %v1528 = vadd.f32 %v1494, %v1512
      %v1529 = vadd.f32 %v1495, %v1513
      %v1530 = vadd.f32 %v1496, %v1514
      %v1531 = vadd.f32 %v1497, %v1515
      %v1532 = vadd.f32 %v1498, %v1516
      %v1533 = vadd.f32 %v1499, %v1517
      %v1534 = vadd.f32 %v1500, %v1518
      %v1535 = vadd.f32 %v1501, %v1519
      %v1536 = vadd.f32 %v1502, %v1520
      %v1537 = vadd.f32 %v1503, %v1521
      %v1538 = vadd.f32 %v1504, %v1522
      %v1539 = vadd.f32 %v1505, %v1523
      %v1540 = vadd.f32 %v1506, %v1524
      %s1541 = sld [smem:[#allocation11 + $0xc]]
      %v1542 = vstv %s1541
      %v1543 = vmul.f32 %v1542, %v1455
      %v1544 = vmul.f32 %v1542, %v1456
      %v1545 = vmul.f32 %v1542, %v1457
      %v1546 = vmul.f32 %v1542, %v1458
      %v1547 = vmul.f32 %v1542, %v1459
      %v1548 = vmul.f32 %v1542, %v1460
      %v1549 = vmul.f32 %v1542, %v1461
      %v1550 = vmul.f32 %v1542, %v1462
      %v1551 = vmul.f32 %v1542, %v1463
      %v1552 = vmul.f32 %v1542, %v1464
      %v1553 = vmul.f32 %v1542, %v1465
      %v1554 = vmul.f32 %v1542, %v1466
      %v1555 = vmul.f32 %v1542, %v1467
      %v1556 = vmul.f32 %v1542, %v1468
      %v1557 = vmul.f32 %v1542, %v1469
      %v1558 = vmul.f32 %v1542, %v1470
      %v1559 = vadd.f32 %v1525, %v1543
      %v1560 = vadd.f32 %v1526, %v1544
      %v1561 = vadd.f32 %v1527, %v1545
      %v1562 = vadd.f32 %v1528, %v1546
      %v1563 = vadd.f32 %v1529, %v1547
      %v1564 = vadd.f32 %v1530, %v1548
      %v1565 = vadd.f32 %v1531, %v1549
      %v1566 = vadd.f32 %v1532, %v1550
      %v1567 = vadd.f32 %v1533, %v1551
      %v1568 = vadd.f32 %v1534, %v1552
      %v1569 = vadd.f32 %v1535, %v1553
      %v1570 = vadd.f32 %v1536, %v1554
      %v1571 = vadd.f32 %v1537, %v1555
      %v1572 = vadd.f32 %v1538, %v1556
      %v1573 = vadd.f32 %v1539, %v1557
      %v1574 = vadd.f32 %v1540, %v1558
      %s1575 = sld [smem:[#allocation11 + $0xd]]
      %v1576 = vstv %s1575
      %v1577 = vmul.f32 %v1576, %v1456
      %v1578 = vmul.f32 %v1576, %v1457
      %v1579 = vmul.f32 %v1576, %v1458
      %v1580 = vmul.f32 %v1576, %v1459
      %v1581 = vmul.f32 %v1576, %v1460
      %v1582 = vmul.f32 %v1576, %v1461
      %v1583 = vmul.f32 %v1576, %v1462
      %v1584 = vmul.f32 %v1576, %v1463
      %v1585 = vmul.f32 %v1576, %v1464
      %v1586 = vmul.f32 %v1576, %v1465
      %v1587 = vmul.f32 %v1576, %v1466
      %v1588 = vmul.f32 %v1576, %v1467
      %v1589 = vmul.f32 %v1576, %v1468
      %v1590 = vmul.f32 %v1576, %v1469
      %v1591 = vmul.f32 %v1576, %v1470
      %v1592 = vmul.f32 %v1576, %v1471
      %v1593 = vadd.f32 %v1559, %v1577
      %v1594 = vadd.f32 %v1560, %v1578
      %v1595 = vadd.f32 %v1561, %v1579
      %v1596 = vadd.f32 %v1562, %v1580
      %v1597 = vadd.f32 %v1563, %v1581
      %v1598 = vadd.f32 %v1564, %v1582
      %v1599 = vadd.f32 %v1565, %v1583
      %v1600 = vadd.f32 %v1566, %v1584
      %v1601 = vadd.f32 %v1567, %v1585
      %v1602 = vadd.f32 %v1568, %v1586
      %v1603 = vadd.f32 %v1569, %v1587
      %v1604 = vadd.f32 %v1570, %v1588
      %v1605 = vadd.f32 %v1571, %v1589
      %v1606 = vadd.f32 %v1572, %v1590
      %v1607 = vadd.f32 %v1573, %v1591
      %v1608 = vadd.f32 %v1574, %v1592
      %s1609 = sld [smem:[#allocation11 + $0xe]]
      %v1610 = vstv %s1609
      %v1611 = vmul.f32 %v1610, %v1457
      %v1612 = vmul.f32 %v1610, %v1458
      %v1613 = vmul.f32 %v1610, %v1459
      %v1614 = vmul.f32 %v1610, %v1460
      %v1615 = vmul.f32 %v1610, %v1461
      %v1616 = vmul.f32 %v1610, %v1462
      %v1617 = vmul.f32 %v1610, %v1463
      %v1618 = vmul.f32 %v1610, %v1464
      %v1619 = vmul.f32 %v1610, %v1465
      %v1620 = vmul.f32 %v1610, %v1466
      %v1621 = vmul.f32 %v1610, %v1467
      %v1622 = vmul.f32 %v1610, %v1468
      %v1623 = vmul.f32 %v1610, %v1469
      %v1624 = vmul.f32 %v1610, %v1470
      %v1625 = vmul.f32 %v1610, %v1471
      %v1626 = vmul.f32 %v1610, %v1472
      %v1627 = vadd.f32 %v1593, %v1611
      %v1628 = vadd.f32 %v1594, %v1612
      %v1629 = vadd.f32 %v1595, %v1613
      %v1630 = vadd.f32 %v1596, %v1614
      %v1631 = vadd.f32 %v1597, %v1615
      %v1632 = vadd.f32 %v1598, %v1616
      %v1633 = vadd.f32 %v1599, %v1617
      %v1634 = vadd.f32 %v1600, %v1618
      %v1635 = vadd.f32 %v1601, %v1619
      %v1636 = vadd.f32 %v1602, %v1620
      %v1637 = vadd.f32 %v1603, %v1621
      %v1638 = vadd.f32 %v1604, %v1622
      %v1639 = vadd.f32 %v1605, %v1623
      %v1640 = vadd.f32 %v1606, %v1624
      %v1641 = vadd.f32 %v1607, %v1625
      %v1642 = vadd.f32 %v1608, %v1626
      %v1643 = vmul.f32 %v1137, %v1453
      %v1644 = vmul.f32 %v1137, %v1454
      %v1645 = vmul.f32 %v1137, %v1455
      %v1646 = vmul.f32 %v1137, %v1456
      %v1647 = vmul.f32 %v1137, %v1457
      %v1648 = vmul.f32 %v1137, %v1458
      %v1649 = vmul.f32 %v1137, %v1459
      %v1650 = vmul.f32 %v1137, %v1460
      %v1651 = vmul.f32 %v1137, %v1461
      %v1652 = vmul.f32 %v1137, %v1462
      %v1653 = vmul.f32 %v1137, %v1463
      %v1654 = vmul.f32 %v1137, %v1464
      %v1655 = vmul.f32 %v1137, %v1465
      %v1656 = vmul.f32 %v1137, %v1466
      %v1657 = vmul.f32 %v1137, %v1467
      %v1658 = vmul.f32 %v1137, %v1468
      %v1659 = vadd.f32 %v1434, %v1643
      %v1660 = vadd.f32 %v1435, %v1644
      %v1661 = vadd.f32 %v1436, %v1645
      %v1662 = vadd.f32 %v1437, %v1646
      %v1663 = vadd.f32 %v1438, %v1647
      %v1664 = vadd.f32 %v1439, %v1648
      %v1665 = vadd.f32 %v1440, %v1649
      %v1666 = vadd.f32 %v1441, %v1650
      %v1667 = vadd.f32 %v1442, %v1651
      %v1668 = vadd.f32 %v1443, %v1652
      %v1669 = vadd.f32 %v1444, %v1653
      %v1670 = vadd.f32 %v1445, %v1654
      %v1671 = vadd.f32 %v1446, %v1655
      %v1672 = vadd.f32 %v1447, %v1656
      %v1673 = vadd.f32 %v1448, %v1657
      %v1674 = vadd.f32 %v1449, %v1658
      %v1675 = vmul.f32 %v1171, %v1454
      %v1676 = vmul.f32 %v1171, %v1455
      %v1677 = vmul.f32 %v1171, %v1456
      %v1678 = vmul.f32 %v1171, %v1457
      %v1679 = vmul.f32 %v1171, %v1458
      %v1680 = vmul.f32 %v1171, %v1459
      %v1681 = vmul.f32 %v1171, %v1460
      %v1682 = vmul.f32 %v1171, %v1461
      %v1683 = vmul.f32 %v1171, %v1462
      %v1684 = vmul.f32 %v1171, %v1463
      %v1685 = vmul.f32 %v1171, %v1464
      %v1686 = vmul.f32 %v1171, %v1465
      %v1687 = vmul.f32 %v1171, %v1466
      %v1688 = vmul.f32 %v1171, %v1467
      %v1689 = vmul.f32 %v1171, %v1468
      %v1690 = vmul.f32 %v1171, %v1469
      %v1691 = vadd.f32 %v1659, %v1675
      %v1692 = vadd.f32 %v1660, %v1676
      %v1693 = vadd.f32 %v1661, %v1677
      %v1694 = vadd.f32 %v1662, %v1678
      %v1695 = vadd.f32 %v1663, %v1679
      %v1696 = vadd.f32 %v1664, %v1680
      %v1697 = vadd.f32 %v1665, %v1681
      %v1698 = vadd.f32 %v1666, %v1682
      %v1699 = vadd.f32 %v1667, %v1683
      %v1700 = vadd.f32 %v1668, %v1684
      %v1701 = vadd.f32 %v1669, %v1685
      %v1702 = vadd.f32 %v1670, %v1686
      %v1703 = vadd.f32 %v1671, %v1687
      %v1704 = vadd.f32 %v1672, %v1688
      %v1705 = vadd.f32 %v1673, %v1689
      %v1706 = vadd.f32 %v1674, %v1690
      %v1707 = vmul.f32 %v1205, %v1455
      %v1708 = vmul.f32 %v1205, %v1456
      %v1709 = vmul.f32 %v1205, %v1457
      %v1710 = vmul.f32 %v1205, %v1458
      %v1711 = vmul.f32 %v1205, %v1459
      %v1712 = vmul.f32 %v1205, %v1460
      %v1713 = vmul.f32 %v1205, %v1461
      %v1714 = vmul.f32 %v1205, %v1462
      %v1715 = vmul.f32 %v1205, %v1463
      %v1716 = vmul.f32 %v1205, %v1464
      %v1717 = vmul.f32 %v1205, %v1465
      %v1718 = vmul.f32 %v1205, %v1466
      %v1719 = vmul.f32 %v1205, %v1467
      %v1720 = vmul.f32 %v1205, %v1468
      %v1721 = vmul.f32 %v1205, %v1469
      %v1722 = vmul.f32 %v1205, %v1470
      %v1723 = vadd.f32 %v1691, %v1707
      %v1724 = vadd.f32 %v1692, %v1708
      %v1725 = vadd.f32 %v1693, %v1709
      %v1726 = vadd.f32 %v1694, %v1710
      %v1727 = vadd.f32 %v1695, %v1711
      %v1728 = vadd.f32 %v1696, %v1712
      %v1729 = vadd.f32 %v1697, %v1713
      %v1730 = vadd.f32 %v1698, %v1714
      %v1731 = vadd.f32 %v1699, %v1715
      %v1732 = vadd.f32 %v1700, %v1716
      %v1733 = vadd.f32 %v1701, %v1717
      %v1734 = vadd.f32 %v1702, %v1718
      %v1735 = vadd.f32 %v1703, %v1719
      %v1736 = vadd.f32 %v1704, %v1720
      %v1737 = vadd.f32 %v1705, %v1721
      %v1738 = vadd.f32 %v1706, %v1722
      %v1739 = vmul.f32 %v1239, %v1456
      %v1740 = vmul.f32 %v1239, %v1457
      %v1741 = vmul.f32 %v1239, %v1458
      %v1742 = vmul.f32 %v1239, %v1459
      %v1743 = vmul.f32 %v1239, %v1460
      %v1744 = vmul.f32 %v1239, %v1461
      %v1745 = vmul.f32 %v1239, %v1462
      %v1746 = vmul.f32 %v1239, %v1463
      %v1747 = vmul.f32 %v1239, %v1464
      %v1748 = vmul.f32 %v1239, %v1465
      %v1749 = vmul.f32 %v1239, %v1466
      %v1750 = vmul.f32 %v1239, %v1467
      %v1751 = vmul.f32 %v1239, %v1468
      %v1752 = vmul.f32 %v1239, %v1469
      %v1753 = vmul.f32 %v1239, %v1470
      %v1754 = vmul.f32 %v1239, %v1471
      %v1755 = vadd.f32 %v1723, %v1739
      %v1756 = vadd.f32 %v1724, %v1740
      %v1757 = vadd.f32 %v1725, %v1741
      %v1758 = vadd.f32 %v1726, %v1742
      %v1759 = vadd.f32 %v1727, %v1743
      %v1760 = vadd.f32 %v1728, %v1744
      %v1761 = vadd.f32 %v1729, %v1745
      %v1762 = vadd.f32 %v1730, %v1746
      %v1763 = vadd.f32 %v1731, %v1747
      %v1764 = vadd.f32 %v1732, %v1748
      %v1765 = vadd.f32 %v1733, %v1749
      %v1766 = vadd.f32 %v1734, %v1750
      %v1767 = vadd.f32 %v1735, %v1751
      %v1768 = vadd.f32 %v1736, %v1752
      %v1769 = vadd.f32 %v1737, %v1753
      %v1770 = vadd.f32 %v1738, %v1754
      %v1771 = vmul.f32 %v1273, %v1457
      %v1772 = vmul.f32 %v1273, %v1458
      %v1773 = vmul.f32 %v1273, %v1459
      %v1774 = vmul.f32 %v1273, %v1460
      %v1775 = vmul.f32 %v1273, %v1461
      %v1776 = vmul.f32 %v1273, %v1462
      %v1777 = vmul.f32 %v1273, %v1463
      %v1778 = vmul.f32 %v1273, %v1464
      %v1779 = vmul.f32 %v1273, %v1465
      %v1780 = vmul.f32 %v1273, %v1466
      %v1781 = vmul.f32 %v1273, %v1467
      %v1782 = vmul.f32 %v1273, %v1468
      %v1783 = vmul.f32 %v1273, %v1469
      %v1784 = vmul.f32 %v1273, %v1470
      %v1785 = vmul.f32 %v1273, %v1471
      %v1786 = vmul.f32 %v1273, %v1472
      %v1787 = vadd.f32 %v1755, %v1771
      %v1788 = vadd.f32 %v1756, %v1772
      %v1789 = vadd.f32 %v1757, %v1773
      %v1790 = vadd.f32 %v1758, %v1774
      %v1791 = vadd.f32 %v1759, %v1775
      %v1792 = vadd.f32 %v1760, %v1776
      %v1793 = vadd.f32 %v1761, %v1777
      %v1794 = vadd.f32 %v1762, %v1778
      %v1795 = vadd.f32 %v1763, %v1779
      %v1796 = vadd.f32 %v1764, %v1780
      %v1797 = vadd.f32 %v1765, %v1781
      %v1798 = vadd.f32 %v1766, %v1782
      %v1799 = vadd.f32 %v1767, %v1783
      %v1800 = vadd.f32 %v1768, %v1784
      %v1801 = vadd.f32 %v1769, %v1785
      %v1802 = vadd.f32 %v1770, %v1786
      %s1803 = sadd.s32 %s936, 3
      %s1804 = smul.u32 %s1803, 160
      %s1805 = scalar_lea.vmem [#allocation2], %s1804
      %v1806 = vld [vmem:[%s1805] sm:$0xff]
      %v1807 = vld [vmem:[%s1805 + $0x8] sm:$0xff]
      %v1808 = vld [vmem:[%s1805 + $0x10] sm:$0xff]
      %v1809 = vld [vmem:[%s1805 + $0x18] sm:$0xff]
      %v1810 = vld [vmem:[%s1805 + $0x20] sm:$0xff]
      %v1811 = vld [vmem:[%s1805 + $0x28] sm:$0xff]
      %v1812 = vld [vmem:[%s1805 + $0x30] sm:$0xff]
      %v1813 = vld [vmem:[%s1805 + $0x38] sm:$0xff]
      %v1814 = vld [vmem:[%s1805 + $0x40] sm:$0xff]
      %v1815 = vld [vmem:[%s1805 + $0x48] sm:$0xff]
      %v1816 = vld [vmem:[%s1805 + $0x50] sm:$0xff]
      %v1817 = vld [vmem:[%s1805 + $0x58] sm:$0xff]
      %v1818 = vld [vmem:[%s1805 + $0x60] sm:$0xff]
      %v1819 = vld [vmem:[%s1805 + $0x68] sm:$0xff]
      %v1820 = vld [vmem:[%s1805 + $0x70] sm:$0xff]
      %v1821 = vld [vmem:[%s1805 + $0x78] sm:$0xff]
      %v1822 = vld [vmem:[%s1805 + $0x80] sm:$0xff]
      %v1823 = vld [vmem:[%s1805 + $0x88] sm:$0xff]
      %v1824 = vld [vmem:[%s1805 + $0x90] sm:$0xff]
      %v1825 = vld [vmem:[%s1805 + $0x98] sm:$0xff]
      %s1826 = sld [smem:[#allocation11 + $0xf]]
      %v1827 = vstv %s1826
      %v1828 = vmul.f32 %v1827, %v1806
      %v1829 = vmul.f32 %v1827, %v1807
      %v1830 = vmul.f32 %v1827, %v1808
      %v1831 = vmul.f32 %v1827, %v1809
      %v1832 = vmul.f32 %v1827, %v1810
      %v1833 = vmul.f32 %v1827, %v1811
      %v1834 = vmul.f32 %v1827, %v1812
      %v1835 = vmul.f32 %v1827, %v1813
      %v1836 = vmul.f32 %v1827, %v1814
      %v1837 = vmul.f32 %v1827, %v1815
      %v1838 = vmul.f32 %v1827, %v1816
      %v1839 = vmul.f32 %v1827, %v1817
      %v1840 = vmul.f32 %v1827, %v1818
      %v1841 = vmul.f32 %v1827, %v1819
      %v1842 = vmul.f32 %v1827, %v1820
      %v1843 = vmul.f32 %v1827, %v1821
      %v1844 = vadd.f32 %v1627, %v1828
      %v1845 = vadd.f32 %v1628, %v1829
      %v1846 = vadd.f32 %v1629, %v1830
      %v1847 = vadd.f32 %v1630, %v1831
      %v1848 = vadd.f32 %v1631, %v1832
      %v1849 = vadd.f32 %v1632, %v1833
      %v1850 = vadd.f32 %v1633, %v1834
      %v1851 = vadd.f32 %v1634, %v1835
      %v1852 = vadd.f32 %v1635, %v1836
      %v1853 = vadd.f32 %v1636, %v1837
      %v1854 = vadd.f32 %v1637, %v1838
      %v1855 = vadd.f32 %v1638, %v1839
      %v1856 = vadd.f32 %v1639, %v1840
      %v1857 = vadd.f32 %v1640, %v1841
      %v1858 = vadd.f32 %v1641, %v1842
      %v1859 = vadd.f32 %v1642, %v1843
      %s1860 = sld [smem:[#allocation11 + $0x10]]
      %v1861 = vstv %s1860
      %v1862 = vmul.f32 %v1861, %v1807
      %v1863 = vmul.f32 %v1861, %v1808
      %v1864 = vmul.f32 %v1861, %v1809
      %v1865 = vmul.f32 %v1861, %v1810
      %v1866 = vmul.f32 %v1861, %v1811
      %v1867 = vmul.f32 %v1861, %v1812
      %v1868 = vmul.f32 %v1861, %v1813
      %v1869 = vmul.f32 %v1861, %v1814
      %v1870 = vmul.f32 %v1861, %v1815
      %v1871 = vmul.f32 %v1861, %v1816
      %v1872 = vmul.f32 %v1861, %v1817
      %v1873 = vmul.f32 %v1861, %v1818
      %v1874 = vmul.f32 %v1861, %v1819
      %v1875 = vmul.f32 %v1861, %v1820
      %v1876 = vmul.f32 %v1861, %v1821
      %v1877 = vmul.f32 %v1861, %v1822
      %v1878 = vadd.f32 %v1844, %v1862
      %v1879 = vadd.f32 %v1845, %v1863
      %v1880 = vadd.f32 %v1846, %v1864
      %v1881 = vadd.f32 %v1847, %v1865
      %v1882 = vadd.f32 %v1848, %v1866
      %v1883 = vadd.f32 %v1849, %v1867
      %v1884 = vadd.f32 %v1850, %v1868
      %v1885 = vadd.f32 %v1851, %v1869
      %v1886 = vadd.f32 %v1852, %v1870
      %v1887 = vadd.f32 %v1853, %v1871
      %v1888 = vadd.f32 %v1854, %v1872
      %v1889 = vadd.f32 %v1855, %v1873
      %v1890 = vadd.f32 %v1856, %v1874
      %v1891 = vadd.f32 %v1857, %v1875
      %v1892 = vadd.f32 %v1858, %v1876
      %v1893 = vadd.f32 %v1859, %v1877
      %s1894 = sld [smem:[#allocation11 + $0x11]]
      %v1895 = vstv %s1894
      %v1896 = vmul.f32 %v1895, %v1808
      %v1897 = vmul.f32 %v1895, %v1809
      %v1898 = vmul.f32 %v1895, %v1810
      %v1899 = vmul.f32 %v1895, %v1811
      %v1900 = vmul.f32 %v1895, %v1812
      %v1901 = vmul.f32 %v1895, %v1813
      %v1902 = vmul.f32 %v1895, %v1814
      %v1903 = vmul.f32 %v1895, %v1815
      %v1904 = vmul.f32 %v1895, %v1816
      %v1905 = vmul.f32 %v1895, %v1817
      %v1906 = vmul.f32 %v1895, %v1818
      %v1907 = vmul.f32 %v1895, %v1819
      %v1908 = vmul.f32 %v1895, %v1820
      %v1909 = vmul.f32 %v1895, %v1821
      %v1910 = vmul.f32 %v1895, %v1822
      %v1911 = vmul.f32 %v1895, %v1823
      %v1912 = vadd.f32 %v1878, %v1896
      %v1913 = vadd.f32 %v1879, %v1897
      %v1914 = vadd.f32 %v1880, %v1898
      %v1915 = vadd.f32 %v1881, %v1899
      %v1916 = vadd.f32 %v1882, %v1900
      %v1917 = vadd.f32 %v1883, %v1901
      %v1918 = vadd.f32 %v1884, %v1902
      %v1919 = vadd.f32 %v1885, %v1903
      %v1920 = vadd.f32 %v1886, %v1904
      %v1921 = vadd.f32 %v1887, %v1905
      %v1922 = vadd.f32 %v1888, %v1906
      %v1923 = vadd.f32 %v1889, %v1907
      %v1924 = vadd.f32 %v1890, %v1908
      %v1925 = vadd.f32 %v1891, %v1909
      %v1926 = vadd.f32 %v1892, %v1910
      %v1927 = vadd.f32 %v1893, %v1911
      %s1928 = sld [smem:[#allocation11 + $0x12]]
      %v1929 = vstv %s1928
      %v1930 = vmul.f32 %v1929, %v1809
      %v1931 = vmul.f32 %v1929, %v1810
      %v1932 = vmul.f32 %v1929, %v1811
      %v1933 = vmul.f32 %v1929, %v1812
      %v1934 = vmul.f32 %v1929, %v1813
      %v1935 = vmul.f32 %v1929, %v1814
      %v1936 = vmul.f32 %v1929, %v1815
      %v1937 = vmul.f32 %v1929, %v1816
      %v1938 = vmul.f32 %v1929, %v1817
      %v1939 = vmul.f32 %v1929, %v1818
      %v1940 = vmul.f32 %v1929, %v1819
      %v1941 = vmul.f32 %v1929, %v1820
      %v1942 = vmul.f32 %v1929, %v1821
      %v1943 = vmul.f32 %v1929, %v1822
      %v1944 = vmul.f32 %v1929, %v1823
      %v1945 = vmul.f32 %v1929, %v1824
      %v1946 = vadd.f32 %v1912, %v1930
      %v1947 = vadd.f32 %v1913, %v1931
      %v1948 = vadd.f32 %v1914, %v1932
      %v1949 = vadd.f32 %v1915, %v1933
      %v1950 = vadd.f32 %v1916, %v1934
      %v1951 = vadd.f32 %v1917, %v1935
      %v1952 = vadd.f32 %v1918, %v1936
      %v1953 = vadd.f32 %v1919, %v1937
      %v1954 = vadd.f32 %v1920, %v1938
      %v1955 = vadd.f32 %v1921, %v1939
      %v1956 = vadd.f32 %v1922, %v1940
      %v1957 = vadd.f32 %v1923, %v1941
      %v1958 = vadd.f32 %v1924, %v1942
      %v1959 = vadd.f32 %v1925, %v1943
      %v1960 = vadd.f32 %v1926, %v1944
      %v1961 = vadd.f32 %v1927, %v1945
      %s1962 = sld [smem:[#allocation11 + $0x13]]
      %v1963 = vstv %s1962
      %v1964 = vmul.f32 %v1963, %v1810
      %v1965 = vmul.f32 %v1963, %v1811
      %v1966 = vmul.f32 %v1963, %v1812
      %v1967 = vmul.f32 %v1963, %v1813
      %v1968 = vmul.f32 %v1963, %v1814
      %v1969 = vmul.f32 %v1963, %v1815
      %v1970 = vmul.f32 %v1963, %v1816
      %v1971 = vmul.f32 %v1963, %v1817
      %v1972 = vmul.f32 %v1963, %v1818
      %v1973 = vmul.f32 %v1963, %v1819
      %v1974 = vmul.f32 %v1963, %v1820
      %v1975 = vmul.f32 %v1963, %v1821
      %v1976 = vmul.f32 %v1963, %v1822
      %v1977 = vmul.f32 %v1963, %v1823
      %v1978 = vmul.f32 %v1963, %v1824
      %v1979 = vmul.f32 %v1963, %v1825
      %v1980 = vadd.f32 %v1946, %v1964
      %v1981 = vadd.f32 %v1947, %v1965
      %v1982 = vadd.f32 %v1948, %v1966
      %v1983 = vadd.f32 %v1949, %v1967
      %v1984 = vadd.f32 %v1950, %v1968
      %v1985 = vadd.f32 %v1951, %v1969
      %v1986 = vadd.f32 %v1952, %v1970
      %v1987 = vadd.f32 %v1953, %v1971
      %v1988 = vadd.f32 %v1954, %v1972
      %v1989 = vadd.f32 %v1955, %v1973
      %v1990 = vadd.f32 %v1956, %v1974
      %v1991 = vadd.f32 %v1957, %v1975
      %v1992 = vadd.f32 %v1958, %v1976
      %v1993 = vadd.f32 %v1959, %v1977
      %v1994 = vadd.f32 %v1960, %v1978
      %v1995 = vadd.f32 %v1961, %v1979
      %v1996 = vmul.f32 %v1474, %v1806
      %v1997 = vmul.f32 %v1474, %v1807
      %v1998 = vmul.f32 %v1474, %v1808
      %v1999 = vmul.f32 %v1474, %v1809
      %v2000 = vmul.f32 %v1474, %v1810
      %v2001 = vmul.f32 %v1474, %v1811
      %v2002 = vmul.f32 %v1474, %v1812
      %v2003 = vmul.f32 %v1474, %v1813
      %v2004 = vmul.f32 %v1474, %v1814
      %v2005 = vmul.f32 %v1474, %v1815
      %v2006 = vmul.f32 %v1474, %v1816
      %v2007 = vmul.f32 %v1474, %v1817
      %v2008 = vmul.f32 %v1474, %v1818
      %v2009 = vmul.f32 %v1474, %v1819
      %v2010 = vmul.f32 %v1474, %v1820
      %v2011 = vmul.f32 %v1474, %v1821
      %v2012 = vadd.f32 %v1787, %v1996
      %v2013 = vadd.f32 %v1788, %v1997
      %v2014 = vadd.f32 %v1789, %v1998
      %v2015 = vadd.f32 %v1790, %v1999
      %v2016 = vadd.f32 %v1791, %v2000
      %v2017 = vadd.f32 %v1792, %v2001
      %v2018 = vadd.f32 %v1793, %v2002
      %v2019 = vadd.f32 %v1794, %v2003
      %v2020 = vadd.f32 %v1795, %v2004
      %v2021 = vadd.f32 %v1796, %v2005
      %v2022 = vadd.f32 %v1797, %v2006
      %v2023 = vadd.f32 %v1798, %v2007
      %v2024 = vadd.f32 %v1799, %v2008
      %v2025 = vadd.f32 %v1800, %v2009
      %v2026 = vadd.f32 %v1801, %v2010
      %v2027 = vadd.f32 %v1802, %v2011
      %v2028 = vmul.f32 %v1508, %v1807
      %v2029 = vmul.f32 %v1508, %v1808
      %v2030 = vmul.f32 %v1508, %v1809
      %v2031 = vmul.f32 %v1508, %v1810
      %v2032 = vmul.f32 %v1508, %v1811
      %v2033 = vmul.f32 %v1508, %v1812
      %v2034 = vmul.f32 %v1508, %v1813
      %v2035 = vmul.f32 %v1508, %v1814
      %v2036 = vmul.f32 %v1508, %v1815
      %v2037 = vmul.f32 %v1508, %v1816
      %v2038 = vmul.f32 %v1508, %v1817
      %v2039 = vmul.f32 %v1508, %v1818
      %v2040 = vmul.f32 %v1508, %v1819
      %v2041 = vmul.f32 %v1508, %v1820
      %v2042 = vmul.f32 %v1508, %v1821
      %v2043 = vmul.f32 %v1508, %v1822
      %v2044 = vadd.f32 %v2012, %v2028
      %v2045 = vadd.f32 %v2013, %v2029
      %v2046 = vadd.f32 %v2014, %v2030
      %v2047 = vadd.f32 %v2015, %v2031
      %v2048 = vadd.f32 %v2016, %v2032
      %v2049 = vadd.f32 %v2017, %v2033
      %v2050 = vadd.f32 %v2018, %v2034
      %v2051 = vadd.f32 %v2019, %v2035
      %v2052 = vadd.f32 %v2020, %v2036
      %v2053 = vadd.f32 %v2021, %v2037
      %v2054 = vadd.f32 %v2022, %v2038
      %v2055 = vadd.f32 %v2023, %v2039
      %v2056 = vadd.f32 %v2024, %v2040
      %v2057 = vadd.f32 %v2025, %v2041
      %v2058 = vadd.f32 %v2026, %v2042
      %v2059 = vadd.f32 %v2027, %v2043
      %v2060 = vmul.f32 %v1542, %v1808
      %v2061 = vmul.f32 %v1542, %v1809
      %v2062 = vmul.f32 %v1542, %v1810
      %v2063 = vmul.f32 %v1542, %v1811
      %v2064 = vmul.f32 %v1542, %v1812
      %v2065 = vmul.f32 %v1542, %v1813
      %v2066 = vmul.f32 %v1542, %v1814
      %v2067 = vmul.f32 %v1542, %v1815
      %v2068 = vmul.f32 %v1542, %v1816
      %v2069 = vmul.f32 %v1542, %v1817
      %v2070 = vmul.f32 %v1542, %v1818
      %v2071 = vmul.f32 %v1542, %v1819
      %v2072 = vmul.f32 %v1542, %v1820
      %v2073 = vmul.f32 %v1542, %v1821
      %v2074 = vmul.f32 %v1542, %v1822
      %v2075 = vmul.f32 %v1542, %v1823
      %v2076 = vadd.f32 %v2044, %v2060
      %v2077 = vadd.f32 %v2045, %v2061
      %v2078 = vadd.f32 %v2046, %v2062
      %v2079 = vadd.f32 %v2047, %v2063
      %v2080 = vadd.f32 %v2048, %v2064
      %v2081 = vadd.f32 %v2049, %v2065
      %v2082 = vadd.f32 %v2050, %v2066
      %v2083 = vadd.f32 %v2051, %v2067
      %v2084 = vadd.f32 %v2052, %v2068
      %v2085 = vadd.f32 %v2053, %v2069
      %v2086 = vadd.f32 %v2054, %v2070
      %v2087 = vadd.f32 %v2055, %v2071
      %v2088 = vadd.f32 %v2056, %v2072
      %v2089 = vadd.f32 %v2057, %v2073
      %v2090 = vadd.f32 %v2058, %v2074
      %v2091 = vadd.f32 %v2059, %v2075
      %v2092 = vmul.f32 %v1576, %v1809
      %v2093 = vmul.f32 %v1576, %v1810
      %v2094 = vmul.f32 %v1576, %v1811
      %v2095 = vmul.f32 %v1576, %v1812
      %v2096 = vmul.f32 %v1576, %v1813
      %v2097 = vmul.f32 %v1576, %v1814
      %v2098 = vmul.f32 %v1576, %v1815
      %v2099 = vmul.f32 %v1576, %v1816
      %v2100 = vmul.f32 %v1576, %v1817
      %v2101 = vmul.f32 %v1576, %v1818
      %v2102 = vmul.f32 %v1576, %v1819
      %v2103 = vmul.f32 %v1576, %v1820
      %v2104 = vmul.f32 %v1576, %v1821
      %v2105 = vmul.f32 %v1576, %v1822
      %v2106 = vmul.f32 %v1576, %v1823
      %v2107 = vmul.f32 %v1576, %v1824
      %v2108 = vadd.f32 %v2076, %v2092
      %v2109 = vadd.f32 %v2077, %v2093
      %v2110 = vadd.f32 %v2078, %v2094
      %v2111 = vadd.f32 %v2079, %v2095
      %v2112 = vadd.f32 %v2080, %v2096
      %v2113 = vadd.f32 %v2081, %v2097
      %v2114 = vadd.f32 %v2082, %v2098
      %v2115 = vadd.f32 %v2083, %v2099
      %v2116 = vadd.f32 %v2084, %v2100
      %v2117 = vadd.f32 %v2085, %v2101
      %v2118 = vadd.f32 %v2086, %v2102
      %v2119 = vadd.f32 %v2087, %v2103
      %v2120 = vadd.f32 %v2088, %v2104
      %v2121 = vadd.f32 %v2089, %v2105
      %v2122 = vadd.f32 %v2090, %v2106
      %v2123 = vadd.f32 %v2091, %v2107
      %v2124 = vmul.f32 %v1610, %v1810
      %v2125 = vmul.f32 %v1610, %v1811
      %v2126 = vmul.f32 %v1610, %v1812
      %v2127 = vmul.f32 %v1610, %v1813
      %v2128 = vmul.f32 %v1610, %v1814
      %v2129 = vmul.f32 %v1610, %v1815
      %v2130 = vmul.f32 %v1610, %v1816
      %v2131 = vmul.f32 %v1610, %v1817
      %v2132 = vmul.f32 %v1610, %v1818
      %v2133 = vmul.f32 %v1610, %v1819
      %v2134 = vmul.f32 %v1610, %v1820
      %v2135 = vmul.f32 %v1610, %v1821
      %v2136 = vmul.f32 %v1610, %v1822
      %v2137 = vmul.f32 %v1610, %v1823
      %v2138 = vmul.f32 %v1610, %v1824
      %v2139 = vmul.f32 %v1610, %v1825
      %v2140 = vadd.f32 %v2108, %v2124
      %v2141 = vadd.f32 %v2109, %v2125
      %v2142 = vadd.f32 %v2110, %v2126
      %v2143 = vadd.f32 %v2111, %v2127
      %v2144 = vadd.f32 %v2112, %v2128
      %v2145 = vadd.f32 %v2113, %v2129
      %v2146 = vadd.f32 %v2114, %v2130
      %v2147 = vadd.f32 %v2115, %v2131
      %v2148 = vadd.f32 %v2116, %v2132
      %v2149 = vadd.f32 %v2117, %v2133
      %v2150 = vadd.f32 %v2118, %v2134
      %v2151 = vadd.f32 %v2119, %v2135
      %v2152 = vadd.f32 %v2120, %v2136
      %v2153 = vadd.f32 %v2121, %v2137
      %v2154 = vadd.f32 %v2122, %v2138
      %v2155 = vadd.f32 %v2123, %v2139
      %s2156 = sadd.s32 %s936, 4
      %s2157 = smul.u32 %s2156, 160
      %s2158 = scalar_lea.vmem [#allocation2], %s2157
      %v2159 = vld [vmem:[%s2158] sm:$0xff]
      %v2160 = vld [vmem:[%s2158 + $0x8] sm:$0xff]
      %v2161 = vld [vmem:[%s2158 + $0x10] sm:$0xff]
      %v2162 = vld [vmem:[%s2158 + $0x18] sm:$0xff]
      %v2163 = vld [vmem:[%s2158 + $0x20] sm:$0xff]
      %v2164 = vld [vmem:[%s2158 + $0x28] sm:$0xff]
      %v2165 = vld [vmem:[%s2158 + $0x30] sm:$0xff]
      %v2166 = vld [vmem:[%s2158 + $0x38] sm:$0xff]
      %v2167 = vld [vmem:[%s2158 + $0x40] sm:$0xff]
      %v2168 = vld [vmem:[%s2158 + $0x48] sm:$0xff]
      %v2169 = vld [vmem:[%s2158 + $0x50] sm:$0xff]
      %v2170 = vld [vmem:[%s2158 + $0x58] sm:$0xff]
      %v2171 = vld [vmem:[%s2158 + $0x60] sm:$0xff]
      %v2172 = vld [vmem:[%s2158 + $0x68] sm:$0xff]
      %v2173 = vld [vmem:[%s2158 + $0x70] sm:$0xff]
      %v2174 = vld [vmem:[%s2158 + $0x78] sm:$0xff]
      %v2175 = vld [vmem:[%s2158 + $0x80] sm:$0xff]
      %v2176 = vld [vmem:[%s2158 + $0x88] sm:$0xff]
      %v2177 = vld [vmem:[%s2158 + $0x90] sm:$0xff]
      %v2178 = vld [vmem:[%s2158 + $0x98] sm:$0xff]
      %s2179 = sld [smem:[#allocation11 + $0x14]]
      %v2180 = vstv %s2179
      %v2181 = vmul.f32 %v2180, %v2159
      %v2182 = vmul.f32 %v2180, %v2160
      %v2183 = vmul.f32 %v2180, %v2161
      %v2184 = vmul.f32 %v2180, %v2162
      %v2185 = vmul.f32 %v2180, %v2163
      %v2186 = vmul.f32 %v2180, %v2164
      %v2187 = vmul.f32 %v2180, %v2165
      %v2188 = vmul.f32 %v2180, %v2166
      %v2189 = vmul.f32 %v2180, %v2167
      %v2190 = vmul.f32 %v2180, %v2168
      %v2191 = vmul.f32 %v2180, %v2169
      %v2192 = vmul.f32 %v2180, %v2170
      %v2193 = vmul.f32 %v2180, %v2171
      %v2194 = vmul.f32 %v2180, %v2172
      %v2195 = vmul.f32 %v2180, %v2173
      %v2196 = vmul.f32 %v2180, %v2174
      %v2197 = vadd.f32 %v1980, %v2181
      %v2198 = vadd.f32 %v1981, %v2182
      %v2199 = vadd.f32 %v1982, %v2183
      %v2200 = vadd.f32 %v1983, %v2184
      %v2201 = vadd.f32 %v1984, %v2185
      %v2202 = vadd.f32 %v1985, %v2186
      %v2203 = vadd.f32 %v1986, %v2187
      %v2204 = vadd.f32 %v1987, %v2188
      %v2205 = vadd.f32 %v1988, %v2189
      %v2206 = vadd.f32 %v1989, %v2190
      %v2207 = vadd.f32 %v1990, %v2191
      %v2208 = vadd.f32 %v1991, %v2192
      %v2209 = vadd.f32 %v1992, %v2193
      %v2210 = vadd.f32 %v1993, %v2194
      %v2211 = vadd.f32 %v1994, %v2195
      %v2212 = vadd.f32 %v1995, %v2196
      %s2213 = sld [smem:[#allocation11 + $0x15]]
      %v2214 = vstv %s2213
      %v2215 = vmul.f32 %v2214, %v2160
      %v2216 = vmul.f32 %v2214, %v2161
      %v2217 = vmul.f32 %v2214, %v2162
      %v2218 = vmul.f32 %v2214, %v2163
      %v2219 = vmul.f32 %v2214, %v2164
      %v2220 = vmul.f32 %v2214, %v2165
      %v2221 = vmul.f32 %v2214, %v2166
      %v2222 = vmul.f32 %v2214, %v2167
      %v2223 = vmul.f32 %v2214, %v2168
      %v2224 = vmul.f32 %v2214, %v2169
      %v2225 = vmul.f32 %v2214, %v2170
      %v2226 = vmul.f32 %v2214, %v2171
      %v2227 = vmul.f32 %v2214, %v2172
      %v2228 = vmul.f32 %v2214, %v2173
      %v2229 = vmul.f32 %v2214, %v2174
      %v2230 = vmul.f32 %v2214, %v2175
      %v2231 = vadd.f32 %v2197, %v2215
      %v2232 = vadd.f32 %v2198, %v2216
      %v2233 = vadd.f32 %v2199, %v2217
      %v2234 = vadd.f32 %v2200, %v2218
      %v2235 = vadd.f32 %v2201, %v2219
      %v2236 = vadd.f32 %v2202, %v2220
      %v2237 = vadd.f32 %v2203, %v2221
      %v2238 = vadd.f32 %v2204, %v2222
      %v2239 = vadd.f32 %v2205, %v2223
      %v2240 = vadd.f32 %v2206, %v2224
      %v2241 = vadd.f32 %v2207, %v2225
      %v2242 = vadd.f32 %v2208, %v2226
      %v2243 = vadd.f32 %v2209, %v2227
      %v2244 = vadd.f32 %v2210, %v2228
      %v2245 = vadd.f32 %v2211, %v2229
      %v2246 = vadd.f32 %v2212, %v2230
      %s2247 = sld [smem:[#allocation11 + $0x16]]
      %v2248 = vstv %s2247
      %v2249 = vmul.f32 %v2248, %v2161
      %v2250 = vmul.f32 %v2248, %v2162
      %v2251 = vmul.f32 %v2248, %v2163
      %v2252 = vmul.f32 %v2248, %v2164
      %v2253 = vmul.f32 %v2248, %v2165
      %v2254 = vmul.f32 %v2248, %v2166
      %v2255 = vmul.f32 %v2248, %v2167
      %v2256 = vmul.f32 %v2248, %v2168
      %v2257 = vmul.f32 %v2248, %v2169
      %v2258 = vmul.f32 %v2248, %v2170
      %v2259 = vmul.f32 %v2248, %v2171
      %v2260 = vmul.f32 %v2248, %v2172
      %v2261 = vmul.f32 %v2248, %v2173
      %v2262 = vmul.f32 %v2248, %v2174
      %v2263 = vmul.f32 %v2248, %v2175
      %v2264 = vmul.f32 %v2248, %v2176
      %v2265 = vadd.f32 %v2231, %v2249
      %v2266 = vadd.f32 %v2232, %v2250
      %v2267 = vadd.f32 %v2233, %v2251
      %v2268 = vadd.f32 %v2234, %v2252
      %v2269 = vadd.f32 %v2235, %v2253
      %v2270 = vadd.f32 %v2236, %v2254
      %v2271 = vadd.f32 %v2237, %v2255
      %v2272 = vadd.f32 %v2238, %v2256
      %v2273 = vadd.f32 %v2239, %v2257
      %v2274 = vadd.f32 %v2240, %v2258
      %v2275 = vadd.f32 %v2241, %v2259
      %v2276 = vadd.f32 %v2242, %v2260
      %v2277 = vadd.f32 %v2243, %v2261
      %v2278 = vadd.f32 %v2244, %v2262
      %v2279 = vadd.f32 %v2245, %v2263
      %v2280 = vadd.f32 %v2246, %v2264
      %s2281 = sld [smem:[#allocation11 + $0x17]]
      %v2282 = vstv %s2281
      %v2283 = vmul.f32 %v2282, %v2162
      %v2284 = vmul.f32 %v2282, %v2163
      %v2285 = vmul.f32 %v2282, %v2164
      %v2286 = vmul.f32 %v2282, %v2165
      %v2287 = vmul.f32 %v2282, %v2166
      %v2288 = vmul.f32 %v2282, %v2167
      %v2289 = vmul.f32 %v2282, %v2168
      %v2290 = vmul.f32 %v2282, %v2169
      %v2291 = vmul.f32 %v2282, %v2170
      %v2292 = vmul.f32 %v2282, %v2171
      %v2293 = vmul.f32 %v2282, %v2172
      %v2294 = vmul.f32 %v2282, %v2173
      %v2295 = vmul.f32 %v2282, %v2174
      %v2296 = vmul.f32 %v2282, %v2175
      %v2297 = vmul.f32 %v2282, %v2176
      %v2298 = vmul.f32 %v2282, %v2177
      %v2299 = vadd.f32 %v2265, %v2283
      %v2300 = vadd.f32 %v2266, %v2284
      %v2301 = vadd.f32 %v2267, %v2285
      %v2302 = vadd.f32 %v2268, %v2286
      %v2303 = vadd.f32 %v2269, %v2287
      %v2304 = vadd.f32 %v2270, %v2288
      %v2305 = vadd.f32 %v2271, %v2289
      %v2306 = vadd.f32 %v2272, %v2290
      %v2307 = vadd.f32 %v2273, %v2291
      %v2308 = vadd.f32 %v2274, %v2292
      %v2309 = vadd.f32 %v2275, %v2293
      %v2310 = vadd.f32 %v2276, %v2294
      %v2311 = vadd.f32 %v2277, %v2295
      %v2312 = vadd.f32 %v2278, %v2296
      %v2313 = vadd.f32 %v2279, %v2297
      %v2314 = vadd.f32 %v2280, %v2298
      %s2315 = sld [smem:[#allocation11 + $0x18]]
      %v2316 = vstv %s2315
      %v2317 = vmul.f32 %v2316, %v2163
      %v2318 = vmul.f32 %v2316, %v2164
      %v2319 = vmul.f32 %v2316, %v2165
      %v2320 = vmul.f32 %v2316, %v2166
      %v2321 = vmul.f32 %v2316, %v2167
      %v2322 = vmul.f32 %v2316, %v2168
      %v2323 = vmul.f32 %v2316, %v2169
      %v2324 = vmul.f32 %v2316, %v2170
      %v2325 = vmul.f32 %v2316, %v2171
      %v2326 = vmul.f32 %v2316, %v2172
      %v2327 = vmul.f32 %v2316, %v2173
      %v2328 = vmul.f32 %v2316, %v2174
      %v2329 = vmul.f32 %v2316, %v2175
      %v2330 = vmul.f32 %v2316, %v2176
      %v2331 = vmul.f32 %v2316, %v2177
      %v2332 = vmul.f32 %v2316, %v2178
      %v2333 = vadd.f32 %v2299, %v2317
      %v2334 = vadd.f32 %v2300, %v2318
      %v2335 = vadd.f32 %v2301, %v2319
      %v2336 = vadd.f32 %v2302, %v2320
      %v2337 = vadd.f32 %v2303, %v2321
      %v2338 = vadd.f32 %v2304, %v2322
      %v2339 = vadd.f32 %v2305, %v2323
      %v2340 = vadd.f32 %v2306, %v2324
      %v2341 = vadd.f32 %v2307, %v2325
      %v2342 = vadd.f32 %v2308, %v2326
      %v2343 = vadd.f32 %v2309, %v2327
      %v2344 = vadd.f32 %v2310, %v2328
      %v2345 = vadd.f32 %v2311, %v2329
      %v2346 = vadd.f32 %v2312, %v2330
      %v2347 = vadd.f32 %v2313, %v2331
      %v2348 = vadd.f32 %v2314, %v2332
      %v2349 = vmul.f32 %v1827, %v2159
      %v2350 = vmul.f32 %v1827, %v2160
      %v2351 = vmul.f32 %v1827, %v2161
      %v2352 = vmul.f32 %v1827, %v2162
      %v2353 = vmul.f32 %v1827, %v2163
      %v2354 = vmul.f32 %v1827, %v2164
      %v2355 = vmul.f32 %v1827, %v2165
      %v2356 = vmul.f32 %v1827, %v2166
      %v2357 = vmul.f32 %v1827, %v2167
      %v2358 = vmul.f32 %v1827, %v2168
      %v2359 = vmul.f32 %v1827, %v2169
      %v2360 = vmul.f32 %v1827, %v2170
      %v2361 = vmul.f32 %v1827, %v2171
      %v2362 = vmul.f32 %v1827, %v2172
      %v2363 = vmul.f32 %v1827, %v2173
      %v2364 = vmul.f32 %v1827, %v2174
      %v2365 = vadd.f32 %v2140, %v2349
      %v2366 = vadd.f32 %v2141, %v2350
      %v2367 = vadd.f32 %v2142, %v2351
      %v2368 = vadd.f32 %v2143, %v2352
      %v2369 = vadd.f32 %v2144, %v2353
      %v2370 = vadd.f32 %v2145, %v2354
      %v2371 = vadd.f32 %v2146, %v2355
      %v2372 = vadd.f32 %v2147, %v2356
      %v2373 = vadd.f32 %v2148, %v2357
      %v2374 = vadd.f32 %v2149, %v2358
      %v2375 = vadd.f32 %v2150, %v2359
      %v2376 = vadd.f32 %v2151, %v2360
      %v2377 = vadd.f32 %v2152, %v2361
      %v2378 = vadd.f32 %v2153, %v2362
      %v2379 = vadd.f32 %v2154, %v2363
      %v2380 = vadd.f32 %v2155, %v2364
      %v2381 = vmul.f32 %v1861, %v2160
      %v2382 = vmul.f32 %v1861, %v2161
      %v2383 = vmul.f32 %v1861, %v2162
      %v2384 = vmul.f32 %v1861, %v2163
      %v2385 = vmul.f32 %v1861, %v2164
      %v2386 = vmul.f32 %v1861, %v2165
      %v2387 = vmul.f32 %v1861, %v2166
      %v2388 = vmul.f32 %v1861, %v2167
      %v2389 = vmul.f32 %v1861, %v2168
      %v2390 = vmul.f32 %v1861, %v2169
      %v2391 = vmul.f32 %v1861, %v2170
      %v2392 = vmul.f32 %v1861, %v2171
      %v2393 = vmul.f32 %v1861, %v2172
      %v2394 = vmul.f32 %v1861, %v2173
      %v2395 = vmul.f32 %v1861, %v2174
      %v2396 = vmul.f32 %v1861, %v2175
      %v2397 = vadd.f32 %v2365, %v2381
      %v2398 = vadd.f32 %v2366, %v2382
      %v2399 = vadd.f32 %v2367, %v2383
      %v2400 = vadd.f32 %v2368, %v2384
      %v2401 = vadd.f32 %v2369, %v2385
      %v2402 = vadd.f32 %v2370, %v2386
      %v2403 = vadd.f32 %v2371, %v2387
      %v2404 = vadd.f32 %v2372, %v2388
      %v2405 = vadd.f32 %v2373, %v2389
      %v2406 = vadd.f32 %v2374, %v2390
      %v2407 = vadd.f32 %v2375, %v2391
      %v2408 = vadd.f32 %v2376, %v2392
      %v2409 = vadd.f32 %v2377, %v2393
      %v2410 = vadd.f32 %v2378, %v2394
      %v2411 = vadd.f32 %v2379, %v2395
      %v2412 = vadd.f32 %v2380, %v2396
      %v2413 = vmul.f32 %v1895, %v2161
      %v2414 = vmul.f32 %v1895, %v2162
      %v2415 = vmul.f32 %v1895, %v2163
      %v2416 = vmul.f32 %v1895, %v2164
      %v2417 = vmul.f32 %v1895, %v2165
      %v2418 = vmul.f32 %v1895, %v2166
      %v2419 = vmul.f32 %v1895, %v2167
      %v2420 = vmul.f32 %v1895, %v2168
      %v2421 = vmul.f32 %v1895, %v2169
      %v2422 = vmul.f32 %v1895, %v2170
      %v2423 = vmul.f32 %v1895, %v2171
      %v2424 = vmul.f32 %v1895, %v2172
      %v2425 = vmul.f32 %v1895, %v2173
      %v2426 = vmul.f32 %v1895, %v2174
      %v2427 = vmul.f32 %v1895, %v2175
      %v2428 = vmul.f32 %v1895, %v2176
      %v2429 = vadd.f32 %v2397, %v2413
      %v2430 = vadd.f32 %v2398, %v2414
      %v2431 = vadd.f32 %v2399, %v2415
      %v2432 = vadd.f32 %v2400, %v2416
      %v2433 = vadd.f32 %v2401, %v2417
      %v2434 = vadd.f32 %v2402, %v2418
      %v2435 = vadd.f32 %v2403, %v2419
      %v2436 = vadd.f32 %v2404, %v2420
      %v2437 = vadd.f32 %v2405, %v2421
      %v2438 = vadd.f32 %v2406, %v2422
      %v2439 = vadd.f32 %v2407, %v2423
      %v2440 = vadd.f32 %v2408, %v2424
      %v2441 = vadd.f32 %v2409, %v2425
      %v2442 = vadd.f32 %v2410, %v2426
      %v2443 = vadd.f32 %v2411, %v2427
      %v2444 = vadd.f32 %v2412, %v2428
      %v2445 = vmul.f32 %v1929, %v2162
      %v2446 = vmul.f32 %v1929, %v2163
      %v2447 = vmul.f32 %v1929, %v2164
      %v2448 = vmul.f32 %v1929, %v2165
      %v2449 = vmul.f32 %v1929, %v2166
      %v2450 = vmul.f32 %v1929, %v2167
      %v2451 = vmul.f32 %v1929, %v2168
      %v2452 = vmul.f32 %v1929, %v2169
      %v2453 = vmul.f32 %v1929, %v2170
      %v2454 = vmul.f32 %v1929, %v2171
      %v2455 = vmul.f32 %v1929, %v2172
      %v2456 = vmul.f32 %v1929, %v2173
      %v2457 = vmul.f32 %v1929, %v2174
      %v2458 = vmul.f32 %v1929, %v2175
      %v2459 = vmul.f32 %v1929, %v2176
      %v2460 = vmul.f32 %v1929, %v2177
      %v2461 = vadd.f32 %v2429, %v2445
      %v2462 = vadd.f32 %v2430, %v2446
      %v2463 = vadd.f32 %v2431, %v2447
      %v2464 = vadd.f32 %v2432, %v2448
      %v2465 = vadd.f32 %v2433, %v2449
      %v2466 = vadd.f32 %v2434, %v2450
      %v2467 = vadd.f32 %v2435, %v2451
      %v2468 = vadd.f32 %v2436, %v2452
      %v2469 = vadd.f32 %v2437, %v2453
      %v2470 = vadd.f32 %v2438, %v2454
      %v2471 = vadd.f32 %v2439, %v2455
      %v2472 = vadd.f32 %v2440, %v2456
      %v2473 = vadd.f32 %v2441, %v2457
      %v2474 = vadd.f32 %v2442, %v2458
      %v2475 = vadd.f32 %v2443, %v2459
      %v2476 = vadd.f32 %v2444, %v2460
      %v2477 = vmul.f32 %v1963, %v2163
      %v2478 = vmul.f32 %v1963, %v2164
      %v2479 = vmul.f32 %v1963, %v2165
      %v2480 = vmul.f32 %v1963, %v2166
      %v2481 = vmul.f32 %v1963, %v2167
      %v2482 = vmul.f32 %v1963, %v2168
      %v2483 = vmul.f32 %v1963, %v2169
      %v2484 = vmul.f32 %v1963, %v2170
      %v2485 = vmul.f32 %v1963, %v2171
      %v2486 = vmul.f32 %v1963, %v2172
      %v2487 = vmul.f32 %v1963, %v2173
      %v2488 = vmul.f32 %v1963, %v2174
      %v2489 = vmul.f32 %v1963, %v2175
      %v2490 = vmul.f32 %v1963, %v2176
      %v2491 = vmul.f32 %v1963, %v2177
      %v2492 = vmul.f32 %v1963, %v2178
      %v2493 = vadd.f32 %v2461, %v2477
      %v2494 = vadd.f32 %v2462, %v2478
      %v2495 = vadd.f32 %v2463, %v2479
      %v2496 = vadd.f32 %v2464, %v2480
      %v2497 = vadd.f32 %v2465, %v2481
      %v2498 = vadd.f32 %v2466, %v2482
      %v2499 = vadd.f32 %v2467, %v2483
      %v2500 = vadd.f32 %v2468, %v2484
      %v2501 = vadd.f32 %v2469, %v2485
      %v2502 = vadd.f32 %v2470, %v2486
      %v2503 = vadd.f32 %v2471, %v2487
      %v2504 = vadd.f32 %v2472, %v2488
      %v2505 = vadd.f32 %v2473, %v2489
      %v2506 = vadd.f32 %v2474, %v2490
      %v2507 = vadd.f32 %v2475, %v2491
      %v2508 = vadd.f32 %v2476, %v2492
      %s2509 = sadd.s32 %s936, 5
      %s2510 = smul.u32 %s2509, 160
      %s2511 = scalar_lea.vmem [#allocation2], %s2510
      %v2512 = vld [vmem:[%s2511] sm:$0xff]
      %v2513 = vld [vmem:[%s2511 + $0x8] sm:$0xff]
      %v2514 = vld [vmem:[%s2511 + $0x10] sm:$0xff]
      %v2515 = vld [vmem:[%s2511 + $0x18] sm:$0xff]
      %v2516 = vld [vmem:[%s2511 + $0x20] sm:$0xff]
      %v2517 = vld [vmem:[%s2511 + $0x28] sm:$0xff]
      %v2518 = vld [vmem:[%s2511 + $0x30] sm:$0xff]
      %v2519 = vld [vmem:[%s2511 + $0x38] sm:$0xff]
      %v2520 = vld [vmem:[%s2511 + $0x40] sm:$0xff]
      %v2521 = vld [vmem:[%s2511 + $0x48] sm:$0xff]
      %v2522 = vld [vmem:[%s2511 + $0x50] sm:$0xff]
      %v2523 = vld [vmem:[%s2511 + $0x58] sm:$0xff]
      %v2524 = vld [vmem:[%s2511 + $0x60] sm:$0xff]
      %v2525 = vld [vmem:[%s2511 + $0x68] sm:$0xff]
      %v2526 = vld [vmem:[%s2511 + $0x70] sm:$0xff]
      %v2527 = vld [vmem:[%s2511 + $0x78] sm:$0xff]
      %v2528 = vld [vmem:[%s2511 + $0x80] sm:$0xff]
      %v2529 = vld [vmem:[%s2511 + $0x88] sm:$0xff]
      %v2530 = vld [vmem:[%s2511 + $0x90] sm:$0xff]
      %v2531 = vld [vmem:[%s2511 + $0x98] sm:$0xff]
      %v2532 = vmul.f32 %v2180, %v2512
      %v2533 = vmul.f32 %v2180, %v2513
      %v2534 = vmul.f32 %v2180, %v2514
      %v2535 = vmul.f32 %v2180, %v2515
      %v2536 = vmul.f32 %v2180, %v2516
      %v2537 = vmul.f32 %v2180, %v2517
      %v2538 = vmul.f32 %v2180, %v2518
      %v2539 = vmul.f32 %v2180, %v2519
      %v2540 = vmul.f32 %v2180, %v2520
      %v2541 = vmul.f32 %v2180, %v2521
      %v2542 = vmul.f32 %v2180, %v2522
      %v2543 = vmul.f32 %v2180, %v2523
      %v2544 = vmul.f32 %v2180, %v2524
      %v2545 = vmul.f32 %v2180, %v2525
      %v2546 = vmul.f32 %v2180, %v2526
      %v2547 = vmul.f32 %v2180, %v2527
      %v2548 = vadd.f32 %v2493, %v2532
      %v2549 = vadd.f32 %v2494, %v2533
      %v2550 = vadd.f32 %v2495, %v2534
      %v2551 = vadd.f32 %v2496, %v2535
      %v2552 = vadd.f32 %v2497, %v2536
      %v2553 = vadd.f32 %v2498, %v2537
      %v2554 = vadd.f32 %v2499, %v2538
      %v2555 = vadd.f32 %v2500, %v2539
      %v2556 = vadd.f32 %v2501, %v2540
      %v2557 = vadd.f32 %v2502, %v2541
      %v2558 = vadd.f32 %v2503, %v2542
      %v2559 = vadd.f32 %v2504, %v2543
      %v2560 = vadd.f32 %v2505, %v2544
      %v2561 = vadd.f32 %v2506, %v2545
      %v2562 = vadd.f32 %v2507, %v2546
      %v2563 = vadd.f32 %v2508, %v2547
      %v2564 = vmul.f32 %v2214, %v2513
      %v2565 = vmul.f32 %v2214, %v2514
      %v2566 = vmul.f32 %v2214, %v2515
      %v2567 = vmul.f32 %v2214, %v2516
      %v2568 = vmul.f32 %v2214, %v2517
      %v2569 = vmul.f32 %v2214, %v2518
      %v2570 = vmul.f32 %v2214, %v2519
      %v2571 = vmul.f32 %v2214, %v2520
      %v2572 = vmul.f32 %v2214, %v2521
      %v2573 = vmul.f32 %v2214, %v2522
      %v2574 = vmul.f32 %v2214, %v2523
      %v2575 = vmul.f32 %v2214, %v2524
      %v2576 = vmul.f32 %v2214, %v2525
      %v2577 = vmul.f32 %v2214, %v2526
      %v2578 = vmul.f32 %v2214, %v2527
      %v2579 = vmul.f32 %v2214, %v2528
      %v2580 = vadd.f32 %v2548, %v2564
      %v2581 = vadd.f32 %v2549, %v2565
      %v2582 = vadd.f32 %v2550, %v2566
      %v2583 = vadd.f32 %v2551, %v2567
      %v2584 = vadd.f32 %v2552, %v2568
      %v2585 = vadd.f32 %v2553, %v2569
      %v2586 = vadd.f32 %v2554, %v2570
      %v2587 = vadd.f32 %v2555, %v2571
      %v2588 = vadd.f32 %v2556, %v2572
      %v2589 = vadd.f32 %v2557, %v2573
      %v2590 = vadd.f32 %v2558, %v2574
      %v2591 = vadd.f32 %v2559, %v2575
      %v2592 = vadd.f32 %v2560, %v2576
      %v2593 = vadd.f32 %v2561, %v2577
      %v2594 = vadd.f32 %v2562, %v2578
      %v2595 = vadd.f32 %v2563, %v2579
      %v2596 = vmul.f32 %v2248, %v2514
      %v2597 = vmul.f32 %v2248, %v2515
      %v2598 = vmul.f32 %v2248, %v2516
      %v2599 = vmul.f32 %v2248, %v2517
      %v2600 = vmul.f32 %v2248, %v2518
      %v2601 = vmul.f32 %v2248, %v2519
      %v2602 = vmul.f32 %v2248, %v2520
      %v2603 = vmul.f32 %v2248, %v2521
      %v2604 = vmul.f32 %v2248, %v2522
      %v2605 = vmul.f32 %v2248, %v2523
      %v2606 = vmul.f32 %v2248, %v2524
      %v2607 = vmul.f32 %v2248, %v2525
      %v2608 = vmul.f32 %v2248, %v2526
      %v2609 = vmul.f32 %v2248, %v2527
      %v2610 = vmul.f32 %v2248, %v2528
      %v2611 = vmul.f32 %v2248, %v2529
      %v2612 = vadd.f32 %v2580, %v2596
      %v2613 = vadd.f32 %v2581, %v2597
      %v2614 = vadd.f32 %v2582, %v2598
      %v2615 = vadd.f32 %v2583, %v2599
      %v2616 = vadd.f32 %v2584, %v2600
      %v2617 = vadd.f32 %v2585, %v2601
      %v2618 = vadd.f32 %v2586, %v2602
      %v2619 = vadd.f32 %v2587, %v2603
      %v2620 = vadd.f32 %v2588, %v2604
      %v2621 = vadd.f32 %v2589, %v2605
      %v2622 = vadd.f32 %v2590, %v2606
      %v2623 = vadd.f32 %v2591, %v2607
      %v2624 = vadd.f32 %v2592, %v2608
      %v2625 = vadd.f32 %v2593, %v2609
      %v2626 = vadd.f32 %v2594, %v2610
      %v2627 = vadd.f32 %v2595, %v2611
      %v2628 = vmul.f32 %v2282, %v2515
      %v2629 = vmul.f32 %v2282, %v2516
      %v2630 = vmul.f32 %v2282, %v2517
      %v2631 = vmul.f32 %v2282, %v2518
      %v2632 = vmul.f32 %v2282, %v2519
      %v2633 = vmul.f32 %v2282, %v2520
      %v2634 = vmul.f32 %v2282, %v2521
      %v2635 = vmul.f32 %v2282, %v2522
      %v2636 = vmul.f32 %v2282, %v2523
      %v2637 = vmul.f32 %v2282, %v2524
      %v2638 = vmul.f32 %v2282, %v2525
      %v2639 = vmul.f32 %v2282, %v2526
      %v2640 = vmul.f32 %v2282, %v2527
      %v2641 = vmul.f32 %v2282, %v2528
      %v2642 = vmul.f32 %v2282, %v2529
      %v2643 = vmul.f32 %v2282, %v2530
      %v2644 = vadd.f32 %v2612, %v2628
      %v2645 = vadd.f32 %v2613, %v2629
      %v2646 = vadd.f32 %v2614, %v2630
      %v2647 = vadd.f32 %v2615, %v2631
      %v2648 = vadd.f32 %v2616, %v2632
      %v2649 = vadd.f32 %v2617, %v2633
      %v2650 = vadd.f32 %v2618, %v2634
      %v2651 = vadd.f32 %v2619, %v2635
      %v2652 = vadd.f32 %v2620, %v2636
      %v2653 = vadd.f32 %v2621, %v2637
      %v2654 = vadd.f32 %v2622, %v2638
      %v2655 = vadd.f32 %v2623, %v2639
      %v2656 = vadd.f32 %v2624, %v2640
      %v2657 = vadd.f32 %v2625, %v2641
      %v2658 = vadd.f32 %v2626, %v2642
      %v2659 = vadd.f32 %v2627, %v2643
      %v2660 = vmul.f32 %v2316, %v2516
      %v2661 = vmul.f32 %v2316, %v2517
      %v2662 = vmul.f32 %v2316, %v2518
      %v2663 = vmul.f32 %v2316, %v2519
      %v2664 = vmul.f32 %v2316, %v2520
      %v2665 = vmul.f32 %v2316, %v2521
      %v2666 = vmul.f32 %v2316, %v2522
      %v2667 = vmul.f32 %v2316, %v2523
      %v2668 = vmul.f32 %v2316, %v2524
      %v2669 = vmul.f32 %v2316, %v2525
      %v2670 = vmul.f32 %v2316, %v2526
      %v2671 = vmul.f32 %v2316, %v2527
      %v2672 = vmul.f32 %v2316, %v2528
      %v2673 = vmul.f32 %v2316, %v2529
      %v2674 = vmul.f32 %v2316, %v2530
      %v2675 = vmul.f32 %v2316, %v2531
      %v2676 = vadd.f32 %v2644, %v2660
      %v2677 = vadd.f32 %v2645, %v2661
      %v2678 = vadd.f32 %v2646, %v2662
      %v2679 = vadd.f32 %v2647, %v2663
      %v2680 = vadd.f32 %v2648, %v2664
      %v2681 = vadd.f32 %v2649, %v2665
      %v2682 = vadd.f32 %v2650, %v2666
      %v2683 = vadd.f32 %v2651, %v2667
      %v2684 = vadd.f32 %v2652, %v2668
      %v2685 = vadd.f32 %v2653, %v2669
      %v2686 = vadd.f32 %v2654, %v2670
      %v2687 = vadd.f32 %v2655, %v2671
      %v2688 = vadd.f32 %v2656, %v2672
      %v2689 = vadd.f32 %v2657, %v2673
      %v2690 = vadd.f32 %v2658, %v2674
      %v2691 = vadd.f32 %v2659, %v2675
      %v2692 = vmax.f32 %v2333, %v2676
      %v2693 = vmax.f32 %v2334, %v2677
      %v2694 = vmax.f32 %v2335, %v2678
      %v2695 = vmax.f32 %v2336, %v2679
      %v2696 = vmax.f32 %v2337, %v2680
      %v2697 = vmax.f32 %v2338, %v2681
      %v2698 = vmax.f32 %v2339, %v2682
      %v2699 = vmax.f32 %v2340, %v2683
      %v2700 = vmax.f32 %v2341, %v2684
      %v2701 = vmax.f32 %v2342, %v2685
      %v2702 = vmax.f32 %v2343, %v2686
      %v2703 = vmax.f32 %v2344, %v2687
      %v2704 = vmax.f32 %v2345, %v2688
      %v2705 = vmax.f32 %v2346, %v2689
      %v2706 = vmax.f32 %v2347, %v2690
      %v2707 = vmax.f32 %v2348, %v2691
      %v2708 = vmax.f32 %v2692, %v2693
      %v2709 = vmax.f32 %v2694, %v2695
      %v2710 = vmax.f32 %v2696, %v2697
      %v2711 = vmax.f32 %v2698, %v2699
      %v2712 = vmax.f32 %v2700, %v2701
      %v2713 = vmax.f32 %v2702, %v2703
      %v2714 = vmax.f32 %v2704, %v2705
      %v2715 = vmax.f32 %v2706, %v2707
      %s2716 = sld [smem:[#allocation12]]
      %v2717 = vstv %s2716
      %v2718 = vadd.f32 %v2708, %v2717
      %v2719 = vadd.f32 %v2709, %v2717
      %v2720 = vadd.f32 %v2710, %v2717
      %v2721 = vadd.f32 %v2711, %v2717
      %v2722 = vadd.f32 %v2712, %v2717
      %v2723 = vadd.f32 %v2713, %v2717
      %v2724 = vadd.f32 %v2714, %v2717
      %v2725 = vadd.f32 %v2715, %v2717
      %v2726 = vmax.f32 %v2718, 0.0
      %v2727 = vmax.f32 %v2719, 0.0
      %v2728 = vmax.f32 %v2720, 0.0
      %v2729 = vmax.f32 %v2721, 0.0
      %v2730 = vmax.f32 %v2722, 0.0
      %v2731 = vmax.f32 %v2723, 0.0
      %v2732 = vmax.f32 %v2724, 0.0
      %v2733 = vmax.f32 %v2725, 0.0
      %s2734 = sadd.s32 %s931, 2
      %s2735 = smul.u32 %s2734, 96
      %s2736 = sadd.s32 16, %s2735
      %s2737 = scalar_lea.vmem [#allocation3], %s2736
      %2738 = vst [vmem:[%s2737] sm:$0xff] %v2726
      %2739 = vst [vmem:[%s2737 + $0x8] sm:$0xff] %v2727
      %2740 = vst [vmem:[%s2737 + $0x10] sm:$0xff] %v2728
      %2741 = vst [vmem:[%s2737 + $0x18] sm:$0xff] %v2729
      %2742 = vst [vmem:[%s2737 + $0x20] sm:$0xff] %v2730
      %2743 = vst [vmem:[%s2737 + $0x28] sm:$0xff] %v2731
      %2744 = vst [vmem:[%s2737 + $0x30] sm:$0xff] %v2732
      %2745 = vst [vmem:[%s2737 + $0x38] sm:$0xff] %v2733
    $region58: #{tpu_custom_call.1} parent=1 // loop_footer
      %s935 = sadd.s32 1, %s931
    $region59: #{tpu_custom_call.1} parent=1 // loop_footer_branch
      %930 = sbr.rel target = $region55
    $region60: #{tpu_custom_call.1} parent=1 // loop_exit
      _
    loop: start=0, step=1, limit=8
    $region61: #{tpu_custom_call.1} parent=1 // loop_pre_header
      _
    $region62: #{tpu_custom_call.1} parent=1 // loop_header
      %s2747 = sphi 0, %s2751
      %p2748 = scmp.ge.s32.totalorder %s2747, 8
    $region63: #{tpu_custom_call.1} parent=1 // loop_header_branch
      %2750 = sbr.rel (%p2748) target = $region67
    $region64: #{tpu_custom_call.1} parent=1 // loop_body
      %s2752 = smul.u32 %s2747, 2
      %s2753 = smul.u32 %s2752, 160
      %s2754 = scalar_lea.vmem [#allocation2], %s2753
      %v2755 = vld [vmem:[%s2754] sm:$0xff]
      %v2756 = vld [vmem:[%s2754 + $0x8] sm:$0xff]
      %v2757 = vld [vmem:[%s2754 + $0x10] sm:$0xff]
      %v2758 = vld [vmem:[%s2754 + $0x18] sm:$0xff]
      %v2759 = vld [vmem:[%s2754 + $0x20] sm:$0xff]
      %v2760 = vld [vmem:[%s2754 + $0x28] sm:$0xff]
      %v2761 = vld [vmem:[%s2754 + $0x30] sm:$0xff]
      %v2762 = vld [vmem:[%s2754 + $0x38] sm:$0xff]
      %v2763 = vld [vmem:[%s2754 + $0x40] sm:$0xff]
      %v2764 = vld [vmem:[%s2754 + $0x48] sm:$0xff]
      %v2765 = vld [vmem:[%s2754 + $0x50] sm:$0xff]
      %v2766 = vld [vmem:[%s2754 + $0x58] sm:$0xff]
      %v2767 = vld [vmem:[%s2754 + $0x60] sm:$0xff]
      %v2768 = vld [vmem:[%s2754 + $0x68] sm:$0xff]
      %v2769 = vld [vmem:[%s2754 + $0x70] sm:$0xff]
      %v2770 = vld [vmem:[%s2754 + $0x78] sm:$0xff]
      %v2771 = vld [vmem:[%s2754 + $0x80] sm:$0xff]
      %v2772 = vld [vmem:[%s2754 + $0x88] sm:$0xff]
      %v2773 = vld [vmem:[%s2754 + $0x90] sm:$0xff]
      %v2774 = vld [vmem:[%s2754 + $0x98] sm:$0xff]
      %s2775 = sld [smem:[#allocation11 + $0x19]]
      %v2776 = vstv %s2775
      %v2777 = vmul.f32 %v2776, %v2755
      %v2778 = vmul.f32 %v2776, %v2756
      %v2779 = vmul.f32 %v2776, %v2757
      %v2780 = vmul.f32 %v2776, %v2758
      %v2781 = vmul.f32 %v2776, %v2759
      %v2782 = vmul.f32 %v2776, %v2760
      %v2783 = vmul.f32 %v2776, %v2761
      %v2784 = vmul.f32 %v2776, %v2762
      %v2785 = vmul.f32 %v2776, %v2763
      %v2786 = vmul.f32 %v2776, %v2764
      %v2787 = vmul.f32 %v2776, %v2765
      %v2788 = vmul.f32 %v2776, %v2766
      %v2789 = vmul.f32 %v2776, %v2767
      %v2790 = vmul.f32 %v2776, %v2768
      %v2791 = vmul.f32 %v2776, %v2769
      %v2792 = vmul.f32 %v2776, %v2770
      %s2793 = sld [smem:[#allocation11 + $0x1a]]
      %v2794 = vstv %s2793
      %v2795 = vmul.f32 %v2794, %v2756
      %v2796 = vmul.f32 %v2794, %v2757
      %v2797 = vmul.f32 %v2794, %v2758
      %v2798 = vmul.f32 %v2794, %v2759
      %v2799 = vmul.f32 %v2794, %v2760
      %v2800 = vmul.f32 %v2794, %v2761
      %v2801 = vmul.f32 %v2794, %v2762
      %v2802 = vmul.f32 %v2794, %v2763
      %v2803 = vmul.f32 %v2794, %v2764
      %v2804 = vmul.f32 %v2794, %v2765
      %v2805 = vmul.f32 %v2794, %v2766
      %v2806 = vmul.f32 %v2794, %v2767
      %v2807 = vmul.f32 %v2794, %v2768
      %v2808 = vmul.f32 %v2794, %v2769
      %v2809 = vmul.f32 %v2794, %v2770
      %v2810 = vmul.f32 %v2794, %v2771
      %v2811 = vadd.f32 %v2777, %v2795
      %v2812 = vadd.f32 %v2778, %v2796
      %v2813 = vadd.f32 %v2779, %v2797
      %v2814 = vadd.f32 %v2780, %v2798
      %v2815 = vadd.f32 %v2781, %v2799
      %v2816 = vadd.f32 %v2782, %v2800
      %v2817 = vadd.f32 %v2783, %v2801
      %v2818 = vadd.f32 %v2784, %v2802
      %v2819 = vadd.f32 %v2785, %v2803
      %v2820 = vadd.f32 %v2786, %v2804
      %v2821 = vadd.f32 %v2787, %v2805
      %v2822 = vadd.f32 %v2788, %v2806
      %v2823 = vadd.f32 %v2789, %v2807
      %v2824 = vadd.f32 %v2790, %v2808
      %v2825 = vadd.f32 %v2791, %v2809
      %v2826 = vadd.f32 %v2792, %v2810
      %s2827 = sld [smem:[#allocation11 + $0x1b]]
      %v2828 = vstv %s2827
      %v2829 = vmul.f32 %v2828, %v2757
      %v2830 = vmul.f32 %v2828, %v2758
      %v2831 = vmul.f32 %v2828, %v2759
      %v2832 = vmul.f32 %v2828, %v2760
      %v2833 = vmul.f32 %v2828, %v2761
      %v2834 = vmul.f32 %v2828, %v2762
      %v2835 = vmul.f32 %v2828, %v2763
      %v2836 = vmul.f32 %v2828, %v2764
      %v2837 = vmul.f32 %v2828, %v2765
      %v2838 = vmul.f32 %v2828, %v2766
      %v2839 = vmul.f32 %v2828, %v2767
      %v2840 = vmul.f32 %v2828, %v2768
      %v2841 = vmul.f32 %v2828, %v2769
      %v2842 = vmul.f32 %v2828, %v2770
      %v2843 = vmul.f32 %v2828, %v2771
      %v2844 = vmul.f32 %v2828, %v2772
      %v2845 = vadd.f32 %v2811, %v2829
      %v2846 = vadd.f32 %v2812, %v2830
      %v2847 = vadd.f32 %v2813, %v2831
      %v2848 = vadd.f32 %v2814, %v2832
      %v2849 = vadd.f32 %v2815, %v2833
      %v2850 = vadd.f32 %v2816, %v2834
      %v2851 = vadd.f32 %v2817, %v2835
      %v2852 = vadd.f32 %v2818, %v2836
      %v2853 = vadd.f32 %v2819, %v2837
      %v2854 = vadd.f32 %v2820, %v2838
      %v2855 = vadd.f32 %v2821, %v2839
      %v2856 = vadd.f32 %v2822, %v2840
      %v2857 = vadd.f32 %v2823, %v2841
      %v2858 = vadd.f32 %v2824, %v2842
      %v2859 = vadd.f32 %v2825, %v2843
      %v2860 = vadd.f32 %v2826, %v2844
      %s2861 = sld [smem:[#allocation11 + $0x1c]]
      %v2862 = vstv %s2861
      %v2863 = vmul.f32 %v2862, %v2758
      %v2864 = vmul.f32 %v2862, %v2759
      %v2865 = vmul.f32 %v2862, %v2760
      %v2866 = vmul.f32 %v2862, %v2761
      %v2867 = vmul.f32 %v2862, %v2762
      %v2868 = vmul.f32 %v2862, %v2763
      %v2869 = vmul.f32 %v2862, %v2764
      %v2870 = vmul.f32 %v2862, %v2765
      %v2871 = vmul.f32 %v2862, %v2766
      %v2872 = vmul.f32 %v2862, %v2767
      %v2873 = vmul.f32 %v2862, %v2768
      %v2874 = vmul.f32 %v2862, %v2769
      %v2875 = vmul.f32 %v2862, %v2770
      %v2876 = vmul.f32 %v2862, %v2771
      %v2877 = vmul.f32 %v2862, %v2772
      %v2878 = vmul.f32 %v2862, %v2773
      %v2879 = vadd.f32 %v2845, %v2863
      %v2880 = vadd.f32 %v2846, %v2864
      %v2881 = vadd.f32 %v2847, %v2865
      %v2882 = vadd.f32 %v2848, %v2866
      %v2883 = vadd.f32 %v2849, %v2867
      %v2884 = vadd.f32 %v2850, %v2868
      %v2885 = vadd.f32 %v2851, %v2869
      %v2886 = vadd.f32 %v2852, %v2870
      %v2887 = vadd.f32 %v2853, %v2871
      %v2888 = vadd.f32 %v2854, %v2872
      %v2889 = vadd.f32 %v2855, %v2873
      %v2890 = vadd.f32 %v2856, %v2874
      %v2891 = vadd.f32 %v2857, %v2875
      %v2892 = vadd.f32 %v2858, %v2876
      %v2893 = vadd.f32 %v2859, %v2877
      %v2894 = vadd.f32 %v2860, %v2878
      %s2895 = sld [smem:[#allocation11 + $0x1d]]
      %v2896 = vstv %s2895
      %v2897 = vmul.f32 %v2896, %v2759
      %v2898 = vmul.f32 %v2896, %v2760
      %v2899 = vmul.f32 %v2896, %v2761
      %v2900 = vmul.f32 %v2896, %v2762
      %v2901 = vmul.f32 %v2896, %v2763
      %v2902 = vmul.f32 %v2896, %v2764
      %v2903 = vmul.f32 %v2896, %v2765
      %v2904 = vmul.f32 %v2896, %v2766
      %v2905 = vmul.f32 %v2896, %v2767
      %v2906 = vmul.f32 %v2896, %v2768
      %v2907 = vmul.f32 %v2896, %v2769
      %v2908 = vmul.f32 %v2896, %v2770
      %v2909 = vmul.f32 %v2896, %v2771
      %v2910 = vmul.f32 %v2896, %v2772
      %v2911 = vmul.f32 %v2896, %v2773
      %v2912 = vmul.f32 %v2896, %v2774
      %v2913 = vadd.f32 %v2879, %v2897
      %v2914 = vadd.f32 %v2880, %v2898
      %v2915 = vadd.f32 %v2881, %v2899
      %v2916 = vadd.f32 %v2882, %v2900
      %v2917 = vadd.f32 %v2883, %v2901
      %v2918 = vadd.f32 %v2884, %v2902
      %v2919 = vadd.f32 %v2885, %v2903
      %v2920 = vadd.f32 %v2886, %v2904
      %v2921 = vadd.f32 %v2887, %v2905
      %v2922 = vadd.f32 %v2888, %v2906
      %v2923 = vadd.f32 %v2889, %v2907
      %v2924 = vadd.f32 %v2890, %v2908
      %v2925 = vadd.f32 %v2891, %v2909
      %v2926 = vadd.f32 %v2892, %v2910
      %v2927 = vadd.f32 %v2893, %v2911
      %v2928 = vadd.f32 %v2894, %v2912
      %s2929 = sadd.s32 %s2752, 1
      %s2930 = smul.u32 %s2929, 160
      %s2931 = scalar_lea.vmem [#allocation2], %s2930
      %v2932 = vld [vmem:[%s2931] sm:$0xff]
      %v2933 = vld [vmem:[%s2931 + $0x8] sm:$0xff]
      %v2934 = vld [vmem:[%s2931 + $0x10] sm:$0xff]
      %v2935 = vld [vmem:[%s2931 + $0x18] sm:$0xff]
      %v2936 = vld [vmem:[%s2931 + $0x20] sm:$0xff]
      %v2937 = vld [vmem:[%s2931 + $0x28] sm:$0xff]
      %v2938 = vld [vmem:[%s2931 + $0x30] sm:$0xff]
      %v2939 = vld [vmem:[%s2931 + $0x38] sm:$0xff]
      %v2940 = vld [vmem:[%s2931 + $0x40] sm:$0xff]
      %v2941 = vld [vmem:[%s2931 + $0x48] sm:$0xff]
      %v2942 = vld [vmem:[%s2931 + $0x50] sm:$0xff]
      %v2943 = vld [vmem:[%s2931 + $0x58] sm:$0xff]
      %v2944 = vld [vmem:[%s2931 + $0x60] sm:$0xff]
      %v2945 = vld [vmem:[%s2931 + $0x68] sm:$0xff]
      %v2946 = vld [vmem:[%s2931 + $0x70] sm:$0xff]
      %v2947 = vld [vmem:[%s2931 + $0x78] sm:$0xff]
      %v2948 = vld [vmem:[%s2931 + $0x80] sm:$0xff]
      %v2949 = vld [vmem:[%s2931 + $0x88] sm:$0xff]
      %v2950 = vld [vmem:[%s2931 + $0x90] sm:$0xff]
      %v2951 = vld [vmem:[%s2931 + $0x98] sm:$0xff]
      %s2952 = sld [smem:[#allocation11 + $0x1e]]
      %v2953 = vstv %s2952
      %v2954 = vmul.f32 %v2953, %v2932
      %v2955 = vmul.f32 %v2953, %v2933
      %v2956 = vmul.f32 %v2953, %v2934
      %v2957 = vmul.f32 %v2953, %v2935
      %v2958 = vmul.f32 %v2953, %v2936
      %v2959 = vmul.f32 %v2953, %v2937
      %v2960 = vmul.f32 %v2953, %v2938
      %v2961 = vmul.f32 %v2953, %v2939
      %v2962 = vmul.f32 %v2953, %v2940
      %v2963 = vmul.f32 %v2953, %v2941
      %v2964 = vmul.f32 %v2953, %v2942
      %v2965 = vmul.f32 %v2953, %v2943
      %v2966 = vmul.f32 %v2953, %v2944
      %v2967 = vmul.f32 %v2953, %v2945
      %v2968 = vmul.f32 %v2953, %v2946
      %v2969 = vmul.f32 %v2953, %v2947
      %v2970 = vadd.f32 %v2913, %v2954
      %v2971 = vadd.f32 %v2914, %v2955
      %v2972 = vadd.f32 %v2915, %v2956
      %v2973 = vadd.f32 %v2916, %v2957
      %v2974 = vadd.f32 %v2917, %v2958
      %v2975 = vadd.f32 %v2918, %v2959
      %v2976 = vadd.f32 %v2919, %v2960
      %v2977 = vadd.f32 %v2920, %v2961
      %v2978 = vadd.f32 %v2921, %v2962
      %v2979 = vadd.f32 %v2922, %v2963
      %v2980 = vadd.f32 %v2923, %v2964
      %v2981 = vadd.f32 %v2924, %v2965
      %v2982 = vadd.f32 %v2925, %v2966
      %v2983 = vadd.f32 %v2926, %v2967
      %v2984 = vadd.f32 %v2927, %v2968
      %v2985 = vadd.f32 %v2928, %v2969
      %s2986 = sld [smem:[#allocation11 + $0x1f]]
      %v2987 = vstv %s2986
      %v2988 = vmul.f32 %v2987, %v2933
      %v2989 = vmul.f32 %v2987, %v2934
      %v2990 = vmul.f32 %v2987, %v2935
      %v2991 = vmul.f32 %v2987, %v2936
      %v2992 = vmul.f32 %v2987, %v2937
      %v2993 = vmul.f32 %v2987, %v2938
      %v2994 = vmul.f32 %v2987, %v2939
      %v2995 = vmul.f32 %v2987, %v2940
      %v2996 = vmul.f32 %v2987, %v2941
      %v2997 = vmul.f32 %v2987, %v2942
      %v2998 = vmul.f32 %v2987, %v2943
      %v2999 = vmul.f32 %v2987, %v2944
      %v3000 = vmul.f32 %v2987, %v2945
      %v3001 = vmul.f32 %v2987, %v2946
      %v3002 = vmul.f32 %v2987, %v2947
      %v3003 = vmul.f32 %v2987, %v2948
      %v3004 = vadd.f32 %v2970, %v2988
      %v3005 = vadd.f32 %v2971, %v2989
      %v3006 = vadd.f32 %v2972, %v2990
      %v3007 = vadd.f32 %v2973, %v2991
      %v3008 = vadd.f32 %v2974, %v2992
      %v3009 = vadd.f32 %v2975, %v2993
      %v3010 = vadd.f32 %v2976, %v2994
      %v3011 = vadd.f32 %v2977, %v2995
      %v3012 = vadd.f32 %v2978, %v2996
      %v3013 = vadd.f32 %v2979, %v2997
      %v3014 = vadd.f32 %v2980, %v2998
      %v3015 = vadd.f32 %v2981, %v2999
      %v3016 = vadd.f32 %v2982, %v3000
      %v3017 = vadd.f32 %v2983, %v3001
      %v3018 = vadd.f32 %v2984, %v3002
      %v3019 = vadd.f32 %v2985, %v3003
      %s3020 = sld [smem:[#allocation11 + $0x20]]
      %v3021 = vstv %s3020
      %v3022 = vmul.f32 %v3021, %v2934
      %v3023 = vmul.f32 %v3021, %v2935
      %v3024 = vmul.f32 %v3021, %v2936
      %v3025 = vmul.f32 %v3021, %v2937
      %v3026 = vmul.f32 %v3021, %v2938
      %v3027 = vmul.f32 %v3021, %v2939
      %v3028 = vmul.f32 %v3021, %v2940
      %v3029 = vmul.f32 %v3021, %v2941
      %v3030 = vmul.f32 %v3021, %v2942
      %v3031 = vmul.f32 %v3021, %v2943
      %v3032 = vmul.f32 %v3021, %v2944
      %v3033 = vmul.f32 %v3021, %v2945
      %v3034 = vmul.f32 %v3021, %v2946
      %v3035 = vmul.f32 %v3021, %v2947
      %v3036 = vmul.f32 %v3021, %v2948
      %v3037 = vmul.f32 %v3021, %v2949
      %v3038 = vadd.f32 %v3004, %v3022
      %v3039 = vadd.f32 %v3005, %v3023
      %v3040 = vadd.f32 %v3006, %v3024
      %v3041 = vadd.f32 %v3007, %v3025
      %v3042 = vadd.f32 %v3008, %v3026
      %v3043 = vadd.f32 %v3009, %v3027
      %v3044 = vadd.f32 %v3010, %v3028
      %v3045 = vadd.f32 %v3011, %v3029
      %v3046 = vadd.f32 %v3012, %v3030
      %v3047 = vadd.f32 %v3013, %v3031
      %v3048 = vadd.f32 %v3014, %v3032
      %v3049 = vadd.f32 %v3015, %v3033
      %v3050 = vadd.f32 %v3016, %v3034
      %v3051 = vadd.f32 %v3017, %v3035
      %v3052 = vadd.f32 %v3018, %v3036
      %v3053 = vadd.f32 %v3019, %v3037
      %s3054 = sld [smem:[#allocation11 + $0x21]]
      %v3055 = vstv %s3054
      %v3056 = vmul.f32 %v3055, %v2935
      %v3057 = vmul.f32 %v3055, %v2936
      %v3058 = vmul.f32 %v3055, %v2937
      %v3059 = vmul.f32 %v3055, %v2938
      %v3060 = vmul.f32 %v3055, %v2939
      %v3061 = vmul.f32 %v3055, %v2940
      %v3062 = vmul.f32 %v3055, %v2941
      %v3063 = vmul.f32 %v3055, %v2942
      %v3064 = vmul.f32 %v3055, %v2943
      %v3065 = vmul.f32 %v3055, %v2944
      %v3066 = vmul.f32 %v3055, %v2945
      %v3067 = vmul.f32 %v3055, %v2946
      %v3068 = vmul.f32 %v3055, %v2947
      %v3069 = vmul.f32 %v3055, %v2948
      %v3070 = vmul.f32 %v3055, %v2949
      %v3071 = vmul.f32 %v3055, %v2950
      %v3072 = vadd.f32 %v3038, %v3056
      %v3073 = vadd.f32 %v3039, %v3057
      %v3074 = vadd.f32 %v3040, %v3058
      %v3075 = vadd.f32 %v3041, %v3059
      %v3076 = vadd.f32 %v3042, %v3060
      %v3077 = vadd.f32 %v3043, %v3061
      %v3078 = vadd.f32 %v3044, %v3062
      %v3079 = vadd.f32 %v3045, %v3063
      %v3080 = vadd.f32 %v3046, %v3064
      %v3081 = vadd.f32 %v3047, %v3065
      %v3082 = vadd.f32 %v3048, %v3066
      %v3083 = vadd.f32 %v3049, %v3067
      %v3084 = vadd.f32 %v3050, %v3068
      %v3085 = vadd.f32 %v3051, %v3069
      %v3086 = vadd.f32 %v3052, %v3070
      %v3087 = vadd.f32 %v3053, %v3071
      %s3088 = sld [smem:[#allocation11 + $0x22]]
      %v3089 = vstv %s3088
      %v3090 = vmul.f32 %v3089, %v2936
      %v3091 = vmul.f32 %v3089, %v2937
      %v3092 = vmul.f32 %v3089, %v2938
      %v3093 = vmul.f32 %v3089, %v2939
      %v3094 = vmul.f32 %v3089, %v2940
      %v3095 = vmul.f32 %v3089, %v2941
      %v3096 = vmul.f32 %v3089, %v2942
      %v3097 = vmul.f32 %v3089, %v2943
      %v3098 = vmul.f32 %v3089, %v2944
      %v3099 = vmul.f32 %v3089, %v2945
      %v3100 = vmul.f32 %v3089, %v2946
      %v3101 = vmul.f32 %v3089, %v2947
      %v3102 = vmul.f32 %v3089, %v2948
      %v3103 = vmul.f32 %v3089, %v2949
      %v3104 = vmul.f32 %v3089, %v2950
      %v3105 = vmul.f32 %v3089, %v2951
      %v3106 = vadd.f32 %v3072, %v3090
      %v3107 = vadd.f32 %v3073, %v3091
      %v3108 = vadd.f32 %v3074, %v3092
      %v3109 = vadd.f32 %v3075, %v3093
      %v3110 = vadd.f32 %v3076, %v3094
      %v3111 = vadd.f32 %v3077, %v3095
      %v3112 = vadd.f32 %v3078, %v3096
      %v3113 = vadd.f32 %v3079, %v3097
      %v3114 = vadd.f32 %v3080, %v3098
      %v3115 = vadd.f32 %v3081, %v3099
      %v3116 = vadd.f32 %v3082, %v3100
      %v3117 = vadd.f32 %v3083, %v3101
      %v3118 = vadd.f32 %v3084, %v3102
      %v3119 = vadd.f32 %v3085, %v3103
      %v3120 = vadd.f32 %v3086, %v3104
      %v3121 = vadd.f32 %v3087, %v3105
      %v3122 = vmul.f32 %v2776, %v2932
      %v3123 = vmul.f32 %v2776, %v2933
      %v3124 = vmul.f32 %v2776, %v2934
      %v3125 = vmul.f32 %v2776, %v2935
      %v3126 = vmul.f32 %v2776, %v2936
      %v3127 = vmul.f32 %v2776, %v2937
      %v3128 = vmul.f32 %v2776, %v2938
      %v3129 = vmul.f32 %v2776, %v2939
      %v3130 = vmul.f32 %v2776, %v2940
      %v3131 = vmul.f32 %v2776, %v2941
      %v3132 = vmul.f32 %v2776, %v2942
      %v3133 = vmul.f32 %v2776, %v2943
      %v3134 = vmul.f32 %v2776, %v2944
      %v3135 = vmul.f32 %v2776, %v2945
      %v3136 = vmul.f32 %v2776, %v2946
      %v3137 = vmul.f32 %v2776, %v2947
      %v3138 = vmul.f32 %v2794, %v2933
      %v3139 = vmul.f32 %v2794, %v2934
      %v3140 = vmul.f32 %v2794, %v2935
      %v3141 = vmul.f32 %v2794, %v2936
      %v3142 = vmul.f32 %v2794, %v2937
      %v3143 = vmul.f32 %v2794, %v2938
      %v3144 = vmul.f32 %v2794, %v2939
      %v3145 = vmul.f32 %v2794, %v2940
      %v3146 = vmul.f32 %v2794, %v2941
      %v3147 = vmul.f32 %v2794, %v2942
      %v3148 = vmul.f32 %v2794, %v2943
      %v3149 = vmul.f32 %v2794, %v2944
      %v3150 = vmul.f32 %v2794, %v2945
      %v3151 = vmul.f32 %v2794, %v2946
      %v3152 = vmul.f32 %v2794, %v2947
      %v3153 = vmul.f32 %v2794, %v2948
      %v3154 = vadd.f32 %v3122, %v3138
      %v3155 = vadd.f32 %v3123, %v3139
      %v3156 = vadd.f32 %v3124, %v3140
      %v3157 = vadd.f32 %v3125, %v3141
      %v3158 = vadd.f32 %v3126, %v3142
      %v3159 = vadd.f32 %v3127, %v3143
      %v3160 = vadd.f32 %v3128, %v3144
      %v3161 = vadd.f32 %v3129, %v3145
      %v3162 = vadd.f32 %v3130, %v3146
      %v3163 = vadd.f32 %v3131, %v3147
      %v3164 = vadd.f32 %v3132, %v3148
      %v3165 = vadd.f32 %v3133, %v3149
      %v3166 = vadd.f32 %v3134, %v3150
      %v3167 = vadd.f32 %v3135, %v3151
      %v3168 = vadd.f32 %v3136, %v3152
      %v3169 = vadd.f32 %v3137, %v3153
      %v3170 = vmul.f32 %v2828, %v2934
      %v3171 = vmul.f32 %v2828, %v2935
      %v3172 = vmul.f32 %v2828, %v2936
      %v3173 = vmul.f32 %v2828, %v2937
      %v3174 = vmul.f32 %v2828, %v2938
      %v3175 = vmul.f32 %v2828, %v2939
      %v3176 = vmul.f32 %v2828, %v2940
      %v3177 = vmul.f32 %v2828, %v2941
      %v3178 = vmul.f32 %v2828, %v2942
      %v3179 = vmul.f32 %v2828, %v2943
      %v3180 = vmul.f32 %v2828, %v2944
      %v3181 = vmul.f32 %v2828, %v2945
      %v3182 = vmul.f32 %v2828, %v2946
      %v3183 = vmul.f32 %v2828, %v2947
      %v3184 = vmul.f32 %v2828, %v2948
      %v3185 = vmul.f32 %v2828, %v2949
      %v3186 = vadd.f32 %v3154, %v3170
      %v3187 = vadd.f32 %v3155, %v3171
      %v3188 = vadd.f32 %v3156, %v3172
      %v3189 = vadd.f32 %v3157, %v3173
      %v3190 = vadd.f32 %v3158, %v3174
      %v3191 = vadd.f32 %v3159, %v3175
      %v3192 = vadd.f32 %v3160, %v3176
      %v3193 = vadd.f32 %v3161, %v3177
      %v3194 = vadd.f32 %v3162, %v3178
      %v3195 = vadd.f32 %v3163, %v3179
      %v3196 = vadd.f32 %v3164, %v3180
      %v3197 = vadd.f32 %v3165, %v3181
      %v3198 = vadd.f32 %v3166, %v3182
      %v3199 = vadd.f32 %v3167, %v3183
      %v3200 = vadd.f32 %v3168, %v3184
      %v3201 = vadd.f32 %v3169, %v3185
      %v3202 = vmul.f32 %v2862, %v2935
      %v3203 = vmul.f32 %v2862, %v2936
      %v3204 = vmul.f32 %v2862, %v2937
      %v3205 = vmul.f32 %v2862, %v2938
      %v3206 = vmul.f32 %v2862, %v2939
      %v3207 = vmul.f32 %v2862, %v2940
      %v3208 = vmul.f32 %v2862, %v2941
      %v3209 = vmul.f32 %v2862, %v2942
      %v3210 = vmul.f32 %v2862, %v2943
      %v3211 = vmul.f32 %v2862, %v2944
      %v3212 = vmul.f32 %v2862, %v2945
      %v3213 = vmul.f32 %v2862, %v2946
      %v3214 = vmul.f32 %v2862, %v2947
      %v3215 = vmul.f32 %v2862, %v2948
      %v3216 = vmul.f32 %v2862, %v2949
      %v3217 = vmul.f32 %v2862, %v2950
      %v3218 = vadd.f32 %v3186, %v3202
      %v3219 = vadd.f32 %v3187, %v3203
      %v3220 = vadd.f32 %v3188, %v3204
      %v3221 = vadd.f32 %v3189, %v3205
      %v3222 = vadd.f32 %v3190, %v3206
      %v3223 = vadd.f32 %v3191, %v3207
      %v3224 = vadd.f32 %v3192, %v3208
      %v3225 = vadd.f32 %v3193, %v3209
      %v3226 = vadd.f32 %v3194, %v3210
      %v3227 = vadd.f32 %v3195, %v3211
      %v3228 = vadd.f32 %v3196, %v3212
      %v3229 = vadd.f32 %v3197, %v3213
      %v3230 = vadd.f32 %v3198, %v3214
      %v3231 = vadd.f32 %v3199, %v3215
      %v3232 = vadd.f32 %v3200, %v3216
      %v3233 = vadd.f32 %v3201, %v3217
      %v3234 = vmul.f32 %v2896, %v2936
      %v3235 = vmul.f32 %v2896, %v2937
      %v3236 = vmul.f32 %v2896, %v2938
      %v3237 = vmul.f32 %v2896, %v2939
      %v3238 = vmul.f32 %v2896, %v2940
      %v3239 = vmul.f32 %v2896, %v2941
      %v3240 = vmul.f32 %v2896, %v2942
      %v3241 = vmul.f32 %v2896, %v2943
      %v3242 = vmul.f32 %v2896, %v2944
      %v3243 = vmul.f32 %v2896, %v2945
      %v3244 = vmul.f32 %v2896, %v2946
      %v3245 = vmul.f32 %v2896, %v2947
      %v3246 = vmul.f32 %v2896, %v2948
      %v3247 = vmul.f32 %v2896, %v2949
      %v3248 = vmul.f32 %v2896, %v2950
      %v3249 = vmul.f32 %v2896, %v2951
      %v3250 = vadd.f32 %v3218, %v3234
      %v3251 = vadd.f32 %v3219, %v3235
      %v3252 = vadd.f32 %v3220, %v3236
      %v3253 = vadd.f32 %v3221, %v3237
      %v3254 = vadd.f32 %v3222, %v3238
      %v3255 = vadd.f32 %v3223, %v3239
      %v3256 = vadd.f32 %v3224, %v3240
      %v3257 = vadd.f32 %v3225, %v3241
      %v3258 = vadd.f32 %v3226, %v3242
      %v3259 = vadd.f32 %v3227, %v3243
      %v3260 = vadd.f32 %v3228, %v3244
      %v3261 = vadd.f32 %v3229, %v3245
      %v3262 = vadd.f32 %v3230, %v3246
      %v3263 = vadd.f32 %v3231, %v3247
      %v3264 = vadd.f32 %v3232, %v3248
      %v3265 = vadd.f32 %v3233, %v3249
      %s3266 = sadd.s32 %s2752, 2
      %s3267 = smul.u32 %s3266, 160
      %s3268 = scalar_lea.vmem [#allocation2], %s3267
      %v3269 = vld [vmem:[%s3268] sm:$0xff]
      %v3270 = vld [vmem:[%s3268 + $0x8] sm:$0xff]
      %v3271 = vld [vmem:[%s3268 + $0x10] sm:$0xff]
      %v3272 = vld [vmem:[%s3268 + $0x18] sm:$0xff]
      %v3273 = vld [vmem:[%s3268 + $0x20] sm:$0xff]
      %v3274 = vld [vmem:[%s3268 + $0x28] sm:$0xff]
      %v3275 = vld [vmem:[%s3268 + $0x30] sm:$0xff]
      %v3276 = vld [vmem:[%s3268 + $0x38] sm:$0xff]
      %v3277 = vld [vmem:[%s3268 + $0x40] sm:$0xff]
      %v3278 = vld [vmem:[%s3268 + $0x48] sm:$0xff]
      %v3279 = vld [vmem:[%s3268 + $0x50] sm:$0xff]
      %v3280 = vld [vmem:[%s3268 + $0x58] sm:$0xff]
      %v3281 = vld [vmem:[%s3268 + $0x60] sm:$0xff]
      %v3282 = vld [vmem:[%s3268 + $0x68] sm:$0xff]
      %v3283 = vld [vmem:[%s3268 + $0x70] sm:$0xff]
      %v3284 = vld [vmem:[%s3268 + $0x78] sm:$0xff]
      %v3285 = vld [vmem:[%s3268 + $0x80] sm:$0xff]
      %v3286 = vld [vmem:[%s3268 + $0x88] sm:$0xff]
      %v3287 = vld [vmem:[%s3268 + $0x90] sm:$0xff]
      %v3288 = vld [vmem:[%s3268 + $0x98] sm:$0xff]
      %s3289 = sld [smem:[#allocation11 + $0x23]]
      %v3290 = vstv %s3289
      %v3291 = vmul.f32 %v3290, %v3269
      %v3292 = vmul.f32 %v3290, %v3270
      %v3293 = vmul.f32 %v3290, %v3271
      %v3294 = vmul.f32 %v3290, %v3272
      %v3295 = vmul.f32 %v3290, %v3273
      %v3296 = vmul.f32 %v3290, %v3274
      %v3297 = vmul.f32 %v3290, %v3275
      %v3298 = vmul.f32 %v3290, %v3276
      %v3299 = vmul.f32 %v3290, %v3277
      %v3300 = vmul.f32 %v3290, %v3278
      %v3301 = vmul.f32 %v3290, %v3279
      %v3302 = vmul.f32 %v3290, %v3280
      %v3303 = vmul.f32 %v3290, %v3281
      %v3304 = vmul.f32 %v3290, %v3282
      %v3305 = vmul.f32 %v3290, %v3283
      %v3306 = vmul.f32 %v3290, %v3284
      %v3307 = vadd.f32 %v3106, %v3291
      %v3308 = vadd.f32 %v3107, %v3292
      %v3309 = vadd.f32 %v3108, %v3293
      %v3310 = vadd.f32 %v3109, %v3294
      %v3311 = vadd.f32 %v3110, %v3295
      %v3312 = vadd.f32 %v3111, %v3296
      %v3313 = vadd.f32 %v3112, %v3297
      %v3314 = vadd.f32 %v3113, %v3298
      %v3315 = vadd.f32 %v3114, %v3299
      %v3316 = vadd.f32 %v3115, %v3300
      %v3317 = vadd.f32 %v3116, %v3301
      %v3318 = vadd.f32 %v3117, %v3302
      %v3319 = vadd.f32 %v3118, %v3303
      %v3320 = vadd.f32 %v3119, %v3304
      %v3321 = vadd.f32 %v3120, %v3305
      %v3322 = vadd.f32 %v3121, %v3306
      %s3323 = sld [smem:[#allocation11 + $0x24]]
      %v3324 = vstv %s3323
      %v3325 = vmul.f32 %v3324, %v3270
      %v3326 = vmul.f32 %v3324, %v3271
      %v3327 = vmul.f32 %v3324, %v3272
      %v3328 = vmul.f32 %v3324, %v3273
      %v3329 = vmul.f32 %v3324, %v3274
      %v3330 = vmul.f32 %v3324, %v3275
      %v3331 = vmul.f32 %v3324, %v3276
      %v3332 = vmul.f32 %v3324, %v3277
      %v3333 = vmul.f32 %v3324, %v3278
      %v3334 = vmul.f32 %v3324, %v3279
      %v3335 = vmul.f32 %v3324, %v3280
      %v3336 = vmul.f32 %v3324, %v3281
      %v3337 = vmul.f32 %v3324, %v3282
      %v3338 = vmul.f32 %v3324, %v3283
      %v3339 = vmul.f32 %v3324, %v3284
      %v3340 = vmul.f32 %v3324, %v3285
      %v3341 = vadd.f32 %v3307, %v3325
      %v3342 = vadd.f32 %v3308, %v3326
      %v3343 = vadd.f32 %v3309, %v3327
      %v3344 = vadd.f32 %v3310, %v3328
      %v3345 = vadd.f32 %v3311, %v3329
      %v3346 = vadd.f32 %v3312, %v3330
      %v3347 = vadd.f32 %v3313, %v3331
      %v3348 = vadd.f32 %v3314, %v3332
      %v3349 = vadd.f32 %v3315, %v3333
      %v3350 = vadd.f32 %v3316, %v3334
      %v3351 = vadd.f32 %v3317, %v3335
      %v3352 = vadd.f32 %v3318, %v3336
      %v3353 = vadd.f32 %v3319, %v3337
      %v3354 = vadd.f32 %v3320, %v3338
      %v3355 = vadd.f32 %v3321, %v3339
      %v3356 = vadd.f32 %v3322, %v3340
      %s3357 = sld [smem:[#allocation11 + $0x25]]
      %v3358 = vstv %s3357
      %v3359 = vmul.f32 %v3358, %v3271
      %v3360 = vmul.f32 %v3358, %v3272
      %v3361 = vmul.f32 %v3358, %v3273
      %v3362 = vmul.f32 %v3358, %v3274
      %v3363 = vmul.f32 %v3358, %v3275
      %v3364 = vmul.f32 %v3358, %v3276
      %v3365 = vmul.f32 %v3358, %v3277
      %v3366 = vmul.f32 %v3358, %v3278
      %v3367 = vmul.f32 %v3358, %v3279
      %v3368 = vmul.f32 %v3358, %v3280
      %v3369 = vmul.f32 %v3358, %v3281
      %v3370 = vmul.f32 %v3358, %v3282
      %v3371 = vmul.f32 %v3358, %v3283
      %v3372 = vmul.f32 %v3358, %v3284
      %v3373 = vmul.f32 %v3358, %v3285
      %v3374 = vmul.f32 %v3358, %v3286
      %v3375 = vadd.f32 %v3341, %v3359
      %v3376 = vadd.f32 %v3342, %v3360
      %v3377 = vadd.f32 %v3343, %v3361
      %v3378 = vadd.f32 %v3344, %v3362
      %v3379 = vadd.f32 %v3345, %v3363
      %v3380 = vadd.f32 %v3346, %v3364
      %v3381 = vadd.f32 %v3347, %v3365
      %v3382 = vadd.f32 %v3348, %v3366
      %v3383 = vadd.f32 %v3349, %v3367
      %v3384 = vadd.f32 %v3350, %v3368
      %v3385 = vadd.f32 %v3351, %v3369
      %v3386 = vadd.f32 %v3352, %v3370
      %v3387 = vadd.f32 %v3353, %v3371
      %v3388 = vadd.f32 %v3354, %v3372
      %v3389 = vadd.f32 %v3355, %v3373
      %v3390 = vadd.f32 %v3356, %v3374
      %s3391 = sld [smem:[#allocation11 + $0x26]]
      %v3392 = vstv %s3391
      %v3393 = vmul.f32 %v3392, %v3272
      %v3394 = vmul.f32 %v3392, %v3273
      %v3395 = vmul.f32 %v3392, %v3274
      %v3396 = vmul.f32 %v3392, %v3275
      %v3397 = vmul.f32 %v3392, %v3276
      %v3398 = vmul.f32 %v3392, %v3277
      %v3399 = vmul.f32 %v3392, %v3278
      %v3400 = vmul.f32 %v3392, %v3279
      %v3401 = vmul.f32 %v3392, %v3280
      %v3402 = vmul.f32 %v3392, %v3281
      %v3403 = vmul.f32 %v3392, %v3282
      %v3404 = vmul.f32 %v3392, %v3283
      %v3405 = vmul.f32 %v3392, %v3284
      %v3406 = vmul.f32 %v3392, %v3285
      %v3407 = vmul.f32 %v3392, %v3286
      %v3408 = vmul.f32 %v3392, %v3287
      %v3409 = vadd.f32 %v3375, %v3393
      %v3410 = vadd.f32 %v3376, %v3394
      %v3411 = vadd.f32 %v3377, %v3395
      %v3412 = vadd.f32 %v3378, %v3396
      %v3413 = vadd.f32 %v3379, %v3397
      %v3414 = vadd.f32 %v3380, %v3398
      %v3415 = vadd.f32 %v3381, %v3399
      %v3416 = vadd.f32 %v3382, %v3400
      %v3417 = vadd.f32 %v3383, %v3401
      %v3418 = vadd.f32 %v3384, %v3402
      %v3419 = vadd.f32 %v3385, %v3403
      %v3420 = vadd.f32 %v3386, %v3404
      %v3421 = vadd.f32 %v3387, %v3405
      %v3422 = vadd.f32 %v3388, %v3406
      %v3423 = vadd.f32 %v3389, %v3407
      %v3424 = vadd.f32 %v3390, %v3408
      %s3425 = sld [smem:[#allocation11 + $0x27]]
      %v3426 = vstv %s3425
      %v3427 = vmul.f32 %v3426, %v3273
      %v3428 = vmul.f32 %v3426, %v3274
      %v3429 = vmul.f32 %v3426, %v3275
      %v3430 = vmul.f32 %v3426, %v3276
      %v3431 = vmul.f32 %v3426, %v3277
      %v3432 = vmul.f32 %v3426, %v3278
      %v3433 = vmul.f32 %v3426, %v3279
      %v3434 = vmul.f32 %v3426, %v3280
      %v3435 = vmul.f32 %v3426, %v3281
      %v3436 = vmul.f32 %v3426, %v3282
      %v3437 = vmul.f32 %v3426, %v3283
      %v3438 = vmul.f32 %v3426, %v3284
      %v3439 = vmul.f32 %v3426, %v3285
      %v3440 = vmul.f32 %v3426, %v3286
      %v3441 = vmul.f32 %v3426, %v3287
      %v3442 = vmul.f32 %v3426, %v3288
      %v3443 = vadd.f32 %v3409, %v3427
      %v3444 = vadd.f32 %v3410, %v3428
      %v3445 = vadd.f32 %v3411, %v3429
      %v3446 = vadd.f32 %v3412, %v3430
      %v3447 = vadd.f32 %v3413, %v3431
      %v3448 = vadd.f32 %v3414, %v3432
      %v3449 = vadd.f32 %v3415, %v3433
      %v3450 = vadd.f32 %v3416, %v3434
      %v3451 = vadd.f32 %v3417, %v3435
      %v3452 = vadd.f32 %v3418, %v3436
      %v3453 = vadd.f32 %v3419, %v3437
      %v3454 = vadd.f32 %v3420, %v3438
      %v3455 = vadd.f32 %v3421, %v3439
      %v3456 = vadd.f32 %v3422, %v3440
      %v3457 = vadd.f32 %v3423, %v3441
      %v3458 = vadd.f32 %v3424, %v3442
      %v3459 = vmul.f32 %v2953, %v3269
      %v3460 = vmul.f32 %v2953, %v3270
      %v3461 = vmul.f32 %v2953, %v3271
      %v3462 = vmul.f32 %v2953, %v3272
      %v3463 = vmul.f32 %v2953, %v3273
      %v3464 = vmul.f32 %v2953, %v3274
      %v3465 = vmul.f32 %v2953, %v3275
      %v3466 = vmul.f32 %v2953, %v3276
      %v3467 = vmul.f32 %v2953, %v3277
      %v3468 = vmul.f32 %v2953, %v3278
      %v3469 = vmul.f32 %v2953, %v3279
      %v3470 = vmul.f32 %v2953, %v3280
      %v3471 = vmul.f32 %v2953, %v3281
      %v3472 = vmul.f32 %v2953, %v3282
      %v3473 = vmul.f32 %v2953, %v3283
      %v3474 = vmul.f32 %v2953, %v3284
      %v3475 = vadd.f32 %v3250, %v3459
      %v3476 = vadd.f32 %v3251, %v3460
      %v3477 = vadd.f32 %v3252, %v3461
      %v3478 = vadd.f32 %v3253, %v3462
      %v3479 = vadd.f32 %v3254, %v3463
      %v3480 = vadd.f32 %v3255, %v3464
      %v3481 = vadd.f32 %v3256, %v3465
      %v3482 = vadd.f32 %v3257, %v3466
      %v3483 = vadd.f32 %v3258, %v3467
      %v3484 = vadd.f32 %v3259, %v3468
      %v3485 = vadd.f32 %v3260, %v3469
      %v3486 = vadd.f32 %v3261, %v3470
      %v3487 = vadd.f32 %v3262, %v3471
      %v3488 = vadd.f32 %v3263, %v3472
      %v3489 = vadd.f32 %v3264, %v3473
      %v3490 = vadd.f32 %v3265, %v3474
      %v3491 = vmul.f32 %v2987, %v3270
      %v3492 = vmul.f32 %v2987, %v3271
      %v3493 = vmul.f32 %v2987, %v3272
      %v3494 = vmul.f32 %v2987, %v3273
      %v3495 = vmul.f32 %v2987, %v3274
      %v3496 = vmul.f32 %v2987, %v3275
      %v3497 = vmul.f32 %v2987, %v3276
      %v3498 = vmul.f32 %v2987, %v3277
      %v3499 = vmul.f32 %v2987, %v3278
      %v3500 = vmul.f32 %v2987, %v3279
      %v3501 = vmul.f32 %v2987, %v3280
      %v3502 = vmul.f32 %v2987, %v3281
      %v3503 = vmul.f32 %v2987, %v3282
      %v3504 = vmul.f32 %v2987, %v3283
      %v3505 = vmul.f32 %v2987, %v3284
      %v3506 = vmul.f32 %v2987, %v3285
      %v3507 = vadd.f32 %v3475, %v3491
      %v3508 = vadd.f32 %v3476, %v3492
      %v3509 = vadd.f32 %v3477, %v3493
      %v3510 = vadd.f32 %v3478, %v3494
      %v3511 = vadd.f32 %v3479, %v3495
      %v3512 = vadd.f32 %v3480, %v3496
      %v3513 = vadd.f32 %v3481, %v3497
      %v3514 = vadd.f32 %v3482, %v3498
      %v3515 = vadd.f32 %v3483, %v3499
      %v3516 = vadd.f32 %v3484, %v3500
      %v3517 = vadd.f32 %v3485, %v3501
      %v3518 = vadd.f32 %v3486, %v3502
      %v3519 = vadd.f32 %v3487, %v3503
      %v3520 = vadd.f32 %v3488, %v3504
      %v3521 = vadd.f32 %v3489, %v3505
      %v3522 = vadd.f32 %v3490, %v3506
      %v3523 = vmul.f32 %v3021, %v3271
      %v3524 = vmul.f32 %v3021, %v3272
      %v3525 = vmul.f32 %v3021, %v3273
      %v3526 = vmul.f32 %v3021, %v3274
      %v3527 = vmul.f32 %v3021, %v3275
      %v3528 = vmul.f32 %v3021, %v3276
      %v3529 = vmul.f32 %v3021, %v3277
      %v3530 = vmul.f32 %v3021, %v3278
      %v3531 = vmul.f32 %v3021, %v3279
      %v3532 = vmul.f32 %v3021, %v3280
      %v3533 = vmul.f32 %v3021, %v3281
      %v3534 = vmul.f32 %v3021, %v3282
      %v3535 = vmul.f32 %v3021, %v3283
      %v3536 = vmul.f32 %v3021, %v3284
      %v3537 = vmul.f32 %v3021, %v3285
      %v3538 = vmul.f32 %v3021, %v3286
      %v3539 = vadd.f32 %v3507, %v3523
      %v3540 = vadd.f32 %v3508, %v3524
      %v3541 = vadd.f32 %v3509, %v3525
      %v3542 = vadd.f32 %v3510, %v3526
      %v3543 = vadd.f32 %v3511, %v3527
      %v3544 = vadd.f32 %v3512, %v3528
      %v3545 = vadd.f32 %v3513, %v3529
      %v3546 = vadd.f32 %v3514, %v3530
      %v3547 = vadd.f32 %v3515, %v3531
      %v3548 = vadd.f32 %v3516, %v3532
      %v3549 = vadd.f32 %v3517, %v3533
      %v3550 = vadd.f32 %v3518, %v3534
      %v3551 = vadd.f32 %v3519, %v3535
      %v3552 = vadd.f32 %v3520, %v3536
      %v3553 = vadd.f32 %v3521, %v3537
      %v3554 = vadd.f32 %v3522, %v3538
      %v3555 = vmul.f32 %v3055, %v3272
      %v3556 = vmul.f32 %v3055, %v3273
      %v3557 = vmul.f32 %v3055, %v3274
      %v3558 = vmul.f32 %v3055, %v3275
      %v3559 = vmul.f32 %v3055, %v3276
      %v3560 = vmul.f32 %v3055, %v3277
      %v3561 = vmul.f32 %v3055, %v3278
      %v3562 = vmul.f32 %v3055, %v3279
      %v3563 = vmul.f32 %v3055, %v3280
      %v3564 = vmul.f32 %v3055, %v3281
      %v3565 = vmul.f32 %v3055, %v3282
      %v3566 = vmul.f32 %v3055, %v3283
      %v3567 = vmul.f32 %v3055, %v3284
      %v3568 = vmul.f32 %v3055, %v3285
      %v3569 = vmul.f32 %v3055, %v3286
      %v3570 = vmul.f32 %v3055, %v3287
      %v3571 = vadd.f32 %v3539, %v3555
      %v3572 = vadd.f32 %v3540, %v3556
      %v3573 = vadd.f32 %v3541, %v3557
      %v3574 = vadd.f32 %v3542, %v3558
      %v3575 = vadd.f32 %v3543, %v3559
      %v3576 = vadd.f32 %v3544, %v3560
      %v3577 = vadd.f32 %v3545, %v3561
      %v3578 = vadd.f32 %v3546, %v3562
      %v3579 = vadd.f32 %v3547, %v3563
      %v3580 = vadd.f32 %v3548, %v3564
      %v3581 = vadd.f32 %v3549, %v3565
      %v3582 = vadd.f32 %v3550, %v3566
      %v3583 = vadd.f32 %v3551, %v3567
      %v3584 = vadd.f32 %v3552, %v3568
      %v3585 = vadd.f32 %v3553, %v3569
      %v3586 = vadd.f32 %v3554, %v3570
      %v3587 = vmul.f32 %v3089, %v3273
      %v3588 = vmul.f32 %v3089, %v3274
      %v3589 = vmul.f32 %v3089, %v3275
      %v3590 = vmul.f32 %v3089, %v3276
      %v3591 = vmul.f32 %v3089, %v3277
      %v3592 = vmul.f32 %v3089, %v3278
      %v3593 = vmul.f32 %v3089, %v3279
      %v3594 = vmul.f32 %v3089, %v3280
      %v3595 = vmul.f32 %v3089, %v3281
      %v3596 = vmul.f32 %v3089, %v3282
      %v3597 = vmul.f32 %v3089, %v3283
      %v3598 = vmul.f32 %v3089, %v3284
      %v3599 = vmul.f32 %v3089, %v3285
      %v3600 = vmul.f32 %v3089, %v3286
      %v3601 = vmul.f32 %v3089, %v3287
      %v3602 = vmul.f32 %v3089, %v3288
      %v3603 = vadd.f32 %v3571, %v3587
      %v3604 = vadd.f32 %v3572, %v3588
      %v3605 = vadd.f32 %v3573, %v3589
      %v3606 = vadd.f32 %v3574, %v3590
      %v3607 = vadd.f32 %v3575, %v3591
      %v3608 = vadd.f32 %v3576, %v3592
      %v3609 = vadd.f32 %v3577, %v3593
      %v3610 = vadd.f32 %v3578, %v3594
      %v3611 = vadd.f32 %v3579, %v3595
      %v3612 = vadd.f32 %v3580, %v3596
      %v3613 = vadd.f32 %v3581, %v3597
      %v3614 = vadd.f32 %v3582, %v3598
      %v3615 = vadd.f32 %v3583, %v3599
      %v3616 = vadd.f32 %v3584, %v3600
      %v3617 = vadd.f32 %v3585, %v3601
      %v3618 = vadd.f32 %v3586, %v3602
      %s3619 = sadd.s32 %s2752, 3
      %s3620 = smul.u32 %s3619, 160
      %s3621 = scalar_lea.vmem [#allocation2], %s3620
      %v3622 = vld [vmem:[%s3621] sm:$0xff]
      %v3623 = vld [vmem:[%s3621 + $0x8] sm:$0xff]
      %v3624 = vld [vmem:[%s3621 + $0x10] sm:$0xff]
      %v3625 = vld [vmem:[%s3621 + $0x18] sm:$0xff]
      %v3626 = vld [vmem:[%s3621 + $0x20] sm:$0xff]
      %v3627 = vld [vmem:[%s3621 + $0x28] sm:$0xff]
      %v3628 = vld [vmem:[%s3621 + $0x30] sm:$0xff]
      %v3629 = vld [vmem:[%s3621 + $0x38] sm:$0xff]
      %v3630 = vld [vmem:[%s3621 + $0x40] sm:$0xff]
      %v3631 = vld [vmem:[%s3621 + $0x48] sm:$0xff]
      %v3632 = vld [vmem:[%s3621 + $0x50] sm:$0xff]
      %v3633 = vld [vmem:[%s3621 + $0x58] sm:$0xff]
      %v3634 = vld [vmem:[%s3621 + $0x60] sm:$0xff]
      %v3635 = vld [vmem:[%s3621 + $0x68] sm:$0xff]
      %v3636 = vld [vmem:[%s3621 + $0x70] sm:$0xff]
      %v3637 = vld [vmem:[%s3621 + $0x78] sm:$0xff]
      %v3638 = vld [vmem:[%s3621 + $0x80] sm:$0xff]
      %v3639 = vld [vmem:[%s3621 + $0x88] sm:$0xff]
      %v3640 = vld [vmem:[%s3621 + $0x90] sm:$0xff]
      %v3641 = vld [vmem:[%s3621 + $0x98] sm:$0xff]
      %s3642 = sld [smem:[#allocation11 + $0x28]]
      %v3643 = vstv %s3642
      %v3644 = vmul.f32 %v3643, %v3622
      %v3645 = vmul.f32 %v3643, %v3623
      %v3646 = vmul.f32 %v3643, %v3624
      %v3647 = vmul.f32 %v3643, %v3625
      %v3648 = vmul.f32 %v3643, %v3626
      %v3649 = vmul.f32 %v3643, %v3627
      %v3650 = vmul.f32 %v3643, %v3628
      %v3651 = vmul.f32 %v3643, %v3629
      %v3652 = vmul.f32 %v3643, %v3630
      %v3653 = vmul.f32 %v3643, %v3631
      %v3654 = vmul.f32 %v3643, %v3632
      %v3655 = vmul.f32 %v3643, %v3633
      %v3656 = vmul.f32 %v3643, %v3634
      %v3657 = vmul.f32 %v3643, %v3635
      %v3658 = vmul.f32 %v3643, %v3636
      %v3659 = vmul.f32 %v3643, %v3637
      %v3660 = vadd.f32 %v3443, %v3644
      %v3661 = vadd.f32 %v3444, %v3645
      %v3662 = vadd.f32 %v3445, %v3646
      %v3663 = vadd.f32 %v3446, %v3647
      %v3664 = vadd.f32 %v3447, %v3648
      %v3665 = vadd.f32 %v3448, %v3649
      %v3666 = vadd.f32 %v3449, %v3650
      %v3667 = vadd.f32 %v3450, %v3651
      %v3668 = vadd.f32 %v3451, %v3652
      %v3669 = vadd.f32 %v3452, %v3653
      %v3670 = vadd.f32 %v3453, %v3654
      %v3671 = vadd.f32 %v3454, %v3655
      %v3672 = vadd.f32 %v3455, %v3656
      %v3673 = vadd.f32 %v3456, %v3657
      %v3674 = vadd.f32 %v3457, %v3658
      %v3675 = vadd.f32 %v3458, %v3659
      %s3676 = sld [smem:[#allocation11 + $0x29]]
      %v3677 = vstv %s3676
      %v3678 = vmul.f32 %v3677, %v3623
      %v3679 = vmul.f32 %v3677, %v3624
      %v3680 = vmul.f32 %v3677, %v3625
      %v3681 = vmul.f32 %v3677, %v3626
      %v3682 = vmul.f32 %v3677, %v3627
      %v3683 = vmul.f32 %v3677, %v3628
      %v3684 = vmul.f32 %v3677, %v3629
      %v3685 = vmul.f32 %v3677, %v3630
      %v3686 = vmul.f32 %v3677, %v3631
      %v3687 = vmul.f32 %v3677, %v3632
      %v3688 = vmul.f32 %v3677, %v3633
      %v3689 = vmul.f32 %v3677, %v3634
      %v3690 = vmul.f32 %v3677, %v3635
      %v3691 = vmul.f32 %v3677, %v3636
      %v3692 = vmul.f32 %v3677, %v3637
      %v3693 = vmul.f32 %v3677, %v3638
      %v3694 = vadd.f32 %v3660, %v3678
      %v3695 = vadd.f32 %v3661, %v3679
      %v3696 = vadd.f32 %v3662, %v3680
      %v3697 = vadd.f32 %v3663, %v3681
      %v3698 = vadd.f32 %v3664, %v3682
      %v3699 = vadd.f32 %v3665, %v3683
      %v3700 = vadd.f32 %v3666, %v3684
      %v3701 = vadd.f32 %v3667, %v3685
      %v3702 = vadd.f32 %v3668, %v3686
      %v3703 = vadd.f32 %v3669, %v3687
      %v3704 = vadd.f32 %v3670, %v3688
      %v3705 = vadd.f32 %v3671, %v3689
      %v3706 = vadd.f32 %v3672, %v3690
      %v3707 = vadd.f32 %v3673, %v3691
      %v3708 = vadd.f32 %v3674, %v3692
      %v3709 = vadd.f32 %v3675, %v3693
      %s3710 = sld [smem:[#allocation11 + $0x2a]]
      %v3711 = vstv %s3710
      %v3712 = vmul.f32 %v3711, %v3624
      %v3713 = vmul.f32 %v3711, %v3625
      %v3714 = vmul.f32 %v3711, %v3626
      %v3715 = vmul.f32 %v3711, %v3627
      %v3716 = vmul.f32 %v3711, %v3628
      %v3717 = vmul.f32 %v3711, %v3629
      %v3718 = vmul.f32 %v3711, %v3630
      %v3719 = vmul.f32 %v3711, %v3631
      %v3720 = vmul.f32 %v3711, %v3632
      %v3721 = vmul.f32 %v3711, %v3633
      %v3722 = vmul.f32 %v3711, %v3634
      %v3723 = vmul.f32 %v3711, %v3635
      %v3724 = vmul.f32 %v3711, %v3636
      %v3725 = vmul.f32 %v3711, %v3637
      %v3726 = vmul.f32 %v3711, %v3638
      %v3727 = vmul.f32 %v3711, %v3639
      %v3728 = vadd.f32 %v3694, %v3712
      %v3729 = vadd.f32 %v3695, %v3713
      %v3730 = vadd.f32 %v3696, %v3714
      %v3731 = vadd.f32 %v3697, %v3715
      %v3732 = vadd.f32 %v3698, %v3716
      %v3733 = vadd.f32 %v3699, %v3717
      %v3734 = vadd.f32 %v3700, %v3718
      %v3735 = vadd.f32 %v3701, %v3719
      %v3736 = vadd.f32 %v3702, %v3720
      %v3737 = vadd.f32 %v3703, %v3721
      %v3738 = vadd.f32 %v3704, %v3722
      %v3739 = vadd.f32 %v3705, %v3723
      %v3740 = vadd.f32 %v3706, %v3724
      %v3741 = vadd.f32 %v3707, %v3725
      %v3742 = vadd.f32 %v3708, %v3726
      %v3743 = vadd.f32 %v3709, %v3727
      %s3744 = sld [smem:[#allocation11 + $0x2b]]
      %v3745 = vstv %s3744
      %v3746 = vmul.f32 %v3745, %v3625
      %v3747 = vmul.f32 %v3745, %v3626
      %v3748 = vmul.f32 %v3745, %v3627
      %v3749 = vmul.f32 %v3745, %v3628
      %v3750 = vmul.f32 %v3745, %v3629
      %v3751 = vmul.f32 %v3745, %v3630
      %v3752 = vmul.f32 %v3745, %v3631
      %v3753 = vmul.f32 %v3745, %v3632
      %v3754 = vmul.f32 %v3745, %v3633
      %v3755 = vmul.f32 %v3745, %v3634
      %v3756 = vmul.f32 %v3745, %v3635
      %v3757 = vmul.f32 %v3745, %v3636
      %v3758 = vmul.f32 %v3745, %v3637
      %v3759 = vmul.f32 %v3745, %v3638
      %v3760 = vmul.f32 %v3745, %v3639
      %v3761 = vmul.f32 %v3745, %v3640
      %v3762 = vadd.f32 %v3728, %v3746
      %v3763 = vadd.f32 %v3729, %v3747
      %v3764 = vadd.f32 %v3730, %v3748
      %v3765 = vadd.f32 %v3731, %v3749
      %v3766 = vadd.f32 %v3732, %v3750
      %v3767 = vadd.f32 %v3733, %v3751
      %v3768 = vadd.f32 %v3734, %v3752
      %v3769 = vadd.f32 %v3735, %v3753
      %v3770 = vadd.f32 %v3736, %v3754
      %v3771 = vadd.f32 %v3737, %v3755
      %v3772 = vadd.f32 %v3738, %v3756
      %v3773 = vadd.f32 %v3739, %v3757
      %v3774 = vadd.f32 %v3740, %v3758
      %v3775 = vadd.f32 %v3741, %v3759
      %v3776 = vadd.f32 %v3742, %v3760
      %v3777 = vadd.f32 %v3743, %v3761
      %s3778 = sld [smem:[#allocation11 + $0x2c]]
      %v3779 = vstv %s3778
      %v3780 = vmul.f32 %v3779, %v3626
      %v3781 = vmul.f32 %v3779, %v3627
      %v3782 = vmul.f32 %v3779, %v3628
      %v3783 = vmul.f32 %v3779, %v3629
      %v3784 = vmul.f32 %v3779, %v3630
      %v3785 = vmul.f32 %v3779, %v3631
      %v3786 = vmul.f32 %v3779, %v3632
      %v3787 = vmul.f32 %v3779, %v3633
      %v3788 = vmul.f32 %v3779, %v3634
      %v3789 = vmul.f32 %v3779, %v3635
      %v3790 = vmul.f32 %v3779, %v3636
      %v3791 = vmul.f32 %v3779, %v3637
      %v3792 = vmul.f32 %v3779, %v3638
      %v3793 = vmul.f32 %v3779, %v3639
      %v3794 = vmul.f32 %v3779, %v3640
      %v3795 = vmul.f32 %v3779, %v3641
      %v3796 = vadd.f32 %v3762, %v3780
      %v3797 = vadd.f32 %v3763, %v3781
      %v3798 = vadd.f32 %v3764, %v3782
      %v3799 = vadd.f32 %v3765, %v3783
      %v3800 = vadd.f32 %v3766, %v3784
      %v3801 = vadd.f32 %v3767, %v3785
      %v3802 = vadd.f32 %v3768, %v3786
      %v3803 = vadd.f32 %v3769, %v3787
      %v3804 = vadd.f32 %v3770, %v3788
      %v3805 = vadd.f32 %v3771, %v3789
      %v3806 = vadd.f32 %v3772, %v3790
      %v3807 = vadd.f32 %v3773, %v3791
      %v3808 = vadd.f32 %v3774, %v3792
      %v3809 = vadd.f32 %v3775, %v3793
      %v3810 = vadd.f32 %v3776, %v3794
      %v3811 = vadd.f32 %v3777, %v3795
      %v3812 = vmul.f32 %v3290, %v3622
      %v3813 = vmul.f32 %v3290, %v3623
      %v3814 = vmul.f32 %v3290, %v3624
      %v3815 = vmul.f32 %v3290, %v3625
      %v3816 = vmul.f32 %v3290, %v3626
      %v3817 = vmul.f32 %v3290, %v3627
      %v3818 = vmul.f32 %v3290, %v3628
      %v3819 = vmul.f32 %v3290, %v3629
      %v3820 = vmul.f32 %v3290, %v3630
      %v3821 = vmul.f32 %v3290, %v3631
      %v3822 = vmul.f32 %v3290, %v3632
      %v3823 = vmul.f32 %v3290, %v3633
      %v3824 = vmul.f32 %v3290, %v3634
      %v3825 = vmul.f32 %v3290, %v3635
      %v3826 = vmul.f32 %v3290, %v3636
      %v3827 = vmul.f32 %v3290, %v3637
      %v3828 = vadd.f32 %v3603, %v3812
      %v3829 = vadd.f32 %v3604, %v3813
      %v3830 = vadd.f32 %v3605, %v3814
      %v3831 = vadd.f32 %v3606, %v3815
      %v3832 = vadd.f32 %v3607, %v3816
      %v3833 = vadd.f32 %v3608, %v3817
      %v3834 = vadd.f32 %v3609, %v3818
      %v3835 = vadd.f32 %v3610, %v3819
      %v3836 = vadd.f32 %v3611, %v3820
      %v3837 = vadd.f32 %v3612, %v3821
      %v3838 = vadd.f32 %v3613, %v3822
      %v3839 = vadd.f32 %v3614, %v3823
      %v3840 = vadd.f32 %v3615, %v3824
      %v3841 = vadd.f32 %v3616, %v3825
      %v3842 = vadd.f32 %v3617, %v3826
      %v3843 = vadd.f32 %v3618, %v3827
      %v3844 = vmul.f32 %v3324, %v3623
      %v3845 = vmul.f32 %v3324, %v3624
      %v3846 = vmul.f32 %v3324, %v3625
      %v3847 = vmul.f32 %v3324, %v3626
      %v3848 = vmul.f32 %v3324, %v3627
      %v3849 = vmul.f32 %v3324, %v3628
      %v3850 = vmul.f32 %v3324, %v3629
      %v3851 = vmul.f32 %v3324, %v3630
      %v3852 = vmul.f32 %v3324, %v3631
      %v3853 = vmul.f32 %v3324, %v3632
      %v3854 = vmul.f32 %v3324, %v3633
      %v3855 = vmul.f32 %v3324, %v3634
      %v3856 = vmul.f32 %v3324, %v3635
      %v3857 = vmul.f32 %v3324, %v3636
      %v3858 = vmul.f32 %v3324, %v3637
      %v3859 = vmul.f32 %v3324, %v3638
      %v3860 = vadd.f32 %v3828, %v3844
      %v3861 = vadd.f32 %v3829, %v3845
      %v3862 = vadd.f32 %v3830, %v3846
      %v3863 = vadd.f32 %v3831, %v3847
      %v3864 = vadd.f32 %v3832, %v3848
      %v3865 = vadd.f32 %v3833, %v3849
      %v3866 = vadd.f32 %v3834, %v3850
      %v3867 = vadd.f32 %v3835, %v3851
      %v3868 = vadd.f32 %v3836, %v3852
      %v3869 = vadd.f32 %v3837, %v3853
      %v3870 = vadd.f32 %v3838, %v3854
      %v3871 = vadd.f32 %v3839, %v3855
      %v3872 = vadd.f32 %v3840, %v3856
      %v3873 = vadd.f32 %v3841, %v3857
      %v3874 = vadd.f32 %v3842, %v3858
      %v3875 = vadd.f32 %v3843, %v3859
      %v3876 = vmul.f32 %v3358, %v3624
      %v3877 = vmul.f32 %v3358, %v3625
      %v3878 = vmul.f32 %v3358, %v3626
      %v3879 = vmul.f32 %v3358, %v3627
      %v3880 = vmul.f32 %v3358, %v3628
      %v3881 = vmul.f32 %v3358, %v3629
      %v3882 = vmul.f32 %v3358, %v3630
      %v3883 = vmul.f32 %v3358, %v3631
      %v3884 = vmul.f32 %v3358, %v3632
      %v3885 = vmul.f32 %v3358, %v3633
      %v3886 = vmul.f32 %v3358, %v3634
      %v3887 = vmul.f32 %v3358, %v3635
      %v3888 = vmul.f32 %v3358, %v3636
      %v3889 = vmul.f32 %v3358, %v3637
      %v3890 = vmul.f32 %v3358, %v3638
      %v3891 = vmul.f32 %v3358, %v3639
      %v3892 = vadd.f32 %v3860, %v3876
      %v3893 = vadd.f32 %v3861, %v3877
      %v3894 = vadd.f32 %v3862, %v3878
      %v3895 = vadd.f32 %v3863, %v3879
      %v3896 = vadd.f32 %v3864, %v3880
      %v3897 = vadd.f32 %v3865, %v3881
      %v3898 = vadd.f32 %v3866, %v3882
      %v3899 = vadd.f32 %v3867, %v3883
      %v3900 = vadd.f32 %v3868, %v3884
      %v3901 = vadd.f32 %v3869, %v3885
      %v3902 = vadd.f32 %v3870, %v3886
      %v3903 = vadd.f32 %v3871, %v3887
      %v3904 = vadd.f32 %v3872, %v3888
      %v3905 = vadd.f32 %v3873, %v3889
      %v3906 = vadd.f32 %v3874, %v3890
      %v3907 = vadd.f32 %v3875, %v3891
      %v3908 = vmul.f32 %v3392, %v3625
      %v3909 = vmul.f32 %v3392, %v3626
      %v3910 = vmul.f32 %v3392, %v3627
      %v3911 = vmul.f32 %v3392, %v3628
      %v3912 = vmul.f32 %v3392, %v3629
      %v3913 = vmul.f32 %v3392, %v3630
      %v3914 = vmul.f32 %v3392, %v3631
      %v3915 = vmul.f32 %v3392, %v3632
      %v3916 = vmul.f32 %v3392, %v3633
      %v3917 = vmul.f32 %v3392, %v3634
      %v3918 = vmul.f32 %v3392, %v3635
      %v3919 = vmul.f32 %v3392, %v3636
      %v3920 = vmul.f32 %v3392, %v3637
      %v3921 = vmul.f32 %v3392, %v3638
      %v3922 = vmul.f32 %v3392, %v3639
      %v3923 = vmul.f32 %v3392, %v3640
      %v3924 = vadd.f32 %v3892, %v3908
      %v3925 = vadd.f32 %v3893, %v3909
      %v3926 = vadd.f32 %v3894, %v3910
      %v3927 = vadd.f32 %v3895, %v3911
      %v3928 = vadd.f32 %v3896, %v3912
      %v3929 = vadd.f32 %v3897, %v3913
      %v3930 = vadd.f32 %v3898, %v3914
      %v3931 = vadd.f32 %v3899, %v3915
      %v3932 = vadd.f32 %v3900, %v3916
      %v3933 = vadd.f32 %v3901, %v3917
      %v3934 = vadd.f32 %v3902, %v3918
      %v3935 = vadd.f32 %v3903, %v3919
      %v3936 = vadd.f32 %v3904, %v3920
      %v3937 = vadd.f32 %v3905, %v3921
      %v3938 = vadd.f32 %v3906, %v3922
      %v3939 = vadd.f32 %v3907, %v3923
      %v3940 = vmul.f32 %v3426, %v3626
      %v3941 = vmul.f32 %v3426, %v3627
      %v3942 = vmul.f32 %v3426, %v3628
      %v3943 = vmul.f32 %v3426, %v3629
      %v3944 = vmul.f32 %v3426, %v3630
      %v3945 = vmul.f32 %v3426, %v3631
      %v3946 = vmul.f32 %v3426, %v3632
      %v3947 = vmul.f32 %v3426, %v3633
      %v3948 = vmul.f32 %v3426, %v3634
      %v3949 = vmul.f32 %v3426, %v3635
      %v3950 = vmul.f32 %v3426, %v3636
      %v3951 = vmul.f32 %v3426, %v3637
      %v3952 = vmul.f32 %v3426, %v3638
      %v3953 = vmul.f32 %v3426, %v3639
      %v3954 = vmul.f32 %v3426, %v3640
      %v3955 = vmul.f32 %v3426, %v3641
      %v3956 = vadd.f32 %v3924, %v3940
      %v3957 = vadd.f32 %v3925, %v3941
      %v3958 = vadd.f32 %v3926, %v3942
      %v3959 = vadd.f32 %v3927, %v3943
      %v3960 = vadd.f32 %v3928, %v3944
      %v3961 = vadd.f32 %v3929, %v3945
      %v3962 = vadd.f32 %v3930, %v3946
      %v3963 = vadd.f32 %v3931, %v3947
      %v3964 = vadd.f32 %v3932, %v3948
      %v3965 = vadd.f32 %v3933, %v3949
      %v3966 = vadd.f32 %v3934, %v3950
      %v3967 = vadd.f32 %v3935, %v3951
      %v3968 = vadd.f32 %v3936, %v3952
      %v3969 = vadd.f32 %v3937, %v3953
      %v3970 = vadd.f32 %v3938, %v3954
      %v3971 = vadd.f32 %v3939, %v3955
      %s3972 = sadd.s32 %s2752, 4
      %s3973 = smul.u32 %s3972, 160
      %s3974 = scalar_lea.vmem [#allocation2], %s3973
      %v3975 = vld [vmem:[%s3974] sm:$0xff]
      %v3976 = vld [vmem:[%s3974 + $0x8] sm:$0xff]
      %v3977 = vld [vmem:[%s3974 + $0x10] sm:$0xff]
      %v3978 = vld [vmem:[%s3974 + $0x18] sm:$0xff]
      %v3979 = vld [vmem:[%s3974 + $0x20] sm:$0xff]
      %v3980 = vld [vmem:[%s3974 + $0x28] sm:$0xff]
      %v3981 = vld [vmem:[%s3974 + $0x30] sm:$0xff]
      %v3982 = vld [vmem:[%s3974 + $0x38] sm:$0xff]
      %v3983 = vld [vmem:[%s3974 + $0x40] sm:$0xff]
      %v3984 = vld [vmem:[%s3974 + $0x48] sm:$0xff]
      %v3985 = vld [vmem:[%s3974 + $0x50] sm:$0xff]
      %v3986 = vld [vmem:[%s3974 + $0x58] sm:$0xff]
      %v3987 = vld [vmem:[%s3974 + $0x60] sm:$0xff]
      %v3988 = vld [vmem:[%s3974 + $0x68] sm:$0xff]
      %v3989 = vld [vmem:[%s3974 + $0x70] sm:$0xff]
      %v3990 = vld [vmem:[%s3974 + $0x78] sm:$0xff]
      %v3991 = vld [vmem:[%s3974 + $0x80] sm:$0xff]
      %v3992 = vld [vmem:[%s3974 + $0x88] sm:$0xff]
      %v3993 = vld [vmem:[%s3974 + $0x90] sm:$0xff]
      %v3994 = vld [vmem:[%s3974 + $0x98] sm:$0xff]
      %s3995 = sld [smem:[#allocation11 + $0x2d]]
      %v3996 = vstv %s3995
      %v3997 = vmul.f32 %v3996, %v3975
      %v3998 = vmul.f32 %v3996, %v3976
      %v3999 = vmul.f32 %v3996, %v3977
      %v4000 = vmul.f32 %v3996, %v3978
      %v4001 = vmul.f32 %v3996, %v3979
      %v4002 = vmul.f32 %v3996, %v3980
      %v4003 = vmul.f32 %v3996, %v3981
      %v4004 = vmul.f32 %v3996, %v3982
      %v4005 = vmul.f32 %v3996, %v3983
      %v4006 = vmul.f32 %v3996, %v3984
      %v4007 = vmul.f32 %v3996, %v3985
      %v4008 = vmul.f32 %v3996, %v3986
      %v4009 = vmul.f32 %v3996, %v3987
      %v4010 = vmul.f32 %v3996, %v3988
      %v4011 = vmul.f32 %v3996, %v3989
      %v4012 = vmul.f32 %v3996, %v3990
      %v4013 = vadd.f32 %v3796, %v3997
      %v4014 = vadd.f32 %v3797, %v3998
      %v4015 = vadd.f32 %v3798, %v3999
      %v4016 = vadd.f32 %v3799, %v4000
      %v4017 = vadd.f32 %v3800, %v4001
      %v4018 = vadd.f32 %v3801, %v4002
      %v4019 = vadd.f32 %v3802, %v4003
      %v4020 = vadd.f32 %v3803, %v4004
      %v4021 = vadd.f32 %v3804, %v4005
      %v4022 = vadd.f32 %v3805, %v4006
      %v4023 = vadd.f32 %v3806, %v4007
      %v4024 = vadd.f32 %v3807, %v4008
      %v4025 = vadd.f32 %v3808, %v4009
      %v4026 = vadd.f32 %v3809, %v4010
      %v4027 = vadd.f32 %v3810, %v4011
      %v4028 = vadd.f32 %v3811, %v4012
      %s4029 = sld [smem:[#allocation11 + $0x2e]]
      %v4030 = vstv %s4029
      %v4031 = vmul.f32 %v4030, %v3976
      %v4032 = vmul.f32 %v4030, %v3977
      %v4033 = vmul.f32 %v4030, %v3978
      %v4034 = vmul.f32 %v4030, %v3979
      %v4035 = vmul.f32 %v4030, %v3980
      %v4036 = vmul.f32 %v4030, %v3981
      %v4037 = vmul.f32 %v4030, %v3982
      %v4038 = vmul.f32 %v4030, %v3983
      %v4039 = vmul.f32 %v4030, %v3984
      %v4040 = vmul.f32 %v4030, %v3985
      %v4041 = vmul.f32 %v4030, %v3986
      %v4042 = vmul.f32 %v4030, %v3987
      %v4043 = vmul.f32 %v4030, %v3988
      %v4044 = vmul.f32 %v4030, %v3989
      %v4045 = vmul.f32 %v4030, %v3990
      %v4046 = vmul.f32 %v4030, %v3991
      %v4047 = vadd.f32 %v4013, %v4031
      %v4048 = vadd.f32 %v4014, %v4032
      %v4049 = vadd.f32 %v4015, %v4033
      %v4050 = vadd.f32 %v4016, %v4034
      %v4051 = vadd.f32 %v4017, %v4035
      %v4052 = vadd.f32 %v4018, %v4036
      %v4053 = vadd.f32 %v4019, %v4037
      %v4054 = vadd.f32 %v4020, %v4038
      %v4055 = vadd.f32 %v4021, %v4039
      %v4056 = vadd.f32 %v4022, %v4040
      %v4057 = vadd.f32 %v4023, %v4041
      %v4058 = vadd.f32 %v4024, %v4042
      %v4059 = vadd.f32 %v4025, %v4043
      %v4060 = vadd.f32 %v4026, %v4044
      %v4061 = vadd.f32 %v4027, %v4045
      %v4062 = vadd.f32 %v4028, %v4046
      %s4063 = sld [smem:[#allocation11 + $0x2f]]
      %v4064 = vstv %s4063
      %v4065 = vmul.f32 %v4064, %v3977
      %v4066 = vmul.f32 %v4064, %v3978
      %v4067 = vmul.f32 %v4064, %v3979
      %v4068 = vmul.f32 %v4064, %v3980
      %v4069 = vmul.f32 %v4064, %v3981
      %v4070 = vmul.f32 %v4064, %v3982
      %v4071 = vmul.f32 %v4064, %v3983
      %v4072 = vmul.f32 %v4064, %v3984
      %v4073 = vmul.f32 %v4064, %v3985
      %v4074 = vmul.f32 %v4064, %v3986
      %v4075 = vmul.f32 %v4064, %v3987
      %v4076 = vmul.f32 %v4064, %v3988
      %v4077 = vmul.f32 %v4064, %v3989
      %v4078 = vmul.f32 %v4064, %v3990
      %v4079 = vmul.f32 %v4064, %v3991
      %v4080 = vmul.f32 %v4064, %v3992
      %v4081 = vadd.f32 %v4047, %v4065
      %v4082 = vadd.f32 %v4048, %v4066
      %v4083 = vadd.f32 %v4049, %v4067
      %v4084 = vadd.f32 %v4050, %v4068
      %v4085 = vadd.f32 %v4051, %v4069
      %v4086 = vadd.f32 %v4052, %v4070
      %v4087 = vadd.f32 %v4053, %v4071
      %v4088 = vadd.f32 %v4054, %v4072
      %v4089 = vadd.f32 %v4055, %v4073
      %v4090 = vadd.f32 %v4056, %v4074
      %v4091 = vadd.f32 %v4057, %v4075
      %v4092 = vadd.f32 %v4058, %v4076
      %v4093 = vadd.f32 %v4059, %v4077
      %v4094 = vadd.f32 %v4060, %v4078
      %v4095 = vadd.f32 %v4061, %v4079
      %v4096 = vadd.f32 %v4062, %v4080
      %s4097 = sld [smem:[#allocation11 + $0x30]]
      %v4098 = vstv %s4097
      %v4099 = vmul.f32 %v4098, %v3978
      %v4100 = vmul.f32 %v4098, %v3979
      %v4101 = vmul.f32 %v4098, %v3980
      %v4102 = vmul.f32 %v4098, %v3981
      %v4103 = vmul.f32 %v4098, %v3982
      %v4104 = vmul.f32 %v4098, %v3983
      %v4105 = vmul.f32 %v4098, %v3984
      %v4106 = vmul.f32 %v4098, %v3985
      %v4107 = vmul.f32 %v4098, %v3986
      %v4108 = vmul.f32 %v4098, %v3987
      %v4109 = vmul.f32 %v4098, %v3988
      %v4110 = vmul.f32 %v4098, %v3989
      %v4111 = vmul.f32 %v4098, %v3990
      %v4112 = vmul.f32 %v4098, %v3991
      %v4113 = vmul.f32 %v4098, %v3992
      %v4114 = vmul.f32 %v4098, %v3993
      %v4115 = vadd.f32 %v4081, %v4099
      %v4116 = vadd.f32 %v4082, %v4100
      %v4117 = vadd.f32 %v4083, %v4101
      %v4118 = vadd.f32 %v4084, %v4102
      %v4119 = vadd.f32 %v4085, %v4103
      %v4120 = vadd.f32 %v4086, %v4104
      %v4121 = vadd.f32 %v4087, %v4105
      %v4122 = vadd.f32 %v4088, %v4106
      %v4123 = vadd.f32 %v4089, %v4107
      %v4124 = vadd.f32 %v4090, %v4108
      %v4125 = vadd.f32 %v4091, %v4109
      %v4126 = vadd.f32 %v4092, %v4110
      %v4127 = vadd.f32 %v4093, %v4111
      %v4128 = vadd.f32 %v4094, %v4112
      %v4129 = vadd.f32 %v4095, %v4113
      %v4130 = vadd.f32 %v4096, %v4114
      %s4131 = sld [smem:[#allocation11 + $0x31]]
      %v4132 = vstv %s4131
      %v4133 = vmul.f32 %v4132, %v3979
      %v4134 = vmul.f32 %v4132, %v3980
      %v4135 = vmul.f32 %v4132, %v3981
      %v4136 = vmul.f32 %v4132, %v3982
      %v4137 = vmul.f32 %v4132, %v3983
      %v4138 = vmul.f32 %v4132, %v3984
      %v4139 = vmul.f32 %v4132, %v3985
      %v4140 = vmul.f32 %v4132, %v3986
      %v4141 = vmul.f32 %v4132, %v3987
      %v4142 = vmul.f32 %v4132, %v3988
      %v4143 = vmul.f32 %v4132, %v3989
      %v4144 = vmul.f32 %v4132, %v3990
      %v4145 = vmul.f32 %v4132, %v3991
      %v4146 = vmul.f32 %v4132, %v3992
      %v4147 = vmul.f32 %v4132, %v3993
      %v4148 = vmul.f32 %v4132, %v3994
      %v4149 = vadd.f32 %v4115, %v4133
      %v4150 = vadd.f32 %v4116, %v4134
      %v4151 = vadd.f32 %v4117, %v4135
      %v4152 = vadd.f32 %v4118, %v4136
      %v4153 = vadd.f32 %v4119, %v4137
      %v4154 = vadd.f32 %v4120, %v4138
      %v4155 = vadd.f32 %v4121, %v4139
      %v4156 = vadd.f32 %v4122, %v4140
      %v4157 = vadd.f32 %v4123, %v4141
      %v4158 = vadd.f32 %v4124, %v4142
      %v4159 = vadd.f32 %v4125, %v4143
      %v4160 = vadd.f32 %v4126, %v4144
      %v4161 = vadd.f32 %v4127, %v4145
      %v4162 = vadd.f32 %v4128, %v4146
      %v4163 = vadd.f32 %v4129, %v4147
      %v4164 = vadd.f32 %v4130, %v4148
      %v4165 = vmul.f32 %v3643, %v3975
      %v4166 = vmul.f32 %v3643, %v3976
      %v4167 = vmul.f32 %v3643, %v3977
      %v4168 = vmul.f32 %v3643, %v3978
      %v4169 = vmul.f32 %v3643, %v3979
      %v4170 = vmul.f32 %v3643, %v3980
      %v4171 = vmul.f32 %v3643, %v3981
      %v4172 = vmul.f32 %v3643, %v3982
      %v4173 = vmul.f32 %v3643, %v3983
      %v4174 = vmul.f32 %v3643, %v3984
      %v4175 = vmul.f32 %v3643, %v3985
      %v4176 = vmul.f32 %v3643, %v3986
      %v4177 = vmul.f32 %v3643, %v3987
      %v4178 = vmul.f32 %v3643, %v3988
      %v4179 = vmul.f32 %v3643, %v3989
      %v4180 = vmul.f32 %v3643, %v3990
      %v4181 = vadd.f32 %v3956, %v4165
      %v4182 = vadd.f32 %v3957, %v4166
      %v4183 = vadd.f32 %v3958, %v4167
      %v4184 = vadd.f32 %v3959, %v4168
      %v4185 = vadd.f32 %v3960, %v4169
      %v4186 = vadd.f32 %v3961, %v4170
      %v4187 = vadd.f32 %v3962, %v4171
      %v4188 = vadd.f32 %v3963, %v4172
      %v4189 = vadd.f32 %v3964, %v4173
      %v4190 = vadd.f32 %v3965, %v4174
      %v4191 = vadd.f32 %v3966, %v4175
      %v4192 = vadd.f32 %v3967, %v4176
      %v4193 = vadd.f32 %v3968, %v4177
      %v4194 = vadd.f32 %v3969, %v4178
      %v4195 = vadd.f32 %v3970, %v4179
      %v4196 = vadd.f32 %v3971, %v4180
      %v4197 = vmul.f32 %v3677, %v3976
      %v4198 = vmul.f32 %v3677, %v3977
      %v4199 = vmul.f32 %v3677, %v3978
      %v4200 = vmul.f32 %v3677, %v3979
      %v4201 = vmul.f32 %v3677, %v3980
      %v4202 = vmul.f32 %v3677, %v3981
      %v4203 = vmul.f32 %v3677, %v3982
      %v4204 = vmul.f32 %v3677, %v3983
      %v4205 = vmul.f32 %v3677, %v3984
      %v4206 = vmul.f32 %v3677, %v3985
      %v4207 = vmul.f32 %v3677, %v3986
      %v4208 = vmul.f32 %v3677, %v3987
      %v4209 = vmul.f32 %v3677, %v3988
      %v4210 = vmul.f32 %v3677, %v3989
      %v4211 = vmul.f32 %v3677, %v3990
      %v4212 = vmul.f32 %v3677, %v3991
      %v4213 = vadd.f32 %v4181, %v4197
      %v4214 = vadd.f32 %v4182, %v4198
      %v4215 = vadd.f32 %v4183, %v4199
      %v4216 = vadd.f32 %v4184, %v4200
      %v4217 = vadd.f32 %v4185, %v4201
      %v4218 = vadd.f32 %v4186, %v4202
      %v4219 = vadd.f32 %v4187, %v4203
      %v4220 = vadd.f32 %v4188, %v4204
      %v4221 = vadd.f32 %v4189, %v4205
      %v4222 = vadd.f32 %v4190, %v4206
      %v4223 = vadd.f32 %v4191, %v4207
      %v4224 = vadd.f32 %v4192, %v4208
      %v4225 = vadd.f32 %v4193, %v4209
      %v4226 = vadd.f32 %v4194, %v4210
      %v4227 = vadd.f32 %v4195, %v4211
      %v4228 = vadd.f32 %v4196, %v4212
      %v4229 = vmul.f32 %v3711, %v3977
      %v4230 = vmul.f32 %v3711, %v3978
      %v4231 = vmul.f32 %v3711, %v3979
      %v4232 = vmul.f32 %v3711, %v3980
      %v4233 = vmul.f32 %v3711, %v3981
      %v4234 = vmul.f32 %v3711, %v3982
      %v4235 = vmul.f32 %v3711, %v3983
      %v4236 = vmul.f32 %v3711, %v3984
      %v4237 = vmul.f32 %v3711, %v3985
      %v4238 = vmul.f32 %v3711, %v3986
      %v4239 = vmul.f32 %v3711, %v3987
      %v4240 = vmul.f32 %v3711, %v3988
      %v4241 = vmul.f32 %v3711, %v3989
      %v4242 = vmul.f32 %v3711, %v3990
      %v4243 = vmul.f32 %v3711, %v3991
      %v4244 = vmul.f32 %v3711, %v3992
      %v4245 = vadd.f32 %v4213, %v4229
      %v4246 = vadd.f32 %v4214, %v4230
      %v4247 = vadd.f32 %v4215, %v4231
      %v4248 = vadd.f32 %v4216, %v4232
      %v4249 = vadd.f32 %v4217, %v4233
      %v4250 = vadd.f32 %v4218, %v4234
      %v4251 = vadd.f32 %v4219, %v4235
      %v4252 = vadd.f32 %v4220, %v4236
      %v4253 = vadd.f32 %v4221, %v4237
      %v4254 = vadd.f32 %v4222, %v4238
      %v4255 = vadd.f32 %v4223, %v4239
      %v4256 = vadd.f32 %v4224, %v4240
      %v4257 = vadd.f32 %v4225, %v4241
      %v4258 = vadd.f32 %v4226, %v4242
      %v4259 = vadd.f32 %v4227, %v4243
      %v4260 = vadd.f32 %v4228, %v4244
      %v4261 = vmul.f32 %v3745, %v3978
      %v4262 = vmul.f32 %v3745, %v3979
      %v4263 = vmul.f32 %v3745, %v3980
      %v4264 = vmul.f32 %v3745, %v3981
      %v4265 = vmul.f32 %v3745, %v3982
      %v4266 = vmul.f32 %v3745, %v3983
      %v4267 = vmul.f32 %v3745, %v3984
      %v4268 = vmul.f32 %v3745, %v3985
      %v4269 = vmul.f32 %v3745, %v3986
      %v4270 = vmul.f32 %v3745, %v3987
      %v4271 = vmul.f32 %v3745, %v3988
      %v4272 = vmul.f32 %v3745, %v3989
      %v4273 = vmul.f32 %v3745, %v3990
      %v4274 = vmul.f32 %v3745, %v3991
      %v4275 = vmul.f32 %v3745, %v3992
      %v4276 = vmul.f32 %v3745, %v3993
      %v4277 = vadd.f32 %v4245, %v4261
      %v4278 = vadd.f32 %v4246, %v4262
      %v4279 = vadd.f32 %v4247, %v4263
      %v4280 = vadd.f32 %v4248, %v4264
      %v4281 = vadd.f32 %v4249, %v4265
      %v4282 = vadd.f32 %v4250, %v4266
      %v4283 = vadd.f32 %v4251, %v4267
      %v4284 = vadd.f32 %v4252, %v4268
      %v4285 = vadd.f32 %v4253, %v4269
      %v4286 = vadd.f32 %v4254, %v4270
      %v4287 = vadd.f32 %v4255, %v4271
      %v4288 = vadd.f32 %v4256, %v4272
      %v4289 = vadd.f32 %v4257, %v4273
      %v4290 = vadd.f32 %v4258, %v4274
      %v4291 = vadd.f32 %v4259, %v4275
      %v4292 = vadd.f32 %v4260, %v4276
      %v4293 = vmul.f32 %v3779, %v3979
      %v4294 = vmul.f32 %v3779, %v3980
      %v4295 = vmul.f32 %v3779, %v3981
      %v4296 = vmul.f32 %v3779, %v3982
      %v4297 = vmul.f32 %v3779, %v3983
      %v4298 = vmul.f32 %v3779, %v3984
      %v4299 = vmul.f32 %v3779, %v3985
      %v4300 = vmul.f32 %v3779, %v3986
      %v4301 = vmul.f32 %v3779, %v3987
      %v4302 = vmul.f32 %v3779, %v3988
      %v4303 = vmul.f32 %v3779, %v3989
      %v4304 = vmul.f32 %v3779, %v3990
      %v4305 = vmul.f32 %v3779, %v3991
      %v4306 = vmul.f32 %v3779, %v3992
      %v4307 = vmul.f32 %v3779, %v3993
      %v4308 = vmul.f32 %v3779, %v3994
      %v4309 = vadd.f32 %v4277, %v4293
      %v4310 = vadd.f32 %v4278, %v4294
      %v4311 = vadd.f32 %v4279, %v4295
      %v4312 = vadd.f32 %v4280, %v4296
      %v4313 = vadd.f32 %v4281, %v4297
      %v4314 = vadd.f32 %v4282, %v4298
      %v4315 = vadd.f32 %v4283, %v4299
      %v4316 = vadd.f32 %v4284, %v4300
      %v4317 = vadd.f32 %v4285, %v4301
      %v4318 = vadd.f32 %v4286, %v4302
      %v4319 = vadd.f32 %v4287, %v4303
      %v4320 = vadd.f32 %v4288, %v4304
      %v4321 = vadd.f32 %v4289, %v4305
      %v4322 = vadd.f32 %v4290, %v4306
      %v4323 = vadd.f32 %v4291, %v4307
      %v4324 = vadd.f32 %v4292, %v4308
      %s4325 = sadd.s32 %s2752, 5
      %s4326 = smul.u32 %s4325, 160
      %s4327 = scalar_lea.vmem [#allocation2], %s4326
      %v4328 = vld [vmem:[%s4327] sm:$0xff]
      %v4329 = vld [vmem:[%s4327 + $0x8] sm:$0xff]
      %v4330 = vld [vmem:[%s4327 + $0x10] sm:$0xff]
      %v4331 = vld [vmem:[%s4327 + $0x18] sm:$0xff]
      %v4332 = vld [vmem:[%s4327 + $0x20] sm:$0xff]
      %v4333 = vld [vmem:[%s4327 + $0x28] sm:$0xff]
      %v4334 = vld [vmem:[%s4327 + $0x30] sm:$0xff]
      %v4335 = vld [vmem:[%s4327 + $0x38] sm:$0xff]
      %v4336 = vld [vmem:[%s4327 + $0x40] sm:$0xff]
      %v4337 = vld [vmem:[%s4327 + $0x48] sm:$0xff]
      %v4338 = vld [vmem:[%s4327 + $0x50] sm:$0xff]
      %v4339 = vld [vmem:[%s4327 + $0x58] sm:$0xff]
      %v4340 = vld [vmem:[%s4327 + $0x60] sm:$0xff]
      %v4341 = vld [vmem:[%s4327 + $0x68] sm:$0xff]
      %v4342 = vld [vmem:[%s4327 + $0x70] sm:$0xff]
      %v4343 = vld [vmem:[%s4327 + $0x78] sm:$0xff]
      %v4344 = vld [vmem:[%s4327 + $0x80] sm:$0xff]
      %v4345 = vld [vmem:[%s4327 + $0x88] sm:$0xff]
      %v4346 = vld [vmem:[%s4327 + $0x90] sm:$0xff]
      %v4347 = vld [vmem:[%s4327 + $0x98] sm:$0xff]
      %v4348 = vmul.f32 %v3996, %v4328
      %v4349 = vmul.f32 %v3996, %v4329
      %v4350 = vmul.f32 %v3996, %v4330
      %v4351 = vmul.f32 %v3996, %v4331
      %v4352 = vmul.f32 %v3996, %v4332
      %v4353 = vmul.f32 %v3996, %v4333
      %v4354 = vmul.f32 %v3996, %v4334
      %v4355 = vmul.f32 %v3996, %v4335
      %v4356 = vmul.f32 %v3996, %v4336
      %v4357 = vmul.f32 %v3996, %v4337
      %v4358 = vmul.f32 %v3996, %v4338
      %v4359 = vmul.f32 %v3996, %v4339
      %v4360 = vmul.f32 %v3996, %v4340
      %v4361 = vmul.f32 %v3996, %v4341
      %v4362 = vmul.f32 %v3996, %v4342
      %v4363 = vmul.f32 %v3996, %v4343
      %v4364 = vadd.f32 %v4309, %v4348
      %v4365 = vadd.f32 %v4310, %v4349
      %v4366 = vadd.f32 %v4311, %v4350
      %v4367 = vadd.f32 %v4312, %v4351
      %v4368 = vadd.f32 %v4313, %v4352
      %v4369 = vadd.f32 %v4314, %v4353
      %v4370 = vadd.f32 %v4315, %v4354
      %v4371 = vadd.f32 %v4316, %v4355
      %v4372 = vadd.f32 %v4317, %v4356
      %v4373 = vadd.f32 %v4318, %v4357
      %v4374 = vadd.f32 %v4319, %v4358
      %v4375 = vadd.f32 %v4320, %v4359
      %v4376 = vadd.f32 %v4321, %v4360
      %v4377 = vadd.f32 %v4322, %v4361
      %v4378 = vadd.f32 %v4323, %v4362
      %v4379 = vadd.f32 %v4324, %v4363
      %v4380 = vmul.f32 %v4030, %v4329
      %v4381 = vmul.f32 %v4030, %v4330
      %v4382 = vmul.f32 %v4030, %v4331
      %v4383 = vmul.f32 %v4030, %v4332
      %v4384 = vmul.f32 %v4030, %v4333
      %v4385 = vmul.f32 %v4030, %v4334
      %v4386 = vmul.f32 %v4030, %v4335
      %v4387 = vmul.f32 %v4030, %v4336
      %v4388 = vmul.f32 %v4030, %v4337
      %v4389 = vmul.f32 %v4030, %v4338
      %v4390 = vmul.f32 %v4030, %v4339
      %v4391 = vmul.f32 %v4030, %v4340
      %v4392 = vmul.f32 %v4030, %v4341
      %v4393 = vmul.f32 %v4030, %v4342
      %v4394 = vmul.f32 %v4030, %v4343
      %v4395 = vmul.f32 %v4030, %v4344
      %v4396 = vadd.f32 %v4364, %v4380
      %v4397 = vadd.f32 %v4365, %v4381
      %v4398 = vadd.f32 %v4366, %v4382
      %v4399 = vadd.f32 %v4367, %v4383
      %v4400 = vadd.f32 %v4368, %v4384
      %v4401 = vadd.f32 %v4369, %v4385
      %v4402 = vadd.f32 %v4370, %v4386
      %v4403 = vadd.f32 %v4371, %v4387
      %v4404 = vadd.f32 %v4372, %v4388
      %v4405 = vadd.f32 %v4373, %v4389
      %v4406 = vadd.f32 %v4374, %v4390
      %v4407 = vadd.f32 %v4375, %v4391
      %v4408 = vadd.f32 %v4376, %v4392
      %v4409 = vadd.f32 %v4377, %v4393
      %v4410 = vadd.f32 %v4378, %v4394
      %v4411 = vadd.f32 %v4379, %v4395
      %v4412 = vmul.f32 %v4064, %v4330
      %v4413 = vmul.f32 %v4064, %v4331
      %v4414 = vmul.f32 %v4064, %v4332
      %v4415 = vmul.f32 %v4064, %v4333
      %v4416 = vmul.f32 %v4064, %v4334
      %v4417 = vmul.f32 %v4064, %v4335
      %v4418 = vmul.f32 %v4064, %v4336
      %v4419 = vmul.f32 %v4064, %v4337
      %v4420 = vmul.f32 %v4064, %v4338
      %v4421 = vmul.f32 %v4064, %v4339
      %v4422 = vmul.f32 %v4064, %v4340
      %v4423 = vmul.f32 %v4064, %v4341
      %v4424 = vmul.f32 %v4064, %v4342
      %v4425 = vmul.f32 %v4064, %v4343
      %v4426 = vmul.f32 %v4064, %v4344
      %v4427 = vmul.f32 %v4064, %v4345
      %v4428 = vadd.f32 %v4396, %v4412
      %v4429 = vadd.f32 %v4397, %v4413
      %v4430 = vadd.f32 %v4398, %v4414
      %v4431 = vadd.f32 %v4399, %v4415
      %v4432 = vadd.f32 %v4400, %v4416
      %v4433 = vadd.f32 %v4401, %v4417
      %v4434 = vadd.f32 %v4402, %v4418
      %v4435 = vadd.f32 %v4403, %v4419
      %v4436 = vadd.f32 %v4404, %v4420
      %v4437 = vadd.f32 %v4405, %v4421
      %v4438 = vadd.f32 %v4406, %v4422
      %v4439 = vadd.f32 %v4407, %v4423
      %v4440 = vadd.f32 %v4408, %v4424
      %v4441 = vadd.f32 %v4409, %v4425
      %v4442 = vadd.f32 %v4410, %v4426
      %v4443 = vadd.f32 %v4411, %v4427
      %v4444 = vmul.f32 %v4098, %v4331
      %v4445 = vmul.f32 %v4098, %v4332
      %v4446 = vmul.f32 %v4098, %v4333
      %v4447 = vmul.f32 %v4098, %v4334
      %v4448 = vmul.f32 %v4098, %v4335
      %v4449 = vmul.f32 %v4098, %v4336
      %v4450 = vmul.f32 %v4098, %v4337
      %v4451 = vmul.f32 %v4098, %v4338
      %v4452 = vmul.f32 %v4098, %v4339
      %v4453 = vmul.f32 %v4098, %v4340
      %v4454 = vmul.f32 %v4098, %v4341
      %v4455 = vmul.f32 %v4098, %v4342
      %v4456 = vmul.f32 %v4098, %v4343
      %v4457 = vmul.f32 %v4098, %v4344
      %v4458 = vmul.f32 %v4098, %v4345
      %v4459 = vmul.f32 %v4098, %v4346
      %v4460 = vadd.f32 %v4428, %v4444
      %v4461 = vadd.f32 %v4429, %v4445
      %v4462 = vadd.f32 %v4430, %v4446
      %v4463 = vadd.f32 %v4431, %v4447
      %v4464 = vadd.f32 %v4432, %v4448
      %v4465 = vadd.f32 %v4433, %v4449
      %v4466 = vadd.f32 %v4434, %v4450
      %v4467 = vadd.f32 %v4435, %v4451
      %v4468 = vadd.f32 %v4436, %v4452
      %v4469 = vadd.f32 %v4437, %v4453
      %v4470 = vadd.f32 %v4438, %v4454
      %v4471 = vadd.f32 %v4439, %v4455
      %v4472 = vadd.f32 %v4440, %v4456
      %v4473 = vadd.f32 %v4441, %v4457
      %v4474 = vadd.f32 %v4442, %v4458
      %v4475 = vadd.f32 %v4443, %v4459
      %v4476 = vmul.f32 %v4132, %v4332
      %v4477 = vmul.f32 %v4132, %v4333
      %v4478 = vmul.f32 %v4132, %v4334
      %v4479 = vmul.f32 %v4132, %v4335
      %v4480 = vmul.f32 %v4132, %v4336
      %v4481 = vmul.f32 %v4132, %v4337
      %v4482 = vmul.f32 %v4132, %v4338
      %v4483 = vmul.f32 %v4132, %v4339
      %v4484 = vmul.f32 %v4132, %v4340
      %v4485 = vmul.f32 %v4132, %v4341
      %v4486 = vmul.f32 %v4132, %v4342
      %v4487 = vmul.f32 %v4132, %v4343
      %v4488 = vmul.f32 %v4132, %v4344
      %v4489 = vmul.f32 %v4132, %v4345
      %v4490 = vmul.f32 %v4132, %v4346
      %v4491 = vmul.f32 %v4132, %v4347
      %v4492 = vadd.f32 %v4460, %v4476
      %v4493 = vadd.f32 %v4461, %v4477
      %v4494 = vadd.f32 %v4462, %v4478
      %v4495 = vadd.f32 %v4463, %v4479
      %v4496 = vadd.f32 %v4464, %v4480
      %v4497 = vadd.f32 %v4465, %v4481
      %v4498 = vadd.f32 %v4466, %v4482
      %v4499 = vadd.f32 %v4467, %v4483
      %v4500 = vadd.f32 %v4468, %v4484
      %v4501 = vadd.f32 %v4469, %v4485
      %v4502 = vadd.f32 %v4470, %v4486
      %v4503 = vadd.f32 %v4471, %v4487
      %v4504 = vadd.f32 %v4472, %v4488
      %v4505 = vadd.f32 %v4473, %v4489
      %v4506 = vadd.f32 %v4474, %v4490
      %v4507 = vadd.f32 %v4475, %v4491
      %v4508 = vmax.f32 %v4149, %v4492
      %v4509 = vmax.f32 %v4150, %v4493
      %v4510 = vmax.f32 %v4151, %v4494
      %v4511 = vmax.f32 %v4152, %v4495
      %v4512 = vmax.f32 %v4153, %v4496
      %v4513 = vmax.f32 %v4154, %v4497
      %v4514 = vmax.f32 %v4155, %v4498
      %v4515 = vmax.f32 %v4156, %v4499
      %v4516 = vmax.f32 %v4157, %v4500
      %v4517 = vmax.f32 %v4158, %v4501
      %v4518 = vmax.f32 %v4159, %v4502
      %v4519 = vmax.f32 %v4160, %v4503
      %v4520 = vmax.f32 %v4161, %v4504
      %v4521 = vmax.f32 %v4162, %v4505
      %v4522 = vmax.f32 %v4163, %v4506
      %v4523 = vmax.f32 %v4164, %v4507
      %v4524 = vmax.f32 %v4508, %v4509
      %v4525 = vmax.f32 %v4510, %v4511
      %v4526 = vmax.f32 %v4512, %v4513
      %v4527 = vmax.f32 %v4514, %v4515
      %v4528 = vmax.f32 %v4516, %v4517
      %v4529 = vmax.f32 %v4518, %v4519
      %v4530 = vmax.f32 %v4520, %v4521
      %v4531 = vmax.f32 %v4522, %v4523
      %s4532 = sld [smem:[#allocation12 + $0x1]]
      %v4533 = vstv %s4532
      %v4534 = vadd.f32 %v4524, %v4533
      %v4535 = vadd.f32 %v4525, %v4533
      %v4536 = vadd.f32 %v4526, %v4533
      %v4537 = vadd.f32 %v4527, %v4533
      %v4538 = vadd.f32 %v4528, %v4533
      %v4539 = vadd.f32 %v4529, %v4533
      %v4540 = vadd.f32 %v4530, %v4533
      %v4541 = vadd.f32 %v4531, %v4533
      %v4542 = vmax.f32 %v4534, 0.0
      %v4543 = vmax.f32 %v4535, 0.0
      %v4544 = vmax.f32 %v4536, 0.0
      %v4545 = vmax.f32 %v4537, 0.0
      %v4546 = vmax.f32 %v4538, 0.0
      %v4547 = vmax.f32 %v4539, 0.0
      %v4548 = vmax.f32 %v4540, 0.0
      %v4549 = vmax.f32 %v4541, 0.0
      %s4550 = sadd.s32 %s2747, 2
      %s4551 = smul.u32 %s4550, 96
      %s4552 = sadd.s32 16, %s4551
      %s4553 = scalar_lea.vmem [#allocation4], %s4552
      %4554 = vst [vmem:[%s4553] sm:$0xff] %v4542
      %4555 = vst [vmem:[%s4553 + $0x8] sm:$0xff] %v4543
      %4556 = vst [vmem:[%s4553 + $0x10] sm:$0xff] %v4544
      %4557 = vst [vmem:[%s4553 + $0x18] sm:$0xff] %v4545
      %4558 = vst [vmem:[%s4553 + $0x20] sm:$0xff] %v4546
      %4559 = vst [vmem:[%s4553 + $0x28] sm:$0xff] %v4547
      %4560 = vst [vmem:[%s4553 + $0x30] sm:$0xff] %v4548
      %4561 = vst [vmem:[%s4553 + $0x38] sm:$0xff] %v4549
    $region65: #{tpu_custom_call.1} parent=1 // loop_footer
      %s2751 = sadd.s32 1, %s2747
    $region66: #{tpu_custom_call.1} parent=1 // loop_footer_branch
      %2746 = sbr.rel target = $region62
    $region67: #{tpu_custom_call.1} parent=1 // loop_exit
      _
    %s4562 = sld [smem:[#allocation16]]
    %v4563 = vstv %s4562
    %v4564 = vadd.f32 %v4563, 0.0
    %s4565 = sld [smem:[#allocation16 + $0x1]]
    %v4566 = vstv %s4565
    %v4567 = vadd.f32 %v4566, 0.0
    %s4568 = sld [smem:[#allocation16 + $0x2]]
    %v4569 = vstv %s4568
    %v4570 = vadd.f32 %v4569, 0.0
    %s4571 = sld [smem:[#allocation16 + $0x3]]
    %v4572 = vstv %s4571
    %v4573 = vadd.f32 %v4572, 0.0
    %s4574 = sld [smem:[#allocation16 + $0x4]]
    %v4575 = vstv %s4574
    %v4576 = vadd.f32 %v4575, 0.0
    %s4577 = sld [smem:[#allocation16 + $0x5]]
    %v4578 = vstv %s4577
    %v4579 = vadd.f32 %v4578, 0.0
    %s4580 = sld [smem:[#allocation16 + $0x6]]
    %v4581 = vstv %s4580
    %v4582 = vadd.f32 %v4581, 0.0
    %s4583 = sld [smem:[#allocation16 + $0x7]]
    %v4584 = vstv %s4583
    %v4585 = vadd.f32 %v4584, 0.0
    %s4586 = sld [smem:[#allocation16 + $0x8]]
    %v4587 = vstv %s4586
    %v4588 = vadd.f32 %v4587, 0.0
    %s4589 = sld [smem:[#allocation16 + $0x9]]
    %v4590 = vstv %s4589
    %v4591 = vadd.f32 %v4590, 0.0
    loop: start=0, step=1, limit=4
    $region68: #{tpu_custom_call.1} parent=1 // loop_pre_header
      _
    $region69: #{tpu_custom_call.1} parent=1 // loop_header
      %s4593 = sphi 0, %s4597
      %p4594 = scmp.ge.s32.totalorder %s4593, 4
      %v4598 = vphi %v4564, %v6672
      %v4599 = vphi %v4567, %v6673
      %v4600 = vphi %v4570, %v6674
      %v4601 = vphi %v4573, %v6675
      %v4602 = vphi %v4576, %v6676
      %v4603 = vphi %v4579, %v6677
      %v4604 = vphi %v4582, %v6678
      %v4605 = vphi %v4585, %v6679
      %v4606 = vphi %v4588, %v6680
      %v4607 = vphi %v4591, %v6681
    $region70: #{tpu_custom_call.1} parent=1 // loop_header_branch
      %4596 = sbr.rel (%p4594) target = $region74
    $region71: #{tpu_custom_call.1} parent=1 // loop_body
      %s4608 = smul.u32 %s4593, 2
      %s4609 = smul.u32 %s4608, 96
      %s4610 = scalar_lea.vmem [#allocation3], %s4609
      %v4611 = vld [vmem:[%s4610] sm:$0xff]
      %v4612 = vld [vmem:[%s4610 + $0x8] sm:$0xff]
      %v4613 = vld [vmem:[%s4610 + $0x10] sm:$0xff]
      %v4614 = vld [vmem:[%s4610 + $0x18] sm:$0xff]
      %v4615 = vld [vmem:[%s4610 + $0x20] sm:$0xff]
      %v4616 = vld [vmem:[%s4610 + $0x28] sm:$0xff]
      %v4617 = vld [vmem:[%s4610 + $0x30] sm:$0xff]
      %v4618 = vld [vmem:[%s4610 + $0x38] sm:$0xff]
      %v4619 = vld [vmem:[%s4610 + $0x40] sm:$0xff]
      %v4620 = vld [vmem:[%s4610 + $0x48] sm:$0xff]
      %v4621 = vld [vmem:[%s4610 + $0x50] sm:$0xff]
      %v4622 = vld [vmem:[%s4610 + $0x58] sm:$0xff]
      %s4623 = sld [smem:[#allocation13]]
      %v4624 = vstv %s4623
      %v4625 = vmul.f32 %v4624, %v4611
      %v4626 = vmul.f32 %v4624, %v4612
      %v4627 = vmul.f32 %v4624, %v4613
      %v4628 = vmul.f32 %v4624, %v4614
      %v4629 = vmul.f32 %v4624, %v4615
      %v4630 = vmul.f32 %v4624, %v4616
      %v4631 = vmul.f32 %v4624, %v4617
      %v4632 = vmul.f32 %v4624, %v4618
      %s4633 = sld [smem:[#allocation13 + $0x1]]
      %v4634 = vstv %s4633
      %v4635 = vmul.f32 %v4634, %v4612
      %v4636 = vmul.f32 %v4634, %v4613
      %v4637 = vmul.f32 %v4634, %v4614
      %v4638 = vmul.f32 %v4634, %v4615
      %v4639 = vmul.f32 %v4634, %v4616
      %v4640 = vmul.f32 %v4634, %v4617
      %v4641 = vmul.f32 %v4634, %v4618
      %v4642 = vmul.f32 %v4634, %v4619
      %v4643 = vadd.f32 %v4625, %v4635
      %v4644 = vadd.f32 %v4626, %v4636
      %v4645 = vadd.f32 %v4627, %v4637
      %v4646 = vadd.f32 %v4628, %v4638
      %v4647 = vadd.f32 %v4629, %v4639
      %v4648 = vadd.f32 %v4630, %v4640
      %v4649 = vadd.f32 %v4631, %v4641
      %v4650 = vadd.f32 %v4632, %v4642
      %s4651 = sld [smem:[#allocation13 + $0x2]]
      %v4652 = vstv %s4651
      %v4653 = vmul.f32 %v4652, %v4613
      %v4654 = vmul.f32 %v4652, %v4614
      %v4655 = vmul.f32 %v4652, %v4615
      %v4656 = vmul.f32 %v4652, %v4616
      %v4657 = vmul.f32 %v4652, %v4617
      %v4658 = vmul.f32 %v4652, %v4618
      %v4659 = vmul.f32 %v4652, %v4619
      %v4660 = vmul.f32 %v4652, %v4620
      %v4661 = vadd.f32 %v4643, %v4653
      %v4662 = vadd.f32 %v4644, %v4654
      %v4663 = vadd.f32 %v4645, %v4655
      %v4664 = vadd.f32 %v4646, %v4656
      %v4665 = vadd.f32 %v4647, %v4657
      %v4666 = vadd.f32 %v4648, %v4658
      %v4667 = vadd.f32 %v4649, %v4659
      %v4668 = vadd.f32 %v4650, %v4660
      %s4669 = sld [smem:[#allocation13 + $0x3]]
      %v4670 = vstv %s4669
      %v4671 = vmul.f32 %v4670, %v4614
      %v4672 = vmul.f32 %v4670, %v4615
      %v4673 = vmul.f32 %v4670, %v4616
      %v4674 = vmul.f32 %v4670, %v4617
      %v4675 = vmul.f32 %v4670, %v4618
      %v4676 = vmul.f32 %v4670, %v4619
      %v4677 = vmul.f32 %v4670, %v4620
      %v4678 = vmul.f32 %v4670, %v4621
      %v4679 = vadd.f32 %v4661, %v4671
      %v4680 = vadd.f32 %v4662, %v4672
      %v4681 = vadd.f32 %v4663, %v4673
      %v4682 = vadd.f32 %v4664, %v4674
      %v4683 = vadd.f32 %v4665, %v4675
      %v4684 = vadd.f32 %v4666, %v4676
      %v4685 = vadd.f32 %v4667, %v4677
      %v4686 = vadd.f32 %v4668, %v4678
      %s4687 = sld [smem:[#allocation13 + $0x4]]
      %v4688 = vstv %s4687
      %v4689 = vmul.f32 %v4688, %v4615
      %v4690 = vmul.f32 %v4688, %v4616
      %v4691 = vmul.f32 %v4688, %v4617
      %v4692 = vmul.f32 %v4688, %v4618
      %v4693 = vmul.f32 %v4688, %v4619
      %v4694 = vmul.f32 %v4688, %v4620
      %v4695 = vmul.f32 %v4688, %v4621
      %v4696 = vmul.f32 %v4688, %v4622
      %v4697 = vadd.f32 %v4679, %v4689
      %v4698 = vadd.f32 %v4680, %v4690
      %v4699 = vadd.f32 %v4681, %v4691
      %v4700 = vadd.f32 %v4682, %v4692
      %v4701 = vadd.f32 %v4683, %v4693
      %v4702 = vadd.f32 %v4684, %v4694
      %v4703 = vadd.f32 %v4685, %v4695
      %v4704 = vadd.f32 %v4686, %v4696
      %s4705 = sadd.s32 %s4608, 1
      %s4706 = smul.u32 %s4705, 96
      %s4707 = scalar_lea.vmem [#allocation3], %s4706
      %v4708 = vld [vmem:[%s4707] sm:$0xff]
      %v4709 = vld [vmem:[%s4707 + $0x8] sm:$0xff]
      %v4710 = vld [vmem:[%s4707 + $0x10] sm:$0xff]
      %v4711 = vld [vmem:[%s4707 + $0x18] sm:$0xff]
      %v4712 = vld [vmem:[%s4707 + $0x20] sm:$0xff]
      %v4713 = vld [vmem:[%s4707 + $0x28] sm:$0xff]
      %v4714 = vld [vmem:[%s4707 + $0x30] sm:$0xff]
      %v4715 = vld [vmem:[%s4707 + $0x38] sm:$0xff]
      %v4716 = vld [vmem:[%s4707 + $0x40] sm:$0xff]
      %v4717 = vld [vmem:[%s4707 + $0x48] sm:$0xff]
      %v4718 = vld [vmem:[%s4707 + $0x50] sm:$0xff]
      %v4719 = vld [vmem:[%s4707 + $0x58] sm:$0xff]
      %s4720 = sld [smem:[#allocation13 + $0x5]]
      %v4721 = vstv %s4720
      %v4722 = vmul.f32 %v4721, %v4708
      %v4723 = vmul.f32 %v4721, %v4709
      %v4724 = vmul.f32 %v4721, %v4710
      %v4725 = vmul.f32 %v4721, %v4711
      %v4726 = vmul.f32 %v4721, %v4712
      %v4727 = vmul.f32 %v4721, %v4713
      %v4728 = vmul.f32 %v4721, %v4714
      %v4729 = vmul.f32 %v4721, %v4715
      %v4730 = vadd.f32 %v4697, %v4722
      %v4731 = vadd.f32 %v4698, %v4723
      %v4732 = vadd.f32 %v4699, %v4724
      %v4733 = vadd.f32 %v4700, %v4725
      %v4734 = vadd.f32 %v4701, %v4726
      %v4735 = vadd.f32 %v4702, %v4727
      %v4736 = vadd.f32 %v4703, %v4728
      %v4737 = vadd.f32 %v4704, %v4729
      %s4738 = sld [smem:[#allocation13 + $0x6]]
      %v4739 = vstv %s4738
      %v4740 = vmul.f32 %v4739, %v4709
      %v4741 = vmul.f32 %v4739, %v4710
      %v4742 = vmul.f32 %v4739, %v4711
      %v4743 = vmul.f32 %v4739, %v4712
      %v4744 = vmul.f32 %v4739, %v4713
      %v4745 = vmul.f32 %v4739, %v4714
      %v4746 = vmul.f32 %v4739, %v4715
      %v4747 = vmul.f32 %v4739, %v4716
      %v4748 = vadd.f32 %v4730, %v4740
      %v4749 = vadd.f32 %v4731, %v4741
      %v4750 = vadd.f32 %v4732, %v4742
      %v4751 = vadd.f32 %v4733, %v4743
      %v4752 = vadd.f32 %v4734, %v4744
      %v4753 = vadd.f32 %v4735, %v4745
      %v4754 = vadd.f32 %v4736, %v4746
      %v4755 = vadd.f32 %v4737, %v4747
      %s4756 = sld [smem:[#allocation13 + $0x7]]
      %v4757 = vstv %s4756
      %v4758 = vmul.f32 %v4757, %v4710
      %v4759 = vmul.f32 %v4757, %v4711
      %v4760 = vmul.f32 %v4757, %v4712
      %v4761 = vmul.f32 %v4757, %v4713
      %v4762 = vmul.f32 %v4757, %v4714
      %v4763 = vmul.f32 %v4757, %v4715
      %v4764 = vmul.f32 %v4757, %v4716
      %v4765 = vmul.f32 %v4757, %v4717
      %v4766 = vadd.f32 %v4748, %v4758
      %v4767 = vadd.f32 %v4749, %v4759
      %v4768 = vadd.f32 %v4750, %v4760
      %v4769 = vadd.f32 %v4751, %v4761
      %v4770 = vadd.f32 %v4752, %v4762
      %v4771 = vadd.f32 %v4753, %v4763
      %v4772 = vadd.f32 %v4754, %v4764
      %v4773 = vadd.f32 %v4755, %v4765
      %s4774 = sld [smem:[#allocation13 + $0x8]]
      %v4775 = vstv %s4774
      %v4776 = vmul.f32 %v4775, %v4711
      %v4777 = vmul.f32 %v4775, %v4712
      %v4778 = vmul.f32 %v4775, %v4713
      %v4779 = vmul.f32 %v4775, %v4714
      %v4780 = vmul.f32 %v4775, %v4715
      %v4781 = vmul.f32 %v4775, %v4716
      %v4782 = vmul.f32 %v4775, %v4717
      %v4783 = vmul.f32 %v4775, %v4718
      %v4784 = vadd.f32 %v4766, %v4776
      %v4785 = vadd.f32 %v4767, %v4777
      %v4786 = vadd.f32 %v4768, %v4778
      %v4787 = vadd.f32 %v4769, %v4779
      %v4788 = vadd.f32 %v4770, %v4780
      %v4789 = vadd.f32 %v4771, %v4781
      %v4790 = vadd.f32 %v4772, %v4782
      %v4791 = vadd.f32 %v4773, %v4783
      %s4792 = sld [smem:[#allocation13 + $0x9]]
      %v4793 = vstv %s4792
      %v4794 = vmul.f32 %v4793, %v4712
      %v4795 = vmul.f32 %v4793, %v4713
      %v4796 = vmul.f32 %v4793, %v4714
      %v4797 = vmul.f32 %v4793, %v4715
      %v4798 = vmul.f32 %v4793, %v4716
      %v4799 = vmul.f32 %v4793, %v4717
      %v4800 = vmul.f32 %v4793, %v4718
      %v4801 = vmul.f32 %v4793, %v4719
      %v4802 = vadd.f32 %v4784, %v4794
      %v4803 = vadd.f32 %v4785, %v4795
      %v4804 = vadd.f32 %v4786, %v4796
      %v4805 = vadd.f32 %v4787, %v4797
      %v4806 = vadd.f32 %v4788, %v4798
      %v4807 = vadd.f32 %v4789, %v4799
      %v4808 = vadd.f32 %v4790, %v4800
      %v4809 = vadd.f32 %v4791, %v4801
      %v4810 = vmul.f32 %v4624, %v4708
      %v4811 = vmul.f32 %v4624, %v4709
      %v4812 = vmul.f32 %v4624, %v4710
      %v4813 = vmul.f32 %v4624, %v4711
      %v4814 = vmul.f32 %v4624, %v4712
      %v4815 = vmul.f32 %v4624, %v4713
      %v4816 = vmul.f32 %v4624, %v4714
      %v4817 = vmul.f32 %v4624, %v4715
      %v4818 = vmul.f32 %v4634, %v4709
      %v4819 = vmul.f32 %v4634, %v4710
      %v4820 = vmul.f32 %v4634, %v4711
      %v4821 = vmul.f32 %v4634, %v4712
      %v4822 = vmul.f32 %v4634, %v4713
      %v4823 = vmul.f32 %v4634, %v4714
      %v4824 = vmul.f32 %v4634, %v4715
      %v4825 = vmul.f32 %v4634, %v4716
      %v4826 = vadd.f32 %v4810, %v4818
      %v4827 = vadd.f32 %v4811, %v4819
      %v4828 = vadd.f32 %v4812, %v4820
      %v4829 = vadd.f32 %v4813, %v4821
      %v4830 = vadd.f32 %v4814, %v4822
      %v4831 = vadd.f32 %v4815, %v4823
      %v4832 = vadd.f32 %v4816, %v4824
      %v4833 = vadd.f32 %v4817, %v4825
      %v4834 = vmul.f32 %v4652, %v4710
      %v4835 = vmul.f32 %v4652, %v4711
      %v4836 = vmul.f32 %v4652, %v4712
      %v4837 = vmul.f32 %v4652, %v4713
      %v4838 = vmul.f32 %v4652, %v4714
      %v4839 = vmul.f32 %v4652, %v4715
      %v4840 = vmul.f32 %v4652, %v4716
      %v4841 = vmul.f32 %v4652, %v4717
      %v4842 = vadd.f32 %v4826, %v4834
      %v4843 = vadd.f32 %v4827, %v4835
      %v4844 = vadd.f32 %v4828, %v4836
      %v4845 = vadd.f32 %v4829, %v4837
      %v4846 = vadd.f32 %v4830, %v4838
      %v4847 = vadd.f32 %v4831, %v4839
      %v4848 = vadd.f32 %v4832, %v4840
      %v4849 = vadd.f32 %v4833, %v4841
      %v4850 = vmul.f32 %v4670, %v4711
      %v4851 = vmul.f32 %v4670, %v4712
      %v4852 = vmul.f32 %v4670, %v4713
      %v4853 = vmul.f32 %v4670, %v4714
      %v4854 = vmul.f32 %v4670, %v4715
      %v4855 = vmul.f32 %v4670, %v4716
      %v4856 = vmul.f32 %v4670, %v4717
      %v4857 = vmul.f32 %v4670, %v4718
      %v4858 = vadd.f32 %v4842, %v4850
      %v4859 = vadd.f32 %v4843, %v4851
      %v4860 = vadd.f32 %v4844, %v4852
      %v4861 = vadd.f32 %v4845, %v4853
      %v4862 = vadd.f32 %v4846, %v4854
      %v4863 = vadd.f32 %v4847, %v4855
      %v4864 = vadd.f32 %v4848, %v4856
      %v4865 = vadd.f32 %v4849, %v4857
      %v4866 = vmul.f32 %v4688, %v4712
      %v4867 = vmul.f32 %v4688, %v4713
      %v4868 = vmul.f32 %v4688, %v4714
      %v4869 = vmul.f32 %v4688, %v4715
      %v4870 = vmul.f32 %v4688, %v4716
      %v4871 = vmul.f32 %v4688, %v4717
      %v4872 = vmul.f32 %v4688, %v4718
      %v4873 = vmul.f32 %v4688, %v4719
      %v4874 = vadd.f32 %v4858, %v4866
      %v4875 = vadd.f32 %v4859, %v4867
      %v4876 = vadd.f32 %v4860, %v4868
      %v4877 = vadd.f32 %v4861, %v4869
      %v4878 = vadd.f32 %v4862, %v4870
      %v4879 = vadd.f32 %v4863, %v4871
      %v4880 = vadd.f32 %v4864, %v4872
      %v4881 = vadd.f32 %v4865, %v4873
      %s4882 = sadd.s32 %s4608, 2
      %s4883 = smul.u32 %s4882, 96
      %s4884 = scalar_lea.vmem [#allocation3], %s4883
      %v4885 = vld [vmem:[%s4884] sm:$0xff]
      %v4886 = vld [vmem:[%s4884 + $0x8] sm:$0xff]
      %v4887 = vld [vmem:[%s4884 + $0x10] sm:$0xff]
      %v4888 = vld [vmem:[%s4884 + $0x18] sm:$0xff]
      %v4889 = vld [vmem:[%s4884 + $0x20] sm:$0xff]
      %v4890 = vld [vmem:[%s4884 + $0x28] sm:$0xff]
      %v4891 = vld [vmem:[%s4884 + $0x30] sm:$0xff]
      %v4892 = vld [vmem:[%s4884 + $0x38] sm:$0xff]
      %v4893 = vld [vmem:[%s4884 + $0x40] sm:$0xff]
      %v4894 = vld [vmem:[%s4884 + $0x48] sm:$0xff]
      %v4895 = vld [vmem:[%s4884 + $0x50] sm:$0xff]
      %v4896 = vld [vmem:[%s4884 + $0x58] sm:$0xff]
      %s4897 = sld [smem:[#allocation13 + $0xa]]
      %v4898 = vstv %s4897
      %v4899 = vmul.f32 %v4898, %v4885
      %v4900 = vmul.f32 %v4898, %v4886
      %v4901 = vmul.f32 %v4898, %v4887
      %v4902 = vmul.f32 %v4898, %v4888
      %v4903 = vmul.f32 %v4898, %v4889
      %v4904 = vmul.f32 %v4898, %v4890
      %v4905 = vmul.f32 %v4898, %v4891
      %v4906 = vmul.f32 %v4898, %v4892
      %v4907 = vadd.f32 %v4802, %v4899
      %v4908 = vadd.f32 %v4803, %v4900
      %v4909 = vadd.f32 %v4804, %v4901
      %v4910 = vadd.f32 %v4805, %v4902
      %v4911 = vadd.f32 %v4806, %v4903
      %v4912 = vadd.f32 %v4807, %v4904
      %v4913 = vadd.f32 %v4808, %v4905
      %v4914 = vadd.f32 %v4809, %v4906
      %s4915 = sld [smem:[#allocation13 + $0xb]]
      %v4916 = vstv %s4915
      %v4917 = vmul.f32 %v4916, %v4886
      %v4918 = vmul.f32 %v4916, %v4887
      %v4919 = vmul.f32 %v4916, %v4888
      %v4920 = vmul.f32 %v4916, %v4889
      %v4921 = vmul.f32 %v4916, %v4890
      %v4922 = vmul.f32 %v4916, %v4891
      %v4923 = vmul.f32 %v4916, %v4892
      %v4924 = vmul.f32 %v4916, %v4893
      %v4925 = vadd.f32 %v4907, %v4917
      %v4926 = vadd.f32 %v4908, %v4918
      %v4927 = vadd.f32 %v4909, %v4919
      %v4928 = vadd.f32 %v4910, %v4920
      %v4929 = vadd.f32 %v4911, %v4921
      %v4930 = vadd.f32 %v4912, %v4922
      %v4931 = vadd.f32 %v4913, %v4923
      %v4932 = vadd.f32 %v4914, %v4924
      %s4933 = sld [smem:[#allocation13 + $0xc]]
      %v4934 = vstv %s4933
      %v4935 = vmul.f32 %v4934, %v4887
      %v4936 = vmul.f32 %v4934, %v4888
      %v4937 = vmul.f32 %v4934, %v4889
      %v4938 = vmul.f32 %v4934, %v4890
      %v4939 = vmul.f32 %v4934, %v4891
      %v4940 = vmul.f32 %v4934, %v4892
      %v4941 = vmul.f32 %v4934, %v4893
      %v4942 = vmul.f32 %v4934, %v4894
      %v4943 = vadd.f32 %v4925, %v4935
      %v4944 = vadd.f32 %v4926, %v4936
      %v4945 = vadd.f32 %v4927, %v4937
      %v4946 = vadd.f32 %v4928, %v4938
      %v4947 = vadd.f32 %v4929, %v4939
      %v4948 = vadd.f32 %v4930, %v4940
      %v4949 = vadd.f32 %v4931, %v4941
      %v4950 = vadd.f32 %v4932, %v4942
      %s4951 = sld [smem:[#allocation13 + $0xd]]
      %v4952 = vstv %s4951
      %v4953 = vmul.f32 %v4952, %v4888
      %v4954 = vmul.f32 %v4952, %v4889
      %v4955 = vmul.f32 %v4952, %v4890
      %v4956 = vmul.f32 %v4952, %v4891
      %v4957 = vmul.f32 %v4952, %v4892
      %v4958 = vmul.f32 %v4952, %v4893
      %v4959 = vmul.f32 %v4952, %v4894
      %v4960 = vmul.f32 %v4952, %v4895
      %v4961 = vadd.f32 %v4943, %v4953
      %v4962 = vadd.f32 %v4944, %v4954
      %v4963 = vadd.f32 %v4945, %v4955
      %v4964 = vadd.f32 %v4946, %v4956
      %v4965 = vadd.f32 %v4947, %v4957
      %v4966 = vadd.f32 %v4948, %v4958
      %v4967 = vadd.f32 %v4949, %v4959
      %v4968 = vadd.f32 %v4950, %v4960
      %s4969 = sld [smem:[#allocation13 + $0xe]]
      %v4970 = vstv %s4969
      %v4971 = vmul.f32 %v4970, %v4889
      %v4972 = vmul.f32 %v4970, %v4890
      %v4973 = vmul.f32 %v4970, %v4891
      %v4974 = vmul.f32 %v4970, %v4892
      %v4975 = vmul.f32 %v4970, %v4893
      %v4976 = vmul.f32 %v4970, %v4894
      %v4977 = vmul.f32 %v4970, %v4895
      %v4978 = vmul.f32 %v4970, %v4896
      %v4979 = vadd.f32 %v4961, %v4971
      %v4980 = vadd.f32 %v4962, %v4972
      %v4981 = vadd.f32 %v4963, %v4973
      %v4982 = vadd.f32 %v4964, %v4974
      %v4983 = vadd.f32 %v4965, %v4975
      %v4984 = vadd.f32 %v4966, %v4976
      %v4985 = vadd.f32 %v4967, %v4977
      %v4986 = vadd.f32 %v4968, %v4978
      %v4987 = vmul.f32 %v4721, %v4885
      %v4988 = vmul.f32 %v4721, %v4886
      %v4989 = vmul.f32 %v4721, %v4887
      %v4990 = vmul.f32 %v4721, %v4888
      %v4991 = vmul.f32 %v4721, %v4889
      %v4992 = vmul.f32 %v4721, %v4890
      %v4993 = vmul.f32 %v4721, %v4891
      %v4994 = vmul.f32 %v4721, %v4892
      %v4995 = vadd.f32 %v4874, %v4987
      %v4996 = vadd.f32 %v4875, %v4988
      %v4997 = vadd.f32 %v4876, %v4989
      %v4998 = vadd.f32 %v4877, %v4990
      %v4999 = vadd.f32 %v4878, %v4991
      %v5000 = vadd.f32 %v4879, %v4992
      %v5001 = vadd.f32 %v4880, %v4993
      %v5002 = vadd.f32 %v4881, %v4994
      %v5003 = vmul.f32 %v4739, %v4886
      %v5004 = vmul.f32 %v4739, %v4887
      %v5005 = vmul.f32 %v4739, %v4888
      %v5006 = vmul.f32 %v4739, %v4889
      %v5007 = vmul.f32 %v4739, %v4890
      %v5008 = vmul.f32 %v4739, %v4891
      %v5009 = vmul.f32 %v4739, %v4892
      %v5010 = vmul.f32 %v4739, %v4893
      %v5011 = vadd.f32 %v4995, %v5003
      %v5012 = vadd.f32 %v4996, %v5004
      %v5013 = vadd.f32 %v4997, %v5005
      %v5014 = vadd.f32 %v4998, %v5006
      %v5015 = vadd.f32 %v4999, %v5007
      %v5016 = vadd.f32 %v5000, %v5008
      %v5017 = vadd.f32 %v5001, %v5009
      %v5018 = vadd.f32 %v5002, %v5010
      %v5019 = vmul.f32 %v4757, %v4887
      %v5020 = vmul.f32 %v4757, %v4888
      %v5021 = vmul.f32 %v4757, %v4889
      %v5022 = vmul.f32 %v4757, %v4890
      %v5023 = vmul.f32 %v4757, %v4891
      %v5024 = vmul.f32 %v4757, %v4892
      %v5025 = vmul.f32 %v4757, %v4893
      %v5026 = vmul.f32 %v4757, %v4894
      %v5027 = vadd.f32 %v5011, %v5019
      %v5028 = vadd.f32 %v5012, %v5020
      %v5029 = vadd.f32 %v5013, %v5021
      %v5030 = vadd.f32 %v5014, %v5022
      %v5031 = vadd.f32 %v5015, %v5023
      %v5032 = vadd.f32 %v5016, %v5024
      %v5033 = vadd.f32 %v5017, %v5025
      %v5034 = vadd.f32 %v5018, %v5026
      %v5035 = vmul.f32 %v4775, %v4888
      %v5036 = vmul.f32 %v4775, %v4889
      %v5037 = vmul.f32 %v4775, %v4890
      %v5038 = vmul.f32 %v4775, %v4891
      %v5039 = vmul.f32 %v4775, %v4892
      %v5040 = vmul.f32 %v4775, %v4893
      %v5041 = vmul.f32 %v4775, %v4894
      %v5042 = vmul.f32 %v4775, %v4895
      %v5043 = vadd.f32 %v5027, %v5035
      %v5044 = vadd.f32 %v5028, %v5036
      %v5045 = vadd.f32 %v5029, %v5037
      %v5046 = vadd.f32 %v5030, %v5038
      %v5047 = vadd.f32 %v5031, %v5039
      %v5048 = vadd.f32 %v5032, %v5040
      %v5049 = vadd.f32 %v5033, %v5041
      %v5050 = vadd.f32 %v5034, %v5042
      %v5051 = vmul.f32 %v4793, %v4889
      %v5052 = vmul.f32 %v4793, %v4890
      %v5053 = vmul.f32 %v4793, %v4891
      %v5054 = vmul.f32 %v4793, %v4892
      %v5055 = vmul.f32 %v4793, %v4893
      %v5056 = vmul.f32 %v4793, %v4894
      %v5057 = vmul.f32 %v4793, %v4895
      %v5058 = vmul.f32 %v4793, %v4896
      %v5059 = vadd.f32 %v5043, %v5051
      %v5060 = vadd.f32 %v5044, %v5052
      %v5061 = vadd.f32 %v5045, %v5053
      %v5062 = vadd.f32 %v5046, %v5054
      %v5063 = vadd.f32 %v5047, %v5055
      %v5064 = vadd.f32 %v5048, %v5056
      %v5065 = vadd.f32 %v5049, %v5057
      %v5066 = vadd.f32 %v5050, %v5058
      %s5067 = sadd.s32 %s4608, 3
      %s5068 = smul.u32 %s5067, 96
      %s5069 = scalar_lea.vmem [#allocation3], %s5068
      %v5070 = vld [vmem:[%s5069] sm:$0xff]
      %v5071 = vld [vmem:[%s5069 + $0x8] sm:$0xff]
      %v5072 = vld [vmem:[%s5069 + $0x10] sm:$0xff]
      %v5073 = vld [vmem:[%s5069 + $0x18] sm:$0xff]
      %v5074 = vld [vmem:[%s5069 + $0x20] sm:$0xff]
      %v5075 = vld [vmem:[%s5069 + $0x28] sm:$0xff]
      %v5076 = vld [vmem:[%s5069 + $0x30] sm:$0xff]
      %v5077 = vld [vmem:[%s5069 + $0x38] sm:$0xff]
      %v5078 = vld [vmem:[%s5069 + $0x40] sm:$0xff]
      %v5079 = vld [vmem:[%s5069 + $0x48] sm:$0xff]
      %v5080 = vld [vmem:[%s5069 + $0x50] sm:$0xff]
      %v5081 = vld [vmem:[%s5069 + $0x58] sm:$0xff]
      %s5082 = sld [smem:[#allocation13 + $0xf]]
      %v5083 = vstv %s5082
      %v5084 = vmul.f32 %v5083, %v5070
      %v5085 = vmul.f32 %v5083, %v5071
      %v5086 = vmul.f32 %v5083, %v5072
      %v5087 = vmul.f32 %v5083, %v5073
      %v5088 = vmul.f32 %v5083, %v5074
      %v5089 = vmul.f32 %v5083, %v5075
      %v5090 = vmul.f32 %v5083, %v5076
      %v5091 = vmul.f32 %v5083, %v5077
      %v5092 = vadd.f32 %v4979, %v5084
      %v5093 = vadd.f32 %v4980, %v5085
      %v5094 = vadd.f32 %v4981, %v5086
      %v5095 = vadd.f32 %v4982, %v5087
      %v5096 = vadd.f32 %v4983, %v5088
      %v5097 = vadd.f32 %v4984, %v5089
      %v5098 = vadd.f32 %v4985, %v5090
      %v5099 = vadd.f32 %v4986, %v5091
      %s5100 = sld [smem:[#allocation13 + $0x10]]
      %v5101 = vstv %s5100
      %v5102 = vmul.f32 %v5101, %v5071
      %v5103 = vmul.f32 %v5101, %v5072
      %v5104 = vmul.f32 %v5101, %v5073
      %v5105 = vmul.f32 %v5101, %v5074
      %v5106 = vmul.f32 %v5101, %v5075
      %v5107 = vmul.f32 %v5101, %v5076
      %v5108 = vmul.f32 %v5101, %v5077
      %v5109 = vmul.f32 %v5101, %v5078
      %v5110 = vadd.f32 %v5092, %v5102
      %v5111 = vadd.f32 %v5093, %v5103
      %v5112 = vadd.f32 %v5094, %v5104
      %v5113 = vadd.f32 %v5095, %v5105
      %v5114 = vadd.f32 %v5096, %v5106
      %v5115 = vadd.f32 %v5097, %v5107
      %v5116 = vadd.f32 %v5098, %v5108
      %v5117 = vadd.f32 %v5099, %v5109
      %s5118 = sld [smem:[#allocation13 + $0x11]]
      %v5119 = vstv %s5118
      %v5120 = vmul.f32 %v5119, %v5072
      %v5121 = vmul.f32 %v5119, %v5073
      %v5122 = vmul.f32 %v5119, %v5074
      %v5123 = vmul.f32 %v5119, %v5075
      %v5124 = vmul.f32 %v5119, %v5076
      %v5125 = vmul.f32 %v5119, %v5077
      %v5126 = vmul.f32 %v5119, %v5078
      %v5127 = vmul.f32 %v5119, %v5079
      %v5128 = vadd.f32 %v5110, %v5120
      %v5129 = vadd.f32 %v5111, %v5121
      %v5130 = vadd.f32 %v5112, %v5122
      %v5131 = vadd.f32 %v5113, %v5123
      %v5132 = vadd.f32 %v5114, %v5124
      %v5133 = vadd.f32 %v5115, %v5125
      %v5134 = vadd.f32 %v5116, %v5126
      %v5135 = vadd.f32 %v5117, %v5127
      %s5136 = sld [smem:[#allocation13 + $0x12]]
      %v5137 = vstv %s5136
      %v5138 = vmul.f32 %v5137, %v5073
      %v5139 = vmul.f32 %v5137, %v5074
      %v5140 = vmul.f32 %v5137, %v5075
      %v5141 = vmul.f32 %v5137, %v5076
      %v5142 = vmul.f32 %v5137, %v5077
      %v5143 = vmul.f32 %v5137, %v5078
      %v5144 = vmul.f32 %v5137, %v5079
      %v5145 = vmul.f32 %v5137, %v5080
      %v5146 = vadd.f32 %v5128, %v5138
      %v5147 = vadd.f32 %v5129, %v5139
      %v5148 = vadd.f32 %v5130, %v5140
      %v5149 = vadd.f32 %v5131, %v5141
      %v5150 = vadd.f32 %v5132, %v5142
      %v5151 = vadd.f32 %v5133, %v5143
      %v5152 = vadd.f32 %v5134, %v5144
      %v5153 = vadd.f32 %v5135, %v5145
      %s5154 = sld [smem:[#allocation13 + $0x13]]
      %v5155 = vstv %s5154
      %v5156 = vmul.f32 %v5155, %v5074
      %v5157 = vmul.f32 %v5155, %v5075
      %v5158 = vmul.f32 %v5155, %v5076
      %v5159 = vmul.f32 %v5155, %v5077
      %v5160 = vmul.f32 %v5155, %v5078
      %v5161 = vmul.f32 %v5155, %v5079
      %v5162 = vmul.f32 %v5155, %v5080
      %v5163 = vmul.f32 %v5155, %v5081
      %v5164 = vadd.f32 %v5146, %v5156
      %v5165 = vadd.f32 %v5147, %v5157
      %v5166 = vadd.f32 %v5148, %v5158
      %v5167 = vadd.f32 %v5149, %v5159
      %v5168 = vadd.f32 %v5150, %v5160
      %v5169 = vadd.f32 %v5151, %v5161
      %v5170 = vadd.f32 %v5152, %v5162
      %v5171 = vadd.f32 %v5153, %v5163
      %v5172 = vmul.f32 %v4898, %v5070
      %v5173 = vmul.f32 %v4898, %v5071
      %v5174 = vmul.f32 %v4898, %v5072
      %v5175 = vmul.f32 %v4898, %v5073
      %v5176 = vmul.f32 %v4898, %v5074
      %v5177 = vmul.f32 %v4898, %v5075
      %v5178 = vmul.f32 %v4898, %v5076
      %v5179 = vmul.f32 %v4898, %v5077
      %v5180 = vadd.f32 %v5059, %v5172
      %v5181 = vadd.f32 %v5060, %v5173
      %v5182 = vadd.f32 %v5061, %v5174
      %v5183 = vadd.f32 %v5062, %v5175
      %v5184 = vadd.f32 %v5063, %v5176
      %v5185 = vadd.f32 %v5064, %v5177
      %v5186 = vadd.f32 %v5065, %v5178
      %v5187 = vadd.f32 %v5066, %v5179
      %v5188 = vmul.f32 %v4916, %v5071
      %v5189 = vmul.f32 %v4916, %v5072
      %v5190 = vmul.f32 %v4916, %v5073
      %v5191 = vmul.f32 %v4916, %v5074
      %v5192 = vmul.f32 %v4916, %v5075
      %v5193 = vmul.f32 %v4916, %v5076
      %v5194 = vmul.f32 %v4916, %v5077
      %v5195 = vmul.f32 %v4916, %v5078
      %v5196 = vadd.f32 %v5180, %v5188
      %v5197 = vadd.f32 %v5181, %v5189
      %v5198 = vadd.f32 %v5182, %v5190
      %v5199 = vadd.f32 %v5183, %v5191
      %v5200 = vadd.f32 %v5184, %v5192
      %v5201 = vadd.f32 %v5185, %v5193
      %v5202 = vadd.f32 %v5186, %v5194
      %v5203 = vadd.f32 %v5187, %v5195
      %v5204 = vmul.f32 %v4934, %v5072
      %v5205 = vmul.f32 %v4934, %v5073
      %v5206 = vmul.f32 %v4934, %v5074
      %v5207 = vmul.f32 %v4934, %v5075
      %v5208 = vmul.f32 %v4934, %v5076
      %v5209 = vmul.f32 %v4934, %v5077
      %v5210 = vmul.f32 %v4934, %v5078
      %v5211 = vmul.f32 %v4934, %v5079
      %v5212 = vadd.f32 %v5196, %v5204
      %v5213 = vadd.f32 %v5197, %v5205
      %v5214 = vadd.f32 %v5198, %v5206
      %v5215 = vadd.f32 %v5199, %v5207
      %v5216 = vadd.f32 %v5200, %v5208
      %v5217 = vadd.f32 %v5201, %v5209
      %v5218 = vadd.f32 %v5202, %v5210
      %v5219 = vadd.f32 %v5203, %v5211
      %v5220 = vmul.f32 %v4952, %v5073
      %v5221 = vmul.f32 %v4952, %v5074
      %v5222 = vmul.f32 %v4952, %v5075
      %v5223 = vmul.f32 %v4952, %v5076
      %v5224 = vmul.f32 %v4952, %v5077
      %v5225 = vmul.f32 %v4952, %v5078
      %v5226 = vmul.f32 %v4952, %v5079
      %v5227 = vmul.f32 %v4952, %v5080
      %v5228 = vadd.f32 %v5212, %v5220
      %v5229 = vadd.f32 %v5213, %v5221
      %v5230 = vadd.f32 %v5214, %v5222
      %v5231 = vadd.f32 %v5215, %v5223
      %v5232 = vadd.f32 %v5216, %v5224
      %v5233 = vadd.f32 %v5217, %v5225
      %v5234 = vadd.f32 %v5218, %v5226
      %v5235 = vadd.f32 %v5219, %v5227
      %v5236 = vmul.f32 %v4970, %v5074
      %v5237 = vmul.f32 %v4970, %v5075
      %v5238 = vmul.f32 %v4970, %v5076
      %v5239 = vmul.f32 %v4970, %v5077
      %v5240 = vmul.f32 %v4970, %v5078
      %v5241 = vmul.f32 %v4970, %v5079
      %v5242 = vmul.f32 %v4970, %v5080
      %v5243 = vmul.f32 %v4970, %v5081
      %v5244 = vadd.f32 %v5228, %v5236
      %v5245 = vadd.f32 %v5229, %v5237
      %v5246 = vadd.f32 %v5230, %v5238
      %v5247 = vadd.f32 %v5231, %v5239
      %v5248 = vadd.f32 %v5232, %v5240
      %v5249 = vadd.f32 %v5233, %v5241
      %v5250 = vadd.f32 %v5234, %v5242
      %v5251 = vadd.f32 %v5235, %v5243
      %s5252 = sadd.s32 %s4608, 4
      %s5253 = smul.u32 %s5252, 96
      %s5254 = scalar_lea.vmem [#allocation3], %s5253
      %v5255 = vld [vmem:[%s5254] sm:$0xff]
      %v5256 = vld [vmem:[%s5254 + $0x8] sm:$0xff]
      %v5257 = vld [vmem:[%s5254 + $0x10] sm:$0xff]
      %v5258 = vld [vmem:[%s5254 + $0x18] sm:$0xff]
      %v5259 = vld [vmem:[%s5254 + $0x20] sm:$0xff]
      %v5260 = vld [vmem:[%s5254 + $0x28] sm:$0xff]
      %v5261 = vld [vmem:[%s5254 + $0x30] sm:$0xff]
      %v5262 = vld [vmem:[%s5254 + $0x38] sm:$0xff]
      %v5263 = vld [vmem:[%s5254 + $0x40] sm:$0xff]
      %v5264 = vld [vmem:[%s5254 + $0x48] sm:$0xff]
      %v5265 = vld [vmem:[%s5254 + $0x50] sm:$0xff]
      %v5266 = vld [vmem:[%s5254 + $0x58] sm:$0xff]
      %s5267 = sld [smem:[#allocation13 + $0x14]]
      %v5268 = vstv %s5267
      %v5269 = vmul.f32 %v5268, %v5255
      %v5270 = vmul.f32 %v5268, %v5256
      %v5271 = vmul.f32 %v5268, %v5257
      %v5272 = vmul.f32 %v5268, %v5258
      %v5273 = vmul.f32 %v5268, %v5259
      %v5274 = vmul.f32 %v5268, %v5260
      %v5275 = vmul.f32 %v5268, %v5261
      %v5276 = vmul.f32 %v5268, %v5262
      %v5277 = vadd.f32 %v5164, %v5269
      %v5278 = vadd.f32 %v5165, %v5270
      %v5279 = vadd.f32 %v5166, %v5271
      %v5280 = vadd.f32 %v5167, %v5272
      %v5281 = vadd.f32 %v5168, %v5273
      %v5282 = vadd.f32 %v5169, %v5274
      %v5283 = vadd.f32 %v5170, %v5275
      %v5284 = vadd.f32 %v5171, %v5276
      %s5285 = sld [smem:[#allocation13 + $0x15]]
      %v5286 = vstv %s5285
      %v5287 = vmul.f32 %v5286, %v5256
      %v5288 = vmul.f32 %v5286, %v5257
      %v5289 = vmul.f32 %v5286, %v5258
      %v5290 = vmul.f32 %v5286, %v5259
      %v5291 = vmul.f32 %v5286, %v5260
      %v5292 = vmul.f32 %v5286, %v5261
      %v5293 = vmul.f32 %v5286, %v5262
      %v5294 = vmul.f32 %v5286, %v5263
      %v5295 = vadd.f32 %v5277, %v5287
      %v5296 = vadd.f32 %v5278, %v5288
      %v5297 = vadd.f32 %v5279, %v5289
      %v5298 = vadd.f32 %v5280, %v5290
      %v5299 = vadd.f32 %v5281, %v5291
      %v5300 = vadd.f32 %v5282, %v5292
      %v5301 = vadd.f32 %v5283, %v5293
      %v5302 = vadd.f32 %v5284, %v5294
      %s5303 = sld [smem:[#allocation13 + $0x16]]
      %v5304 = vstv %s5303
      %v5305 = vmul.f32 %v5304, %v5257
      %v5306 = vmul.f32 %v5304, %v5258
      %v5307 = vmul.f32 %v5304, %v5259
      %v5308 = vmul.f32 %v5304, %v5260
      %v5309 = vmul.f32 %v5304, %v5261
      %v5310 = vmul.f32 %v5304, %v5262
      %v5311 = vmul.f32 %v5304, %v5263
      %v5312 = vmul.f32 %v5304, %v5264
      %v5313 = vadd.f32 %v5295, %v5305
      %v5314 = vadd.f32 %v5296, %v5306
      %v5315 = vadd.f32 %v5297, %v5307
      %v5316 = vadd.f32 %v5298, %v5308
      %v5317 = vadd.f32 %v5299, %v5309
      %v5318 = vadd.f32 %v5300, %v5310
      %v5319 = vadd.f32 %v5301, %v5311
      %v5320 = vadd.f32 %v5302, %v5312
      %s5321 = sld [smem:[#allocation13 + $0x17]]
      %v5322 = vstv %s5321
      %v5323 = vmul.f32 %v5322, %v5258
      %v5324 = vmul.f32 %v5322, %v5259
      %v5325 = vmul.f32 %v5322, %v5260
      %v5326 = vmul.f32 %v5322, %v5261
      %v5327 = vmul.f32 %v5322, %v5262
      %v5328 = vmul.f32 %v5322, %v5263
      %v5329 = vmul.f32 %v5322, %v5264
      %v5330 = vmul.f32 %v5322, %v5265
      %v5331 = vadd.f32 %v5313, %v5323
      %v5332 = vadd.f32 %v5314, %v5324
      %v5333 = vadd.f32 %v5315, %v5325
      %v5334 = vadd.f32 %v5316, %v5326
      %v5335 = vadd.f32 %v5317, %v5327
      %v5336 = vadd.f32 %v5318, %v5328
      %v5337 = vadd.f32 %v5319, %v5329
      %v5338 = vadd.f32 %v5320, %v5330
      %s5339 = sld [smem:[#allocation13 + $0x18]]
      %v5340 = vstv %s5339
      %v5341 = vmul.f32 %v5340, %v5259
      %v5342 = vmul.f32 %v5340, %v5260
      %v5343 = vmul.f32 %v5340, %v5261
      %v5344 = vmul.f32 %v5340, %v5262
      %v5345 = vmul.f32 %v5340, %v5263
      %v5346 = vmul.f32 %v5340, %v5264
      %v5347 = vmul.f32 %v5340, %v5265
      %v5348 = vmul.f32 %v5340, %v5266
      %v5349 = vadd.f32 %v5331, %v5341
      %v5350 = vadd.f32 %v5332, %v5342
      %v5351 = vadd.f32 %v5333, %v5343
      %v5352 = vadd.f32 %v5334, %v5344
      %v5353 = vadd.f32 %v5335, %v5345
      %v5354 = vadd.f32 %v5336, %v5346
      %v5355 = vadd.f32 %v5337, %v5347
      %v5356 = vadd.f32 %v5338, %v5348
      %v5357 = vmul.f32 %v5083, %v5255
      %v5358 = vmul.f32 %v5083, %v5256
      %v5359 = vmul.f32 %v5083, %v5257
      %v5360 = vmul.f32 %v5083, %v5258
      %v5361 = vmul.f32 %v5083, %v5259
      %v5362 = vmul.f32 %v5083, %v5260
      %v5363 = vmul.f32 %v5083, %v5261
      %v5364 = vmul.f32 %v5083, %v5262
      %v5365 = vadd.f32 %v5244, %v5357
      %v5366 = vadd.f32 %v5245, %v5358
      %v5367 = vadd.f32 %v5246, %v5359
      %v5368 = vadd.f32 %v5247, %v5360
      %v5369 = vadd.f32 %v5248, %v5361
      %v5370 = vadd.f32 %v5249, %v5362
      %v5371 = vadd.f32 %v5250, %v5363
      %v5372 = vadd.f32 %v5251, %v5364
      %v5373 = vmul.f32 %v5101, %v5256
      %v5374 = vmul.f32 %v5101, %v5257
      %v5375 = vmul.f32 %v5101, %v5258
      %v5376 = vmul.f32 %v5101, %v5259
      %v5377 = vmul.f32 %v5101, %v5260
      %v5378 = vmul.f32 %v5101, %v5261
      %v5379 = vmul.f32 %v5101, %v5262
      %v5380 = vmul.f32 %v5101, %v5263
      %v5381 = vadd.f32 %v5365, %v5373
      %v5382 = vadd.f32 %v5366, %v5374
      %v5383 = vadd.f32 %v5367, %v5375
      %v5384 = vadd.f32 %v5368, %v5376
      %v5385 = vadd.f32 %v5369, %v5377
      %v5386 = vadd.f32 %v5370, %v5378
      %v5387 = vadd.f32 %v5371, %v5379
      %v5388 = vadd.f32 %v5372, %v5380
      %v5389 = vmul.f32 %v5119, %v5257
      %v5390 = vmul.f32 %v5119, %v5258
      %v5391 = vmul.f32 %v5119, %v5259
      %v5392 = vmul.f32 %v5119, %v5260
      %v5393 = vmul.f32 %v5119, %v5261
      %v5394 = vmul.f32 %v5119, %v5262
      %v5395 = vmul.f32 %v5119, %v5263
      %v5396 = vmul.f32 %v5119, %v5264
      %v5397 = vadd.f32 %v5381, %v5389
      %v5398 = vadd.f32 %v5382, %v5390
      %v5399 = vadd.f32 %v5383, %v5391
      %v5400 = vadd.f32 %v5384, %v5392
      %v5401 = vadd.f32 %v5385, %v5393
      %v5402 = vadd.f32 %v5386, %v5394
      %v5403 = vadd.f32 %v5387, %v5395
      %v5404 = vadd.f32 %v5388, %v5396
      %v5405 = vmul.f32 %v5137, %v5258
      %v5406 = vmul.f32 %v5137, %v5259
      %v5407 = vmul.f32 %v5137, %v5260
      %v5408 = vmul.f32 %v5137, %v5261
      %v5409 = vmul.f32 %v5137, %v5262
      %v5410 = vmul.f32 %v5137, %v5263
      %v5411 = vmul.f32 %v5137, %v5264
      %v5412 = vmul.f32 %v5137, %v5265
      %v5413 = vadd.f32 %v5397, %v5405
      %v5414 = vadd.f32 %v5398, %v5406
      %v5415 = vadd.f32 %v5399, %v5407
      %v5416 = vadd.f32 %v5400, %v5408
      %v5417 = vadd.f32 %v5401, %v5409
      %v5418 = vadd.f32 %v5402, %v5410
      %v5419 = vadd.f32 %v5403, %v5411
      %v5420 = vadd.f32 %v5404, %v5412
      %v5421 = vmul.f32 %v5155, %v5259
      %v5422 = vmul.f32 %v5155, %v5260
      %v5423 = vmul.f32 %v5155, %v5261
      %v5424 = vmul.f32 %v5155, %v5262
      %v5425 = vmul.f32 %v5155, %v5263
      %v5426 = vmul.f32 %v5155, %v5264
      %v5427 = vmul.f32 %v5155, %v5265
      %v5428 = vmul.f32 %v5155, %v5266
      %v5429 = vadd.f32 %v5413, %v5421
      %v5430 = vadd.f32 %v5414, %v5422
      %v5431 = vadd.f32 %v5415, %v5423
      %v5432 = vadd.f32 %v5416, %v5424
      %v5433 = vadd.f32 %v5417, %v5425
      %v5434 = vadd.f32 %v5418, %v5426
      %v5435 = vadd.f32 %v5419, %v5427
      %v5436 = vadd.f32 %v5420, %v5428
      %s5437 = sadd.s32 %s4608, 5
      %s5438 = smul.u32 %s5437, 96
      %s5439 = scalar_lea.vmem [#allocation3], %s5438
      %v5440 = vld [vmem:[%s5439] sm:$0xff]
      %v5441 = vld [vmem:[%s5439 + $0x8] sm:$0xff]
      %v5442 = vld [vmem:[%s5439 + $0x10] sm:$0xff]
      %v5443 = vld [vmem:[%s5439 + $0x18] sm:$0xff]
      %v5444 = vld [vmem:[%s5439 + $0x20] sm:$0xff]
      %v5445 = vld [vmem:[%s5439 + $0x28] sm:$0xff]
      %v5446 = vld [vmem:[%s5439 + $0x30] sm:$0xff]
      %v5447 = vld [vmem:[%s5439 + $0x38] sm:$0xff]
      %v5448 = vld [vmem:[%s5439 + $0x40] sm:$0xff]
      %v5449 = vld [vmem:[%s5439 + $0x48] sm:$0xff]
      %v5450 = vld [vmem:[%s5439 + $0x50] sm:$0xff]
      %v5451 = vld [vmem:[%s5439 + $0x58] sm:$0xff]
      %v5452 = vmul.f32 %v5268, %v5440
      %v5453 = vmul.f32 %v5268, %v5441
      %v5454 = vmul.f32 %v5268, %v5442
      %v5455 = vmul.f32 %v5268, %v5443
      %v5456 = vmul.f32 %v5268, %v5444
      %v5457 = vmul.f32 %v5268, %v5445
      %v5458 = vmul.f32 %v5268, %v5446
      %v5459 = vmul.f32 %v5268, %v5447
      %v5460 = vadd.f32 %v5429, %v5452
      %v5461 = vadd.f32 %v5430, %v5453
      %v5462 = vadd.f32 %v5431, %v5454
      %v5463 = vadd.f32 %v5432, %v5455
      %v5464 = vadd.f32 %v5433, %v5456
      %v5465 = vadd.f32 %v5434, %v5457
      %v5466 = vadd.f32 %v5435, %v5458
      %v5467 = vadd.f32 %v5436, %v5459
      %v5468 = vmul.f32 %v5286, %v5441
      %v5469 = vmul.f32 %v5286, %v5442
      %v5470 = vmul.f32 %v5286, %v5443
      %v5471 = vmul.f32 %v5286, %v5444
      %v5472 = vmul.f32 %v5286, %v5445
      %v5473 = vmul.f32 %v5286, %v5446
      %v5474 = vmul.f32 %v5286, %v5447
      %v5475 = vmul.f32 %v5286, %v5448
      %v5476 = vadd.f32 %v5460, %v5468
      %v5477 = vadd.f32 %v5461, %v5469
      %v5478 = vadd.f32 %v5462, %v5470
      %v5479 = vadd.f32 %v5463, %v5471
      %v5480 = vadd.f32 %v5464, %v5472
      %v5481 = vadd.f32 %v5465, %v5473
      %v5482 = vadd.f32 %v5466, %v5474
      %v5483 = vadd.f32 %v5467, %v5475
      %v5484 = vmul.f32 %v5304, %v5442
      %v5485 = vmul.f32 %v5304, %v5443
      %v5486 = vmul.f32 %v5304, %v5444
      %v5487 = vmul.f32 %v5304, %v5445
      %v5488 = vmul.f32 %v5304, %v5446
      %v5489 = vmul.f32 %v5304, %v5447
      %v5490 = vmul.f32 %v5304, %v5448
      %v5491 = vmul.f32 %v5304, %v5449
      %v5492 = vadd.f32 %v5476, %v5484
      %v5493 = vadd.f32 %v5477, %v5485
      %v5494 = vadd.f32 %v5478, %v5486
      %v5495 = vadd.f32 %v5479, %v5487
      %v5496 = vadd.f32 %v5480, %v5488
      %v5497 = vadd.f32 %v5481, %v5489
      %v5498 = vadd.f32 %v5482, %v5490
      %v5499 = vadd.f32 %v5483, %v5491
      %v5500 = vmul.f32 %v5322, %v5443
      %v5501 = vmul.f32 %v5322, %v5444
      %v5502 = vmul.f32 %v5322, %v5445
      %v5503 = vmul.f32 %v5322, %v5446
      %v5504 = vmul.f32 %v5322, %v5447
      %v5505 = vmul.f32 %v5322, %v5448
      %v5506 = vmul.f32 %v5322, %v5449
      %v5507 = vmul.f32 %v5322, %v5450
      %v5508 = vadd.f32 %v5492, %v5500
      %v5509 = vadd.f32 %v5493, %v5501
      %v5510 = vadd.f32 %v5494, %v5502
      %v5511 = vadd.f32 %v5495, %v5503
      %v5512 = vadd.f32 %v5496, %v5504
      %v5513 = vadd.f32 %v5497, %v5505
      %v5514 = vadd.f32 %v5498, %v5506
      %v5515 = vadd.f32 %v5499, %v5507
      %v5516 = vmul.f32 %v5340, %v5444
      %v5517 = vmul.f32 %v5340, %v5445
      %v5518 = vmul.f32 %v5340, %v5446
      %v5519 = vmul.f32 %v5340, %v5447
      %v5520 = vmul.f32 %v5340, %v5448
      %v5521 = vmul.f32 %v5340, %v5449
      %v5522 = vmul.f32 %v5340, %v5450
      %v5523 = vmul.f32 %v5340, %v5451
      %v5524 = vadd.f32 %v5508, %v5516
      %v5525 = vadd.f32 %v5509, %v5517
      %v5526 = vadd.f32 %v5510, %v5518
      %v5527 = vadd.f32 %v5511, %v5519
      %v5528 = vadd.f32 %v5512, %v5520
      %v5529 = vadd.f32 %v5513, %v5521
      %v5530 = vadd.f32 %v5514, %v5522
      %v5531 = vadd.f32 %v5515, %v5523
      %s5532 = scalar_lea.vmem [#allocation4], %s4609
      %v5533 = vld [vmem:[%s5532] sm:$0xff]
      %v5534 = vld [vmem:[%s5532 + $0x8] sm:$0xff]
      %v5535 = vld [vmem:[%s5532 + $0x10] sm:$0xff]
      %v5536 = vld [vmem:[%s5532 + $0x18] sm:$0xff]
      %v5537 = vld [vmem:[%s5532 + $0x20] sm:$0xff]
      %v5538 = vld [vmem:[%s5532 + $0x28] sm:$0xff]
      %v5539 = vld [vmem:[%s5532 + $0x30] sm:$0xff]
      %v5540 = vld [vmem:[%s5532 + $0x38] sm:$0xff]
      %v5541 = vld [vmem:[%s5532 + $0x40] sm:$0xff]
      %v5542 = vld [vmem:[%s5532 + $0x48] sm:$0xff]
      %v5543 = vld [vmem:[%s5532 + $0x50] sm:$0xff]
      %v5544 = vld [vmem:[%s5532 + $0x58] sm:$0xff]
      %s5545 = sld [smem:[#allocation13 + $0x19]]
      %v5546 = vstv %s5545
      %v5547 = vmul.f32 %v5546, %v5533
      %v5548 = vmul.f32 %v5546, %v5534
      %v5549 = vmul.f32 %v5546, %v5535
      %v5550 = vmul.f32 %v5546, %v5536
      %v5551 = vmul.f32 %v5546, %v5537
      %v5552 = vmul.f32 %v5546, %v5538
      %v5553 = vmul.f32 %v5546, %v5539
      %v5554 = vmul.f32 %v5546, %v5540
      %v5555 = vadd.f32 %v5349, %v5547
      %v5556 = vadd.f32 %v5350, %v5548
      %v5557 = vadd.f32 %v5351, %v5549
      %v5558 = vadd.f32 %v5352, %v5550
      %v5559 = vadd.f32 %v5353, %v5551
      %v5560 = vadd.f32 %v5354, %v5552
      %v5561 = vadd.f32 %v5355, %v5553
      %v5562 = vadd.f32 %v5356, %v5554
      %s5563 = sld [smem:[#allocation13 + $0x1a]]
      %v5564 = vstv %s5563
      %v5565 = vmul.f32 %v5564, %v5534
      %v5566 = vmul.f32 %v5564, %v5535
      %v5567 = vmul.f32 %v5564, %v5536
      %v5568 = vmul.f32 %v5564, %v5537
      %v5569 = vmul.f32 %v5564, %v5538
      %v5570 = vmul.f32 %v5564, %v5539
      %v5571 = vmul.f32 %v5564, %v5540
      %v5572 = vmul.f32 %v5564, %v5541
      %v5573 = vadd.f32 %v5555, %v5565
      %v5574 = vadd.f32 %v5556, %v5566
      %v5575 = vadd.f32 %v5557, %v5567
      %v5576 = vadd.f32 %v5558, %v5568
      %v5577 = vadd.f32 %v5559, %v5569
      %v5578 = vadd.f32 %v5560, %v5570
      %v5579 = vadd.f32 %v5561, %v5571
      %v5580 = vadd.f32 %v5562, %v5572
      %s5581 = sld [smem:[#allocation13 + $0x1b]]
      %v5582 = vstv %s5581
      %v5583 = vmul.f32 %v5582, %v5535
      %v5584 = vmul.f32 %v5582, %v5536
      %v5585 = vmul.f32 %v5582, %v5537
      %v5586 = vmul.f32 %v5582, %v5538
      %v5587 = vmul.f32 %v5582, %v5539
      %v5588 = vmul.f32 %v5582, %v5540
      %v5589 = vmul.f32 %v5582, %v5541
      %v5590 = vmul.f32 %v5582, %v5542
      %v5591 = vadd.f32 %v5573, %v5583
      %v5592 = vadd.f32 %v5574, %v5584
      %v5593 = vadd.f32 %v5575, %v5585
      %v5594 = vadd.f32 %v5576, %v5586
      %v5595 = vadd.f32 %v5577, %v5587
      %v5596 = vadd.f32 %v5578, %v5588
      %v5597 = vadd.f32 %v5579, %v5589
      %v5598 = vadd.f32 %v5580, %v5590
      %s5599 = sld [smem:[#allocation13 + $0x1c]]
      %v5600 = vstv %s5599
      %v5601 = vmul.f32 %v5600, %v5536
      %v5602 = vmul.f32 %v5600, %v5537
      %v5603 = vmul.f32 %v5600, %v5538
      %v5604 = vmul.f32 %v5600, %v5539
      %v5605 = vmul.f32 %v5600, %v5540
      %v5606 = vmul.f32 %v5600, %v5541
      %v5607 = vmul.f32 %v5600, %v5542
      %v5608 = vmul.f32 %v5600, %v5543
      %v5609 = vadd.f32 %v5591, %v5601
      %v5610 = vadd.f32 %v5592, %v5602
      %v5611 = vadd.f32 %v5593, %v5603
      %v5612 = vadd.f32 %v5594, %v5604
      %v5613 = vadd.f32 %v5595, %v5605
      %v5614 = vadd.f32 %v5596, %v5606
      %v5615 = vadd.f32 %v5597, %v5607
      %v5616 = vadd.f32 %v5598, %v5608
      %s5617 = sld [smem:[#allocation13 + $0x1d]]
      %v5618 = vstv %s5617
      %v5619 = vmul.f32 %v5618, %v5537
      %v5620 = vmul.f32 %v5618, %v5538
      %v5621 = vmul.f32 %v5618, %v5539
      %v5622 = vmul.f32 %v5618, %v5540
      %v5623 = vmul.f32 %v5618, %v5541
      %v5624 = vmul.f32 %v5618, %v5542
      %v5625 = vmul.f32 %v5618, %v5543
      %v5626 = vmul.f32 %v5618, %v5544
      %v5627 = vadd.f32 %v5609, %v5619
      %v5628 = vadd.f32 %v5610, %v5620
      %v5629 = vadd.f32 %v5611, %v5621
      %v5630 = vadd.f32 %v5612, %v5622
      %v5631 = vadd.f32 %v5613, %v5623
      %v5632 = vadd.f32 %v5614, %v5624
      %v5633 = vadd.f32 %v5615, %v5625
      %v5634 = vadd.f32 %v5616, %v5626
      %s5635 = scalar_lea.vmem [#allocation4], %s4706
      %v5636 = vld [vmem:[%s5635] sm:$0xff]
      %v5637 = vld [vmem:[%s5635 + $0x8] sm:$0xff]
      %v5638 = vld [vmem:[%s5635 + $0x10] sm:$0xff]
      %v5639 = vld [vmem:[%s5635 + $0x18] sm:$0xff]
      %v5640 = vld [vmem:[%s5635 + $0x20] sm:$0xff]
      %v5641 = vld [vmem:[%s5635 + $0x28] sm:$0xff]
      %v5642 = vld [vmem:[%s5635 + $0x30] sm:$0xff]
      %v5643 = vld [vmem:[%s5635 + $0x38] sm:$0xff]
      %v5644 = vld [vmem:[%s5635 + $0x40] sm:$0xff]
      %v5645 = vld [vmem:[%s5635 + $0x48] sm:$0xff]
      %v5646 = vld [vmem:[%s5635 + $0x50] sm:$0xff]
      %v5647 = vld [vmem:[%s5635 + $0x58] sm:$0xff]
      %s5648 = sld [smem:[#allocation13 + $0x1e]]
      %v5649 = vstv %s5648
      %v5650 = vmul.f32 %v5649, %v5636
      %v5651 = vmul.f32 %v5649, %v5637
      %v5652 = vmul.f32 %v5649, %v5638
      %v5653 = vmul.f32 %v5649, %v5639
      %v5654 = vmul.f32 %v5649, %v5640
      %v5655 = vmul.f32 %v5649, %v5641
      %v5656 = vmul.f32 %v5649, %v5642
      %v5657 = vmul.f32 %v5649, %v5643
      %v5658 = vadd.f32 %v5627, %v5650
      %v5659 = vadd.f32 %v5628, %v5651
      %v5660 = vadd.f32 %v5629, %v5652
      %v5661 = vadd.f32 %v5630, %v5653
      %v5662 = vadd.f32 %v5631, %v5654
      %v5663 = vadd.f32 %v5632, %v5655
      %v5664 = vadd.f32 %v5633, %v5656
      %v5665 = vadd.f32 %v5634, %v5657
      %s5666 = sld [smem:[#allocation13 + $0x1f]]
      %v5667 = vstv %s5666
      %v5668 = vmul.f32 %v5667, %v5637
      %v5669 = vmul.f32 %v5667, %v5638
      %v5670 = vmul.f32 %v5667, %v5639
      %v5671 = vmul.f32 %v5667, %v5640
      %v5672 = vmul.f32 %v5667, %v5641
      %v5673 = vmul.f32 %v5667, %v5642
      %v5674 = vmul.f32 %v5667, %v5643
      %v5675 = vmul.f32 %v5667, %v5644
      %v5676 = vadd.f32 %v5658, %v5668
      %v5677 = vadd.f32 %v5659, %v5669
      %v5678 = vadd.f32 %v5660, %v5670
      %v5679 = vadd.f32 %v5661, %v5671
      %v5680 = vadd.f32 %v5662, %v5672
      %v5681 = vadd.f32 %v5663, %v5673
      %v5682 = vadd.f32 %v5664, %v5674
      %v5683 = vadd.f32 %v5665, %v5675
      %s5684 = sld [smem:[#allocation13 + $0x20]]
      %v5685 = vstv %s5684
      %v5686 = vmul.f32 %v5685, %v5638
      %v5687 = vmul.f32 %v5685, %v5639
      %v5688 = vmul.f32 %v5685, %v5640
      %v5689 = vmul.f32 %v5685, %v5641
      %v5690 = vmul.f32 %v5685, %v5642
      %v5691 = vmul.f32 %v5685, %v5643
      %v5692 = vmul.f32 %v5685, %v5644
      %v5693 = vmul.f32 %v5685, %v5645
      %v5694 = vadd.f32 %v5676, %v5686
      %v5695 = vadd.f32 %v5677, %v5687
      %v5696 = vadd.f32 %v5678, %v5688
      %v5697 = vadd.f32 %v5679, %v5689
      %v5698 = vadd.f32 %v5680, %v5690
      %v5699 = vadd.f32 %v5681, %v5691
      %v5700 = vadd.f32 %v5682, %v5692
      %v5701 = vadd.f32 %v5683, %v5693
      %s5702 = sld [smem:[#allocation13 + $0x21]]
      %v5703 = vstv %s5702
      %v5704 = vmul.f32 %v5703, %v5639
      %v5705 = vmul.f32 %v5703, %v5640
      %v5706 = vmul.f32 %v5703, %v5641
      %v5707 = vmul.f32 %v5703, %v5642
      %v5708 = vmul.f32 %v5703, %v5643
      %v5709 = vmul.f32 %v5703, %v5644
      %v5710 = vmul.f32 %v5703, %v5645
      %v5711 = vmul.f32 %v5703, %v5646
      %v5712 = vadd.f32 %v5694, %v5704
      %v5713 = vadd.f32 %v5695, %v5705
      %v5714 = vadd.f32 %v5696, %v5706
      %v5715 = vadd.f32 %v5697, %v5707
      %v5716 = vadd.f32 %v5698, %v5708
      %v5717 = vadd.f32 %v5699, %v5709
      %v5718 = vadd.f32 %v5700, %v5710
      %v5719 = vadd.f32 %v5701, %v5711
      %s5720 = sld [smem:[#allocation13 + $0x22]]
      %v5721 = vstv %s5720
      %v5722 = vmul.f32 %v5721, %v5640
      %v5723 = vmul.f32 %v5721, %v5641
      %v5724 = vmul.f32 %v5721, %v5642
      %v5725 = vmul.f32 %v5721, %v5643
      %v5726 = vmul.f32 %v5721, %v5644
      %v5727 = vmul.f32 %v5721, %v5645
      %v5728 = vmul.f32 %v5721, %v5646
      %v5729 = vmul.f32 %v5721, %v5647
      %v5730 = vadd.f32 %v5712, %v5722
      %v5731 = vadd.f32 %v5713, %v5723
      %v5732 = vadd.f32 %v5714, %v5724
      %v5733 = vadd.f32 %v5715, %v5725
      %v5734 = vadd.f32 %v5716, %v5726
      %v5735 = vadd.f32 %v5717, %v5727
      %v5736 = vadd.f32 %v5718, %v5728
      %v5737 = vadd.f32 %v5719, %v5729
      %v5738 = vmul.f32 %v5546, %v5636
      %v5739 = vmul.f32 %v5546, %v5637
      %v5740 = vmul.f32 %v5546, %v5638
      %v5741 = vmul.f32 %v5546, %v5639
      %v5742 = vmul.f32 %v5546, %v5640
      %v5743 = vmul.f32 %v5546, %v5641
      %v5744 = vmul.f32 %v5546, %v5642
      %v5745 = vmul.f32 %v5546, %v5643
      %v5746 = vadd.f32 %v5524, %v5738
      %v5747 = vadd.f32 %v5525, %v5739
      %v5748 = vadd.f32 %v5526, %v5740
      %v5749 = vadd.f32 %v5527, %v5741
      %v5750 = vadd.f32 %v5528, %v5742
      %v5751 = vadd.f32 %v5529, %v5743
      %v5752 = vadd.f32 %v5530, %v5744
      %v5753 = vadd.f32 %v5531, %v5745
      %v5754 = vmul.f32 %v5564, %v5637
      %v5755 = vmul.f32 %v5564, %v5638
      %v5756 = vmul.f32 %v5564, %v5639
      %v5757 = vmul.f32 %v5564, %v5640
      %v5758 = vmul.f32 %v5564, %v5641
      %v5759 = vmul.f32 %v5564, %v5642
      %v5760 = vmul.f32 %v5564, %v5643
      %v5761 = vmul.f32 %v5564, %v5644
      %v5762 = vadd.f32 %v5746, %v5754
      %v5763 = vadd.f32 %v5747, %v5755
      %v5764 = vadd.f32 %v5748, %v5756
      %v5765 = vadd.f32 %v5749, %v5757
      %v5766 = vadd.f32 %v5750, %v5758
      %v5767 = vadd.f32 %v5751, %v5759
      %v5768 = vadd.f32 %v5752, %v5760
      %v5769 = vadd.f32 %v5753, %v5761
      %v5770 = vmul.f32 %v5582, %v5638
      %v5771 = vmul.f32 %v5582, %v5639
      %v5772 = vmul.f32 %v5582, %v5640
      %v5773 = vmul.f32 %v5582, %v5641
      %v5774 = vmul.f32 %v5582, %v5642
      %v5775 = vmul.f32 %v5582, %v5643
      %v5776 = vmul.f32 %v5582, %v5644
      %v5777 = vmul.f32 %v5582, %v5645
      %v5778 = vadd.f32 %v5762, %v5770
      %v5779 = vadd.f32 %v5763, %v5771
      %v5780 = vadd.f32 %v5764, %v5772
      %v5781 = vadd.f32 %v5765, %v5773
      %v5782 = vadd.f32 %v5766, %v5774
      %v5783 = vadd.f32 %v5767, %v5775
      %v5784 = vadd.f32 %v5768, %v5776
      %v5785 = vadd.f32 %v5769, %v5777
      %v5786 = vmul.f32 %v5600, %v5639
      %v5787 = vmul.f32 %v5600, %v5640
      %v5788 = vmul.f32 %v5600, %v5641
      %v5789 = vmul.f32 %v5600, %v5642
      %v5790 = vmul.f32 %v5600, %v5643
      %v5791 = vmul.f32 %v5600, %v5644
      %v5792 = vmul.f32 %v5600, %v5645
      %v5793 = vmul.f32 %v5600, %v5646
      %v5794 = vadd.f32 %v5778, %v5786
      %v5795 = vadd.f32 %v5779, %v5787
      %v5796 = vadd.f32 %v5780, %v5788
      %v5797 = vadd.f32 %v5781, %v5789
      %v5798 = vadd.f32 %v5782, %v5790
      %v5799 = vadd.f32 %v5783, %v5791
      %v5800 = vadd.f32 %v5784, %v5792
      %v5801 = vadd.f32 %v5785, %v5793
      %v5802 = vmul.f32 %v5618, %v5640
      %v5803 = vmul.f32 %v5618, %v5641
      %v5804 = vmul.f32 %v5618, %v5642
      %v5805 = vmul.f32 %v5618, %v5643
      %v5806 = vmul.f32 %v5618, %v5644
      %v5807 = vmul.f32 %v5618, %v5645
      %v5808 = vmul.f32 %v5618, %v5646
      %v5809 = vmul.f32 %v5618, %v5647
      %v5810 = vadd.f32 %v5794, %v5802
      %v5811 = vadd.f32 %v5795, %v5803
      %v5812 = vadd.f32 %v5796, %v5804
      %v5813 = vadd.f32 %v5797, %v5805
      %v5814 = vadd.f32 %v5798, %v5806
      %v5815 = vadd.f32 %v5799, %v5807
      %v5816 = vadd.f32 %v5800, %v5808
      %v5817 = vadd.f32 %v5801, %v5809
      %s5818 = scalar_lea.vmem [#allocation4], %s4883
      %v5819 = vld [vmem:[%s5818] sm:$0xff]
      %v5820 = vld [vmem:[%s5818 + $0x8] sm:$0xff]
      %v5821 = vld [vmem:[%s5818 + $0x10] sm:$0xff]
      %v5822 = vld [vmem:[%s5818 + $0x18] sm:$0xff]
      %v5823 = vld [vmem:[%s5818 + $0x20] sm:$0xff]
      %v5824 = vld [vmem:[%s5818 + $0x28] sm:$0xff]
      %v5825 = vld [vmem:[%s5818 + $0x30] sm:$0xff]
      %v5826 = vld [vmem:[%s5818 + $0x38] sm:$0xff]
      %v5827 = vld [vmem:[%s5818 + $0x40] sm:$0xff]
      %v5828 = vld [vmem:[%s5818 + $0x48] sm:$0xff]
      %v5829 = vld [vmem:[%s5818 + $0x50] sm:$0xff]
      %v5830 = vld [vmem:[%s5818 + $0x58] sm:$0xff]
      %s5831 = sld [smem:[#allocation13 + $0x23]]
      %v5832 = vstv %s5831
      %v5833 = vmul.f32 %v5832, %v5819
      %v5834 = vmul.f32 %v5832, %v5820
      %v5835 = vmul.f32 %v5832, %v5821
      %v5836 = vmul.f32 %v5832, %v5822
      %v5837 = vmul.f32 %v5832, %v5823
      %v5838 = vmul.f32 %v5832, %v5824
      %v5839 = vmul.f32 %v5832, %v5825
      %v5840 = vmul.f32 %v5832, %v5826
      %v5841 = vadd.f32 %v5730, %v5833
      %v5842 = vadd.f32 %v5731, %v5834
      %v5843 = vadd.f32 %v5732, %v5835
      %v5844 = vadd.f32 %v5733, %v5836
      %v5845 = vadd.f32 %v5734, %v5837
      %v5846 = vadd.f32 %v5735, %v5838
      %v5847 = vadd.f32 %v5736, %v5839
      %v5848 = vadd.f32 %v5737, %v5840
      %s5849 = sld [smem:[#allocation13 + $0x24]]
      %v5850 = vstv %s5849
      %v5851 = vmul.f32 %v5850, %v5820
      %v5852 = vmul.f32 %v5850, %v5821
      %v5853 = vmul.f32 %v5850, %v5822
      %v5854 = vmul.f32 %v5850, %v5823
      %v5855 = vmul.f32 %v5850, %v5824
      %v5856 = vmul.f32 %v5850, %v5825
      %v5857 = vmul.f32 %v5850, %v5826
      %v5858 = vmul.f32 %v5850, %v5827
      %v5859 = vadd.f32 %v5841, %v5851
      %v5860 = vadd.f32 %v5842, %v5852
      %v5861 = vadd.f32 %v5843, %v5853
      %v5862 = vadd.f32 %v5844, %v5854
      %v5863 = vadd.f32 %v5845, %v5855
      %v5864 = vadd.f32 %v5846, %v5856
      %v5865 = vadd.f32 %v5847, %v5857
      %v5866 = vadd.f32 %v5848, %v5858
      %s5867 = sld [smem:[#allocation13 + $0x25]]
      %v5868 = vstv %s5867
      %v5869 = vmul.f32 %v5868, %v5821
      %v5870 = vmul.f32 %v5868, %v5822
      %v5871 = vmul.f32 %v5868, %v5823
      %v5872 = vmul.f32 %v5868, %v5824
      %v5873 = vmul.f32 %v5868, %v5825
      %v5874 = vmul.f32 %v5868, %v5826
      %v5875 = vmul.f32 %v5868, %v5827
      %v5876 = vmul.f32 %v5868, %v5828
      %v5877 = vadd.f32 %v5859, %v5869
      %v5878 = vadd.f32 %v5860, %v5870
      %v5879 = vadd.f32 %v5861, %v5871
      %v5880 = vadd.f32 %v5862, %v5872
      %v5881 = vadd.f32 %v5863, %v5873
      %v5882 = vadd.f32 %v5864, %v5874
      %v5883 = vadd.f32 %v5865, %v5875
      %v5884 = vadd.f32 %v5866, %v5876
      %s5885 = sld [smem:[#allocation13 + $0x26]]
      %v5886 = vstv %s5885
      %v5887 = vmul.f32 %v5886, %v5822
      %v5888 = vmul.f32 %v5886, %v5823
      %v5889 = vmul.f32 %v5886, %v5824
      %v5890 = vmul.f32 %v5886, %v5825
      %v5891 = vmul.f32 %v5886, %v5826
      %v5892 = vmul.f32 %v5886, %v5827
      %v5893 = vmul.f32 %v5886, %v5828
      %v5894 = vmul.f32 %v5886, %v5829
      %v5895 = vadd.f32 %v5877, %v5887
      %v5896 = vadd.f32 %v5878, %v5888
      %v5897 = vadd.f32 %v5879, %v5889
      %v5898 = vadd.f32 %v5880, %v5890
      %v5899 = vadd.f32 %v5881, %v5891
      %v5900 = vadd.f32 %v5882, %v5892
      %v5901 = vadd.f32 %v5883, %v5893
      %v5902 = vadd.f32 %v5884, %v5894
      %s5903 = sld [smem:[#allocation13 + $0x27]]
      %v5904 = vstv %s5903
      %v5905 = vmul.f32 %v5904, %v5823
      %v5906 = vmul.f32 %v5904, %v5824
      %v5907 = vmul.f32 %v5904, %v5825
      %v5908 = vmul.f32 %v5904, %v5826
      %v5909 = vmul.f32 %v5904, %v5827
      %v5910 = vmul.f32 %v5904, %v5828
      %v5911 = vmul.f32 %v5904, %v5829
      %v5912 = vmul.f32 %v5904, %v5830
      %v5913 = vadd.f32 %v5895, %v5905
      %v5914 = vadd.f32 %v5896, %v5906
      %v5915 = vadd.f32 %v5897, %v5907
      %v5916 = vadd.f32 %v5898, %v5908
      %v5917 = vadd.f32 %v5899, %v5909
      %v5918 = vadd.f32 %v5900, %v5910
      %v5919 = vadd.f32 %v5901, %v5911
      %v5920 = vadd.f32 %v5902, %v5912
      %v5921 = vmul.f32 %v5649, %v5819
      %v5922 = vmul.f32 %v5649, %v5820
      %v5923 = vmul.f32 %v5649, %v5821
      %v5924 = vmul.f32 %v5649, %v5822
      %v5925 = vmul.f32 %v5649, %v5823
      %v5926 = vmul.f32 %v5649, %v5824
      %v5927 = vmul.f32 %v5649, %v5825
      %v5928 = vmul.f32 %v5649, %v5826
      %v5929 = vadd.f32 %v5810, %v5921
      %v5930 = vadd.f32 %v5811, %v5922
      %v5931 = vadd.f32 %v5812, %v5923
      %v5932 = vadd.f32 %v5813, %v5924
      %v5933 = vadd.f32 %v5814, %v5925
      %v5934 = vadd.f32 %v5815, %v5926
      %v5935 = vadd.f32 %v5816, %v5927
      %v5936 = vadd.f32 %v5817, %v5928
      %v5937 = vmul.f32 %v5667, %v5820
      %v5938 = vmul.f32 %v5667, %v5821
      %v5939 = vmul.f32 %v5667, %v5822
      %v5940 = vmul.f32 %v5667, %v5823
      %v5941 = vmul.f32 %v5667, %v5824
      %v5942 = vmul.f32 %v5667, %v5825
      %v5943 = vmul.f32 %v5667, %v5826
      %v5944 = vmul.f32 %v5667, %v5827
      %v5945 = vadd.f32 %v5929, %v5937
      %v5946 = vadd.f32 %v5930, %v5938
      %v5947 = vadd.f32 %v5931, %v5939
      %v5948 = vadd.f32 %v5932, %v5940
      %v5949 = vadd.f32 %v5933, %v5941
      %v5950 = vadd.f32 %v5934, %v5942
      %v5951 = vadd.f32 %v5935, %v5943
      %v5952 = vadd.f32 %v5936, %v5944
      %v5953 = vmul.f32 %v5685, %v5821
      %v5954 = vmul.f32 %v5685, %v5822
      %v5955 = vmul.f32 %v5685, %v5823
      %v5956 = vmul.f32 %v5685, %v5824
      %v5957 = vmul.f32 %v5685, %v5825
      %v5958 = vmul.f32 %v5685, %v5826
      %v5959 = vmul.f32 %v5685, %v5827
      %v5960 = vmul.f32 %v5685, %v5828
      %v5961 = vadd.f32 %v5945, %v5953
      %v5962 = vadd.f32 %v5946, %v5954
      %v5963 = vadd.f32 %v5947, %v5955
      %v5964 = vadd.f32 %v5948, %v5956
      %v5965 = vadd.f32 %v5949, %v5957
      %v5966 = vadd.f32 %v5950, %v5958
      %v5967 = vadd.f32 %v5951, %v5959
      %v5968 = vadd.f32 %v5952, %v5960
      %v5969 = vmul.f32 %v5703, %v5822
      %v5970 = vmul.f32 %v5703, %v5823
      %v5971 = vmul.f32 %v5703, %v5824
      %v5972 = vmul.f32 %v5703, %v5825
      %v5973 = vmul.f32 %v5703, %v5826
      %v5974 = vmul.f32 %v5703, %v5827
      %v5975 = vmul.f32 %v5703, %v5828
      %v5976 = vmul.f32 %v5703, %v5829
      %v5977 = vadd.f32 %v5961, %v5969
      %v5978 = vadd.f32 %v5962, %v5970
      %v5979 = vadd.f32 %v5963, %v5971
      %v5980 = vadd.f32 %v5964, %v5972
      %v5981 = vadd.f32 %v5965, %v5973
      %v5982 = vadd.f32 %v5966, %v5974
      %v5983 = vadd.f32 %v5967, %v5975
      %v5984 = vadd.f32 %v5968, %v5976
      %v5985 = vmul.f32 %v5721, %v5823
      %v5986 = vmul.f32 %v5721, %v5824
      %v5987 = vmul.f32 %v5721, %v5825
      %v5988 = vmul.f32 %v5721, %v5826
      %v5989 = vmul.f32 %v5721, %v5827
      %v5990 = vmul.f32 %v5721, %v5828
      %v5991 = vmul.f32 %v5721, %v5829
      %v5992 = vmul.f32 %v5721, %v5830
      %v5993 = vadd.f32 %v5977, %v5985
      %v5994 = vadd.f32 %v5978, %v5986
      %v5995 = vadd.f32 %v5979, %v5987
      %v5996 = vadd.f32 %v5980, %v5988
      %v5997 = vadd.f32 %v5981, %v5989
      %v5998 = vadd.f32 %v5982, %v5990
      %v5999 = vadd.f32 %v5983, %v5991
      %v6000 = vadd.f32 %v5984, %v5992
      %s6001 = scalar_lea.vmem [#allocation4], %s5068
      %v6002 = vld [vmem:[%s6001] sm:$0xff]
      %v6003 = vld [vmem:[%s6001 + $0x8] sm:$0xff]
      %v6004 = vld [vmem:[%s6001 + $0x10] sm:$0xff]
      %v6005 = vld [vmem:[%s6001 + $0x18] sm:$0xff]
      %v6006 = vld [vmem:[%s6001 + $0x20] sm:$0xff]
      %v6007 = vld [vmem:[%s6001 + $0x28] sm:$0xff]
      %v6008 = vld [vmem:[%s6001 + $0x30] sm:$0xff]
      %v6009 = vld [vmem:[%s6001 + $0x38] sm:$0xff]
      %v6010 = vld [vmem:[%s6001 + $0x40] sm:$0xff]
      %v6011 = vld [vmem:[%s6001 + $0x48] sm:$0xff]
      %v6012 = vld [vmem:[%s6001 + $0x50] sm:$0xff]
      %v6013 = vld [vmem:[%s6001 + $0x58] sm:$0xff]
      %s6014 = sld [smem:[#allocation13 + $0x28]]
      %v6015 = vstv %s6014
      %v6016 = vmul.f32 %v6015, %v6002
      %v6017 = vmul.f32 %v6015, %v6003
      %v6018 = vmul.f32 %v6015, %v6004
      %v6019 = vmul.f32 %v6015, %v6005
      %v6020 = vmul.f32 %v6015, %v6006
      %v6021 = vmul.f32 %v6015, %v6007
      %v6022 = vmul.f32 %v6015, %v6008
      %v6023 = vmul.f32 %v6015, %v6009
      %v6024 = vadd.f32 %v5913, %v6016
      %v6025 = vadd.f32 %v5914, %v6017
      %v6026 = vadd.f32 %v5915, %v6018
      %v6027 = vadd.f32 %v5916, %v6019
      %v6028 = vadd.f32 %v5917, %v6020
      %v6029 = vadd.f32 %v5918, %v6021
      %v6030 = vadd.f32 %v5919, %v6022
      %v6031 = vadd.f32 %v5920, %v6023
      %s6032 = sld [smem:[#allocation13 + $0x29]]
      %v6033 = vstv %s6032
      %v6034 = vmul.f32 %v6033, %v6003
      %v6035 = vmul.f32 %v6033, %v6004
      %v6036 = vmul.f32 %v6033, %v6005
      %v6037 = vmul.f32 %v6033, %v6006
      %v6038 = vmul.f32 %v6033, %v6007
      %v6039 = vmul.f32 %v6033, %v6008
      %v6040 = vmul.f32 %v6033, %v6009
      %v6041 = vmul.f32 %v6033, %v6010
      %v6042 = vadd.f32 %v6024, %v6034
      %v6043 = vadd.f32 %v6025, %v6035
      %v6044 = vadd.f32 %v6026, %v6036
      %v6045 = vadd.f32 %v6027, %v6037
      %v6046 = vadd.f32 %v6028, %v6038
      %v6047 = vadd.f32 %v6029, %v6039
      %v6048 = vadd.f32 %v6030, %v6040
      %v6049 = vadd.f32 %v6031, %v6041
      %s6050 = sld [smem:[#allocation13 + $0x2a]]
      %v6051 = vstv %s6050
      %v6052 = vmul.f32 %v6051, %v6004
      %v6053 = vmul.f32 %v6051, %v6005
      %v6054 = vmul.f32 %v6051, %v6006
      %v6055 = vmul.f32 %v6051, %v6007
      %v6056 = vmul.f32 %v6051, %v6008
      %v6057 = vmul.f32 %v6051, %v6009
      %v6058 = vmul.f32 %v6051, %v6010
      %v6059 = vmul.f32 %v6051, %v6011
      %v6060 = vadd.f32 %v6042, %v6052
      %v6061 = vadd.f32 %v6043, %v6053
      %v6062 = vadd.f32 %v6044, %v6054
      %v6063 = vadd.f32 %v6045, %v6055
      %v6064 = vadd.f32 %v6046, %v6056
      %v6065 = vadd.f32 %v6047, %v6057
      %v6066 = vadd.f32 %v6048, %v6058
      %v6067 = vadd.f32 %v6049, %v6059
      %s6068 = sld [smem:[#allocation13 + $0x2b]]
      %v6069 = vstv %s6068
      %v6070 = vmul.f32 %v6069, %v6005
      %v6071 = vmul.f32 %v6069, %v6006
      %v6072 = vmul.f32 %v6069, %v6007
      %v6073 = vmul.f32 %v6069, %v6008
      %v6074 = vmul.f32 %v6069, %v6009
      %v6075 = vmul.f32 %v6069, %v6010
      %v6076 = vmul.f32 %v6069, %v6011
      %v6077 = vmul.f32 %v6069, %v6012
      %v6078 = vadd.f32 %v6060, %v6070
      %v6079 = vadd.f32 %v6061, %v6071
      %v6080 = vadd.f32 %v6062, %v6072
      %v6081 = vadd.f32 %v6063, %v6073
      %v6082 = vadd.f32 %v6064, %v6074
      %v6083 = vadd.f32 %v6065, %v6075
      %v6084 = vadd.f32 %v6066, %v6076
      %v6085 = vadd.f32 %v6067, %v6077
      %s6086 = sld [smem:[#allocation13 + $0x2c]]
      %v6087 = vstv %s6086
      %v6088 = vmul.f32 %v6087, %v6006
      %v6089 = vmul.f32 %v6087, %v6007
      %v6090 = vmul.f32 %v6087, %v6008
      %v6091 = vmul.f32 %v6087, %v6009
      %v6092 = vmul.f32 %v6087, %v6010
      %v6093 = vmul.f32 %v6087, %v6011
      %v6094 = vmul.f32 %v6087, %v6012
      %v6095 = vmul.f32 %v6087, %v6013
      %v6096 = vadd.f32 %v6078, %v6088
      %v6097 = vadd.f32 %v6079, %v6089
      %v6098 = vadd.f32 %v6080, %v6090
      %v6099 = vadd.f32 %v6081, %v6091
      %v6100 = vadd.f32 %v6082, %v6092
      %v6101 = vadd.f32 %v6083, %v6093
      %v6102 = vadd.f32 %v6084, %v6094
      %v6103 = vadd.f32 %v6085, %v6095
      %v6104 = vmul.f32 %v5832, %v6002
      %v6105 = vmul.f32 %v5832, %v6003
      %v6106 = vmul.f32 %v5832, %v6004
      %v6107 = vmul.f32 %v5832, %v6005
      %v6108 = vmul.f32 %v5832, %v6006
      %v6109 = vmul.f32 %v5832, %v6007
      %v6110 = vmul.f32 %v5832, %v6008
      %v6111 = vmul.f32 %v5832, %v6009
      %v6112 = vadd.f32 %v5993, %v6104
      %v6113 = vadd.f32 %v5994, %v6105
      %v6114 = vadd.f32 %v5995, %v6106
      %v6115 = vadd.f32 %v5996, %v6107
      %v6116 = vadd.f32 %v5997, %v6108
      %v6117 = vadd.f32 %v5998, %v6109
      %v6118 = vadd.f32 %v5999, %v6110
      %v6119 = vadd.f32 %v6000, %v6111
      %v6120 = vmul.f32 %v5850, %v6003
      %v6121 = vmul.f32 %v5850, %v6004
      %v6122 = vmul.f32 %v5850, %v6005
      %v6123 = vmul.f32 %v5850, %v6006
      %v6124 = vmul.f32 %v5850, %v6007
      %v6125 = vmul.f32 %v5850, %v6008
      %v6126 = vmul.f32 %v5850, %v6009
      %v6127 = vmul.f32 %v5850, %v6010
      %v6128 = vadd.f32 %v6112, %v6120
      %v6129 = vadd.f32 %v6113, %v6121
      %v6130 = vadd.f32 %v6114, %v6122
      %v6131 = vadd.f32 %v6115, %v6123
      %v6132 = vadd.f32 %v6116, %v6124
      %v6133 = vadd.f32 %v6117, %v6125
      %v6134 = vadd.f32 %v6118, %v6126
      %v6135 = vadd.f32 %v6119, %v6127
      %v6136 = vmul.f32 %v5868, %v6004
      %v6137 = vmul.f32 %v5868, %v6005
      %v6138 = vmul.f32 %v5868, %v6006
      %v6139 = vmul.f32 %v5868, %v6007
      %v6140 = vmul.f32 %v5868, %v6008
      %v6141 = vmul.f32 %v5868, %v6009
      %v6142 = vmul.f32 %v5868, %v6010
      %v6143 = vmul.f32 %v5868, %v6011
      %v6144 = vadd.f32 %v6128, %v6136
      %v6145 = vadd.f32 %v6129, %v6137
      %v6146 = vadd.f32 %v6130, %v6138
      %v6147 = vadd.f32 %v6131, %v6139
      %v6148 = vadd.f32 %v6132, %v6140
      %v6149 = vadd.f32 %v6133, %v6141
      %v6150 = vadd.f32 %v6134, %v6142
      %v6151 = vadd.f32 %v6135, %v6143
      %v6152 = vmul.f32 %v5886, %v6005
      %v6153 = vmul.f32 %v5886, %v6006
      %v6154 = vmul.f32 %v5886, %v6007
      %v6155 = vmul.f32 %v5886, %v6008
      %v6156 = vmul.f32 %v5886, %v6009
      %v6157 = vmul.f32 %v5886, %v6010
      %v6158 = vmul.f32 %v5886, %v6011
      %v6159 = vmul.f32 %v5886, %v6012
      %v6160 = vadd.f32 %v6144, %v6152
      %v6161 = vadd.f32 %v6145, %v6153
      %v6162 = vadd.f32 %v6146, %v6154
      %v6163 = vadd.f32 %v6147, %v6155
      %v6164 = vadd.f32 %v6148, %v6156
      %v6165 = vadd.f32 %v6149, %v6157
      %v6166 = vadd.f32 %v6150, %v6158
      %v6167 = vadd.f32 %v6151, %v6159
      %v6168 = vmul.f32 %v5904, %v6006
      %v6169 = vmul.f32 %v5904, %v6007
      %v6170 = vmul.f32 %v5904, %v6008
      %v6171 = vmul.f32 %v5904, %v6009
      %v6172 = vmul.f32 %v5904, %v6010
      %v6173 = vmul.f32 %v5904, %v6011
      %v6174 = vmul.f32 %v5904, %v6012
      %v6175 = vmul.f32 %v5904, %v6013
      %v6176 = vadd.f32 %v6160, %v6168
      %v6177 = vadd.f32 %v6161, %v6169
      %v6178 = vadd.f32 %v6162, %v6170
      %v6179 = vadd.f32 %v6163, %v6171
      %v6180 = vadd.f32 %v6164, %v6172
      %v6181 = vadd.f32 %v6165, %v6173
      %v6182 = vadd.f32 %v6166, %v6174
      %v6183 = vadd.f32 %v6167, %v6175
      %s6184 = scalar_lea.vmem [#allocation4], %s5253
      %v6185 = vld [vmem:[%s6184] sm:$0xff]
      %v6186 = vld [vmem:[%s6184 + $0x8] sm:$0xff]
      %v6187 = vld [vmem:[%s6184 + $0x10] sm:$0xff]
      %v6188 = vld [vmem:[%s6184 + $0x18] sm:$0xff]
      %v6189 = vld [vmem:[%s6184 + $0x20] sm:$0xff]
      %v6190 = vld [vmem:[%s6184 + $0x28] sm:$0xff]
      %v6191 = vld [vmem:[%s6184 + $0x30] sm:$0xff]
      %v6192 = vld [vmem:[%s6184 + $0x38] sm:$0xff]
      %v6193 = vld [vmem:[%s6184 + $0x40] sm:$0xff]
      %v6194 = vld [vmem:[%s6184 + $0x48] sm:$0xff]
      %v6195 = vld [vmem:[%s6184 + $0x50] sm:$0xff]
      %v6196 = vld [vmem:[%s6184 + $0x58] sm:$0xff]
      %s6197 = sld [smem:[#allocation13 + $0x2d]]
      %v6198 = vstv %s6197
      %v6199 = vmul.f32 %v6198, %v6185
      %v6200 = vmul.f32 %v6198, %v6186
      %v6201 = vmul.f32 %v6198, %v6187
      %v6202 = vmul.f32 %v6198, %v6188
      %v6203 = vmul.f32 %v6198, %v6189
      %v6204 = vmul.f32 %v6198, %v6190
      %v6205 = vmul.f32 %v6198, %v6191
      %v6206 = vmul.f32 %v6198, %v6192
      %v6207 = vadd.f32 %v6096, %v6199
      %v6208 = vadd.f32 %v6097, %v6200
      %v6209 = vadd.f32 %v6098, %v6201
      %v6210 = vadd.f32 %v6099, %v6202
      %v6211 = vadd.f32 %v6100, %v6203
      %v6212 = vadd.f32 %v6101, %v6204
      %v6213 = vadd.f32 %v6102, %v6205
      %v6214 = vadd.f32 %v6103, %v6206
      %s6215 = sld [smem:[#allocation13 + $0x2e]]
      %v6216 = vstv %s6215
      %v6217 = vmul.f32 %v6216, %v6186
      %v6218 = vmul.f32 %v6216, %v6187
      %v6219 = vmul.f32 %v6216, %v6188
      %v6220 = vmul.f32 %v6216, %v6189
      %v6221 = vmul.f32 %v6216, %v6190
      %v6222 = vmul.f32 %v6216, %v6191
      %v6223 = vmul.f32 %v6216, %v6192
      %v6224 = vmul.f32 %v6216, %v6193
      %v6225 = vadd.f32 %v6207, %v6217
      %v6226 = vadd.f32 %v6208, %v6218
      %v6227 = vadd.f32 %v6209, %v6219
      %v6228 = vadd.f32 %v6210, %v6220
      %v6229 = vadd.f32 %v6211, %v6221
      %v6230 = vadd.f32 %v6212, %v6222
      %v6231 = vadd.f32 %v6213, %v6223
      %v6232 = vadd.f32 %v6214, %v6224
      %s6233 = sld [smem:[#allocation13 + $0x2f]]
      %v6234 = vstv %s6233
      %v6235 = vmul.f32 %v6234, %v6187
      %v6236 = vmul.f32 %v6234, %v6188
      %v6237 = vmul.f32 %v6234, %v6189
      %v6238 = vmul.f32 %v6234, %v6190
      %v6239 = vmul.f32 %v6234, %v6191
      %v6240 = vmul.f32 %v6234, %v6192
      %v6241 = vmul.f32 %v6234, %v6193
      %v6242 = vmul.f32 %v6234, %v6194
      %v6243 = vadd.f32 %v6225, %v6235
      %v6244 = vadd.f32 %v6226, %v6236
      %v6245 = vadd.f32 %v6227, %v6237
      %v6246 = vadd.f32 %v6228, %v6238
      %v6247 = vadd.f32 %v6229, %v6239
      %v6248 = vadd.f32 %v6230, %v6240
      %v6249 = vadd.f32 %v6231, %v6241
      %v6250 = vadd.f32 %v6232, %v6242
      %s6251 = sld [smem:[#allocation13 + $0x30]]
      %v6252 = vstv %s6251
      %v6253 = vmul.f32 %v6252, %v6188
      %v6254 = vmul.f32 %v6252, %v6189
      %v6255 = vmul.f32 %v6252, %v6190
      %v6256 = vmul.f32 %v6252, %v6191
      %v6257 = vmul.f32 %v6252, %v6192
      %v6258 = vmul.f32 %v6252, %v6193
      %v6259 = vmul.f32 %v6252, %v6194
      %v6260 = vmul.f32 %v6252, %v6195
      %v6261 = vadd.f32 %v6243, %v6253
      %v6262 = vadd.f32 %v6244, %v6254
      %v6263 = vadd.f32 %v6245, %v6255
      %v6264 = vadd.f32 %v6246, %v6256
      %v6265 = vadd.f32 %v6247, %v6257
      %v6266 = vadd.f32 %v6248, %v6258
      %v6267 = vadd.f32 %v6249, %v6259
      %v6268 = vadd.f32 %v6250, %v6260
      %s6269 = sld [smem:[#allocation13 + $0x31]]
      %v6270 = vstv %s6269
      %v6271 = vmul.f32 %v6270, %v6189
      %v6272 = vmul.f32 %v6270, %v6190
      %v6273 = vmul.f32 %v6270, %v6191
      %v6274 = vmul.f32 %v6270, %v6192
      %v6275 = vmul.f32 %v6270, %v6193
      %v6276 = vmul.f32 %v6270, %v6194
      %v6277 = vmul.f32 %v6270, %v6195
      %v6278 = vmul.f32 %v6270, %v6196
      %v6279 = vadd.f32 %v6261, %v6271
      %v6280 = vadd.f32 %v6262, %v6272
      %v6281 = vadd.f32 %v6263, %v6273
      %v6282 = vadd.f32 %v6264, %v6274
      %v6283 = vadd.f32 %v6265, %v6275
      %v6284 = vadd.f32 %v6266, %v6276
      %v6285 = vadd.f32 %v6267, %v6277
      %v6286 = vadd.f32 %v6268, %v6278
      %v6287 = vmul.f32 %v6015, %v6185
      %v6288 = vmul.f32 %v6015, %v6186
      %v6289 = vmul.f32 %v6015, %v6187
      %v6290 = vmul.f32 %v6015, %v6188
      %v6291 = vmul.f32 %v6015, %v6189
      %v6292 = vmul.f32 %v6015, %v6190
      %v6293 = vmul.f32 %v6015, %v6191
      %v6294 = vmul.f32 %v6015, %v6192
      %v6295 = vadd.f32 %v6176, %v6287
      %v6296 = vadd.f32 %v6177, %v6288
      %v6297 = vadd.f32 %v6178, %v6289
      %v6298 = vadd.f32 %v6179, %v6290
      %v6299 = vadd.f32 %v6180, %v6291
      %v6300 = vadd.f32 %v6181, %v6292
      %v6301 = vadd.f32 %v6182, %v6293
      %v6302 = vadd.f32 %v6183, %v6294
      %v6303 = vmul.f32 %v6033, %v6186
      %v6304 = vmul.f32 %v6033, %v6187
      %v6305 = vmul.f32 %v6033, %v6188
      %v6306 = vmul.f32 %v6033, %v6189
      %v6307 = vmul.f32 %v6033, %v6190
      %v6308 = vmul.f32 %v6033, %v6191
      %v6309 = vmul.f32 %v6033, %v6192
      %v6310 = vmul.f32 %v6033, %v6193
      %v6311 = vadd.f32 %v6295, %v6303
      %v6312 = vadd.f32 %v6296, %v6304
      %v6313 = vadd.f32 %v6297, %v6305
      %v6314 = vadd.f32 %v6298, %v6306
      %v6315 = vadd.f32 %v6299, %v6307
      %v6316 = vadd.f32 %v6300, %v6308
      %v6317 = vadd.f32 %v6301, %v6309
      %v6318 = vadd.f32 %v6302, %v6310
      %v6319 = vmul.f32 %v6051, %v6187
      %v6320 = vmul.f32 %v6051, %v6188
      %v6321 = vmul.f32 %v6051, %v6189
      %v6322 = vmul.f32 %v6051, %v6190
      %v6323 = vmul.f32 %v6051, %v6191
      %v6324 = vmul.f32 %v6051, %v6192
      %v6325 = vmul.f32 %v6051, %v6193
      %v6326 = vmul.f32 %v6051, %v6194
      %v6327 = vadd.f32 %v6311, %v6319
      %v6328 = vadd.f32 %v6312, %v6320
      %v6329 = vadd.f32 %v6313, %v6321
      %v6330 = vadd.f32 %v6314, %v6322
      %v6331 = vadd.f32 %v6315, %v6323
      %v6332 = vadd.f32 %v6316, %v6324
      %v6333 = vadd.f32 %v6317, %v6325
      %v6334 = vadd.f32 %v6318, %v6326
      %v6335 = vmul.f32 %v6069, %v6188
      %v6336 = vmul.f32 %v6069, %v6189
      %v6337 = vmul.f32 %v6069, %v6190
      %v6338 = vmul.f32 %v6069, %v6191
      %v6339 = vmul.f32 %v6069, %v6192
      %v6340 = vmul.f32 %v6069, %v6193
      %v6341 = vmul.f32 %v6069, %v6194
      %v6342 = vmul.f32 %v6069, %v6195
      %v6343 = vadd.f32 %v6327, %v6335
      %v6344 = vadd.f32 %v6328, %v6336
      %v6345 = vadd.f32 %v6329, %v6337
      %v6346 = vadd.f32 %v6330, %v6338
      %v6347 = vadd.f32 %v6331, %v6339
      %v6348 = vadd.f32 %v6332, %v6340
      %v6349 = vadd.f32 %v6333, %v6341
      %v6350 = vadd.f32 %v6334, %v6342
      %v6351 = vmul.f32 %v6087, %v6189
      %v6352 = vmul.f32 %v6087, %v6190
      %v6353 = vmul.f32 %v6087, %v6191
      %v6354 = vmul.f32 %v6087, %v6192
      %v6355 = vmul.f32 %v6087, %v6193
      %v6356 = vmul.f32 %v6087, %v6194
      %v6357 = vmul.f32 %v6087, %v6195
      %v6358 = vmul.f32 %v6087, %v6196
      %v6359 = vadd.f32 %v6343, %v6351
      %v6360 = vadd.f32 %v6344, %v6352
      %v6361 = vadd.f32 %v6345, %v6353
      %v6362 = vadd.f32 %v6346, %v6354
      %v6363 = vadd.f32 %v6347, %v6355
      %v6364 = vadd.f32 %v6348, %v6356
      %v6365 = vadd.f32 %v6349, %v6357
      %v6366 = vadd.f32 %v6350, %v6358
      %s6367 = scalar_lea.vmem [#allocation4], %s5438
      %v6368 = vld [vmem:[%s6367] sm:$0xff]
      %v6369 = vld [vmem:[%s6367 + $0x8] sm:$0xff]
      %v6370 = vld [vmem:[%s6367 + $0x10] sm:$0xff]
      %v6371 = vld [vmem:[%s6367 + $0x18] sm:$0xff]
      %v6372 = vld [vmem:[%s6367 + $0x20] sm:$0xff]
      %v6373 = vld [vmem:[%s6367 + $0x28] sm:$0xff]
      %v6374 = vld [vmem:[%s6367 + $0x30] sm:$0xff]
      %v6375 = vld [vmem:[%s6367 + $0x38] sm:$0xff]
      %v6376 = vld [vmem:[%s6367 + $0x40] sm:$0xff]
      %v6377 = vld [vmem:[%s6367 + $0x48] sm:$0xff]
      %v6378 = vld [vmem:[%s6367 + $0x50] sm:$0xff]
      %v6379 = vld [vmem:[%s6367 + $0x58] sm:$0xff]
      %v6380 = vmul.f32 %v6198, %v6368
      %v6381 = vmul.f32 %v6198, %v6369
      %v6382 = vmul.f32 %v6198, %v6370
      %v6383 = vmul.f32 %v6198, %v6371
      %v6384 = vmul.f32 %v6198, %v6372
      %v6385 = vmul.f32 %v6198, %v6373
      %v6386 = vmul.f32 %v6198, %v6374
      %v6387 = vmul.f32 %v6198, %v6375
      %v6388 = vadd.f32 %v6359, %v6380
      %v6389 = vadd.f32 %v6360, %v6381
      %v6390 = vadd.f32 %v6361, %v6382
      %v6391 = vadd.f32 %v6362, %v6383
      %v6392 = vadd.f32 %v6363, %v6384
      %v6393 = vadd.f32 %v6364, %v6385
      %v6394 = vadd.f32 %v6365, %v6386
      %v6395 = vadd.f32 %v6366, %v6387
      %v6396 = vmul.f32 %v6216, %v6369
      %v6397 = vmul.f32 %v6216, %v6370
      %v6398 = vmul.f32 %v6216, %v6371
      %v6399 = vmul.f32 %v6216, %v6372
      %v6400 = vmul.f32 %v6216, %v6373
      %v6401 = vmul.f32 %v6216, %v6374
      %v6402 = vmul.f32 %v6216, %v6375
      %v6403 = vmul.f32 %v6216, %v6376
      %v6404 = vadd.f32 %v6388, %v6396
      %v6405 = vadd.f32 %v6389, %v6397
      %v6406 = vadd.f32 %v6390, %v6398
      %v6407 = vadd.f32 %v6391, %v6399
      %v6408 = vadd.f32 %v6392, %v6400
      %v6409 = vadd.f32 %v6393, %v6401
      %v6410 = vadd.f32 %v6394, %v6402
      %v6411 = vadd.f32 %v6395, %v6403
      %v6412 = vmul.f32 %v6234, %v6370
      %v6413 = vmul.f32 %v6234, %v6371
      %v6414 = vmul.f32 %v6234, %v6372
      %v6415 = vmul.f32 %v6234, %v6373
      %v6416 = vmul.f32 %v6234, %v6374
      %v6417 = vmul.f32 %v6234, %v6375
      %v6418 = vmul.f32 %v6234, %v6376
      %v6419 = vmul.f32 %v6234, %v6377
      %v6420 = vadd.f32 %v6404, %v6412
      %v6421 = vadd.f32 %v6405, %v6413
      %v6422 = vadd.f32 %v6406, %v6414
      %v6423 = vadd.f32 %v6407, %v6415
      %v6424 = vadd.f32 %v6408, %v6416
      %v6425 = vadd.f32 %v6409, %v6417
      %v6426 = vadd.f32 %v6410, %v6418
      %v6427 = vadd.f32 %v6411, %v6419
      %v6428 = vmul.f32 %v6252, %v6371
      %v6429 = vmul.f32 %v6252, %v6372
      %v6430 = vmul.f32 %v6252, %v6373
      %v6431 = vmul.f32 %v6252, %v6374
      %v6432 = vmul.f32 %v6252, %v6375
      %v6433 = vmul.f32 %v6252, %v6376
      %v6434 = vmul.f32 %v6252, %v6377
      %v6435 = vmul.f32 %v6252, %v6378
      %v6436 = vadd.f32 %v6420, %v6428
      %v6437 = vadd.f32 %v6421, %v6429
      %v6438 = vadd.f32 %v6422, %v6430
      %v6439 = vadd.f32 %v6423, %v6431
      %v6440 = vadd.f32 %v6424, %v6432
      %v6441 = vadd.f32 %v6425, %v6433
      %v6442 = vadd.f32 %v6426, %v6434
      %v6443 = vadd.f32 %v6427, %v6435
      %v6444 = vmul.f32 %v6270, %v6372
      %v6445 = vmul.f32 %v6270, %v6373
      %v6446 = vmul.f32 %v6270, %v6374
      %v6447 = vmul.f32 %v6270, %v6375
      %v6448 = vmul.f32 %v6270, %v6376
      %v6449 = vmul.f32 %v6270, %v6377
      %v6450 = vmul.f32 %v6270, %v6378
      %v6451 = vmul.f32 %v6270, %v6379
      %v6452 = vadd.f32 %v6436, %v6444
      %v6453 = vadd.f32 %v6437, %v6445
      %v6454 = vadd.f32 %v6438, %v6446
      %v6455 = vadd.f32 %v6439, %v6447
      %v6456 = vadd.f32 %v6440, %v6448
      %v6457 = vadd.f32 %v6441, %v6449
      %v6458 = vadd.f32 %v6442, %v6450
      %v6459 = vadd.f32 %v6443, %v6451
      %v6460 = vmax.f32 %v6279, %v6452
      %v6461 = vmax.f32 %v6280, %v6453
      %v6462 = vmax.f32 %v6281, %v6454
      %v6463 = vmax.f32 %v6282, %v6455
      %v6464 = vmax.f32 %v6283, %v6456
      %v6465 = vmax.f32 %v6284, %v6457
      %v6466 = vmax.f32 %v6285, %v6458
      %v6467 = vmax.f32 %v6286, %v6459
      %v6468 = vmax.f32 %v6460, %v6461
      %s6469 = sld [smem:[#allocation5]]
      %v6470 = vstv %s6469
      %v6471 = vadd.f32 %v6468, %v6470
      %v6472 = vmax.f32 %v6471, 0.0
      %v6473 = vmax.f32 %v6462, %v6463
      %v6474 = vadd.f32 %v6473, %v6470
      %v6475 = vmax.f32 %v6474, 0.0
      %v6476 = vmax.f32 %v6464, %v6465
      %v6477 = vadd.f32 %v6476, %v6470
      %v6478 = vmax.f32 %v6477, 0.0
      %v6479 = vmax.f32 %v6466, %v6467
      %v6480 = vadd.f32 %v6479, %v6470
      %v6481 = vmax.f32 %v6480, 0.0
      %s6482 = smul.u32 %s4593, 4
      %s6483 = sld [smem:[#allocation15 + %s6482]]
      %v6484 = vstv %s6483
      %v6485 = vmul.f32 %v6484, %v6472
      %s6486 = sadd.s32 %s6482, 1
      %s6487 = sld [smem:[#allocation15 + %s6486]]
      %v6488 = vstv %s6487
      %v6489 = vmul.f32 %v6488, %v6475
      %v6490 = vadd.f32 %v6485, %v6489
      %s6491 = sadd.s32 %s6482, 2
      %s6492 = sld [smem:[#allocation15 + %s6491]]
      %v6493 = vstv %s6492
      %v6494 = vmul.f32 %v6493, %v6478
      %v6495 = vadd.f32 %v6490, %v6494
      %s6496 = sadd.s32 %s6482, 3
      %s6497 = sld [smem:[#allocation15 + %s6496]]
      %v6498 = vstv %s6497
      %v6499 = vmul.f32 %v6498, %v6481
      %v6500 = vadd.f32 %v6495, %v6499
      %s6501 = sadd.s32 %s6482, 16
      %s6502 = sld [smem:[#allocation15 + %s6501]]
      %v6503 = vstv %s6502
      %v6504 = vmul.f32 %v6503, %v6472
      %s6505 = sadd.s32 %s6482, 17
      %s6506 = sld [smem:[#allocation15 + %s6505]]
      %v6507 = vstv %s6506
      %v6508 = vmul.f32 %v6507, %v6475
      %v6509 = vadd.f32 %v6504, %v6508
      %s6510 = sadd.s32 %s6482, 18
      %s6511 = sld [smem:[#allocation15 + %s6510]]
      %v6512 = vstv %s6511
      %v6513 = vmul.f32 %v6512, %v6478
      %v6514 = vadd.f32 %v6509, %v6513
      %s6515 = sadd.s32 %s6482, 19
      %s6516 = sld [smem:[#allocation15 + %s6515]]
      %v6517 = vstv %s6516
      %v6518 = vmul.f32 %v6517, %v6481
      %v6519 = vadd.f32 %v6514, %v6518
      %s6520 = sadd.s32 %s6482, 32
      %s6521 = sld [smem:[#allocation15 + %s6520]]
      %v6522 = vstv %s6521
      %v6523 = vmul.f32 %v6522, %v6472
      %s6524 = sadd.s32 %s6482, 33
      %s6525 = sld [smem:[#allocation15 + %s6524]]
      %v6526 = vstv %s6525
      %v6527 = vmul.f32 %v6526, %v6475
      %v6528 = vadd.f32 %v6523, %v6527
      %s6529 = sadd.s32 %s6482, 34
      %s6530 = sld [smem:[#allocation15 + %s6529]]
      %v6531 = vstv %s6530
      %v6532 = vmul.f32 %v6531, %v6478
      %v6533 = vadd.f32 %v6528, %v6532
      %s6534 = sadd.s32 %s6482, 35
      %s6535 = sld [smem:[#allocation15 + %s6534]]
      %v6536 = vstv %s6535
      %v6537 = vmul.f32 %v6536, %v6481
      %v6538 = vadd.f32 %v6533, %v6537
      %s6539 = sadd.s32 %s6482, 48
      %s6540 = sld [smem:[#allocation15 + %s6539]]
      %v6541 = vstv %s6540
      %v6542 = vmul.f32 %v6541, %v6472
      %s6543 = sadd.s32 %s6482, 49
      %s6544 = sld [smem:[#allocation15 + %s6543]]
      %v6545 = vstv %s6544
      %v6546 = vmul.f32 %v6545, %v6475
      %v6547 = vadd.f32 %v6542, %v6546
      %s6548 = sadd.s32 %s6482, 50
      %s6549 = sld [smem:[#allocation15 + %s6548]]
      %v6550 = vstv %s6549
      %v6551 = vmul.f32 %v6550, %v6478
      %v6552 = vadd.f32 %v6547, %v6551
      %s6553 = sadd.s32 %s6482, 51
      %s6554 = sld [smem:[#allocation15 + %s6553]]
      %v6555 = vstv %s6554
      %v6556 = vmul.f32 %v6555, %v6481
      %v6557 = vadd.f32 %v6552, %v6556
      %s6558 = sadd.s32 %s6482, 64
      %s6559 = sld [smem:[#allocation15 + %s6558]]
      %v6560 = vstv %s6559
      %v6561 = vmul.f32 %v6560, %v6472
      %s6562 = sadd.s32 %s6482, 65
      %s6563 = sld [smem:[#allocation15 + %s6562]]
      %v6564 = vstv %s6563
      %v6565 = vmul.f32 %v6564, %v6475
      %v6566 = vadd.f32 %v6561, %v6565
      %s6567 = sadd.s32 %s6482, 66
      %s6568 = sld [smem:[#allocation15 + %s6567]]
      %v6569 = vstv %s6568
      %v6570 = vmul.f32 %v6569, %v6478
      %v6571 = vadd.f32 %v6566, %v6570
      %s6572 = sadd.s32 %s6482, 67
      %s6573 = sld [smem:[#allocation15 + %s6572]]
      %v6574 = vstv %s6573
      %v6575 = vmul.f32 %v6574, %v6481
      %v6576 = vadd.f32 %v6571, %v6575
      %s6577 = sadd.s32 %s6482, 80
      %s6578 = sld [smem:[#allocation15 + %s6577]]
      %v6579 = vstv %s6578
      %v6580 = vmul.f32 %v6579, %v6472
      %s6581 = sadd.s32 %s6482, 81
      %s6582 = sld [smem:[#allocation15 + %s6581]]
      %v6583 = vstv %s6582
      %v6584 = vmul.f32 %v6583, %v6475
      %v6585 = vadd.f32 %v6580, %v6584
      %s6586 = sadd.s32 %s6482, 82
      %s6587 = sld [smem:[#allocation15 + %s6586]]
      %v6588 = vstv %s6587
      %v6589 = vmul.f32 %v6588, %v6478
      %v6590 = vadd.f32 %v6585, %v6589
      %s6591 = sadd.s32 %s6482, 83
      %s6592 = sld [smem:[#allocation15 + %s6591]]
      %v6593 = vstv %s6592
      %v6594 = vmul.f32 %v6593, %v6481
      %v6595 = vadd.f32 %v6590, %v6594
      %s6596 = sadd.s32 %s6482, 96
      %s6597 = sld [smem:[#allocation15 + %s6596]]
      %v6598 = vstv %s6597
      %v6599 = vmul.f32 %v6598, %v6472
      %s6600 = sadd.s32 %s6482, 97
      %s6601 = sld [smem:[#allocation15 + %s6600]]
      %v6602 = vstv %s6601
      %v6603 = vmul.f32 %v6602, %v6475
      %v6604 = vadd.f32 %v6599, %v6603
      %s6605 = sadd.s32 %s6482, 98
      %s6606 = sld [smem:[#allocation15 + %s6605]]
      %v6607 = vstv %s6606
      %v6608 = vmul.f32 %v6607, %v6478
      %v6609 = vadd.f32 %v6604, %v6608
      %s6610 = sadd.s32 %s6482, 99
      %s6611 = sld [smem:[#allocation15 + %s6610]]
      %v6612 = vstv %s6611
      %v6613 = vmul.f32 %v6612, %v6481
      %v6614 = vadd.f32 %v6609, %v6613
      %s6615 = sadd.s32 %s6482, 112
      %s6616 = sld [smem:[#allocation15 + %s6615]]
      %v6617 = vstv %s6616
      %v6618 = vmul.f32 %v6617, %v6472
      %s6619 = sadd.s32 %s6482, 113
      %s6620 = sld [smem:[#allocation15 + %s6619]]
      %v6621 = vstv %s6620
      %v6622 = vmul.f32 %v6621, %v6475
      %v6623 = vadd.f32 %v6618, %v6622
      %s6624 = sadd.s32 %s6482, 114
      %s6625 = sld [smem:[#allocation15 + %s6624]]
      %v6626 = vstv %s6625
      %v6627 = vmul.f32 %v6626, %v6478
      %v6628 = vadd.f32 %v6623, %v6627
      %s6629 = sadd.s32 %s6482, 115
      %s6630 = sld [smem:[#allocation15 + %s6629]]
      %v6631 = vstv %s6630
      %v6632 = vmul.f32 %v6631, %v6481
      %v6633 = vadd.f32 %v6628, %v6632
      %s6634 = sadd.s32 %s6482, 128
      %s6635 = sld [smem:[#allocation15 + %s6634]]
      %v6636 = vstv %s6635
      %v6637 = vmul.f32 %v6636, %v6472
      %s6638 = sadd.s32 %s6482, 129
      %s6639 = sld [smem:[#allocation15 + %s6638]]
      %v6640 = vstv %s6639
      %v6641 = vmul.f32 %v6640, %v6475
      %v6642 = vadd.f32 %v6637, %v6641
      %s6643 = sadd.s32 %s6482, 130
      %s6644 = sld [smem:[#allocation15 + %s6643]]
      %v6645 = vstv %s6644
      %v6646 = vmul.f32 %v6645, %v6478
      %v6647 = vadd.f32 %v6642, %v6646
      %s6648 = sadd.s32 %s6482, 131
      %s6649 = sld [smem:[#allocation15 + %s6648]]
      %v6650 = vstv %s6649
      %v6651 = vmul.f32 %v6650, %v6481
      %v6652 = vadd.f32 %v6647, %v6651
      %s6653 = sadd.s32 %s6482, 144
      %s6654 = sld [smem:[#allocation15 + %s6653]]
      %v6655 = vstv %s6654
      %v6656 = vmul.f32 %v6655, %v6472
      %s6657 = sadd.s32 %s6482, 145
      %s6658 = sld [smem:[#allocation15 + %s6657]]
      %v6659 = vstv %s6658
      %v6660 = vmul.f32 %v6659, %v6475
      %v6661 = vadd.f32 %v6656, %v6660
      %s6662 = sadd.s32 %s6482, 146
      %s6663 = sld [smem:[#allocation15 + %s6662]]
      %v6664 = vstv %s6663
      %v6665 = vmul.f32 %v6664, %v6478
      %v6666 = vadd.f32 %v6661, %v6665
      %s6667 = sadd.s32 %s6482, 147
      %s6668 = sld [smem:[#allocation15 + %s6667]]
      %v6669 = vstv %s6668
      %v6670 = vmul.f32 %v6669, %v6481
      %v6671 = vadd.f32 %v6666, %v6670
      %v6672 = vadd.f32 %v4598, %v6500
      %v6673 = vadd.f32 %v4599, %v6519
      %v6674 = vadd.f32 %v4600, %v6538
      %v6675 = vadd.f32 %v4601, %v6557
      %v6676 = vadd.f32 %v4602, %v6576
      %v6677 = vadd.f32 %v4603, %v6595
      %v6678 = vadd.f32 %v4604, %v6614
      %v6679 = vadd.f32 %v4605, %v6633
      %v6680 = vadd.f32 %v4606, %v6652
      %v6681 = vadd.f32 %v4607, %v6671
    $region72: #{tpu_custom_call.1} parent=1 // loop_footer
      %s4597 = sadd.s32 1, %s4593
    $region73: #{tpu_custom_call.1} parent=1 // loop_footer_branch
      %4592 = sbr.rel target = $region69
    $region74: #{tpu_custom_call.1} parent=1 // loop_exit
      _
    %6682 = vst [vmem:[#allocation18] sm:$0xff] %v4598
    %6683 = vst [vmem:[#allocation18 + $0x8] sm:$0xff] %v4599
    %6684 = vst [vmem:[#allocation18 + $0x10] sm:$0xff] %v4600
    %6685 = vst [vmem:[#allocation18 + $0x18] sm:$0xff] %v4601
    %6686 = vst [vmem:[#allocation18 + $0x20] sm:$0xff] %v4602
    %6687 = vst [vmem:[#allocation18 + $0x28] sm:$0xff] %v4603
    %6688 = vst [vmem:[#allocation18 + $0x30] sm:$0xff] %v4604
    %6689 = vst [vmem:[#allocation18 + $0x38] sm:$0xff] %v4605
    %6690 = vst [vmem:[#allocation18 + $0x40] sm:$0xff] %v4606
    %6691 = vst [vmem:[#allocation18 + $0x48] sm:$0xff] %v4607
    // Predicated region
    $region75: #{tpu_custom_call.1} parent=1 // pred_check
      _
    $region76: #{tpu_custom_call.1} parent=1 // pred_check_branch
      %6693 = sbr.rel (0) target = $region78
    $region77: #{tpu_custom_call.1} parent=1 // pred_region
      %6695 = vsyncadd [#allocation8], 0
      %s6696 = sshll.u32 [#allocation18], 4
      %s6697 = int_to_ptr.vmem [resolvable:$true] %s6696
      %s6698 = sshll.u32 %s7, 4
      %s6699 = int_to_ptr.hbm [resolvable:$true] %s6698
      %6704 = dma.vmem_to_hbm [thread:$0]  %s6697, 1280, %s6699, [#allocation8], 128, 128, 8
    $region78: #{tpu_custom_call.1} parent=1 // pred_fallthru
      _
    // Predicated region
    $region79: #{tpu_custom_call.1} parent=1 // pred_check
      _
    $region80: #{tpu_custom_call.1} parent=1 // pred_check_branch
      %6706 = sbr.rel (0) target = $region82
    $region81: #{tpu_custom_call.1} parent=1 // pred_region
      %6708 = dma.done [#allocation8], 1280
    $region82: #{tpu_custom_call.1} parent=1 // pred_fallthru
      _
    %6709 = vsyncpa [#allocation7], 1
    %6710 = vsyncpa [#allocation8], 1
    %6711 = vsyncpa [#allocation9], 1
    %6712 = vsyncpa [#allocation10], 1
    %6713 = vsyncpa [#allocation14], 1
    %6714 = vsyncpa [#allocation17], 1

</llo_original>
